<compile_context>
chip_gen: v7x
topology: tpu7x:2x2x1
jax: 0.10.0
libtpu: 0.0.40
codegen_flags: <defaults>
</compile_context>

<pallas_src>
import functools

import jax
import jax.numpy as jnp
from jax.experimental import pallas as pl
from jax.experimental.pallas import tpu as pltpu

_LANE = 128


def _round_up(n, m):
    return ((n + m - 1) // m) * m


def _fused_regression_kernel(p1_ref, w1_ref, b1_ref, w2_ref, b2_ref,
                             wo_ref, bo_ref, o_ref, act_s, patch_s, *, H, W):
    """One batch element per grid step; conv1/conv2/output fused, acts stay in VMEM."""
    F = w1_ref.shape[1]
    HW = H * W

    # Zero only the 1-pixel border of the activation scratch; the (H, W) interior is
    # fully overwritten before every use, so full-buffer fills are unnecessary.
    act_s[0:1, :, :] = jnp.zeros((1, W + 2, F), act_s.dtype)
    act_s[H + 1:H + 2, :, :] = jnp.zeros((1, W + 2, F), act_s.dtype)
    act_s[:, 0:1, :] = jnp.zeros((H + 2, 1, F), act_s.dtype)
    act_s[:, W + 1:W + 2, :] = jnp.zeros((H + 2, 1, F), act_s.dtype)

    # conv1 + ReLU: im2col patch precomputed outside (lane-dense, K padded to 128),
    # so conv1 is a single MXU matmul with no zero-slot K columns.
    a1 = jnp.dot(p1_ref[0], w1_ref[...], preferred_element_type=jnp.float32)
    a1 = jnp.maximum(a1 + b1_ref[...], 0.0)
    act_s[1:H + 1, 1:W + 1, :] = a1.reshape(H, W, F).astype(act_s.dtype)

    def conv3x3(w_ref, b_ref, relu):
        # im2col from the zero-bordered activation scratch; tight channel packing
        # (column = tap*F + c), so K = 9*F with no zero-padded slots.
        # TODO(synk): on v5e, generate the 9 taps with pltpu.roll + boundary masks on a
        # 2-D (H*W, F) layout to move this relayout work onto the idle XLU slot.
        for kh in range(3):
            for kw in range(3):
                t = kh * 3 + kw
                patch_s[:, t * F:(t + 1) * F] = (
                    act_s[kh:kh + H, kw:kw + W, :].reshape(HW, F))
        acc = jnp.dot(patch_s[...], w_ref[...], preferred_element_type=jnp.float32)
        acc = acc + b_ref[...]
        return jnp.maximum(acc, 0.0) if relu else acc

    # conv2 + ReLU (re-uses the same padded activation scratch).
    a2 = conv3x3(w2_ref, b2_ref, relu=True)
    act_s[1:H + 1, 1:W + 1, :] = a2.reshape(H, W, F).astype(act_s.dtype)

    # Output conv (no ReLU). N is zero-padded to one full 128-lane group so this store
    # is an unmasked, lane-dense block; the wrapper slices Co back out.
    out = conv3x3(wo_ref, bo_ref, relu=False)                  # (HW, Cop) float32
    o_ref[...] = out.reshape(1, HW, out.shape[-1]).astype(o_ref.dtype)


def regression_model_forward(x_nchw, params):
    """Matches RegressionModel.forward with a single fused pallas_call."""
    (w1, b1), (w2, b2), (wo, bo) = params
    x = jnp.transpose(x_nchw, (0, 2, 3, 1))              # NCHW -> NHWC
    B, H, W, Cin = x.shape
    F = w1.shape[-1]
    Co = wo.shape[-1]                                    # num_anchor_points * 2

    K1 = 9 * Cin
    K1p = _round_up(K1, _LANE)                           # conv1 contraction (lane-padded)
    K2 = 9 * F                                           # conv2/output contraction (tight)
    Cop = _round_up(Co, _LANE)                           # lane-dense output columns

    # conv1 im2col patch precomputed outside the kernel (cheap XLA ops, lane-dense).
    xp = jnp.pad(x, ((0, 0), (1, 1), (1, 1), (0, 0)))
    taps = [xp[:, kh:kh + H, kw:kw + W, :] for kh in range(3) for kw in range(3)]
    patch1 = jnp.concatenate(taps, axis=-1).reshape(B, H * W, K1)
    patch1 = jnp.pad(patch1, ((0, 0), (0, 0), (0, K1p - K1))).astype(jnp.bfloat16)

    # Weights packed tap-major / channel-minor to match the patch column order.
    w1m = jnp.pad(w1.reshape(K1, F), ((0, K1p - K1), (0, 0))).astype(jnp.bfloat16)
    w2m = w2.reshape(K2, F).astype(jnp.bfloat16)
    wom = jnp.pad(wo.reshape(K2, Co), ((0, 0), (0, Cop - Co))).astype(jnp.bfloat16)
    b1m = b1.reshape(1, F).astype(jnp.float32)
    b2m = b2.reshape(1, F).astype(jnp.float32)
    bom = jnp.pad(bo.reshape(1, Co), ((0, 0), (0, Cop - Co))).astype(jnp.float32)

    kernel = functools.partial(_fused_regression_kernel, H=H, W=W)

    # TODO(synk): for production shapes (feature_size=256, large H*W) add an H-row tile
    # grid axis with 1-row halos (second "parallel" axis keeps both v7x TCs busy) and
    # re-derive vmem_limit_bytes; full-image-in-VMEM is fine at these test sizes.
    out = pl.pallas_call(
        kernel,
        out_shape=jax.ShapeDtypeStruct((B, H * W, Cop), x_nchw.dtype),
        grid_spec=pltpu.PrefetchScalarGridSpec(
            num_scalar_prefetch=0,
            grid=(B,),
            in_specs=[
                pl.BlockSpec((1, H * W, K1p), lambda b: (b, 0, 0)),   # conv1 patches
                pl.BlockSpec((K1p, F), lambda b: (0, 0)),             # w1
                pl.BlockSpec((1, F), lambda b: (0, 0)),               # b1
                pl.BlockSpec((K2, F), lambda b: (0, 0)),              # w2
                pl.BlockSpec((1, F), lambda b: (0, 0)),               # b2
                pl.BlockSpec((K2, Cop), lambda b: (0, 0)),            # w_out (N padded)
                pl.BlockSpec((1, Cop), lambda b: (0, 0)),             # b_out (N padded)
            ],
            out_specs=pl.BlockSpec((1, H * W, Cop), lambda b: (b, 0, 0)),
            scratch_shapes=[
                pltpu.VMEM((H + 2, W + 2, F), jnp.bfloat16),  # padded acts (shared)
                pltpu.VMEM((H * W, K2), jnp.bfloat16),        # im2col patch matrix
            ],
        ),
        compiler_params=pltpu.CompilerParams(
            dimension_semantics=("parallel",),
            vmem_limit_bytes=32 * 1024 * 1024,
        ),
    )(patch1, w1m, b1m, w2m, b2m, wom, bom)

    # Drop lane padding, then (B, H*W, Co) -> (B, H*W*A, 2)
    # == permute(0,2,3,1).contiguous().view(B, -1, 2).
    return out[:, :, :Co].reshape(B, -1, 2)


def init_params(key, num_features_in, num_anchor_points, feature_size):
    """Synthetic params in PyTorch layout (Cout, Cin, 3, 3), converted to HWIO."""
    ks = jax.random.split(key, 3)

    def conv_param(k, cin, cout):
        kw_, kb_ = jax.random.split(k)
        scale = 1.0 / jnp.sqrt(cin * 9.0)
        w_t = jax.random.uniform(kw_, (cout, cin, 3, 3), jnp.float32, -scale, scale)
        b = jax.random.uniform(kb_, (cout,), jnp.float32, -scale, scale)
        return jnp.transpose(w_t, (2, 3, 1, 0)), b       # -> (3, 3, Cin, Cout)

    w1, b1 = conv_param(ks[0], num_features_in, feature_size)
    w2, b2 = conv_param(ks[1], feature_size, feature_size)
    wo, bo = conv_param(ks[2], feature_size, num_anchor_points * 2)
    return (w1, b1), (w2, b2), (wo, bo)


def _reference_forward(x_nchw, params):
    """Pure-JAX reference with the kernel's precision policy (bf16 matmul, f32 acc)."""
    (w1, b1), (w2, b2), (wo, bo) = params
    x = jnp.transpose(x_nchw, (0, 2, 3, 1))

    def conv(x_f32, w, b, relu):
        y = jax.lax.conv_general_dilated(
            x_f32.astype(jnp.bfloat16), w.astype(jnp.bfloat16),
            window_strides=(1, 1), padding="SAME",
            dimension_numbers=("NHWC", "HWIO", "NHWC"),
            preferred_element_type=jnp.float32)
        y = y + b
        return jnp.maximum(y, 0.0) if relu else y

    a1 = conv(x, w1, b1, True)
    a2 = conv(a1, w2, b2, True)
    out = conv(a2, wo, bo, False)
    return out.reshape(out.shape[0], -1, 2)


if __name__ == "__main__":
    # Small shapes consistent with the module's forward.
    B, Cin, H, W = 2, 4, 16, 16
    num_anchor_points = 4
    feature_size = 64   # constructor default is 256; smaller synthetic width for the test

    key = jax.random.PRNGKey(0)
    kx, kp = jax.random.split(key)
    x = jax.random.normal(kx, (B, Cin, H, W), jnp.float32)
    params = init_params(kp, Cin, num_anchor_points, feature_size)

    out = jax.block_until_ready(regression_model_forward(x, params))
    assert out.shape == (B, H * W * num_anchor_points, 2), out.shape

    ref = jax.block_until_ready(_reference_forward(x, params))
    max_err = float(jnp.max(jnp.abs(out - ref)))
    assert jnp.allclose(out, ref, atol=2e-2, rtol=2e-2), max_err

    print("KERNEL_OK")
</pallas_src>

<mosaic_0001>
module attributes {stable_mosaic.version = 11 : i64} {
  func.func @_fused_regression_kernel(%arg0: i32, %arg1: memref<1x256x128xbf16, #tpu.memory_space<vmem>>, %arg2: memref<128x64xbf16, #tpu.memory_space<vmem>>, %arg3: memref<1x64xf32, #tpu.memory_space<vmem>>, %arg4: memref<576x64xbf16, #tpu.memory_space<vmem>>, %arg5: memref<1x64xf32, #tpu.memory_space<vmem>>, %arg6: memref<576x128xbf16, #tpu.memory_space<vmem>>, %arg7: memref<1x128xf32, #tpu.memory_space<vmem>>, %arg8: memref<1x256x128xf32, #tpu.memory_space<vmem>>, %arg9: memref<18x18x64xbf16, #tpu.memory_space<vmem>>, %arg10: memref<256x576xbf16, #tpu.memory_space<vmem>>) attributes {dimension_semantics = [#tpu.dimension_semantics<parallel>], iteration_bounds = array<i64: 2>, scalar_prefetch = 0 : i64, scratch_operands = 2 : i64, tpu.core_type = #tpu.core_type<tc>, window_params = [{transform_indices = @transform_0, window_bounds = array<i64: 1, 256, 128>}, {pipeline_mode = #tpu.pipeline_mode<synchronous>, transform_indices = @transform_1, window_bounds = array<i64: 128, 64>}, {pipeline_mode = #tpu.pipeline_mode<synchronous>, transform_indices = @transform_2, window_bounds = array<i64: 1, 64>}, {pipeline_mode = #tpu.pipeline_mode<synchronous>, transform_indices = @transform_3, window_bounds = array<i64: 576, 64>}, {pipeline_mode = #tpu.pipeline_mode<synchronous>, transform_indices = @transform_4, window_bounds = array<i64: 1, 64>}, {pipeline_mode = #tpu.pipeline_mode<synchronous>, transform_indices = @transform_5, window_bounds = array<i64: 576, 128>}, {pipeline_mode = #tpu.pipeline_mode<synchronous>, transform_indices = @transform_6, window_bounds = array<i64: 1, 128>}, {transform_indices = @transform_7, window_bounds = array<i64: 1, 256, 128>}]} {
    %cst = arith.constant 0.000000e+00 : bf16
    %0 = vector.broadcast %cst : bf16 to vector<1x18x64xbf16>
    %c0 = arith.constant 0 : index
    %c0_0 = arith.constant 0 : index
    %c0_1 = arith.constant 0 : index
    %1 = vector.load %arg9[%c0, %c0_0, %c0_1] : memref<18x18x64xbf16, #tpu.memory_space<vmem>>, vector<1x18x64xbf16>
    tpu.vector_store %arg9[%c0, %c0_0, %c0_1], %0 {strides = array<i32>} : memref<18x18x64xbf16, #tpu.memory_space<vmem>>, vector<1x18x64xbf16>,
    %cst_2 = arith.constant 0.000000e+00 : bf16
    %2 = vector.broadcast %cst_2 : bf16 to vector<1x18x64xbf16>
    %c17 = arith.constant 17 : index
    %c0_3 = arith.constant 0 : index
    %c0_4 = arith.constant 0 : index
    %3 = vector.load %arg9[%c17, %c0_3, %c0_4] : memref<18x18x64xbf16, #tpu.memory_space<vmem>>, vector<1x18x64xbf16>
    tpu.vector_store %arg9[%c17, %c0_3, %c0_4], %2 {strides = array<i32>} : memref<18x18x64xbf16, #tpu.memory_space<vmem>>, vector<1x18x64xbf16>,
    %cst_5 = arith.constant 0.000000e+00 : bf16
    %4 = vector.broadcast %cst_5 : bf16 to vector<18x1x64xbf16>
    %c0_6 = arith.constant 0 : index
    %c0_7 = arith.constant 0 : index
    %c0_8 = arith.constant 0 : index
    %5 = vector.load %arg9[%c0_6, %c0_7, %c0_8] : memref<18x18x64xbf16, #tpu.memory_space<vmem>>, vector<18x1x64xbf16>
    tpu.vector_store %arg9[%c0_6, %c0_7, %c0_8], %4 {strides = array<i32>} : memref<18x18x64xbf16, #tpu.memory_space<vmem>>, vector<18x1x64xbf16>,
    %cst_9 = arith.constant 0.000000e+00 : bf16
    %6 = vector.broadcast %cst_9 : bf16 to vector<18x1x64xbf16>
    %c0_10 = arith.constant 0 : index
    %c17_11 = arith.constant 17 : index
    %c0_12 = arith.constant 0 : index
    %7 = vector.load %arg9[%c0_10, %c17_11, %c0_12] : memref<18x18x64xbf16, #tpu.memory_space<vmem>>, vector<18x1x64xbf16>
    tpu.vector_store %arg9[%c0_10, %c17_11, %c0_12], %6 {strides = array<i32>} : memref<18x18x64xbf16, #tpu.memory_space<vmem>>, vector<18x1x64xbf16>,
    %c0_13 = arith.constant 0 : index
    %c0_14 = arith.constant 0 : index
    %c0_15 = arith.constant 0 : index
    %8 = vector.load %arg1[%c0_13, %c0_14, %c0_15] : memref<1x256x128xbf16, #tpu.memory_space<vmem>>, vector<1x256x128xbf16>
    %9 = vector.shape_cast %8 : vector<1x256x128xbf16> to vector<256x128xbf16>
    %c0_16 = arith.constant 0 : index
    %c0_17 = arith.constant 0 : index
    %10 = vector.load %arg2[%c0_16, %c0_17] : memref<128x64xbf16, #tpu.memory_space<vmem>>, vector<128x64xbf16>
    %cst_18 = arith.constant dense<0.000000e+00> : vector<256x64xf32>
    %11 = tpu.matmul %9, %10, %cst_18 {dimension_numbers = #tpu.dot_dimension_numbers<[1], [0], [0], [1], [0, 0, 1, 1], [], []>} : vector<256x128xbf16>, vector<128x64xbf16>, vector<256x64xf32> -> vector<256x64xf32>
    %c0_19 = arith.constant 0 : index
    %c0_20 = arith.constant 0 : index
    %12 = vector.load %arg3[%c0_19, %c0_20] : memref<1x64xf32, #tpu.memory_space<vmem>>, vector<1x64xf32>
    %13 = vector.broadcast %12 : vector<1x64xf32> to vector<256x64xf32>
    %14 = arith.addf %11, %13 : vector<256x64xf32>
    %cst_21 = arith.constant 0.000000e+00 : f32
    %15 = vector.broadcast %cst_21 : f32 to vector<256x64xf32>
    %16 = arith.maximumf %14, %15 : vector<256x64xf32>
    %17 = vector.shape_cast %16 : vector<256x64xf32> to vector<16x16x64xf32>
    %18 = arith.truncf %17 : vector<16x16x64xf32> to vector<16x16x64xbf16>
    %c1 = arith.constant 1 : index
    %c1_22 = arith.constant 1 : index
    %c0_23 = arith.constant 0 : index
    %19 = vector.load %arg9[%c1, %c1_22, %c0_23] : memref<18x18x64xbf16, #tpu.memory_space<vmem>>, vector<16x16x64xbf16>
    tpu.vector_store %arg9[%c1, %c1_22, %c0_23], %18 {strides = array<i32>} : memref<18x18x64xbf16, #tpu.memory_space<vmem>>, vector<16x16x64xbf16>,
    %c0_24 = arith.constant 0 : index
    %c0_25 = arith.constant 0 : index
    %c0_26 = arith.constant 0 : index
    %20 = vector.load %arg9[%c0_24, %c0_25, %c0_26] : memref<18x18x64xbf16, #tpu.memory_space<vmem>>, vector<16x16x64xbf16>
    %21 = vector.shape_cast %20 : vector<16x16x64xbf16> to vector<256x64xbf16>
    %c0_27 = arith.constant 0 : index
    %c0_28 = arith.constant 0 : index
    %22 = vector.load %arg10[%c0_27, %c0_28] : memref<256x576xbf16, #tpu.memory_space<vmem>>, vector<256x64xbf16>
    tpu.vector_store %arg10[%c0_27, %c0_28], %21 {strides = array<i32>} : memref<256x576xbf16, #tpu.memory_space<vmem>>, vector<256x64xbf16>,
    %c0_29 = arith.constant 0 : index
    %c1_30 = arith.constant 1 : index
    %c0_31 = arith.constant 0 : index
    %23 = vector.load %arg9[%c0_29, %c1_30, %c0_31] : memref<18x18x64xbf16, #tpu.memory_space<vmem>>, vector<16x16x64xbf16>
    %24 = vector.shape_cast %23 : vector<16x16x64xbf16> to vector<256x64xbf16>
    %c0_32 = arith.constant 0 : index
    %c64 = arith.constant 64 : index
    %25 = vector.load %arg10[%c0_32, %c64] : memref<256x576xbf16, #tpu.memory_space<vmem>>, vector<256x64xbf16>
    tpu.vector_store %arg10[%c0_32, %c64], %24 {strides = array<i32>} : memref<256x576xbf16, #tpu.memory_space<vmem>>, vector<256x64xbf16>,
    %c0_33 = arith.constant 0 : index
    %c2 = arith.constant 2 : index
    %c0_34 = arith.constant 0 : index
    %26 = vector.load %arg9[%c0_33, %c2, %c0_34] : memref<18x18x64xbf16, #tpu.memory_space<vmem>>, vector<16x16x64xbf16>
    %27 = vector.shape_cast %26 : vector<16x16x64xbf16> to vector<256x64xbf16>
    %c0_35 = arith.constant 0 : index
    %c128 = arith.constant 128 : index
    %28 = vector.load %arg10[%c0_35, %c128] : memref<256x576xbf16, #tpu.memory_space<vmem>>, vector<256x64xbf16>
    tpu.vector_store %arg10[%c0_35, %c128], %27 {strides = array<i32>} : memref<256x576xbf16, #tpu.memory_space<vmem>>, vector<256x64xbf16>,
    %c1_36 = arith.constant 1 : index
    %c0_37 = arith.constant 0 : index
    %c0_38 = arith.constant 0 : index
    %29 = vector.load %arg9[%c1_36, %c0_37, %c0_38] : memref<18x18x64xbf16, #tpu.memory_space<vmem>>, vector<16x16x64xbf16>
    %30 = vector.shape_cast %29 : vector<16x16x64xbf16> to vector<256x64xbf16>
    %c0_39 = arith.constant 0 : index
    %c192 = arith.constant 192 : index
    %31 = vector.load %arg10[%c0_39, %c192] : memref<256x576xbf16, #tpu.memory_space<vmem>>, vector<256x64xbf16>
    tpu.vector_store %arg10[%c0_39, %c192], %30 {strides = array<i32>} : memref<256x576xbf16, #tpu.memory_space<vmem>>, vector<256x64xbf16>,
    %c1_40 = arith.constant 1 : index
    %c1_41 = arith.constant 1 : index
    %c0_42 = arith.constant 0 : index
    %32 = vector.load %arg9[%c1_40, %c1_41, %c0_42] : memref<18x18x64xbf16, #tpu.memory_space<vmem>>, vector<16x16x64xbf16>
    %33 = vector.shape_cast %32 : vector<16x16x64xbf16> to vector<256x64xbf16>
    %c0_43 = arith.constant 0 : index
    %c256 = arith.constant 256 : index
    %34 = vector.load %arg10[%c0_43, %c256] : memref<256x576xbf16, #tpu.memory_space<vmem>>, vector<256x64xbf16>
    tpu.vector_store %arg10[%c0_43, %c256], %33 {strides = array<i32>} : memref<256x576xbf16, #tpu.memory_space<vmem>>, vector<256x64xbf16>,
    %c1_44 = arith.constant 1 : index
    %c2_45 = arith.constant 2 : index
    %c0_46 = arith.constant 0 : index
    %35 = vector.load %arg9[%c1_44, %c2_45, %c0_46] : memref<18x18x64xbf16, #tpu.memory_space<vmem>>, vector<16x16x64xbf16>
    %36 = vector.shape_cast %35 : vector<16x16x64xbf16> to vector<256x64xbf16>
    %c0_47 = arith.constant 0 : index
    %c320 = arith.constant 320 : index
    %37 = vector.load %arg10[%c0_47, %c320] : memref<256x576xbf16, #tpu.memory_space<vmem>>, vector<256x64xbf16>
    tpu.vector_store %arg10[%c0_47, %c320], %36 {strides = array<i32>} : memref<256x576xbf16, #tpu.memory_space<vmem>>, vector<256x64xbf16>,
    %c2_48 = arith.constant 2 : index
    %c0_49 = arith.constant 0 : index
    %c0_50 = arith.constant 0 : index
    %38 = vector.load %arg9[%c2_48, %c0_49, %c0_50] : memref<18x18x64xbf16, #tpu.memory_space<vmem>>, vector<16x16x64xbf16>
    %39 = vector.shape_cast %38 : vector<16x16x64xbf16> to vector<256x64xbf16>
    %c0_51 = arith.constant 0 : index
    %c384 = arith.constant 384 : index
    %40 = vector.load %arg10[%c0_51, %c384] : memref<256x576xbf16, #tpu.memory_space<vmem>>, vector<256x64xbf16>
    tpu.vector_store %arg10[%c0_51, %c384], %39 {strides = array<i32>} : memref<256x576xbf16, #tpu.memory_space<vmem>>, vector<256x64xbf16>,
    %c2_52 = arith.constant 2 : index
    %c1_53 = arith.constant 1 : index
    %c0_54 = arith.constant 0 : index
    %41 = vector.load %arg9[%c2_52, %c1_53, %c0_54] : memref<18x18x64xbf16, #tpu.memory_space<vmem>>, vector<16x16x64xbf16>
    %42 = vector.shape_cast %41 : vector<16x16x64xbf16> to vector<256x64xbf16>
    %c0_55 = arith.constant 0 : index
    %c448 = arith.constant 448 : index
    %43 = vector.load %arg10[%c0_55, %c448] : memref<256x576xbf16, #tpu.memory_space<vmem>>, vector<256x64xbf16>
    tpu.vector_store %arg10[%c0_55, %c448], %42 {strides = array<i32>} : memref<256x576xbf16, #tpu.memory_space<vmem>>, vector<256x64xbf16>,
    %c2_56 = arith.constant 2 : index
    %c2_57 = arith.constant 2 : index
    %c0_58 = arith.constant 0 : index
    %44 = vector.load %arg9[%c2_56, %c2_57, %c0_58] : memref<18x18x64xbf16, #tpu.memory_space<vmem>>, vector<16x16x64xbf16>
    %45 = vector.shape_cast %44 : vector<16x16x64xbf16> to vector<256x64xbf16>
    %c0_59 = arith.constant 0 : index
    %c512 = arith.constant 512 : index
    %46 = vector.load %arg10[%c0_59, %c512] : memref<256x576xbf16, #tpu.memory_space<vmem>>, vector<256x64xbf16>
    tpu.vector_store %arg10[%c0_59, %c512], %45 {strides = array<i32>} : memref<256x576xbf16, #tpu.memory_space<vmem>>, vector<256x64xbf16>,
    %c0_60 = arith.constant 0 : index
    %c0_61 = arith.constant 0 : index
    %47 = vector.load %arg10[%c0_60, %c0_61] : memref<256x576xbf16, #tpu.memory_space<vmem>>, vector<256x576xbf16>
    %c0_62 = arith.constant 0 : index
    %c0_63 = arith.constant 0 : index
    %48 = vector.load %arg4[%c0_62, %c0_63] : memref<576x64xbf16, #tpu.memory_space<vmem>>, vector<576x64xbf16>
    %cst_64 = arith.constant dense<0.000000e+00> : vector<256x64xf32>
    %49 = tpu.matmul %47, %48, %cst_64 {dimension_numbers = #tpu.dot_dimension_numbers<[1], [0], [0], [1], [0, 0, 1, 1], [], []>} : vector<256x576xbf16>, vector<576x64xbf16>, vector<256x64xf32> -> vector<256x64xf32>
    %c0_65 = arith.constant 0 : index
    %c0_66 = arith.constant 0 : index
    %50 = vector.load %arg5[%c0_65, %c0_66] : memref<1x64xf32, #tpu.memory_space<vmem>>, vector<1x64xf32>
    %51 = vector.broadcast %50 : vector<1x64xf32> to vector<256x64xf32>
    %52 = arith.addf %49, %51 : vector<256x64xf32>
    %cst_67 = arith.constant 0.000000e+00 : f32
    %53 = vector.broadcast %cst_67 : f32 to vector<256x64xf32>
    %54 = arith.maximumf %52, %53 : vector<256x64xf32>
    %55 = vector.shape_cast %54 : vector<256x64xf32> to vector<16x16x64xf32>
    %56 = arith.truncf %55 : vector<16x16x64xf32> to vector<16x16x64xbf16>
    %c1_68 = arith.constant 1 : index
    %c1_69 = arith.constant 1 : index
    %c0_70 = arith.constant 0 : index
    %57 = vector.load %arg9[%c1_68, %c1_69, %c0_70] : memref<18x18x64xbf16, #tpu.memory_space<vmem>>, vector<16x16x64xbf16>
    tpu.vector_store %arg9[%c1_68, %c1_69, %c0_70], %56 {strides = array<i32>} : memref<18x18x64xbf16, #tpu.memory_space<vmem>>, vector<16x16x64xbf16>,
    %c0_71 = arith.constant 0 : index
    %c0_72 = arith.constant 0 : index
    %c0_73 = arith.constant 0 : index
    %58 = vector.load %arg9[%c0_71, %c0_72, %c0_73] : memref<18x18x64xbf16, #tpu.memory_space<vmem>>, vector<16x16x64xbf16>
    %59 = vector.shape_cast %58 : vector<16x16x64xbf16> to vector<256x64xbf16>
    %c0_74 = arith.constant 0 : index
    %c0_75 = arith.constant 0 : index
    %60 = vector.load %arg10[%c0_74, %c0_75] : memref<256x576xbf16, #tpu.memory_space<vmem>>, vector<256x64xbf16>
    tpu.vector_store %arg10[%c0_74, %c0_75], %59 {strides = array<i32>} : memref<256x576xbf16, #tpu.memory_space<vmem>>, vector<256x64xbf16>,
    %c0_76 = arith.constant 0 : index
    %c1_77 = arith.constant 1 : index
    %c0_78 = arith.constant 0 : index
    %61 = vector.load %arg9[%c0_76, %c1_77, %c0_78] : memref<18x18x64xbf16, #tpu.memory_space<vmem>>, vector<16x16x64xbf16>
    %62 = vector.shape_cast %61 : vector<16x16x64xbf16> to vector<256x64xbf16>
    %c0_79 = arith.constant 0 : index
    %c64_80 = arith.constant 64 : index
    %63 = vector.load %arg10[%c0_79, %c64_80] : memref<256x576xbf16, #tpu.memory_space<vmem>>, vector<256x64xbf16>
    tpu.vector_store %arg10[%c0_79, %c64_80], %62 {strides = array<i32>} : memref<256x576xbf16, #tpu.memory_space<vmem>>, vector<256x64xbf16>,
    %c0_81 = arith.constant 0 : index
    %c2_82 = arith.constant 2 : index
    %c0_83 = arith.constant 0 : index
    %64 = vector.load %arg9[%c0_81, %c2_82, %c0_83] : memref<18x18x64xbf16, #tpu.memory_space<vmem>>, vector<16x16x64xbf16>
    %65 = vector.shape_cast %64 : vector<16x16x64xbf16> to vector<256x64xbf16>
    %c0_84 = arith.constant 0 : index
    %c128_85 = arith.constant 128 : index
    %66 = vector.load %arg10[%c0_84, %c128_85] : memref<256x576xbf16, #tpu.memory_space<vmem>>, vector<256x64xbf16>
    tpu.vector_store %arg10[%c0_84, %c128_85], %65 {strides = array<i32>} : memref<256x576xbf16, #tpu.memory_space<vmem>>, vector<256x64xbf16>,
    %c1_86 = arith.constant 1 : index
    %c0_87 = arith.constant 0 : index
    %c0_88 = arith.constant 0 : index
    %67 = vector.load %arg9[%c1_86, %c0_87, %c0_88] : memref<18x18x64xbf16, #tpu.memory_space<vmem>>, vector<16x16x64xbf16>
    %68 = vector.shape_cast %67 : vector<16x16x64xbf16> to vector<256x64xbf16>
    %c0_89 = arith.constant 0 : index
    %c192_90 = arith.constant 192 : index
    %69 = vector.load %arg10[%c0_89, %c192_90] : memref<256x576xbf16, #tpu.memory_space<vmem>>, vector<256x64xbf16>
    tpu.vector_store %arg10[%c0_89, %c192_90], %68 {strides = array<i32>} : memref<256x576xbf16, #tpu.memory_space<vmem>>, vector<256x64xbf16>,
    %c1_91 = arith.constant 1 : index
    %c1_92 = arith.constant 1 : index
    %c0_93 = arith.constant 0 : index
    %70 = vector.load %arg9[%c1_91, %c1_92, %c0_93] : memref<18x18x64xbf16, #tpu.memory_space<vmem>>, vector<16x16x64xbf16>
    %71 = vector.shape_cast %70 : vector<16x16x64xbf16> to vector<256x64xbf16>
    %c0_94 = arith.constant 0 : index
    %c256_95 = arith.constant 256 : index
    %72 = vector.load %arg10[%c0_94, %c256_95] : memref<256x576xbf16, #tpu.memory_space<vmem>>, vector<256x64xbf16>
    tpu.vector_store %arg10[%c0_94, %c256_95], %71 {strides = array<i32>} : memref<256x576xbf16, #tpu.memory_space<vmem>>, vector<256x64xbf16>,
    %c1_96 = arith.constant 1 : index
    %c2_97 = arith.constant 2 : index
    %c0_98 = arith.constant 0 : index
    %73 = vector.load %arg9[%c1_96, %c2_97, %c0_98] : memref<18x18x64xbf16, #tpu.memory_space<vmem>>, vector<16x16x64xbf16>
    %74 = vector.shape_cast %73 : vector<16x16x64xbf16> to vector<256x64xbf16>
    %c0_99 = arith.constant 0 : index
    %c320_100 = arith.constant 320 : index
    %75 = vector.load %arg10[%c0_99, %c320_100] : memref<256x576xbf16, #tpu.memory_space<vmem>>, vector<256x64xbf16>
    tpu.vector_store %arg10[%c0_99, %c320_100], %74 {strides = array<i32>} : memref<256x576xbf16, #tpu.memory_space<vmem>>, vector<256x64xbf16>,
    %c2_101 = arith.constant 2 : index
    %c0_102 = arith.constant 0 : index
    %c0_103 = arith.constant 0 : index
    %76 = vector.load %arg9[%c2_101, %c0_102, %c0_103] : memref<18x18x64xbf16, #tpu.memory_space<vmem>>, vector<16x16x64xbf16>
    %77 = vector.shape_cast %76 : vector<16x16x64xbf16> to vector<256x64xbf16>
    %c0_104 = arith.constant 0 : index
    %c384_105 = arith.constant 384 : index
    %78 = vector.load %arg10[%c0_104, %c384_105] : memref<256x576xbf16, #tpu.memory_space<vmem>>, vector<256x64xbf16>
    tpu.vector_store %arg10[%c0_104, %c384_105], %77 {strides = array<i32>} : memref<256x576xbf16, #tpu.memory_space<vmem>>, vector<256x64xbf16>,
    %c2_106 = arith.constant 2 : index
    %c1_107 = arith.constant 1 : index
    %c0_108 = arith.constant 0 : index
    %79 = vector.load %arg9[%c2_106, %c1_107, %c0_108] : memref<18x18x64xbf16, #tpu.memory_space<vmem>>, vector<16x16x64xbf16>
    %80 = vector.shape_cast %79 : vector<16x16x64xbf16> to vector<256x64xbf16>
    %c0_109 = arith.constant 0 : index
    %c448_110 = arith.constant 448 : index
    %81 = vector.load %arg10[%c0_109, %c448_110] : memref<256x576xbf16, #tpu.memory_space<vmem>>, vector<256x64xbf16>
    tpu.vector_store %arg10[%c0_109, %c448_110], %80 {strides = array<i32>} : memref<256x576xbf16, #tpu.memory_space<vmem>>, vector<256x64xbf16>,
    %c2_111 = arith.constant 2 : index
    %c2_112 = arith.constant 2 : index
    %c0_113 = arith.constant 0 : index
    %82 = vector.load %arg9[%c2_111, %c2_112, %c0_113] : memref<18x18x64xbf16, #tpu.memory_space<vmem>>, vector<16x16x64xbf16>
    %83 = vector.shape_cast %82 : vector<16x16x64xbf16> to vector<256x64xbf16>
    %c0_114 = arith.constant 0 : index
    %c512_115 = arith.constant 512 : index
    %84 = vector.load %arg10[%c0_114, %c512_115] : memref<256x576xbf16, #tpu.memory_space<vmem>>, vector<256x64xbf16>
    tpu.vector_store %arg10[%c0_114, %c512_115], %83 {strides = array<i32>} : memref<256x576xbf16, #tpu.memory_space<vmem>>, vector<256x64xbf16>,
    %c0_116 = arith.constant 0 : index
    %c0_117 = arith.constant 0 : index
    %85 = vector.load %arg10[%c0_116, %c0_117] : memref<256x576xbf16, #tpu.memory_space<vmem>>, vector<256x576xbf16>
    %c0_118 = arith.constant 0 : index
    %c0_119 = arith.constant 0 : index
    %86 = vector.load %arg6[%c0_118, %c0_119] : memref<576x128xbf16, #tpu.memory_space<vmem>>, vector<576x128xbf16>
    %cst_120 = arith.constant dense<0.000000e+00> : vector<256x128xf32>
    %87 = tpu.matmul %85, %86, %cst_120 {dimension_numbers = #tpu.dot_dimension_numbers<[1], [0], [0], [1], [0, 0, 1, 1], [], []>} : vector<256x576xbf16>, vector<576x128xbf16>, vector<256x128xf32> -> vector<256x128xf32>
    %c0_121 = arith.constant 0 : index
    %c0_122 = arith.constant 0 : index
    %88 = vector.load %arg7[%c0_121, %c0_122] : memref<1x128xf32, #tpu.memory_space<vmem>>, vector<1x128xf32>
    %89 = vector.broadcast %88 : vector<1x128xf32> to vector<256x128xf32>
    %90 = arith.addf %87, %89 : vector<256x128xf32>
    %91 = vector.shape_cast %90 : vector<256x128xf32> to vector<1x256x128xf32>
    %c0_123 = arith.constant 0 : index
    %c0_124 = arith.constant 0 : index
    %c0_125 = arith.constant 0 : index
    %92 = vector.load %arg8[%c0_123, %c0_124, %c0_125] : memref<1x256x128xf32, #tpu.memory_space<vmem>>, vector<1x256x128xf32>
    tpu.vector_store %arg8[%c0_123, %c0_124, %c0_125], %91 {strides = array<i32>} : memref<1x256x128xf32, #tpu.memory_space<vmem>>, vector<1x256x128xf32>,
    return
  }
  func.func @transform_0(%arg0: i32) -> (i32, i32, i32) {
    %c0_i32 = arith.constant 0 : i32
    %c0_i32_0 = arith.constant 0 : i32
    %c0_i32_1 = arith.constant 0 : i32
    return %arg0, %c0_i32, %c0_i32_0 : i32, i32, i32
  }
  func.func @transform_1(%arg0: i32) -> (i32, i32) {
    %c0_i32 = arith.constant 0 : i32
    %c0_i32_0 = arith.constant 0 : i32
    %c0_i32_1 = arith.constant 0 : i32
    return %c0_i32, %c0_i32_0 : i32, i32
  }
  func.func @transform_2(%arg0: i32) -> (i32, i32) {
    %c0_i32 = arith.constant 0 : i32
    %c0_i32_0 = arith.constant 0 : i32
    %c0_i32_1 = arith.constant 0 : i32
    return %c0_i32, %c0_i32_0 : i32, i32
  }
  func.func @transform_3(%arg0: i32) -> (i32, i32) {
    %c0_i32 = arith.constant 0 : i32
    %c0_i32_0 = arith.constant 0 : i32
    %c0_i32_1 = arith.constant 0 : i32
    return %c0_i32, %c0_i32_0 : i32, i32
  }
  func.func @transform_4(%arg0: i32) -> (i32, i32) {
    %c0_i32 = arith.constant 0 : i32
    %c0_i32_0 = arith.constant 0 : i32
    %c0_i32_1 = arith.constant 0 : i32
    return %c0_i32, %c0_i32_0 : i32, i32
  }
  func.func @transform_5(%arg0: i32) -> (i32, i32) {
    %c0_i32 = arith.constant 0 : i32
    %c0_i32_0 = arith.constant 0 : i32
    %c0_i32_1 = arith.constant 0 : i32
    return %c0_i32, %c0_i32_0 : i32, i32
  }
  func.func @transform_6(%arg0: i32) -> (i32, i32) {
    %c0_i32 = arith.constant 0 : i32
    %c0_i32_0 = arith.constant 0 : i32
    %c0_i32_1 = arith.constant 0 : i32
    return %c0_i32, %c0_i32_0 : i32, i32
  }
  func.func @transform_7(%arg0: i32) -> (i32, i32, i32) {
    %c0_i32 = arith.constant 0 : i32
    %c0_i32_0 = arith.constant 0 : i32
    %c0_i32_1 = arith.constant 0 : i32
    return %arg0, %c0_i32, %c0_i32_0 : i32, i32, i32
  }
}

</mosaic_0001>

<llo_original>
// kernel: tpu_custom_call.1
$region0: #{tpu_custom_call.1}
  #allocation0 [shape = 'u32[]', space=smem, size = 0x4, offset = 0x4, fixed_abs, tag = 'smem constant byte address 0x4 - core index']
  #allocation1 [shape = 'u32[144,128]{1,0:T(1,128)}', space=vmem, size = 0x12000, scoped, tag = 'internal scratch']
  #allocation2 [shape = 'bf16[18,18,64]{2,1,0:T(8,128)(2,1)}', space=vmem, size = 0x1b000, scoped, tag = 'scratch operand']
  #allocation3 [shape = 'bf16[256,576]{1,0:T(16,128)(2,1)}', space=vmem, size = 0x50000, scoped, tag = 'scratch operand']
  %s0 = inlined_call_operand.vmem [shape: bf16[2,256,128], index: 0, kind: input, shape index: {}]
  %s1 = inlined_call_operand.vmem [shape: bf16[128,64], index: 1, kind: input, shape index: {}]
  %s2 = inlined_call_operand.vmem [shape: f32[1,64], index: 2, kind: input, shape index: {}]
  %s3 = inlined_call_operand.vmem [shape: bf16[576,64], index: 3, kind: input, shape index: {}]
  %s4 = inlined_call_operand.vmem [shape: f32[1,64], index: 4, kind: input, shape index: {}]
  %s5 = inlined_call_operand.vmem [shape: bf16[576,128], index: 5, kind: input, shape index: {}]
  %s6 = inlined_call_operand.vmem [shape: f32[1,128], index: 6, kind: input, shape index: {}]
  %s7 = inlined_call_operand.hbm [shape: f32[2,256,128], index: 7, kind: output, shape index: {}]
  %s8 = sld [smem:[#allocation0]]
  $region61: #{tpu_custom_call.1} parent=0
    _
  %s10 = ssub.s32 1, %s8
  %s11 = scalar_select 0, %s10, %s8
  $region1: #{tpu_custom_call.1} parent=0
    #allocation4 [shape = 'u8[262144]{0}', space=vmem, size = 0x40000, scoped, tag = 'output window, operand 0']
    #allocation5 [shape = 's32[2]{0}', space=sflag, size = 0x8, scoped, tag = 'scoped memory for tpu_custom_call.1']
    %12 = vsyncpa [#allocation5], 0
    %s13 = scalar_lea.sflag [#allocation5], 1
    %14 = vsyncpa %s13, 0
    loop: start=0, step=1, limit=4
    $region2: #{tpu_custom_call.1} parent=1 // loop_pre_header
      _
    $region3: #{tpu_custom_call.1} parent=1 // loop_header
      %s16 = sphi 0, %s20
      %p17 = scmp.ge.s32.totalorder %s16, 4
      %s26 = sphi 0, %s28
      %s29 = sphi 0, %s26
      %s30 = sphi 0, %s29
      %s46 = sphi 0, %s30
      %s50 = sphi 0, %s50
      %s52 = sphi 0, %s50
      %s53 = sphi 0, %s52
      %s67 = sphi 0, %s53
      %s71 = sphi 0, %s71
      %s73 = sphi 0, %s71
      %s74 = sphi 0, %s73
      %s88 = sphi 0, %s74
      %s92 = sphi 0, %s92
      %s94 = sphi 0, %s92
      %s95 = sphi 0, %s94
      %s109 = sphi 0, %s95
      %s113 = sphi 0, %s113
      %s115 = sphi 0, %s113
      %s116 = sphi 0, %s115
      %s130 = sphi 0, %s116
      %s134 = sphi 0, %s134
      %s136 = sphi 0, %s134
      %s137 = sphi 0, %s136
      %s151 = sphi 0, %s137
      %s155 = sphi 0, %s155
      %s157 = sphi 0, %s155
      %s158 = sphi 0, %s157
      %s172 = sphi 0, %s158
      %s178 = sphi 0, %s180
      %s181 = sphi 0, %s178
      %s182 = sphi 0, %s181
      %s198 = sphi 0, %s182
    $region4: #{tpu_custom_call.1} parent=1 // loop_header_branch
      %19 = sbr.rel (%p17) target = $region8
    $region5: #{tpu_custom_call.1} parent=1 // loop_body
      %s21 = ssub.s32 %s16, 1
      %s22 = ssub.s32 %s16, 2
      %s23 = sadd.s32 %s16, 1
      %s24 = ssub.s32 %s16, %s23
      %p25 = scmp.eq.s32.totalorder %s24, 0
      %s27 = sadd.s32 %s26, 1
      %s28 = scalar_select %p25, %s26, %s27
      %p31 = pneg %p25
      %p32 = scmp.eq.s32.totalorder %s16, 1
      %p33 = por %p31, %p32
      %p34 = scmp.ne.s32.totalorder %s26, %s29
      %p35 = scmp.eq.s32.totalorder %s16, 0
      %p36 = por %p34, %p35
      %p37 = scmp.ne.s32.totalorder %s26, %s29
      %p38 = scmp.eq.s32.totalorder %s21, 1
      %p39 = por %p37, %p38
      %p40 = scmp.ne.s32.totalorder %s29, %s30
      %p41 = scmp.eq.s32.totalorder %s21, 0
      %p42 = por %p40, %p41
      %p43 = scmp.ne.s32.totalorder %s29, %s30
      %p44 = scmp.eq.s32.totalorder %s22, 1
      %p45 = por %p43, %p44
      %p47 = scmp.ne.s32.totalorder %s30, %s46
      %p48 = scmp.eq.s32.totalorder %s22, 0
      %p49 = por %p47, %p48
      %s51 = sadd.s32 %s50, 1
      %p54 = scmp.eq.s32.totalorder %s16, 1
      %p55 = scmp.ne.s32.totalorder %s50, %s52
      %p56 = scmp.eq.s32.totalorder %s16, 0
      %p57 = por %p55, %p56
      %p58 = scmp.ne.s32.totalorder %s50, %s52
      %p59 = scmp.eq.s32.totalorder %s21, 1
      %p60 = por %p58, %p59
      %p61 = scmp.ne.s32.totalorder %s52, %s53
      %p62 = scmp.eq.s32.totalorder %s21, 0
      %p63 = por %p61, %p62
      %p64 = scmp.ne.s32.totalorder %s52, %s53
      %p65 = scmp.eq.s32.totalorder %s22, 1
      %p66 = por %p64, %p65
      %p68 = scmp.ne.s32.totalorder %s53, %s67
      %p69 = scmp.eq.s32.totalorder %s22, 0
      %p70 = por %p68, %p69
      %s72 = sadd.s32 %s71, 1
      %p75 = scmp.eq.s32.totalorder %s16, 1
      %p76 = scmp.ne.s32.totalorder %s71, %s73
      %p77 = scmp.eq.s32.totalorder %s16, 0
      %p78 = por %p76, %p77
      %p79 = scmp.ne.s32.totalorder %s71, %s73
      %p80 = scmp.eq.s32.totalorder %s21, 1
      %p81 = por %p79, %p80
      %p82 = scmp.ne.s32.totalorder %s73, %s74
      %p83 = scmp.eq.s32.totalorder %s21, 0
      %p84 = por %p82, %p83
      %p85 = scmp.ne.s32.totalorder %s73, %s74
      %p86 = scmp.eq.s32.totalorder %s22, 1
      %p87 = por %p85, %p86
      %p89 = scmp.ne.s32.totalorder %s74, %s88
      %p90 = scmp.eq.s32.totalorder %s22, 0
      %p91 = por %p89, %p90
      %s93 = sadd.s32 %s92, 1
      %p96 = scmp.eq.s32.totalorder %s16, 1
      %p97 = scmp.ne.s32.totalorder %s92, %s94
      %p98 = scmp.eq.s32.totalorder %s16, 0
      %p99 = por %p97, %p98
      %p100 = scmp.ne.s32.totalorder %s92, %s94
      %p101 = scmp.eq.s32.totalorder %s21, 1
      %p102 = por %p100, %p101
      %p103 = scmp.ne.s32.totalorder %s94, %s95
      %p104 = scmp.eq.s32.totalorder %s21, 0
      %p105 = por %p103, %p104
      %p106 = scmp.ne.s32.totalorder %s94, %s95
      %p107 = scmp.eq.s32.totalorder %s22, 1
      %p108 = por %p106, %p107
      %p110 = scmp.ne.s32.totalorder %s95, %s109
      %p111 = scmp.eq.s32.totalorder %s22, 0
      %p112 = por %p110, %p111
      %s114 = sadd.s32 %s113, 1
      %p117 = scmp.eq.s32.totalorder %s16, 1
      %p118 = scmp.ne.s32.totalorder %s113, %s115
      %p119 = scmp.eq.s32.totalorder %s16, 0
      %p120 = por %p118, %p119
      %p121 = scmp.ne.s32.totalorder %s113, %s115
      %p122 = scmp.eq.s32.totalorder %s21, 1
      %p123 = por %p121, %p122
      %p124 = scmp.ne.s32.totalorder %s115, %s116
      %p125 = scmp.eq.s32.totalorder %s21, 0
      %p126 = por %p124, %p125
      %p127 = scmp.ne.s32.totalorder %s115, %s116
      %p128 = scmp.eq.s32.totalorder %s22, 1
      %p129 = por %p127, %p128
      %p131 = scmp.ne.s32.totalorder %s116, %s130
      %p132 = scmp.eq.s32.totalorder %s22, 0
      %p133 = por %p131, %p132
      %s135 = sadd.s32 %s134, 1
      %p138 = scmp.eq.s32.totalorder %s16, 1
      %p139 = scmp.ne.s32.totalorder %s134, %s136
      %p140 = scmp.eq.s32.totalorder %s16, 0
      %p141 = por %p139, %p140
      %p142 = scmp.ne.s32.totalorder %s134, %s136
      %p143 = scmp.eq.s32.totalorder %s21, 1
      %p144 = por %p142, %p143
      %p145 = scmp.ne.s32.totalorder %s136, %s137
      %p146 = scmp.eq.s32.totalorder %s21, 0
      %p147 = por %p145, %p146
      %p148 = scmp.ne.s32.totalorder %s136, %s137
      %p149 = scmp.eq.s32.totalorder %s22, 1
      %p150 = por %p148, %p149
      %p152 = scmp.ne.s32.totalorder %s137, %s151
      %p153 = scmp.eq.s32.totalorder %s22, 0
      %p154 = por %p152, %p153
      %s156 = sadd.s32 %s155, 1
      %p159 = scmp.eq.s32.totalorder %s16, 1
      %p160 = scmp.ne.s32.totalorder %s155, %s157
      %p161 = scmp.eq.s32.totalorder %s16, 0
      %p162 = por %p160, %p161
      %p163 = scmp.ne.s32.totalorder %s155, %s157
      %p164 = scmp.eq.s32.totalorder %s21, 1
      %p165 = por %p163, %p164
      %p166 = scmp.ne.s32.totalorder %s157, %s158
      %p167 = scmp.eq.s32.totalorder %s21, 0
      %p168 = por %p166, %p167
      %p169 = scmp.ne.s32.totalorder %s157, %s158
      %p170 = scmp.eq.s32.totalorder %s22, 1
      %p171 = por %p169, %p170
      %p173 = scmp.ne.s32.totalorder %s158, %s172
      %p174 = scmp.eq.s32.totalorder %s22, 0
      %p175 = por %p173, %p174
      %s176 = ssub.s32 %s16, %s23
      %p177 = scmp.eq.s32.totalorder %s176, 0
      %s179 = sadd.s32 %s178, 1
      %s180 = scalar_select %p177, %s178, %s179
      %p183 = pneg %p177
      %p184 = scmp.eq.s32.totalorder %s16, 1
      %p185 = por %p183, %p184
      %p186 = scmp.ne.s32.totalorder %s178, %s181
      %p187 = scmp.eq.s32.totalorder %s16, 0
      %p188 = por %p186, %p187
      %p189 = scmp.ne.s32.totalorder %s178, %s181
      %p190 = scmp.eq.s32.totalorder %s21, 1
      %p191 = por %p189, %p190
      %p192 = scmp.ne.s32.totalorder %s181, %s182
      %p193 = scmp.eq.s32.totalorder %s21, 0
      %p194 = por %p192, %p193
      %p195 = scmp.ne.s32.totalorder %s181, %s182
      %p196 = scmp.eq.s32.totalorder %s22, 1
      %p197 = por %p195, %p196
      %p199 = scmp.ne.s32.totalorder %s182, %s198
      %p200 = scmp.eq.s32.totalorder %s22, 0
      %p201 = por %p199, %p200
      %p202 = scmp.le.s32.totalorder 1, %s16
      %p203 = scmp.lt.s32.totalorder %s16, 3
      %p204 = pnand %p202, %p203
      %p205 = pneg %p204
      // Predicated region
      $region9: #{tpu_custom_call.1} parent=5 // pred_check
        _
      $region10: #{tpu_custom_call.1} parent=5 // pred_check_branch
        %207 = sbr.rel (%p204) target = $region12
      $region11: #{tpu_custom_call.1} parent=5 // pred_region
        %s208 = ssub.s32 %s16, 1
        // Predicated region
        $region13: #{tpu_custom_call.1} parent=11 // pred_check
          %p209 = pneg %p63
        $region14: #{tpu_custom_call.1} parent=11 // pred_check_branch
          %211 = sbr.rel (%p209) target = $region16
        $region15: #{tpu_custom_call.1} parent=11 // pred_region
          _
        $region16: #{tpu_custom_call.1} parent=11 // pred_fallthru
          _
        // Predicated region
        $region17: #{tpu_custom_call.1} parent=11 // pred_check
          %p212 = pneg %p84
        $region18: #{tpu_custom_call.1} parent=11 // pred_check_branch
          %214 = sbr.rel (%p212) target = $region20
        $region19: #{tpu_custom_call.1} parent=11 // pred_region
          _
        $region20: #{tpu_custom_call.1} parent=11 // pred_fallthru
          _
        // Predicated region
        $region21: #{tpu_custom_call.1} parent=11 // pred_check
          %p215 = pneg %p105
        $region22: #{tpu_custom_call.1} parent=11 // pred_check_branch
          %217 = sbr.rel (%p215) target = $region24
        $region23: #{tpu_custom_call.1} parent=11 // pred_region
          _
        $region24: #{tpu_custom_call.1} parent=11 // pred_fallthru
          _
        // Predicated region
        $region25: #{tpu_custom_call.1} parent=11 // pred_check
          %p218 = pneg %p126
        $region26: #{tpu_custom_call.1} parent=11 // pred_check_branch
          %220 = sbr.rel (%p218) target = $region28
        $region27: #{tpu_custom_call.1} parent=11 // pred_region
          _
        $region28: #{tpu_custom_call.1} parent=11 // pred_fallthru
          _
        // Predicated region
        $region29: #{tpu_custom_call.1} parent=11 // pred_check
          %p221 = pneg %p147
        $region30: #{tpu_custom_call.1} parent=11 // pred_check_branch
          %223 = sbr.rel (%p221) target = $region32
        $region31: #{tpu_custom_call.1} parent=11 // pred_region
          _
        $region32: #{tpu_custom_call.1} parent=11 // pred_fallthru
          _
        // Predicated region
        $region33: #{tpu_custom_call.1} parent=11 // pred_check
          %p224 = pneg %p168
        $region34: #{tpu_custom_call.1} parent=11 // pred_check_branch
          %226 = sbr.rel (%p224) target = $region36
        $region35: #{tpu_custom_call.1} parent=11 // pred_region
          _
        $region36: #{tpu_custom_call.1} parent=11 // pred_fallthru
          _
      $region12: #{tpu_custom_call.1} parent=5 // pred_fallthru
        _
      %p227 = scmp.lt.s32.totalorder %s16, 2
      // Predicated region
      $region37: #{tpu_custom_call.1} parent=5 // pred_check
        %p228 = pneg %p227
      $region38: #{tpu_custom_call.1} parent=5 // pred_check_branch
        %230 = sbr.rel (%p228) target = $region40
      $region39: #{tpu_custom_call.1} parent=5 // pred_region
        // Predicated region
        $region41: #{tpu_custom_call.1} parent=39 // pred_check
          %p231 = pneg %p36
        $region42: #{tpu_custom_call.1} parent=39 // pred_check_branch
          %233 = sbr.rel (%p231) target = $region44
        $region43: #{tpu_custom_call.1} parent=39 // pred_region
          %p234 = scmp.lt.s32.totalorder %s16, 1
          %s235 = scalar_select %p234, %s16, 1
          %s236 = smul.addr %s235, 32
          %s237 = smul.addr %s236, 4
          %s238 = scalar_lea.vmem %s0, %s237
        $region44: #{tpu_custom_call.1} parent=39 // pred_fallthru
          _
      $region40: #{tpu_custom_call.1} parent=5 // pred_fallthru
        _
      %p239 = scmp.le.s32.totalorder 1, %s16
      %p240 = scmp.lt.s32.totalorder %s16, 3
      %p241 = pnand %p239, %p240
      %p242 = pneg %p241
      // Predicated region
      $region45: #{tpu_custom_call.1} parent=5 // pred_check
        _
      $region46: #{tpu_custom_call.1} parent=5 // pred_check_branch
        %244 = sbr.rel (%p241) target = $region48
      $region47: #{tpu_custom_call.1} parent=5 // pred_region
        %s245 = ssub.s32 %s16, 1
        %p246 = scmp.lt.s32.totalorder %s21, 1
        %s247 = scalar_select %p246, %s21, 1
        %s248 = smul.addr %s247, 32
        %s249 = smul.addr %s248, 4
        %s250 = scalar_lea.vmem %s0, %s249
        %p251 = pneg %p42
        %p252 = pneg %p39
        %p253 = pneg %p63
        %p254 = pneg %p60
        %p255 = pneg %p84
        %p256 = pneg %p81
        %p257 = pneg %p105
        %p258 = pneg %p102
        %p259 = pneg %p126
        %p260 = pneg %p123
        %p261 = pneg %p147
        %p262 = pneg %p144
        %p263 = pneg %p168
        %p264 = pneg %p165
        %p265 = pneg %p194
        %p266 = pneg %p191
        %s267 = sand.u32 %s181, 1
        %s268 = scalar_lea.sflag [#allocation5], %s267
        %s269 = sand.u32 %s181, 1
        %s270 = smul.addr %s269, 256
        %s271 = scalar_lea.vmem [#allocation4], %s270
        %p272 = scmp.lt.s32.totalorder %s21, 1
        %s273 = scalar_select %p272, %s21, 1
        %s274 = smul.addr %s273, 32
        %s275 = smul.addr %s274, 4
        %s276 = scalar_lea.vmem %s0, %s275
        %vm278 = vcmask 519168
        %279 = vst.msk [vmem:[#allocation2] sm:$0xf] %vm278, 0
        %280 = vst.msk [vmem:[#allocation2 + $0x4] sm:$0xf] %vm278, 0
        %vm281 = vcmask 516096
        %282 = vst.msk [vmem:[#allocation2 + $0x8] sm:$0x1] %vm281, 0
        %s283 = scalar_lea.vmem [#allocation2], 204
        %284 = vst.msk [vmem:[%s283] sm:$0xf] %vm278, 0
        %285 = vst.msk [vmem:[%s283 + $0x4] sm:$0xf] %vm278, 0
        %286 = vst.msk [vmem:[%s283 + $0x8] sm:$0x1] %vm281, 0
        %vm287 = vcmask 516096
        %vm288 = vsmask.f32 256
        %vm289 = vmand %vm287, %vm288
        %v290 = vld [vmem:[#allocation2] sm:$0x1]
        %v291 = vsel %vm289, 0, %v290
        %292 = vst [vmem:[#allocation2] sm:$0x1] %v291
        %v293 = vld [vmem:[#allocation2 + $0xc] sm:$0x1]
        %v294 = vsel %vm289, 0, %v293
        %295 = vst [vmem:[#allocation2 + $0xc] sm:$0x1] %v294
        %v296 = vld [vmem:[#allocation2 + $0x18] sm:$0x1]
        %v297 = vsel %vm289, 0, %v296
        %298 = vst [vmem:[#allocation2 + $0x18] sm:$0x1] %v297
        %v299 = vld [vmem:[#allocation2 + $0x24] sm:$0x1]
        %v300 = vsel %vm289, 0, %v299
        %301 = vst [vmem:[#allocation2 + $0x24] sm:$0x1] %v300
        %v302 = vld [vmem:[#allocation2 + $0x30] sm:$0x1]
        %v303 = vsel %vm289, 0, %v302
        %304 = vst [vmem:[#allocation2 + $0x30] sm:$0x1] %v303
        %v305 = vld [vmem:[#allocation2 + $0x3c] sm:$0x1]
        %v306 = vsel %vm289, 0, %v305
        %307 = vst [vmem:[#allocation2 + $0x3c] sm:$0x1] %v306
        %v308 = vld [vmem:[#allocation2 + $0x48] sm:$0x1]
        %v309 = vsel %vm289, 0, %v308
        %310 = vst [vmem:[#allocation2 + $0x48] sm:$0x1] %v309
        %v311 = vld [vmem:[#allocation2 + $0x54] sm:$0x1]
        %v312 = vsel %vm289, 0, %v311
        %313 = vst [vmem:[#allocation2 + $0x54] sm:$0x1] %v312
        %v314 = vld [vmem:[#allocation2 + $0x60] sm:$0x1]
        %v315 = vsel %vm289, 0, %v314
        %316 = vst [vmem:[#allocation2 + $0x60] sm:$0x1] %v315
        %v317 = vld [vmem:[#allocation2 + $0x6c] sm:$0x1]
        %v318 = vsel %vm289, 0, %v317
        %319 = vst [vmem:[#allocation2 + $0x6c] sm:$0x1] %v318
        %v320 = vld [vmem:[#allocation2 + $0x78] sm:$0x1]
        %v321 = vsel %vm289, 0, %v320
        %322 = vst [vmem:[#allocation2 + $0x78] sm:$0x1] %v321
        %v323 = vld [vmem:[#allocation2 + $0x84] sm:$0x1]
        %v324 = vsel %vm289, 0, %v323
        %325 = vst [vmem:[#allocation2 + $0x84] sm:$0x1] %v324
        %v326 = vld [vmem:[#allocation2 + $0x90] sm:$0x1]
        %v327 = vsel %vm289, 0, %v326
        %328 = vst [vmem:[#allocation2 + $0x90] sm:$0x1] %v327
        %v329 = vld [vmem:[#allocation2 + $0x9c] sm:$0x1]
        %v330 = vsel %vm289, 0, %v329
        %331 = vst [vmem:[#allocation2 + $0x9c] sm:$0x1] %v330
        %v332 = vld [vmem:[#allocation2 + $0xa8] sm:$0x1]
        %v333 = vsel %vm289, 0, %v332
        %334 = vst [vmem:[#allocation2 + $0xa8] sm:$0x1] %v333
        %v335 = vld [vmem:[#allocation2 + $0xb4] sm:$0x1]
        %v336 = vsel %vm289, 0, %v335
        %337 = vst [vmem:[#allocation2 + $0xb4] sm:$0x1] %v336
        %v338 = vld [vmem:[#allocation2 + $0xc0] sm:$0x1]
        %v339 = vsel %vm289, 0, %v338
        %340 = vst [vmem:[#allocation2 + $0xc0] sm:$0x1] %v339
        %v341 = vld [vmem:[#allocation2 + $0xcc] sm:$0x1]
        %v342 = vsel %vm289, 0, %v341
        %343 = vst [vmem:[#allocation2 + $0xcc] sm:$0x1] %v342
        %vm344 = vsmask.f32 7938
        %vm345 = vmand %vm287, %vm344
        %v346 = vld [vmem:[#allocation2 + $0x8] sm:$0x1]
        %v347 = vsel %vm345, 0, %v346
        %348 = vst [vmem:[#allocation2 + $0x8] sm:$0x1] %v347
        %v349 = vld [vmem:[#allocation2 + $0x14] sm:$0x1]
        %v350 = vsel %vm345, 0, %v349
        %351 = vst [vmem:[#allocation2 + $0x14] sm:$0x1] %v350
        %v352 = vld [vmem:[#allocation2 + $0x20] sm:$0x1]
        %v353 = vsel %vm345, 0, %v352
        %354 = vst [vmem:[#allocation2 + $0x20] sm:$0x1] %v353
        %v355 = vld [vmem:[#allocation2 + $0x2c] sm:$0x1]
        %v356 = vsel %vm345, 0, %v355
        %357 = vst [vmem:[#allocation2 + $0x2c] sm:$0x1] %v356
        %v358 = vld [vmem:[#allocation2 + $0x38] sm:$0x1]
        %v359 = vsel %vm345, 0, %v358
        %360 = vst [vmem:[#allocation2 + $0x38] sm:$0x1] %v359
        %v361 = vld [vmem:[#allocation2 + $0x44] sm:$0x1]
        %v362 = vsel %vm345, 0, %v361
        %363 = vst [vmem:[#allocation2 + $0x44] sm:$0x1] %v362
        %v364 = vld [vmem:[#allocation2 + $0x50] sm:$0x1]
        %v365 = vsel %vm345, 0, %v364
        %366 = vst [vmem:[#allocation2 + $0x50] sm:$0x1] %v365
        %v367 = vld [vmem:[#allocation2 + $0x5c] sm:$0x1]
        %v368 = vsel %vm345, 0, %v367
        %369 = vst [vmem:[#allocation2 + $0x5c] sm:$0x1] %v368
        %v370 = vld [vmem:[#allocation2 + $0x68] sm:$0x1]
        %v371 = vsel %vm345, 0, %v370
        %372 = vst [vmem:[#allocation2 + $0x68] sm:$0x1] %v371
        %v373 = vld [vmem:[#allocation2 + $0x74] sm:$0x1]
        %v374 = vsel %vm345, 0, %v373
        %375 = vst [vmem:[#allocation2 + $0x74] sm:$0x1] %v374
        %v376 = vld [vmem:[#allocation2 + $0x80] sm:$0x1]
        %v377 = vsel %vm345, 0, %v376
        %378 = vst [vmem:[#allocation2 + $0x80] sm:$0x1] %v377
        %v379 = vld [vmem:[#allocation2 + $0x8c] sm:$0x1]
        %v380 = vsel %vm345, 0, %v379
        %381 = vst [vmem:[#allocation2 + $0x8c] sm:$0x1] %v380
        %v382 = vld [vmem:[#allocation2 + $0x98] sm:$0x1]
        %v383 = vsel %vm345, 0, %v382
        %384 = vst [vmem:[#allocation2 + $0x98] sm:$0x1] %v383
        %v385 = vld [vmem:[#allocation2 + $0xa4] sm:$0x1]
        %v386 = vsel %vm345, 0, %v385
        %387 = vst [vmem:[#allocation2 + $0xa4] sm:$0x1] %v386
        %v388 = vld [vmem:[#allocation2 + $0xb0] sm:$0x1]
        %v389 = vsel %vm345, 0, %v388
        %390 = vst [vmem:[#allocation2 + $0xb0] sm:$0x1] %v389
        %v391 = vld [vmem:[#allocation2 + $0xbc] sm:$0x1]
        %v392 = vsel %vm345, 0, %v391
        %393 = vst [vmem:[#allocation2 + $0xbc] sm:$0x1] %v392
        %v394 = vld [vmem:[#allocation2 + $0xc8] sm:$0x1]
        %v395 = vsel %vm345, 0, %v394
        %396 = vst [vmem:[#allocation2 + $0xc8] sm:$0x1] %v395
        %v397 = vld [vmem:[#allocation2 + $0xd4] sm:$0x1]
        %v398 = vsel %vm345, 0, %v397
        %399 = vst [vmem:[#allocation2 + $0xd4] sm:$0x1] %v398
        %v400 = vld [vmem:[%s276] sm:$0xf]
        %v401 = vld [vmem:[%s276 + $0x4] sm:$0xf]
        %v402 = vld [vmem:[%s276 + $0x8] sm:$0xf]
        %v403 = vld [vmem:[%s276 + $0xc] sm:$0xf]
        %v404 = vld [vmem:[%s276 + $0x10] sm:$0xf]
        %v405 = vld [vmem:[%s276 + $0x14] sm:$0xf]
        %v406 = vld [vmem:[%s276 + $0x18] sm:$0xf]
        %v407 = vld [vmem:[%s276 + $0x1c] sm:$0xf]
        %v408 = vld [vmem:[%s276 + $0x20] sm:$0xf]
        %v409 = vld [vmem:[%s276 + $0x24] sm:$0xf]
        %v410 = vld [vmem:[%s276 + $0x28] sm:$0xf]
        %v411 = vld [vmem:[%s276 + $0x2c] sm:$0xf]
        %v412 = vld [vmem:[%s276 + $0x30] sm:$0xf]
        %v413 = vld [vmem:[%s276 + $0x34] sm:$0xf]
        %v414 = vld [vmem:[%s276 + $0x38] sm:$0xf]
        %v415 = vld [vmem:[%s276 + $0x3c] sm:$0xf]
        %v416 = vld [vmem:[%s276 + $0x40] sm:$0xf]
        %v417 = vld [vmem:[%s276 + $0x44] sm:$0xf]
        %v418 = vld [vmem:[%s276 + $0x48] sm:$0xf]
        %v419 = vld [vmem:[%s276 + $0x4c] sm:$0xf]
        %v420 = vld [vmem:[%s276 + $0x50] sm:$0xf]
        %v421 = vld [vmem:[%s276 + $0x54] sm:$0xf]
        %v422 = vld [vmem:[%s276 + $0x58] sm:$0xf]
        %v423 = vld [vmem:[%s276 + $0x5c] sm:$0xf]
        %v424 = vld [vmem:[%s276 + $0x60] sm:$0xf]
        %v425 = vld [vmem:[%s276 + $0x64] sm:$0xf]
        %v426 = vld [vmem:[%s276 + $0x68] sm:$0xf]
        %v427 = vld [vmem:[%s276 + $0x6c] sm:$0xf]
        %v428 = vld [vmem:[%s276 + $0x70] sm:$0xf]
        %v429 = vld [vmem:[%s276 + $0x74] sm:$0xf]
        %v430 = vld [vmem:[%s276 + $0x78] sm:$0xf]
        %v431 = vld [vmem:[%s276 + $0x7c] sm:$0xf]
        %v432 = vld [vmem:[%s1] sm:$0xf]
        %v433 = vld [vmem:[%s1 + $0x4] sm:$0xf]
        %v434 = vld [vmem:[%s1 + $0x8] sm:$0xf]
        %v435 = vld [vmem:[%s1 + $0xc] sm:$0xf]
        %v436 = vld [vmem:[%s1 + $0x10] sm:$0xf]
        %v437 = vld [vmem:[%s1 + $0x14] sm:$0xf]
        %v438 = vld [vmem:[%s1 + $0x18] sm:$0xf]
        %v439 = vld [vmem:[%s1 + $0x1c] sm:$0xf]
        %v440 = vld [vmem:[%s1 + $0x20] sm:$0xf]
        %v441 = vld [vmem:[%s1 + $0x24] sm:$0xf]
        %v442 = vld [vmem:[%s1 + $0x28] sm:$0xf]
        %v443 = vld [vmem:[%s1 + $0x2c] sm:$0xf]
        %v444 = vld [vmem:[%s1 + $0x30] sm:$0xf]
        %v445 = vld [vmem:[%s1 + $0x34] sm:$0xf]
        %v446 = vld [vmem:[%s1 + $0x38] sm:$0xf]
        %v447 = vld [vmem:[%s1 + $0x3c] sm:$0xf]
        %v448 = vld [vmem:[%s2] sm:$0x1]
        %v450 = vlaneseq
        %v451 = vshrl.u32 %v450, 7
        %v452 = vsub.s32 0, %v451
        %v453 = vrot.slane %v448, %v452
        %v487 = vunpack.c.l.b16 %v400
        %v488 = vunpack.c.l.b16 %v401
        %v489 = vunpack.c.l.b16 %v402
        %v490 = vunpack.c.l.b16 %v403
        %v491 = vunpack.c.l.b16 %v404
        %v492 = vunpack.c.l.b16 %v405
        %v493 = vunpack.c.l.b16 %v406
        %v494 = vunpack.c.l.b16 %v407
        %v495 = vunpack.c.l.b16 %v408
        %v496 = vunpack.c.l.b16 %v409
        %v497 = vunpack.c.l.b16 %v410
        %v498 = vunpack.c.l.b16 %v411
        %v499 = vunpack.c.l.b16 %v412
        %v500 = vunpack.c.l.b16 %v413
        %v501 = vunpack.c.l.b16 %v414
        %v502 = vunpack.c.l.b16 %v415
        %v503 = vunpack.c.l.b16 %v416
        %v504 = vunpack.c.l.b16 %v417
        %v505 = vunpack.c.l.b16 %v418
        %v506 = vunpack.c.l.b16 %v419
        %v507 = vunpack.c.l.b16 %v420
        %v508 = vunpack.c.l.b16 %v421
        %v509 = vunpack.c.l.b16 %v422
        %v510 = vunpack.c.l.b16 %v423
        %v511 = vunpack.c.l.b16 %v424
        %v512 = vunpack.c.l.b16 %v425
        %v513 = vunpack.c.l.b16 %v426
        %v514 = vunpack.c.l.b16 %v427
        %v515 = vunpack.c.l.b16 %v428
        %v516 = vunpack.c.l.b16 %v429
        %v517 = vunpack.c.l.b16 %v430
        %v518 = vunpack.c.l.b16 %v431
        %v519 = vpack.c.b16 %v488, %v487
        %v520 = vpack.c.b16 %v490, %v489
        %v521 = vpack.c.b16 %v492, %v491
        %v522 = vpack.c.b16 %v494, %v493
        %v523 = vpack.c.b16 %v496, %v495
        %v524 = vpack.c.b16 %v498, %v497
        %v525 = vpack.c.b16 %v500, %v499
        %v526 = vpack.c.b16 %v502, %v501
        %v527 = vpack.c.b16 %v504, %v503
        %v528 = vpack.c.b16 %v506, %v505
        %v529 = vpack.c.b16 %v508, %v507
        %v530 = vpack.c.b16 %v510, %v509
        %v531 = vpack.c.b16 %v512, %v511
        %v532 = vpack.c.b16 %v514, %v513
        %v533 = vpack.c.b16 %v516, %v515
        %v534 = vpack.c.b16 %v518, %v517
        %v567 = vunpack.c.l.b16 %v432
        %v568 = vunpack.c.l.b16 %v433
        %v569 = vunpack.c.l.b16 %v434
        %v570 = vunpack.c.l.b16 %v435
        %v571 = vunpack.c.l.b16 %v436
        %v572 = vunpack.c.l.b16 %v437
        %v573 = vunpack.c.l.b16 %v438
        %v574 = vunpack.c.l.b16 %v439
        %v575 = vunpack.c.l.b16 %v440
        %v576 = vunpack.c.l.b16 %v441
        %v577 = vunpack.c.l.b16 %v442
        %v578 = vunpack.c.l.b16 %v443
        %v579 = vunpack.c.l.b16 %v444
        %v580 = vunpack.c.l.b16 %v445
        %v581 = vunpack.c.l.b16 %v446
        %v582 = vunpack.c.l.b16 %v447
        %v583 = vpack.c.b16 %v568, %v567
        %v584 = vpack.c.b16 %v570, %v569
        %v585 = vpack.c.b16 %v572, %v571
        %v586 = vpack.c.b16 %v574, %v573
        %v587 = vpack.c.b16 %v576, %v575
        %v588 = vpack.c.b16 %v578, %v577
        %v589 = vpack.c.b16 %v580, %v579
        %v590 = vpack.c.b16 %v582, %v581
        %599 = vmatprep.subr.bf16.mxu0 0
        %600 = vmatpush1.bf16.msra.mxu0 %v583
        %601 = vmatprep.subr.bf16.mxu0 0
        %602 = vmatpush1.bf16.msra.mxu0 %v584
        %603 = vmatprep.subr.bf16.mxu0 0
        %604 = vmatpush1.bf16.msra.mxu0 %v585
        %605 = vmatprep.subr.bf16.mxu0 0
        %606 = vmatpush1.bf16.msra.mxu0 %v586
        %607 = vmatprep.subr.bf16.mxu0 0
        %608 = vmatpush1.bf16.msra.mxu0 %v587
        %609 = vmatprep.subr.bf16.mxu0 0
        %610 = vmatpush1.bf16.msra.mxu0 %v588
        %611 = vmatprep.subr.bf16.mxu0 0
        %612 = vmatpush1.bf16.msra.mxu0 %v589
        %613 = vmatprep.subr.bf16.mxu0 0
        %614 = vmatpush1.bf16.msra.mxu0 %v590
        %615 = vmatprep.subr.bf16.mxu0 0
        %616 = vmatpush1.bf16.msra.mxu0 0
        %617 = vmatprep.subr.bf16.mxu0 0
        %618 = vmatpush1.bf16.msra.mxu0 0
        %619 = vmatprep.subr.bf16.mxu0 0
        %620 = vmatpush1.bf16.msra.mxu0 0
        %621 = vmatprep.subr.bf16.mxu0 0
        %622 = vmatpush1.bf16.msra.mxu0 0
        %623 = vmatprep.subr.bf16.mxu0 0
        %624 = vmatpush1.bf16.msra.mxu0 0
        %625 = vmatprep.subr.bf16.mxu0 0
        %626 = vmatpush1.bf16.msra.mxu0 0
        %627 = vmatprep.subr.bf16.mxu0 0
        %628 = vmatpush1.bf16.msra.mxu0 0
        %629 = vmatprep.subr.bf16.mxu0 0
        %630 = vmatpush1.bf16.msra.mxu0 0
        %631 = vmatprep.mubr.bf16.mxu0 0
        %632 = vmatmul.mubr.bf16.gmra.mrb[0].mxu0 %v519
        %v633 = vpop.f32.mrb[0].mxu0
        %v634 = vadd.f32 %v453, %v633
        %v635 = vpop.f32.mrb[0].mxu0
        %v636 = vpop.f32.mrb[0].mxu0
        %v637 = vadd.f32 %v453, %v636
        %v638 = vpop.f32.mrb[0].mxu0
        %639 = vmatprep.mubr.bf16.mxu0 0
        %640 = vmatmul.mubr.bf16.gmra.mrb[0].mxu0 %v520
        %v641 = vpop.f32.mrb[0].mxu0
        %v642 = vadd.f32 %v453, %v641
        %v643 = vpop.f32.mrb[0].mxu0
        %v644 = vpop.f32.mrb[0].mxu0
        %v645 = vadd.f32 %v453, %v644
        %v646 = vpop.f32.mrb[0].mxu0
        %647 = vmatprep.mubr.bf16.mxu0 0
        %648 = vmatmul.mubr.bf16.gmra.mrb[0].mxu0 %v521
        %v649 = vpop.f32.mrb[0].mxu0
        %v650 = vadd.f32 %v453, %v649
        %v651 = vpop.f32.mrb[0].mxu0
        %v652 = vpop.f32.mrb[0].mxu0
        %v653 = vadd.f32 %v453, %v652
        %v654 = vpop.f32.mrb[0].mxu0
        %655 = vmatprep.mubr.bf16.mxu0 0
        %656 = vmatmul.mubr.bf16.gmra.mrb[0].mxu0 %v522
        %v657 = vpop.f32.mrb[0].mxu0
        %v658 = vadd.f32 %v453, %v657
        %v659 = vpop.f32.mrb[0].mxu0
        %v660 = vpop.f32.mrb[0].mxu0
        %v661 = vadd.f32 %v453, %v660
        %v662 = vpop.f32.mrb[0].mxu0
        %663 = vmatprep.mubr.bf16.mxu0 0
        %664 = vmatmul.mubr.bf16.gmra.mrb[0].mxu0 %v523
        %v665 = vpop.f32.mrb[0].mxu0
        %v666 = vadd.f32 %v453, %v665
        %v667 = vpop.f32.mrb[0].mxu0
        %v668 = vpop.f32.mrb[0].mxu0
        %v669 = vadd.f32 %v453, %v668
        %v670 = vpop.f32.mrb[0].mxu0
        %671 = vmatprep.mubr.bf16.mxu0 0
        %672 = vmatmul.mubr.bf16.gmra.mrb[0].mxu0 %v524
        %v673 = vpop.f32.mrb[0].mxu0
        %v674 = vadd.f32 %v453, %v673
        %v675 = vpop.f32.mrb[0].mxu0
        %v676 = vpop.f32.mrb[0].mxu0
        %v677 = vadd.f32 %v453, %v676
        %v678 = vpop.f32.mrb[0].mxu0
        %679 = vmatprep.mubr.bf16.mxu0 0
        %680 = vmatmul.mubr.bf16.gmra.mrb[0].mxu0 %v525
        %v681 = vpop.f32.mrb[0].mxu0
        %v682 = vadd.f32 %v453, %v681
        %v683 = vpop.f32.mrb[0].mxu0
        %v684 = vpop.f32.mrb[0].mxu0
        %v685 = vadd.f32 %v453, %v684
        %v686 = vpop.f32.mrb[0].mxu0
        %687 = vmatprep.mubr.bf16.mxu0 0
        %688 = vmatmul.mubr.bf16.gmra.mrb[0].mxu0 %v526
        %v689 = vpop.f32.mrb[0].mxu0
        %v690 = vadd.f32 %v453, %v689
        %v691 = vpop.f32.mrb[0].mxu0
        %v692 = vpop.f32.mrb[0].mxu0
        %v693 = vadd.f32 %v453, %v692
        %v694 = vpop.f32.mrb[0].mxu0
        %695 = vmatprep.mubr.bf16.mxu0 0
        %696 = vmatmul.mubr.bf16.gmra.mrb[0].mxu0 %v527
        %v697 = vpop.f32.mrb[0].mxu0
        %v698 = vadd.f32 %v453, %v697
        %v699 = vpop.f32.mrb[0].mxu0
        %v700 = vpop.f32.mrb[0].mxu0
        %v701 = vadd.f32 %v453, %v700
        %v702 = vpop.f32.mrb[0].mxu0
        %703 = vmatprep.mubr.bf16.mxu0 0
        %704 = vmatmul.mubr.bf16.gmra.mrb[0].mxu0 %v528
        %v705 = vpop.f32.mrb[0].mxu0
        %v706 = vadd.f32 %v453, %v705
        %v707 = vpop.f32.mrb[0].mxu0
        %v708 = vpop.f32.mrb[0].mxu0
        %v709 = vadd.f32 %v453, %v708
        %v710 = vpop.f32.mrb[0].mxu0
        %711 = vmatprep.mubr.bf16.mxu0 0
        %712 = vmatmul.mubr.bf16.gmra.mrb[0].mxu0 %v529
        %v713 = vpop.f32.mrb[0].mxu0
        %v714 = vadd.f32 %v453, %v713
        %v715 = vpop.f32.mrb[0].mxu0
        %v716 = vpop.f32.mrb[0].mxu0
        %v717 = vadd.f32 %v453, %v716
        %v718 = vpop.f32.mrb[0].mxu0
        %719 = vmatprep.mubr.bf16.mxu0 0
        %720 = vmatmul.mubr.bf16.gmra.mrb[0].mxu0 %v530
        %v721 = vpop.f32.mrb[0].mxu0
        %v722 = vadd.f32 %v453, %v721
        %v723 = vpop.f32.mrb[0].mxu0
        %v724 = vpop.f32.mrb[0].mxu0
        %v725 = vadd.f32 %v453, %v724
        %v726 = vpop.f32.mrb[0].mxu0
        %727 = vmatprep.mubr.bf16.mxu0 0
        %728 = vmatmul.mubr.bf16.gmra.mrb[0].mxu0 %v531
        %v729 = vpop.f32.mrb[0].mxu0
        %v730 = vadd.f32 %v453, %v729
        %v731 = vpop.f32.mrb[0].mxu0
        %v732 = vpop.f32.mrb[0].mxu0
        %v733 = vadd.f32 %v453, %v732
        %v734 = vpop.f32.mrb[0].mxu0
        %735 = vmatprep.mubr.bf16.mxu0 0
        %736 = vmatmul.mubr.bf16.gmra.mrb[0].mxu0 %v532
        %v737 = vpop.f32.mrb[0].mxu0
        %v738 = vadd.f32 %v453, %v737
        %v739 = vpop.f32.mrb[0].mxu0
        %v740 = vpop.f32.mrb[0].mxu0
        %v741 = vadd.f32 %v453, %v740
        %v742 = vpop.f32.mrb[0].mxu0
        %743 = vmatprep.mubr.bf16.mxu0 0
        %744 = vmatmul.mubr.bf16.gmra.mrb[0].mxu0 %v533
        %v745 = vpop.f32.mrb[0].mxu0
        %v746 = vadd.f32 %v453, %v745
        %v747 = vpop.f32.mrb[0].mxu0
        %v748 = vpop.f32.mrb[0].mxu0
        %v749 = vadd.f32 %v453, %v748
        %v750 = vpop.f32.mrb[0].mxu0
        %751 = vmatprep.mubr.bf16.mxu0 0
        %752 = vmatmul.mubr.bf16.gmra.mrb[0].mxu0 %v534
        %v753 = vpop.f32.mrb[0].mxu0
        %v754 = vadd.f32 %v453, %v753
        %v755 = vpop.f32.mrb[0].mxu0
        %v756 = vpop.f32.mrb[0].mxu0
        %v757 = vadd.f32 %v453, %v756
        %v758 = vpop.f32.mrb[0].mxu0
        %759 = vdwg.mxu0
        %v760 = vmax.f32 %v634, 0.0
        %v761 = vmax.f32 %v637, 0.0
        %v762 = vmax.f32 %v642, 0.0
        %v763 = vmax.f32 %v645, 0.0
        %v764 = vmax.f32 %v650, 0.0
        %v765 = vmax.f32 %v653, 0.0
        %v766 = vmax.f32 %v658, 0.0
        %v767 = vmax.f32 %v661, 0.0
        %v768 = vmax.f32 %v666, 0.0
        %v769 = vmax.f32 %v669, 0.0
        %v770 = vmax.f32 %v674, 0.0
        %v771 = vmax.f32 %v677, 0.0
        %v772 = vmax.f32 %v682, 0.0
        %v773 = vmax.f32 %v685, 0.0
        %v774 = vmax.f32 %v690, 0.0
        %v775 = vmax.f32 %v693, 0.0
        %v776 = vmax.f32 %v698, 0.0
        %v777 = vmax.f32 %v701, 0.0
        %v778 = vmax.f32 %v706, 0.0
        %v779 = vmax.f32 %v709, 0.0
        %v780 = vmax.f32 %v714, 0.0
        %v781 = vmax.f32 %v717, 0.0
        %v782 = vmax.f32 %v722, 0.0
        %v783 = vmax.f32 %v725, 0.0
        %v784 = vmax.f32 %v730, 0.0
        %v785 = vmax.f32 %v733, 0.0
        %v786 = vmax.f32 %v738, 0.0
        %v787 = vmax.f32 %v741, 0.0
        %v788 = vmax.f32 %v746, 0.0
        %v789 = vmax.f32 %v749, 0.0
        %v790 = vmax.f32 %v754, 0.0
        %v791 = vmax.f32 %v757, 0.0
        %v792 = vpack.c.bf16 %v761, %v760
        %v793 = vpack.c.bf16 %v763, %v762
        %v794 = vpack.c.bf16 %v765, %v764
        %v795 = vpack.c.bf16 %v767, %v766
        %v796 = vpack.c.bf16 %v769, %v768
        %v797 = vpack.c.bf16 %v771, %v770
        %v798 = vpack.c.bf16 %v773, %v772
        %v799 = vpack.c.bf16 %v775, %v774
        %v800 = vpack.c.bf16 %v777, %v776
        %v801 = vpack.c.bf16 %v779, %v778
        %v802 = vpack.c.bf16 %v781, %v780
        %v803 = vpack.c.bf16 %v783, %v782
        %v804 = vpack.c.bf16 %v785, %v784
        %v805 = vpack.c.bf16 %v787, %v786
        %v806 = vpack.c.bf16 %v789, %v788
        %v807 = vpack.c.bf16 %v791, %v790
        %v824 = vunpack.c.l.b16 %v792
        %v825 = vunpack.c.h.b16 %v792
        %v826 = vunpack.c.l.b16 %v793
        %v827 = vunpack.c.h.b16 %v793
        %v828 = vunpack.c.l.b16 %v794
        %v829 = vunpack.c.h.b16 %v794
        %v830 = vunpack.c.l.b16 %v795
        %v831 = vunpack.c.h.b16 %v795
        %v832 = vunpack.c.l.b16 %v796
        %v833 = vunpack.c.h.b16 %v796
        %v834 = vunpack.c.l.b16 %v797
        %v835 = vunpack.c.h.b16 %v797
        %v836 = vunpack.c.l.b16 %v798
        %v837 = vunpack.c.h.b16 %v798
        %v838 = vunpack.c.l.b16 %v799
        %v839 = vunpack.c.h.b16 %v799
        %v840 = vunpack.c.l.b16 %v800
        %v841 = vunpack.c.h.b16 %v800
        %v842 = vunpack.c.l.b16 %v801
        %v843 = vunpack.c.h.b16 %v801
        %v844 = vunpack.c.l.b16 %v802
        %v845 = vunpack.c.h.b16 %v802
        %v846 = vunpack.c.l.b16 %v803
        %v847 = vunpack.c.h.b16 %v803
        %v848 = vunpack.c.l.b16 %v804
        %v849 = vunpack.c.h.b16 %v804
        %v850 = vunpack.c.l.b16 %v805
        %v851 = vunpack.c.h.b16 %v805
        %v852 = vunpack.c.l.b16 %v806
        %v853 = vunpack.c.h.b16 %v806
        %v854 = vunpack.c.l.b16 %v807
        %v855 = vunpack.c.h.b16 %v807
        %v856 = vpack.c.b16 %v824, %v824
        %v857 = vpack.c.b16 %v825, %v825
        %v858 = vpack.c.b16 %v826, %v826
        %v859 = vpack.c.b16 %v827, %v827
        %v860 = vpack.c.b16 %v828, %v828
        %v861 = vpack.c.b16 %v829, %v829
        %v862 = vpack.c.b16 %v830, %v830
        %v863 = vpack.c.b16 %v831, %v831
        %v864 = vpack.c.b16 %v832, %v832
        %v865 = vpack.c.b16 %v833, %v833
        %v866 = vpack.c.b16 %v834, %v834
        %v867 = vpack.c.b16 %v835, %v835
        %v868 = vpack.c.b16 %v836, %v836
        %v869 = vpack.c.b16 %v837, %v837
        %v870 = vpack.c.b16 %v838, %v838
        %v871 = vpack.c.b16 %v839, %v839
        %v872 = vpack.c.b16 %v840, %v840
        %v873 = vpack.c.b16 %v841, %v841
        %v874 = vpack.c.b16 %v842, %v842
        %v875 = vpack.c.b16 %v843, %v843
        %v876 = vpack.c.b16 %v844, %v844
        %v877 = vpack.c.b16 %v845, %v845
        %v878 = vpack.c.b16 %v846, %v846
        %v879 = vpack.c.b16 %v847, %v847
        %v880 = vpack.c.b16 %v848, %v848
        %v881 = vpack.c.b16 %v849, %v849
        %v882 = vpack.c.b16 %v850, %v850
        %v883 = vpack.c.b16 %v851, %v851
        %v884 = vpack.c.b16 %v852, %v852
        %v885 = vpack.c.b16 %v853, %v853
        %v886 = vpack.c.b16 %v854, %v854
        %v887 = vpack.c.b16 %v855, %v855
        %vm888 = vsmask.f32 4368
        %vm889 = vmor %vm288, %vm888
        %v891 = vshrl.u32 %v856, 16
        %v893 = vrot.slane %v891, 7
        %v894 = vshll.u32 %v856, 16
        %v896 = vor.u32 %v893, %v894
        %v897 = vrot.slane %v893, 4
        %v899 = vshrl.u32 %v857, 16
        %v901 = vrot.slane %v899, 7
        %v902 = vshll.u32 %v857, 16
        %v904 = vor.u32 %v901, %v902
        %v905 = vsel %vm889, %v897, %v904
        %v906 = vrot.slane %v901, 4
        %v908 = vshrl.u32 %v858, 16
        %v910 = vrot.slane %v908, 7
        %v911 = vshll.u32 %v858, 16
        %v913 = vor.u32 %v910, %v911
        %v914 = vrot.slane %v910, 4
        %v916 = vshrl.u32 %v859, 16
        %v918 = vrot.slane %v916, 7
        %v919 = vshll.u32 %v859, 16
        %v921 = vor.u32 %v918, %v919
        %v922 = vsel %vm889, %v914, %v921
        %v923 = vrot.slane %v918, 4
        %v925 = vshrl.u32 %v860, 16
        %v927 = vrot.slane %v925, 7
        %v928 = vshll.u32 %v860, 16
        %v930 = vor.u32 %v927, %v928
        %v931 = vrot.slane %v927, 4
        %v933 = vshrl.u32 %v861, 16
        %v935 = vrot.slane %v933, 7
        %v936 = vshll.u32 %v861, 16
        %v938 = vor.u32 %v935, %v936
        %v939 = vsel %vm889, %v931, %v938
        %v940 = vrot.slane %v935, 4
        %v942 = vshrl.u32 %v862, 16
        %v944 = vrot.slane %v942, 7
        %v945 = vshll.u32 %v862, 16
        %v947 = vor.u32 %v944, %v945
        %v948 = vrot.slane %v944, 4
        %v950 = vshrl.u32 %v863, 16
        %v952 = vrot.slane %v950, 7
        %v953 = vshll.u32 %v863, 16
        %v955 = vor.u32 %v952, %v953
        %v956 = vsel %vm889, %v948, %v955
        %v957 = vrot.slane %v952, 4
        %v959 = vshrl.u32 %v864, 16
        %v961 = vrot.slane %v959, 7
        %v962 = vshll.u32 %v864, 16
        %v964 = vor.u32 %v961, %v962
        %v965 = vrot.slane %v961, 4
        %v967 = vshrl.u32 %v865, 16
        %v969 = vrot.slane %v967, 7
        %v970 = vshll.u32 %v865, 16
        %v972 = vor.u32 %v969, %v970
        %v973 = vsel %vm889, %v965, %v972
        %v974 = vrot.slane %v969, 4
        %v976 = vshrl.u32 %v866, 16
        %v978 = vrot.slane %v976, 7
        %v979 = vshll.u32 %v866, 16
        %v981 = vor.u32 %v978, %v979
        %v982 = vrot.slane %v978, 4
        %v984 = vshrl.u32 %v867, 16
        %v986 = vrot.slane %v984, 7
        %v987 = vshll.u32 %v867, 16
        %v989 = vor.u32 %v986, %v987
        %v990 = vsel %vm889, %v982, %v989
        %v991 = vrot.slane %v986, 4
        %v993 = vshrl.u32 %v868, 16
        %v995 = vrot.slane %v993, 7
        %v996 = vshll.u32 %v868, 16
        %v998 = vor.u32 %v995, %v996
        %v999 = vrot.slane %v995, 4
        %v1001 = vshrl.u32 %v869, 16
        %v1003 = vrot.slane %v1001, 7
        %v1004 = vshll.u32 %v869, 16
        %v1006 = vor.u32 %v1003, %v1004
        %v1007 = vsel %vm889, %v999, %v1006
        %v1008 = vrot.slane %v1003, 4
        %v1010 = vshrl.u32 %v870, 16
        %v1012 = vrot.slane %v1010, 7
        %v1013 = vshll.u32 %v870, 16
        %v1015 = vor.u32 %v1012, %v1013
        %v1016 = vrot.slane %v1012, 4
        %v1018 = vshrl.u32 %v871, 16
        %v1020 = vrot.slane %v1018, 7
        %v1021 = vshll.u32 %v871, 16
        %v1023 = vor.u32 %v1020, %v1021
        %v1024 = vsel %vm889, %v1016, %v1023
        %v1025 = vrot.slane %v1020, 4
        %v1027 = vshrl.u32 %v872, 16
        %v1029 = vrot.slane %v1027, 7
        %v1030 = vshll.u32 %v872, 16
        %v1032 = vor.u32 %v1029, %v1030
        %v1033 = vrot.slane %v1029, 4
        %v1035 = vshrl.u32 %v873, 16
        %v1037 = vrot.slane %v1035, 7
        %v1038 = vshll.u32 %v873, 16
        %v1040 = vor.u32 %v1037, %v1038
        %v1041 = vsel %vm889, %v1033, %v1040
        %v1042 = vrot.slane %v1037, 4
        %v1044 = vshrl.u32 %v874, 16
        %v1046 = vrot.slane %v1044, 7
        %v1047 = vshll.u32 %v874, 16
        %v1049 = vor.u32 %v1046, %v1047
        %v1050 = vrot.slane %v1046, 4
        %v1052 = vshrl.u32 %v875, 16
        %v1054 = vrot.slane %v1052, 7
        %v1055 = vshll.u32 %v875, 16
        %v1057 = vor.u32 %v1054, %v1055
        %v1058 = vsel %vm889, %v1050, %v1057
        %v1059 = vrot.slane %v1054, 4
        %v1061 = vshrl.u32 %v876, 16
        %v1063 = vrot.slane %v1061, 7
        %v1064 = vshll.u32 %v876, 16
        %v1066 = vor.u32 %v1063, %v1064
        %v1067 = vrot.slane %v1063, 4
        %v1069 = vshrl.u32 %v877, 16
        %v1071 = vrot.slane %v1069, 7
        %v1072 = vshll.u32 %v877, 16
        %v1074 = vor.u32 %v1071, %v1072
        %v1075 = vsel %vm889, %v1067, %v1074
        %v1076 = vrot.slane %v1071, 4
        %v1078 = vshrl.u32 %v878, 16
        %v1080 = vrot.slane %v1078, 7
        %v1081 = vshll.u32 %v878, 16
        %v1083 = vor.u32 %v1080, %v1081
        %v1084 = vrot.slane %v1080, 4
        %v1086 = vshrl.u32 %v879, 16
        %v1088 = vrot.slane %v1086, 7
        %v1089 = vshll.u32 %v879, 16
        %v1091 = vor.u32 %v1088, %v1089
        %v1092 = vsel %vm889, %v1084, %v1091
        %v1093 = vrot.slane %v1088, 4
        %v1095 = vshrl.u32 %v880, 16
        %v1097 = vrot.slane %v1095, 7
        %v1098 = vshll.u32 %v880, 16
        %v1100 = vor.u32 %v1097, %v1098
        %v1101 = vrot.slane %v1097, 4
        %v1103 = vshrl.u32 %v881, 16
        %v1105 = vrot.slane %v1103, 7
        %v1106 = vshll.u32 %v881, 16
        %v1108 = vor.u32 %v1105, %v1106
        %v1109 = vsel %vm889, %v1101, %v1108
        %v1110 = vrot.slane %v1105, 4
        %v1112 = vshrl.u32 %v882, 16
        %v1114 = vrot.slane %v1112, 7
        %v1115 = vshll.u32 %v882, 16
        %v1117 = vor.u32 %v1114, %v1115
        %v1118 = vrot.slane %v1114, 4
        %v1120 = vshrl.u32 %v883, 16
        %v1122 = vrot.slane %v1120, 7
        %v1123 = vshll.u32 %v883, 16
        %v1125 = vor.u32 %v1122, %v1123
        %v1126 = vsel %vm889, %v1118, %v1125
        %v1127 = vrot.slane %v1122, 4
        %v1129 = vshrl.u32 %v884, 16
        %v1131 = vrot.slane %v1129, 7
        %v1132 = vshll.u32 %v884, 16
        %v1134 = vor.u32 %v1131, %v1132
        %v1135 = vrot.slane %v1131, 4
        %v1137 = vshrl.u32 %v885, 16
        %v1139 = vrot.slane %v1137, 7
        %v1140 = vshll.u32 %v885, 16
        %v1142 = vor.u32 %v1139, %v1140
        %v1143 = vsel %vm889, %v1135, %v1142
        %v1144 = vrot.slane %v1139, 4
        %v1146 = vshrl.u32 %v886, 16
        %v1148 = vrot.slane %v1146, 7
        %v1149 = vshll.u32 %v886, 16
        %v1151 = vor.u32 %v1148, %v1149
        %v1152 = vrot.slane %v1148, 4
        %v1154 = vshrl.u32 %v887, 16
        %v1156 = vrot.slane %v1154, 7
        %v1157 = vshll.u32 %v887, 16
        %v1159 = vor.u32 %v1156, %v1157
        %v1160 = vsel %vm889, %v1152, %v1159
        %v1161 = vrot.slane %v1156, 4
        %s1210 = scalar_lea.vmem [#allocation2], 12
        %vm1211 = vcmask 519168
        %vm1212 = vmand %vm1211, %vm344
        %v1213 = vld [vmem:[%s1210] sm:$0xf]
        %v1214 = vsel %vm1212, %v896, %v1213
        %1215 = vst [vmem:[%s1210] sm:$0xf] %v1214
        %1216 = vst.msk [vmem:[%s1210 + $0x4] sm:$0xf] %vm278, %v905
        %v1217 = vld [vmem:[%s1210 + $0x8] sm:$0x1]
        %v1218 = vsel %vm289, %v906, %v1217
        %1219 = vst [vmem:[%s1210 + $0x8] sm:$0x1] %v1218
        %v1220 = vld [vmem:[%s1210 + $0xc] sm:$0xf]
        %v1221 = vsel %vm1212, %v913, %v1220
        %1222 = vst [vmem:[%s1210 + $0xc] sm:$0xf] %v1221
        %1223 = vst.msk [vmem:[%s1210 + $0x10] sm:$0xf] %vm278, %v922
        %v1224 = vld [vmem:[%s1210 + $0x14] sm:$0x1]
        %v1225 = vsel %vm289, %v923, %v1224
        %1226 = vst [vmem:[%s1210 + $0x14] sm:$0x1] %v1225
        %v1227 = vld [vmem:[%s1210 + $0x18] sm:$0xf]
        %v1228 = vsel %vm1212, %v930, %v1227
        %1229 = vst [vmem:[%s1210 + $0x18] sm:$0xf] %v1228
        %1230 = vst.msk [vmem:[%s1210 + $0x1c] sm:$0xf] %vm278, %v939
        %v1231 = vld [vmem:[%s1210 + $0x20] sm:$0x1]
        %v1232 = vsel %vm289, %v940, %v1231
        %1233 = vst [vmem:[%s1210 + $0x20] sm:$0x1] %v1232
        %v1234 = vld [vmem:[%s1210 + $0x24] sm:$0xf]
        %v1235 = vsel %vm1212, %v947, %v1234
        %1236 = vst [vmem:[%s1210 + $0x24] sm:$0xf] %v1235
        %1237 = vst.msk [vmem:[%s1210 + $0x28] sm:$0xf] %vm278, %v956
        %v1238 = vld [vmem:[%s1210 + $0x2c] sm:$0x1]
        %v1239 = vsel %vm289, %v957, %v1238
        %1240 = vst [vmem:[%s1210 + $0x2c] sm:$0x1] %v1239
        %v1241 = vld [vmem:[%s1210 + $0x30] sm:$0xf]
        %v1242 = vsel %vm1212, %v964, %v1241
        %1243 = vst [vmem:[%s1210 + $0x30] sm:$0xf] %v1242
        %1244 = vst.msk [vmem:[%s1210 + $0x34] sm:$0xf] %vm278, %v973
        %v1245 = vld [vmem:[%s1210 + $0x38] sm:$0x1]
        %v1246 = vsel %vm289, %v974, %v1245
        %1247 = vst [vmem:[%s1210 + $0x38] sm:$0x1] %v1246
        %v1248 = vld [vmem:[%s1210 + $0x3c] sm:$0xf]
        %v1249 = vsel %vm1212, %v981, %v1248
        %1250 = vst [vmem:[%s1210 + $0x3c] sm:$0xf] %v1249
        %1251 = vst.msk [vmem:[%s1210 + $0x40] sm:$0xf] %vm278, %v990
        %v1252 = vld [vmem:[%s1210 + $0x44] sm:$0x1]
        %v1253 = vsel %vm289, %v991, %v1252
        %1254 = vst [vmem:[%s1210 + $0x44] sm:$0x1] %v1253
        %v1255 = vld [vmem:[%s1210 + $0x48] sm:$0xf]
        %v1256 = vsel %vm1212, %v998, %v1255
        %1257 = vst [vmem:[%s1210 + $0x48] sm:$0xf] %v1256
        %1258 = vst.msk [vmem:[%s1210 + $0x4c] sm:$0xf] %vm278, %v1007
        %v1259 = vld [vmem:[%s1210 + $0x50] sm:$0x1]
        %v1260 = vsel %vm289, %v1008, %v1259
        %1261 = vst [vmem:[%s1210 + $0x50] sm:$0x1] %v1260
        %v1262 = vld [vmem:[%s1210 + $0x54] sm:$0xf]
        %v1263 = vsel %vm1212, %v1015, %v1262
        %1264 = vst [vmem:[%s1210 + $0x54] sm:$0xf] %v1263
        %1265 = vst.msk [vmem:[%s1210 + $0x58] sm:$0xf] %vm278, %v1024
        %v1266 = vld [vmem:[%s1210 + $0x5c] sm:$0x1]
        %v1267 = vsel %vm289, %v1025, %v1266
        %1268 = vst [vmem:[%s1210 + $0x5c] sm:$0x1] %v1267
        %v1269 = vld [vmem:[%s1210 + $0x60] sm:$0xf]
        %v1270 = vsel %vm1212, %v1032, %v1269
        %1271 = vst [vmem:[%s1210 + $0x60] sm:$0xf] %v1270
        %1272 = vst.msk [vmem:[%s1210 + $0x64] sm:$0xf] %vm278, %v1041
        %v1273 = vld [vmem:[%s1210 + $0x68] sm:$0x1]
        %v1274 = vsel %vm289, %v1042, %v1273
        %1275 = vst [vmem:[%s1210 + $0x68] sm:$0x1] %v1274
        %v1276 = vld [vmem:[%s1210 + $0x6c] sm:$0xf]
        %v1277 = vsel %vm1212, %v1049, %v1276
        %1278 = vst [vmem:[%s1210 + $0x6c] sm:$0xf] %v1277
        %1279 = vst.msk [vmem:[%s1210 + $0x70] sm:$0xf] %vm278, %v1058
        %v1280 = vld [vmem:[%s1210 + $0x74] sm:$0x1]
        %v1281 = vsel %vm289, %v1059, %v1280
        %1282 = vst [vmem:[%s1210 + $0x74] sm:$0x1] %v1281
        %v1283 = vld [vmem:[%s1210 + $0x78] sm:$0xf]
        %v1284 = vsel %vm1212, %v1066, %v1283
        %1285 = vst [vmem:[%s1210 + $0x78] sm:$0xf] %v1284
        %1286 = vst.msk [vmem:[%s1210 + $0x7c] sm:$0xf] %vm278, %v1075
        %v1287 = vld [vmem:[%s1210 + $0x80] sm:$0x1]
        %v1288 = vsel %vm289, %v1076, %v1287
        %1289 = vst [vmem:[%s1210 + $0x80] sm:$0x1] %v1288
        %v1290 = vld [vmem:[%s1210 + $0x84] sm:$0xf]
        %v1291 = vsel %vm1212, %v1083, %v1290
        %1292 = vst [vmem:[%s1210 + $0x84] sm:$0xf] %v1291
        %1293 = vst.msk [vmem:[%s1210 + $0x88] sm:$0xf] %vm278, %v1092
        %v1294 = vld [vmem:[%s1210 + $0x8c] sm:$0x1]
        %v1295 = vsel %vm289, %v1093, %v1294
        %1296 = vst [vmem:[%s1210 + $0x8c] sm:$0x1] %v1295
        %v1297 = vld [vmem:[%s1210 + $0x90] sm:$0xf]
        %v1298 = vsel %vm1212, %v1100, %v1297
        %1299 = vst [vmem:[%s1210 + $0x90] sm:$0xf] %v1298
        %1300 = vst.msk [vmem:[%s1210 + $0x94] sm:$0xf] %vm278, %v1109
        %v1301 = vld [vmem:[%s1210 + $0x98] sm:$0x1]
        %v1302 = vsel %vm289, %v1110, %v1301
        %1303 = vst [vmem:[%s1210 + $0x98] sm:$0x1] %v1302
        %v1304 = vld [vmem:[%s1210 + $0x9c] sm:$0xf]
        %v1305 = vsel %vm1212, %v1117, %v1304
        %1306 = vst [vmem:[%s1210 + $0x9c] sm:$0xf] %v1305
        %1307 = vst.msk [vmem:[%s1210 + $0xa0] sm:$0xf] %vm278, %v1126
        %v1308 = vld [vmem:[%s1210 + $0xa4] sm:$0x1]
        %v1309 = vsel %vm289, %v1127, %v1308
        %1310 = vst [vmem:[%s1210 + $0xa4] sm:$0x1] %v1309
        %v1311 = vld [vmem:[%s1210 + $0xa8] sm:$0xf]
        %v1312 = vsel %vm1212, %v1134, %v1311
        %1313 = vst [vmem:[%s1210 + $0xa8] sm:$0xf] %v1312
        %1314 = vst.msk [vmem:[%s1210 + $0xac] sm:$0xf] %vm278, %v1143
        %v1315 = vld [vmem:[%s1210 + $0xb0] sm:$0x1]
        %v1316 = vsel %vm289, %v1144, %v1315
        %1317 = vst [vmem:[%s1210 + $0xb0] sm:$0x1] %v1316
        %v1318 = vld [vmem:[%s1210 + $0xb4] sm:$0xf]
        %v1319 = vsel %vm1212, %v1151, %v1318
        %1320 = vst [vmem:[%s1210 + $0xb4] sm:$0xf] %v1319
        %1321 = vst.msk [vmem:[%s1210 + $0xb8] sm:$0xf] %vm278, %v1160
        %v1322 = vld [vmem:[%s1210 + $0xbc] sm:$0x1]
        %v1323 = vsel %vm289, %v1161, %v1322
        %1324 = vst [vmem:[%s1210 + $0xbc] sm:$0x1] %v1323
        %v1325 = vld [vmem:[#allocation2] sm:$0xf]
        %v1326 = vld [vmem:[#allocation2 + $0x4] sm:$0xf]
        %v1327 = vld [vmem:[#allocation2 + $0xc] sm:$0xf]
        %v1328 = vld [vmem:[#allocation2 + $0x10] sm:$0xf]
        %v1329 = vld [vmem:[#allocation2 + $0x18] sm:$0xf]
        %v1330 = vld [vmem:[#allocation2 + $0x1c] sm:$0xf]
        %v1331 = vld [vmem:[#allocation2 + $0x24] sm:$0xf]
        %v1332 = vld [vmem:[#allocation2 + $0x28] sm:$0xf]
        %v1333 = vld [vmem:[#allocation2 + $0x30] sm:$0xf]
        %v1334 = vld [vmem:[#allocation2 + $0x34] sm:$0xf]
        %v1335 = vld [vmem:[#allocation2 + $0x3c] sm:$0xf]
        %v1336 = vld [vmem:[#allocation2 + $0x40] sm:$0xf]
        %v1337 = vld [vmem:[#allocation2 + $0x48] sm:$0xf]
        %v1338 = vld [vmem:[#allocation2 + $0x4c] sm:$0xf]
        %v1339 = vld [vmem:[#allocation2 + $0x54] sm:$0xf]
        %v1340 = vld [vmem:[#allocation2 + $0x58] sm:$0xf]
        %v1341 = vld [vmem:[#allocation2 + $0x60] sm:$0xf]
        %v1342 = vld [vmem:[#allocation2 + $0x64] sm:$0xf]
        %v1343 = vld [vmem:[#allocation2 + $0x6c] sm:$0xf]
        %v1344 = vld [vmem:[#allocation2 + $0x70] sm:$0xf]
        %v1345 = vld [vmem:[#allocation2 + $0x78] sm:$0xf]
        %v1346 = vld [vmem:[#allocation2 + $0x7c] sm:$0xf]
        %v1347 = vld [vmem:[#allocation2 + $0x84] sm:$0xf]
        %v1348 = vld [vmem:[#allocation2 + $0x88] sm:$0xf]
        %v1349 = vld [vmem:[#allocation2 + $0x90] sm:$0xf]
        %v1350 = vld [vmem:[#allocation2 + $0x94] sm:$0xf]
        %v1351 = vld [vmem:[#allocation2 + $0x9c] sm:$0xf]
        %v1352 = vld [vmem:[#allocation2 + $0xa0] sm:$0xf]
        %v1353 = vld [vmem:[#allocation2 + $0xa8] sm:$0xf]
        %v1354 = vld [vmem:[#allocation2 + $0xac] sm:$0xf]
        %v1355 = vld [vmem:[#allocation2 + $0xb4] sm:$0xf]
        %v1356 = vld [vmem:[#allocation2 + $0xb8] sm:$0xf]
        %v1389 = vunpack.c.l.b16 %v1325
        %v1390 = vunpack.c.l.b16 %v1326
        %v1391 = vunpack.c.l.b16 %v1327
        %v1392 = vunpack.c.l.b16 %v1328
        %v1393 = vunpack.c.l.b16 %v1329
        %v1394 = vunpack.c.l.b16 %v1330
        %v1395 = vunpack.c.l.b16 %v1331
        %v1396 = vunpack.c.l.b16 %v1332
        %v1397 = vunpack.c.l.b16 %v1333
        %v1398 = vunpack.c.l.b16 %v1334
        %v1399 = vunpack.c.l.b16 %v1335
        %v1400 = vunpack.c.l.b16 %v1336
        %v1401 = vunpack.c.l.b16 %v1337
        %v1402 = vunpack.c.l.b16 %v1338
        %v1403 = vunpack.c.l.b16 %v1339
        %v1404 = vunpack.c.l.b16 %v1340
        %v1405 = vunpack.c.l.b16 %v1341
        %v1406 = vunpack.c.l.b16 %v1342
        %v1407 = vunpack.c.l.b16 %v1343
        %v1408 = vunpack.c.l.b16 %v1344
        %v1409 = vunpack.c.l.b16 %v1345
        %v1410 = vunpack.c.l.b16 %v1346
        %v1411 = vunpack.c.l.b16 %v1347
        %v1412 = vunpack.c.l.b16 %v1348
        %v1413 = vunpack.c.l.b16 %v1349
        %v1414 = vunpack.c.l.b16 %v1350
        %v1415 = vunpack.c.l.b16 %v1351
        %v1416 = vunpack.c.l.b16 %v1352
        %v1417 = vunpack.c.l.b16 %v1353
        %v1418 = vunpack.c.l.b16 %v1354
        %v1419 = vunpack.c.l.b16 %v1355
        %v1420 = vunpack.c.l.b16 %v1356
        %v1421 = vpack.c.b16 %v1390, %v1389
        %v1422 = vpack.c.b16 %v1392, %v1391
        %v1423 = vpack.c.b16 %v1394, %v1393
        %v1424 = vpack.c.b16 %v1396, %v1395
        %v1425 = vpack.c.b16 %v1398, %v1397
        %v1426 = vpack.c.b16 %v1400, %v1399
        %v1427 = vpack.c.b16 %v1402, %v1401
        %v1428 = vpack.c.b16 %v1404, %v1403
        %v1429 = vpack.c.b16 %v1406, %v1405
        %v1430 = vpack.c.b16 %v1408, %v1407
        %v1431 = vpack.c.b16 %v1410, %v1409
        %v1432 = vpack.c.b16 %v1412, %v1411
        %v1433 = vpack.c.b16 %v1414, %v1413
        %v1434 = vpack.c.b16 %v1416, %v1415
        %v1435 = vpack.c.b16 %v1418, %v1417
        %v1436 = vpack.c.b16 %v1420, %v1419
        %vm1453 = vcmask 523264
        %1454 = vst.msk [vmem:[#allocation3] sm:$0xff] %vm1453, %v1421
        %1455 = vst.msk [vmem:[#allocation3 + $0x28] sm:$0xff] %vm1453, %v1422
        %1456 = vst.msk [vmem:[#allocation3 + $0x50] sm:$0xff] %vm1453, %v1423
        %1457 = vst.msk [vmem:[#allocation3 + $0x78] sm:$0xff] %vm1453, %v1424
        %1458 = vst.msk [vmem:[#allocation3 + $0xa0] sm:$0xff] %vm1453, %v1425
        %1459 = vst.msk [vmem:[#allocation3 + $0xc8] sm:$0xff] %vm1453, %v1426
        %1460 = vst.msk [vmem:[#allocation3 + $0xf0] sm:$0xff] %vm1453, %v1427
        %1461 = vst.msk [vmem:[#allocation3 + $0x118] sm:$0xff] %vm1453, %v1428
        %1462 = vst.msk [vmem:[#allocation3 + $0x140] sm:$0xff] %vm1453, %v1429
        %1463 = vst.msk [vmem:[#allocation3 + $0x168] sm:$0xff] %vm1453, %v1430
        %1464 = vst.msk [vmem:[#allocation3 + $0x190] sm:$0xff] %vm1453, %v1431
        %1465 = vst.msk [vmem:[#allocation3 + $0x1b8] sm:$0xff] %vm1453, %v1432
        %1466 = vst.msk [vmem:[#allocation3 + $0x1e0] sm:$0xff] %vm1453, %v1433
        %1467 = vst.msk [vmem:[#allocation3 + $0x208] sm:$0xff] %vm1453, %v1434
        %1468 = vst.msk [vmem:[#allocation3 + $0x230] sm:$0xff] %vm1453, %v1435
        %1469 = vst.msk [vmem:[#allocation3 + $0x258] sm:$0xff] %vm1453, %v1436
        %v1470 = vld [vmem:[#allocation2] sm:$0xf]
        %v1471 = vld [vmem:[#allocation2 + $0x4] sm:$0xf]
        %v1472 = vld [vmem:[#allocation2 + $0x8] sm:$0x1]
        %v1473 = vld [vmem:[#allocation2 + $0xc] sm:$0xf]
        %v1474 = vld [vmem:[#allocation2 + $0x10] sm:$0xf]
        %v1475 = vld [vmem:[#allocation2 + $0x14] sm:$0x1]
        %v1476 = vld [vmem:[#allocation2 + $0x18] sm:$0xf]
        %v1477 = vld [vmem:[#allocation2 + $0x1c] sm:$0xf]
        %v1478 = vld [vmem:[#allocation2 + $0x20] sm:$0x1]
        %v1479 = vld [vmem:[#allocation2 + $0x24] sm:$0xf]
        %v1480 = vld [vmem:[#allocation2 + $0x28] sm:$0xf]
        %v1481 = vld [vmem:[#allocation2 + $0x2c] sm:$0x1]
        %v1482 = vld [vmem:[#allocation2 + $0x30] sm:$0xf]
        %v1483 = vld [vmem:[#allocation2 + $0x34] sm:$0xf]
        %v1484 = vld [vmem:[#allocation2 + $0x38] sm:$0x1]
        %v1485 = vld [vmem:[#allocation2 + $0x3c] sm:$0xf]
        %v1486 = vld [vmem:[#allocation2 + $0x40] sm:$0xf]
        %v1487 = vld [vmem:[#allocation2 + $0x44] sm:$0x1]
        %v1488 = vld [vmem:[#allocation2 + $0x48] sm:$0xf]
        %v1489 = vld [vmem:[#allocation2 + $0x4c] sm:$0xf]
        %v1490 = vld [vmem:[#allocation2 + $0x50] sm:$0x1]
        %v1491 = vld [vmem:[#allocation2 + $0x54] sm:$0xf]
        %v1492 = vld [vmem:[#allocation2 + $0x58] sm:$0xf]
        %v1493 = vld [vmem:[#allocation2 + $0x5c] sm:$0x1]
        %v1494 = vld [vmem:[#allocation2 + $0x60] sm:$0xf]
        %v1495 = vld [vmem:[#allocation2 + $0x64] sm:$0xf]
        %v1496 = vld [vmem:[#allocation2 + $0x68] sm:$0x1]
        %v1497 = vld [vmem:[#allocation2 + $0x6c] sm:$0xf]
        %v1498 = vld [vmem:[#allocation2 + $0x70] sm:$0xf]
        %v1499 = vld [vmem:[#allocation2 + $0x74] sm:$0x1]
        %v1500 = vld [vmem:[#allocation2 + $0x78] sm:$0xf]
        %v1501 = vld [vmem:[#allocation2 + $0x7c] sm:$0xf]
        %v1502 = vld [vmem:[#allocation2 + $0x80] sm:$0x1]
        %v1503 = vld [vmem:[#allocation2 + $0x84] sm:$0xf]
        %v1504 = vld [vmem:[#allocation2 + $0x88] sm:$0xf]
        %v1505 = vld [vmem:[#allocation2 + $0x8c] sm:$0x1]
        %v1506 = vld [vmem:[#allocation2 + $0x90] sm:$0xf]
        %v1507 = vld [vmem:[#allocation2 + $0x94] sm:$0xf]
        %v1508 = vld [vmem:[#allocation2 + $0x98] sm:$0x1]
        %v1509 = vld [vmem:[#allocation2 + $0x9c] sm:$0xf]
        %v1510 = vld [vmem:[#allocation2 + $0xa0] sm:$0xf]
        %v1511 = vld [vmem:[#allocation2 + $0xa4] sm:$0x1]
        %v1512 = vld [vmem:[#allocation2 + $0xa8] sm:$0xf]
        %v1513 = vld [vmem:[#allocation2 + $0xac] sm:$0xf]
        %v1514 = vld [vmem:[#allocation2 + $0xb0] sm:$0x1]
        %v1515 = vld [vmem:[#allocation2 + $0xb4] sm:$0xf]
        %v1516 = vld [vmem:[#allocation2 + $0xb8] sm:$0xf]
        %v1517 = vld [vmem:[#allocation2 + $0xbc] sm:$0x1]
        %vm1518 = vsmask.f32 3328
        %vm1519 = vsmask.f32 7440
        %vm1520 = vmor %vm1518, %vm1519
        %v1522 = vshrl.u32 %v1470, 16
        %v1524 = vrot.slane %v1522, 4
        %v1525 = vshll.u32 %v1470, 16
        %v1527 = vrot.slane %v1525, 5
        %v1528 = vor.u32 %v1524, %v1527
        %v1529 = vrot.slane %v1528, 4
        %v1531 = vshll.u32 %v1471, 16
        %v1533 = vrot.slane %v1531, 5
        %v1534 = vsel %vm1520, %v1529, %v1533
        %v1535 = vshrl.u32 %v1471, 16
        %v1537 = vrot.slane %v1535, 4
        %v1538 = vor.u32 %v1537, %v1533
        %v1539 = vrot.slane %v1538, 4
        %v1541 = vshll.u32 %v1472, 16
        %v1543 = vrot.slane %v1541, 5
        %v1544 = vsel %vm1520, %v1539, %v1543
        %v1546 = vshrl.u32 %v1473, 16
        %v1548 = vrot.slane %v1546, 4
        %v1549 = vshll.u32 %v1473, 16
        %v1551 = vrot.slane %v1549, 5
        %v1552 = vor.u32 %v1548, %v1551
        %v1553 = vrot.slane %v1552, 4
        %v1555 = vshll.u32 %v1474, 16
        %v1557 = vrot.slane %v1555, 5
        %v1558 = vsel %vm1520, %v1553, %v1557
        %v1559 = vshrl.u32 %v1474, 16
        %v1561 = vrot.slane %v1559, 4
        %v1562 = vor.u32 %v1561, %v1557
        %v1563 = vrot.slane %v1562, 4
        %v1565 = vshll.u32 %v1475, 16
        %v1567 = vrot.slane %v1565, 5
        %v1568 = vsel %vm1520, %v1563, %v1567
        %v1570 = vshrl.u32 %v1476, 16
        %v1572 = vrot.slane %v1570, 4
        %v1573 = vshll.u32 %v1476, 16
        %v1575 = vrot.slane %v1573, 5
        %v1576 = vor.u32 %v1572, %v1575
        %v1577 = vrot.slane %v1576, 4
        %v1579 = vshll.u32 %v1477, 16
        %v1581 = vrot.slane %v1579, 5
        %v1582 = vsel %vm1520, %v1577, %v1581
        %v1583 = vshrl.u32 %v1477, 16
        %v1585 = vrot.slane %v1583, 4
        %v1586 = vor.u32 %v1585, %v1581
        %v1587 = vrot.slane %v1586, 4
        %v1589 = vshll.u32 %v1478, 16
        %v1591 = vrot.slane %v1589, 5
        %v1592 = vsel %vm1520, %v1587, %v1591
        %v1594 = vshrl.u32 %v1479, 16
        %v1596 = vrot.slane %v1594, 4
        %v1597 = vshll.u32 %v1479, 16
        %v1599 = vrot.slane %v1597, 5
        %v1600 = vor.u32 %v1596, %v1599
        %v1601 = vrot.slane %v1600, 4
        %v1603 = vshll.u32 %v1480, 16
        %v1605 = vrot.slane %v1603, 5
        %v1606 = vsel %vm1520, %v1601, %v1605
        %v1607 = vshrl.u32 %v1480, 16
        %v1609 = vrot.slane %v1607, 4
        %v1610 = vor.u32 %v1609, %v1605
        %v1611 = vrot.slane %v1610, 4
        %v1613 = vshll.u32 %v1481, 16
        %v1615 = vrot.slane %v1613, 5
        %v1616 = vsel %vm1520, %v1611, %v1615
        %v1618 = vshrl.u32 %v1482, 16
        %v1620 = vrot.slane %v1618, 4
        %v1621 = vshll.u32 %v1482, 16
        %v1623 = vrot.slane %v1621, 5
        %v1624 = vor.u32 %v1620, %v1623
        %v1625 = vrot.slane %v1624, 4
        %v1627 = vshll.u32 %v1483, 16
        %v1629 = vrot.slane %v1627, 5
        %v1630 = vsel %vm1520, %v1625, %v1629
        %v1631 = vshrl.u32 %v1483, 16
        %v1633 = vrot.slane %v1631, 4
        %v1634 = vor.u32 %v1633, %v1629
        %v1635 = vrot.slane %v1634, 4
        %v1637 = vshll.u32 %v1484, 16
        %v1639 = vrot.slane %v1637, 5
        %v1640 = vsel %vm1520, %v1635, %v1639
        %v1642 = vshrl.u32 %v1485, 16
        %v1644 = vrot.slane %v1642, 4
        %v1645 = vshll.u32 %v1485, 16
        %v1647 = vrot.slane %v1645, 5
        %v1648 = vor.u32 %v1644, %v1647
        %v1649 = vrot.slane %v1648, 4
        %v1651 = vshll.u32 %v1486, 16
        %v1653 = vrot.slane %v1651, 5
        %v1654 = vsel %vm1520, %v1649, %v1653
        %v1655 = vshrl.u32 %v1486, 16
        %v1657 = vrot.slane %v1655, 4
        %v1658 = vor.u32 %v1657, %v1653
        %v1659 = vrot.slane %v1658, 4
        %v1661 = vshll.u32 %v1487, 16
        %v1663 = vrot.slane %v1661, 5
        %v1664 = vsel %vm1520, %v1659, %v1663
        %v1666 = vshrl.u32 %v1488, 16
        %v1668 = vrot.slane %v1666, 4
        %v1669 = vshll.u32 %v1488, 16
        %v1671 = vrot.slane %v1669, 5
        %v1672 = vor.u32 %v1668, %v1671
        %v1673 = vrot.slane %v1672, 4
        %v1675 = vshll.u32 %v1489, 16
        %v1677 = vrot.slane %v1675, 5
        %v1678 = vsel %vm1520, %v1673, %v1677
        %v1679 = vshrl.u32 %v1489, 16
        %v1681 = vrot.slane %v1679, 4
        %v1682 = vor.u32 %v1681, %v1677
        %v1683 = vrot.slane %v1682, 4
        %v1685 = vshll.u32 %v1490, 16
        %v1687 = vrot.slane %v1685, 5
        %v1688 = vsel %vm1520, %v1683, %v1687
        %v1690 = vshrl.u32 %v1491, 16
        %v1692 = vrot.slane %v1690, 4
        %v1693 = vshll.u32 %v1491, 16
        %v1695 = vrot.slane %v1693, 5
        %v1696 = vor.u32 %v1692, %v1695
        %v1697 = vrot.slane %v1696, 4
        %v1699 = vshll.u32 %v1492, 16
        %v1701 = vrot.slane %v1699, 5
        %v1702 = vsel %vm1520, %v1697, %v1701
        %v1703 = vshrl.u32 %v1492, 16
        %v1705 = vrot.slane %v1703, 4
        %v1706 = vor.u32 %v1705, %v1701
        %v1707 = vrot.slane %v1706, 4
        %v1709 = vshll.u32 %v1493, 16
        %v1711 = vrot.slane %v1709, 5
        %v1712 = vsel %vm1520, %v1707, %v1711
        %v1714 = vshrl.u32 %v1494, 16
        %v1716 = vrot.slane %v1714, 4
        %v1717 = vshll.u32 %v1494, 16
        %v1719 = vrot.slane %v1717, 5
        %v1720 = vor.u32 %v1716, %v1719
        %v1721 = vrot.slane %v1720, 4
        %v1723 = vshll.u32 %v1495, 16
        %v1725 = vrot.slane %v1723, 5
        %v1726 = vsel %vm1520, %v1721, %v1725
        %v1727 = vshrl.u32 %v1495, 16
        %v1729 = vrot.slane %v1727, 4
        %v1730 = vor.u32 %v1729, %v1725
        %v1731 = vrot.slane %v1730, 4
        %v1733 = vshll.u32 %v1496, 16
        %v1735 = vrot.slane %v1733, 5
        %v1736 = vsel %vm1520, %v1731, %v1735
        %v1738 = vshrl.u32 %v1497, 16
        %v1740 = vrot.slane %v1738, 4
        %v1741 = vshll.u32 %v1497, 16
        %v1743 = vrot.slane %v1741, 5
        %v1744 = vor.u32 %v1740, %v1743
        %v1745 = vrot.slane %v1744, 4
        %v1747 = vshll.u32 %v1498, 16
        %v1749 = vrot.slane %v1747, 5
        %v1750 = vsel %vm1520, %v1745, %v1749
        %v1751 = vshrl.u32 %v1498, 16
        %v1753 = vrot.slane %v1751, 4
        %v1754 = vor.u32 %v1753, %v1749
        %v1755 = vrot.slane %v1754, 4
        %v1757 = vshll.u32 %v1499, 16
        %v1759 = vrot.slane %v1757, 5
        %v1760 = vsel %vm1520, %v1755, %v1759
        %v1762 = vshrl.u32 %v1500, 16
        %v1764 = vrot.slane %v1762, 4
        %v1765 = vshll.u32 %v1500, 16
        %v1767 = vrot.slane %v1765, 5
        %v1768 = vor.u32 %v1764, %v1767
        %v1769 = vrot.slane %v1768, 4
        %v1771 = vshll.u32 %v1501, 16
        %v1773 = vrot.slane %v1771, 5
        %v1774 = vsel %vm1520, %v1769, %v1773
        %v1775 = vshrl.u32 %v1501, 16
        %v1777 = vrot.slane %v1775, 4
        %v1778 = vor.u32 %v1777, %v1773
        %v1779 = vrot.slane %v1778, 4
        %v1781 = vshll.u32 %v1502, 16
        %v1783 = vrot.slane %v1781, 5
        %v1784 = vsel %vm1520, %v1779, %v1783
        %v1786 = vshrl.u32 %v1503, 16
        %v1788 = vrot.slane %v1786, 4
        %v1789 = vshll.u32 %v1503, 16
        %v1791 = vrot.slane %v1789, 5
        %v1792 = vor.u32 %v1788, %v1791
        %v1793 = vrot.slane %v1792, 4
        %v1795 = vshll.u32 %v1504, 16
        %v1797 = vrot.slane %v1795, 5
        %v1798 = vsel %vm1520, %v1793, %v1797
        %v1799 = vshrl.u32 %v1504, 16
        %v1801 = vrot.slane %v1799, 4
        %v1802 = vor.u32 %v1801, %v1797
        %v1803 = vrot.slane %v1802, 4
        %v1805 = vshll.u32 %v1505, 16
        %v1807 = vrot.slane %v1805, 5
        %v1808 = vsel %vm1520, %v1803, %v1807
        %v1810 = vshrl.u32 %v1506, 16
        %v1812 = vrot.slane %v1810, 4
        %v1813 = vshll.u32 %v1506, 16
        %v1815 = vrot.slane %v1813, 5
        %v1816 = vor.u32 %v1812, %v1815
        %v1817 = vrot.slane %v1816, 4
        %v1819 = vshll.u32 %v1507, 16
        %v1821 = vrot.slane %v1819, 5
        %v1822 = vsel %vm1520, %v1817, %v1821
        %v1823 = vshrl.u32 %v1507, 16
        %v1825 = vrot.slane %v1823, 4
        %v1826 = vor.u32 %v1825, %v1821
        %v1827 = vrot.slane %v1826, 4
        %v1829 = vshll.u32 %v1508, 16
        %v1831 = vrot.slane %v1829, 5
        %v1832 = vsel %vm1520, %v1827, %v1831
        %v1834 = vshrl.u32 %v1509, 16
        %v1836 = vrot.slane %v1834, 4
        %v1837 = vshll.u32 %v1509, 16
        %v1839 = vrot.slane %v1837, 5
        %v1840 = vor.u32 %v1836, %v1839
        %v1841 = vrot.slane %v1840, 4
        %v1843 = vshll.u32 %v1510, 16
        %v1845 = vrot.slane %v1843, 5
        %v1846 = vsel %vm1520, %v1841, %v1845
        %v1847 = vshrl.u32 %v1510, 16
        %v1849 = vrot.slane %v1847, 4
        %v1850 = vor.u32 %v1849, %v1845
        %v1851 = vrot.slane %v1850, 4
        %v1853 = vshll.u32 %v1511, 16
        %v1855 = vrot.slane %v1853, 5
        %v1856 = vsel %vm1520, %v1851, %v1855
        %v1858 = vshrl.u32 %v1512, 16
        %v1860 = vrot.slane %v1858, 4
        %v1861 = vshll.u32 %v1512, 16
        %v1863 = vrot.slane %v1861, 5
        %v1864 = vor.u32 %v1860, %v1863
        %v1865 = vrot.slane %v1864, 4
        %v1867 = vshll.u32 %v1513, 16
        %v1869 = vrot.slane %v1867, 5
        %v1870 = vsel %vm1520, %v1865, %v1869
        %v1871 = vshrl.u32 %v1513, 16
        %v1873 = vrot.slane %v1871, 4
        %v1874 = vor.u32 %v1873, %v1869
        %v1875 = vrot.slane %v1874, 4
        %v1877 = vshll.u32 %v1514, 16
        %v1879 = vrot.slane %v1877, 5
        %v1880 = vsel %vm1520, %v1875, %v1879
        %v1882 = vshrl.u32 %v1515, 16
        %v1884 = vrot.slane %v1882, 4
        %v1885 = vshll.u32 %v1515, 16
        %v1887 = vrot.slane %v1885, 5
        %v1888 = vor.u32 %v1884, %v1887
        %v1889 = vrot.slane %v1888, 4
        %v1891 = vshll.u32 %v1516, 16
        %v1893 = vrot.slane %v1891, 5
        %v1894 = vsel %vm1520, %v1889, %v1893
        %v1895 = vshrl.u32 %v1516, 16
        %v1897 = vrot.slane %v1895, 4
        %v1898 = vor.u32 %v1897, %v1893
        %v1899 = vrot.slane %v1898, 4
        %v1901 = vshll.u32 %v1517, 16
        %v1903 = vrot.slane %v1901, 5
        %v1904 = vsel %vm1520, %v1899, %v1903
        %v1905 = vunpack.c.l.b16 %v1534
        %v1906 = vunpack.c.l.b16 %v1544
        %v1907 = vunpack.c.l.b16 %v1558
        %v1908 = vunpack.c.l.b16 %v1568
        %v1909 = vunpack.c.l.b16 %v1582
        %v1910 = vunpack.c.l.b16 %v1592
        %v1911 = vunpack.c.l.b16 %v1606
        %v1912 = vunpack.c.l.b16 %v1616
        %v1913 = vunpack.c.l.b16 %v1630
        %v1914 = vunpack.c.l.b16 %v1640
        %v1915 = vunpack.c.l.b16 %v1654
        %v1916 = vunpack.c.l.b16 %v1664
        %v1917 = vunpack.c.l.b16 %v1678
        %v1918 = vunpack.c.l.b16 %v1688
        %v1919 = vunpack.c.l.b16 %v1702
        %v1920 = vunpack.c.l.b16 %v1712
        %v1921 = vunpack.c.l.b16 %v1726
        %v1922 = vunpack.c.l.b16 %v1736
        %v1923 = vunpack.c.l.b16 %v1750
        %v1924 = vunpack.c.l.b16 %v1760
        %v1925 = vunpack.c.l.b16 %v1774
        %v1926 = vunpack.c.l.b16 %v1784
        %v1927 = vunpack.c.l.b16 %v1798
        %v1928 = vunpack.c.l.b16 %v1808
        %v1929 = vunpack.c.l.b16 %v1822
        %v1930 = vunpack.c.l.b16 %v1832
        %v1931 = vunpack.c.l.b16 %v1846
        %v1932 = vunpack.c.l.b16 %v1856
        %v1933 = vunpack.c.l.b16 %v1870
        %v1934 = vunpack.c.l.b16 %v1880
        %v1935 = vunpack.c.l.b16 %v1894
        %v1936 = vunpack.c.l.b16 %v1904
        %v1937 = vpack.c.b16 %v1906, %v1905
        %v1938 = vpack.c.b16 %v1908, %v1907
        %v1939 = vpack.c.b16 %v1910, %v1909
        %v1940 = vpack.c.b16 %v1912, %v1911
        %v1941 = vpack.c.b16 %v1914, %v1913
        %v1942 = vpack.c.b16 %v1916, %v1915
        %v1943 = vpack.c.b16 %v1918, %v1917
        %v1944 = vpack.c.b16 %v1920, %v1919
        %v1945 = vpack.c.b16 %v1922, %v1921
        %v1946 = vpack.c.b16 %v1924, %v1923
        %v1947 = vpack.c.b16 %v1926, %v1925
        %v1948 = vpack.c.b16 %v1928, %v1927
        %v1949 = vpack.c.b16 %v1930, %v1929
        %v1950 = vpack.c.b16 %v1932, %v1931
        %v1951 = vpack.c.b16 %v1934, %v1933
        %v1952 = vpack.c.b16 %v1936, %v1935
        %1953 = vrot.lane.b32.xlu0 %v1937, 64
        %v1954 = vpop.permute.xlu0 %1953
        %1955 = vrot.lane.b32.xlu0 %v1938, 64
        %v1956 = vpop.permute.xlu0 %1955
        %1957 = vrot.lane.b32.xlu0 %v1939, 64
        %v1958 = vpop.permute.xlu0 %1957
        %1959 = vrot.lane.b32.xlu0 %v1940, 64
        %v1960 = vpop.permute.xlu0 %1959
        %1961 = vrot.lane.b32.xlu0 %v1941, 64
        %v1962 = vpop.permute.xlu0 %1961
        %1963 = vrot.lane.b32.xlu0 %v1942, 64
        %v1964 = vpop.permute.xlu0 %1963
        %1965 = vrot.lane.b32.xlu0 %v1943, 64
        %v1966 = vpop.permute.xlu0 %1965
        %1967 = vrot.lane.b32.xlu0 %v1944, 64
        %v1968 = vpop.permute.xlu0 %1967
        %1969 = vrot.lane.b32.xlu0 %v1945, 64
        %v1970 = vpop.permute.xlu0 %1969
        %1971 = vrot.lane.b32.xlu0 %v1946, 64
        %v1972 = vpop.permute.xlu0 %1971
        %1973 = vrot.lane.b32.xlu0 %v1947, 64
        %v1974 = vpop.permute.xlu0 %1973
        %1975 = vrot.lane.b32.xlu0 %v1948, 64
        %v1976 = vpop.permute.xlu0 %1975
        %1977 = vrot.lane.b32.xlu0 %v1949, 64
        %v1978 = vpop.permute.xlu0 %1977
        %1979 = vrot.lane.b32.xlu0 %v1950, 64
        %v1980 = vpop.permute.xlu0 %1979
        %1981 = vrot.lane.b32.xlu0 %v1951, 64
        %v1982 = vpop.permute.xlu0 %1981
        %1983 = vrot.lane.b32.xlu0 %v1952, 64
        %v1984 = vpop.permute.xlu0 %1983
        %vm2001 = vcmask 1048064
        %2002 = vst.msk [vmem:[#allocation3] sm:$0xff] %vm2001, %v1954
        %2003 = vst.msk [vmem:[#allocation3 + $0x28] sm:$0xff] %vm2001, %v1956
        %2004 = vst.msk [vmem:[#allocation3 + $0x50] sm:$0xff] %vm2001, %v1958
        %2005 = vst.msk [vmem:[#allocation3 + $0x78] sm:$0xff] %vm2001, %v1960
        %2006 = vst.msk [vmem:[#allocation3 + $0xa0] sm:$0xff] %vm2001, %v1962
        %2007 = vst.msk [vmem:[#allocation3 + $0xc8] sm:$0xff] %vm2001, %v1964
        %2008 = vst.msk [vmem:[#allocation3 + $0xf0] sm:$0xff] %vm2001, %v1966
        %2009 = vst.msk [vmem:[#allocation3 + $0x118] sm:$0xff] %vm2001, %v1968
        %2010 = vst.msk [vmem:[#allocation3 + $0x140] sm:$0xff] %vm2001, %v1970
        %2011 = vst.msk [vmem:[#allocation3 + $0x168] sm:$0xff] %vm2001, %v1972
        %2012 = vst.msk [vmem:[#allocation3 + $0x190] sm:$0xff] %vm2001, %v1974
        %2013 = vst.msk [vmem:[#allocation3 + $0x1b8] sm:$0xff] %vm2001, %v1976
        %2014 = vst.msk [vmem:[#allocation3 + $0x1e0] sm:$0xff] %vm2001, %v1978
        %2015 = vst.msk [vmem:[#allocation3 + $0x208] sm:$0xff] %vm2001, %v1980
        %2016 = vst.msk [vmem:[#allocation3 + $0x230] sm:$0xff] %vm2001, %v1982
        %2017 = vst.msk [vmem:[#allocation3 + $0x258] sm:$0xff] %vm2001, %v1984
        %v2018 = vld [vmem:[#allocation2] sm:$0xe]
        %v2019 = vld [vmem:[#allocation2 + $0x4] sm:$0xf]
        %v2020 = vld [vmem:[#allocation2 + $0x8] sm:$0x1]
        %v2021 = vld [vmem:[#allocation2 + $0xc] sm:$0xe]
        %v2022 = vld [vmem:[#allocation2 + $0x10] sm:$0xf]
        %v2023 = vld [vmem:[#allocation2 + $0x14] sm:$0x1]
        %v2024 = vld [vmem:[#allocation2 + $0x18] sm:$0xe]
        %v2025 = vld [vmem:[#allocation2 + $0x1c] sm:$0xf]
        %v2026 = vld [vmem:[#allocation2 + $0x20] sm:$0x1]
        %v2027 = vld [vmem:[#allocation2 + $0x24] sm:$0xe]
        %v2028 = vld [vmem:[#allocation2 + $0x28] sm:$0xf]
        %v2029 = vld [vmem:[#allocation2 + $0x2c] sm:$0x1]
        %v2030 = vld [vmem:[#allocation2 + $0x30] sm:$0xe]
        %v2031 = vld [vmem:[#allocation2 + $0x34] sm:$0xf]
        %v2032 = vld [vmem:[#allocation2 + $0x38] sm:$0x1]
        %v2033 = vld [vmem:[#allocation2 + $0x3c] sm:$0xe]
        %v2034 = vld [vmem:[#allocation2 + $0x40] sm:$0xf]
        %v2035 = vld [vmem:[#allocation2 + $0x44] sm:$0x1]
        %v2036 = vld [vmem:[#allocation2 + $0x48] sm:$0xe]
        %v2037 = vld [vmem:[#allocation2 + $0x4c] sm:$0xf]
        %v2038 = vld [vmem:[#allocation2 + $0x50] sm:$0x1]
        %v2039 = vld [vmem:[#allocation2 + $0x54] sm:$0xe]
        %v2040 = vld [vmem:[#allocation2 + $0x58] sm:$0xf]
        %v2041 = vld [vmem:[#allocation2 + $0x5c] sm:$0x1]
        %v2042 = vld [vmem:[#allocation2 + $0x60] sm:$0xe]
        %v2043 = vld [vmem:[#allocation2 + $0x64] sm:$0xf]
        %v2044 = vld [vmem:[#allocation2 + $0x68] sm:$0x1]
        %v2045 = vld [vmem:[#allocation2 + $0x6c] sm:$0xe]
        %v2046 = vld [vmem:[#allocation2 + $0x70] sm:$0xf]
        %v2047 = vld [vmem:[#allocation2 + $0x74] sm:$0x1]
        %v2048 = vld [vmem:[#allocation2 + $0x78] sm:$0xe]
        %v2049 = vld [vmem:[#allocation2 + $0x7c] sm:$0xf]
        %v2050 = vld [vmem:[#allocation2 + $0x80] sm:$0x1]
        %v2051 = vld [vmem:[#allocation2 + $0x84] sm:$0xe]
        %v2052 = vld [vmem:[#allocation2 + $0x88] sm:$0xf]
        %v2053 = vld [vmem:[#allocation2 + $0x8c] sm:$0x1]
        %v2054 = vld [vmem:[#allocation2 + $0x90] sm:$0xe]
        %v2055 = vld [vmem:[#allocation2 + $0x94] sm:$0xf]
        %v2056 = vld [vmem:[#allocation2 + $0x98] sm:$0x1]
        %v2057 = vld [vmem:[#allocation2 + $0x9c] sm:$0xe]
        %v2058 = vld [vmem:[#allocation2 + $0xa0] sm:$0xf]
        %v2059 = vld [vmem:[#allocation2 + $0xa4] sm:$0x1]
        %v2060 = vld [vmem:[#allocation2 + $0xa8] sm:$0xe]
        %v2061 = vld [vmem:[#allocation2 + $0xac] sm:$0xf]
        %v2062 = vld [vmem:[#allocation2 + $0xb0] sm:$0x1]
        %v2063 = vld [vmem:[#allocation2 + $0xb4] sm:$0xe]
        %v2064 = vld [vmem:[#allocation2 + $0xb8] sm:$0xf]
        %v2065 = vld [vmem:[#allocation2 + $0xbc] sm:$0x1]
        %vm2114 = vcmask 1042432
        %vm2115 = vcmask 1046532
        %vm2116 = vmor %vm2114, %vm2115
        %v2117 = vrot.slane %v2018, 5
        %v2118 = vrot.slane %v2117, 4
        %v2119 = vrot.slane %v2019, 5
        %v2120 = vsel %vm2116, %v2118, %v2119
        %v2121 = vrot.slane %v2119, 4
        %v2122 = vrot.slane %v2020, 5
        %v2123 = vsel %vm2116, %v2121, %v2122
        %v2124 = vrot.slane %v2021, 5
        %v2125 = vrot.slane %v2124, 4
        %v2126 = vrot.slane %v2022, 5
        %v2127 = vsel %vm2116, %v2125, %v2126
        %v2128 = vrot.slane %v2126, 4
        %v2129 = vrot.slane %v2023, 5
        %v2130 = vsel %vm2116, %v2128, %v2129
        %v2131 = vrot.slane %v2024, 5
        %v2132 = vrot.slane %v2131, 4
        %v2133 = vrot.slane %v2025, 5
        %v2134 = vsel %vm2116, %v2132, %v2133
        %v2135 = vrot.slane %v2133, 4
        %v2136 = vrot.slane %v2026, 5
        %v2137 = vsel %vm2116, %v2135, %v2136
        %v2138 = vrot.slane %v2027, 5
        %v2139 = vrot.slane %v2138, 4
        %v2140 = vrot.slane %v2028, 5
        %v2141 = vsel %vm2116, %v2139, %v2140
        %v2142 = vrot.slane %v2140, 4
        %v2143 = vrot.slane %v2029, 5
        %v2144 = vsel %vm2116, %v2142, %v2143
        %v2145 = vrot.slane %v2030, 5
        %v2146 = vrot.slane %v2145, 4
        %v2147 = vrot.slane %v2031, 5
        %v2148 = vsel %vm2116, %v2146, %v2147
        %v2149 = vrot.slane %v2147, 4
        %v2150 = vrot.slane %v2032, 5
        %v2151 = vsel %vm2116, %v2149, %v2150
        %v2152 = vrot.slane %v2033, 5
        %v2153 = vrot.slane %v2152, 4
        %v2154 = vrot.slane %v2034, 5
        %v2155 = vsel %vm2116, %v2153, %v2154
        %v2156 = vrot.slane %v2154, 4
        %v2157 = vrot.slane %v2035, 5
        %v2158 = vsel %vm2116, %v2156, %v2157
        %v2159 = vrot.slane %v2036, 5
        %v2160 = vrot.slane %v2159, 4
        %v2161 = vrot.slane %v2037, 5
        %v2162 = vsel %vm2116, %v2160, %v2161
        %v2163 = vrot.slane %v2161, 4
        %v2164 = vrot.slane %v2038, 5
        %v2165 = vsel %vm2116, %v2163, %v2164
        %v2166 = vrot.slane %v2039, 5
        %v2167 = vrot.slane %v2166, 4
        %v2168 = vrot.slane %v2040, 5
        %v2169 = vsel %vm2116, %v2167, %v2168
        %v2170 = vrot.slane %v2168, 4
        %v2171 = vrot.slane %v2041, 5
        %v2172 = vsel %vm2116, %v2170, %v2171
        %v2173 = vrot.slane %v2042, 5
        %v2174 = vrot.slane %v2173, 4
        %v2175 = vrot.slane %v2043, 5
        %v2176 = vsel %vm2116, %v2174, %v2175
        %v2177 = vrot.slane %v2175, 4
        %v2178 = vrot.slane %v2044, 5
        %v2179 = vsel %vm2116, %v2177, %v2178
        %v2180 = vrot.slane %v2045, 5
        %v2181 = vrot.slane %v2180, 4
        %v2182 = vrot.slane %v2046, 5
        %v2183 = vsel %vm2116, %v2181, %v2182
        %v2184 = vrot.slane %v2182, 4
        %v2185 = vrot.slane %v2047, 5
        %v2186 = vsel %vm2116, %v2184, %v2185
        %v2187 = vrot.slane %v2048, 5
        %v2188 = vrot.slane %v2187, 4
        %v2189 = vrot.slane %v2049, 5
        %v2190 = vsel %vm2116, %v2188, %v2189
        %v2191 = vrot.slane %v2189, 4
        %v2192 = vrot.slane %v2050, 5
        %v2193 = vsel %vm2116, %v2191, %v2192
        %v2194 = vrot.slane %v2051, 5
        %v2195 = vrot.slane %v2194, 4
        %v2196 = vrot.slane %v2052, 5
        %v2197 = vsel %vm2116, %v2195, %v2196
        %v2198 = vrot.slane %v2196, 4
        %v2199 = vrot.slane %v2053, 5
        %v2200 = vsel %vm2116, %v2198, %v2199
        %v2201 = vrot.slane %v2054, 5
        %v2202 = vrot.slane %v2201, 4
        %v2203 = vrot.slane %v2055, 5
        %v2204 = vsel %vm2116, %v2202, %v2203
        %v2205 = vrot.slane %v2203, 4
        %v2206 = vrot.slane %v2056, 5
        %v2207 = vsel %vm2116, %v2205, %v2206
        %v2208 = vrot.slane %v2057, 5
        %v2209 = vrot.slane %v2208, 4
        %v2210 = vrot.slane %v2058, 5
        %v2211 = vsel %vm2116, %v2209, %v2210
        %v2212 = vrot.slane %v2210, 4
        %v2213 = vrot.slane %v2059, 5
        %v2214 = vsel %vm2116, %v2212, %v2213
        %v2215 = vrot.slane %v2060, 5
        %v2216 = vrot.slane %v2215, 4
        %v2217 = vrot.slane %v2061, 5
        %v2218 = vsel %vm2116, %v2216, %v2217
        %v2219 = vrot.slane %v2217, 4
        %v2220 = vrot.slane %v2062, 5
        %v2221 = vsel %vm2116, %v2219, %v2220
        %v2222 = vrot.slane %v2063, 5
        %v2223 = vrot.slane %v2222, 4
        %v2224 = vrot.slane %v2064, 5
        %v2225 = vsel %vm2116, %v2223, %v2224
        %v2226 = vrot.slane %v2224, 4
        %v2227 = vrot.slane %v2065, 5
        %v2228 = vsel %vm2116, %v2226, %v2227
        %v2229 = vunpack.c.l.b16 %v2120
        %v2230 = vunpack.c.l.b16 %v2123
        %v2231 = vunpack.c.l.b16 %v2127
        %v2232 = vunpack.c.l.b16 %v2130
        %v2233 = vunpack.c.l.b16 %v2134
        %v2234 = vunpack.c.l.b16 %v2137
        %v2235 = vunpack.c.l.b16 %v2141
        %v2236 = vunpack.c.l.b16 %v2144
        %v2237 = vunpack.c.l.b16 %v2148
        %v2238 = vunpack.c.l.b16 %v2151
        %v2239 = vunpack.c.l.b16 %v2155
        %v2240 = vunpack.c.l.b16 %v2158
        %v2241 = vunpack.c.l.b16 %v2162
        %v2242 = vunpack.c.l.b16 %v2165
        %v2243 = vunpack.c.l.b16 %v2169
        %v2244 = vunpack.c.l.b16 %v2172
        %v2245 = vunpack.c.l.b16 %v2176
        %v2246 = vunpack.c.l.b16 %v2179
        %v2247 = vunpack.c.l.b16 %v2183
        %v2248 = vunpack.c.l.b16 %v2186
        %v2249 = vunpack.c.l.b16 %v2190
        %v2250 = vunpack.c.l.b16 %v2193
        %v2251 = vunpack.c.l.b16 %v2197
        %v2252 = vunpack.c.l.b16 %v2200
        %v2253 = vunpack.c.l.b16 %v2204
        %v2254 = vunpack.c.l.b16 %v2207
        %v2255 = vunpack.c.l.b16 %v2211
        %v2256 = vunpack.c.l.b16 %v2214
        %v2257 = vunpack.c.l.b16 %v2218
        %v2258 = vunpack.c.l.b16 %v2221
        %v2259 = vunpack.c.l.b16 %v2225
        %v2260 = vunpack.c.l.b16 %v2228
        %v2261 = vpack.c.b16 %v2230, %v2229
        %v2262 = vpack.c.b16 %v2232, %v2231
        %v2263 = vpack.c.b16 %v2234, %v2233
        %v2264 = vpack.c.b16 %v2236, %v2235
        %v2265 = vpack.c.b16 %v2238, %v2237
        %v2266 = vpack.c.b16 %v2240, %v2239
        %v2267 = vpack.c.b16 %v2242, %v2241
        %v2268 = vpack.c.b16 %v2244, %v2243
        %v2269 = vpack.c.b16 %v2246, %v2245
        %v2270 = vpack.c.b16 %v2248, %v2247
        %v2271 = vpack.c.b16 %v2250, %v2249
        %v2272 = vpack.c.b16 %v2252, %v2251
        %v2273 = vpack.c.b16 %v2254, %v2253
        %v2274 = vpack.c.b16 %v2256, %v2255
        %v2275 = vpack.c.b16 %v2258, %v2257
        %v2276 = vpack.c.b16 %v2260, %v2259
        %2293 = vst.msk [vmem:[#allocation3 + $0x8] sm:$0xff] %vm1453, %v2261
        %2294 = vst.msk [vmem:[#allocation3 + $0x30] sm:$0xff] %vm1453, %v2262
        %2295 = vst.msk [vmem:[#allocation3 + $0x58] sm:$0xff] %vm1453, %v2263
        %2296 = vst.msk [vmem:[#allocation3 + $0x80] sm:$0xff] %vm1453, %v2264
        %2297 = vst.msk [vmem:[#allocation3 + $0xa8] sm:$0xff] %vm1453, %v2265
        %2298 = vst.msk [vmem:[#allocation3 + $0xd0] sm:$0xff] %vm1453, %v2266
        %2299 = vst.msk [vmem:[#allocation3 + $0xf8] sm:$0xff] %vm1453, %v2267
        %2300 = vst.msk [vmem:[#allocation3 + $0x120] sm:$0xff] %vm1453, %v2268
        %2301 = vst.msk [vmem:[#allocation3 + $0x148] sm:$0xff] %vm1453, %v2269
        %2302 = vst.msk [vmem:[#allocation3 + $0x170] sm:$0xff] %vm1453, %v2270
        %2303 = vst.msk [vmem:[#allocation3 + $0x198] sm:$0xff] %vm1453, %v2271
        %2304 = vst.msk [vmem:[#allocation3 + $0x1c0] sm:$0xff] %vm1453, %v2272
        %2305 = vst.msk [vmem:[#allocation3 + $0x1e8] sm:$0xff] %vm1453, %v2273
        %2306 = vst.msk [vmem:[#allocation3 + $0x210] sm:$0xff] %vm1453, %v2274
        %2307 = vst.msk [vmem:[#allocation3 + $0x238] sm:$0xff] %vm1453, %v2275
        %2308 = vst.msk [vmem:[#allocation3 + $0x260] sm:$0xff] %vm1453, %v2276
        %v2309 = vld [vmem:[%s1210] sm:$0xf]
        %v2310 = vld [vmem:[%s1210 + $0x4] sm:$0xf]
        %v2311 = vld [vmem:[%s1210 + $0xc] sm:$0xf]
        %v2312 = vld [vmem:[%s1210 + $0x10] sm:$0xf]
        %v2313 = vld [vmem:[%s1210 + $0x18] sm:$0xf]
        %v2314 = vld [vmem:[%s1210 + $0x1c] sm:$0xf]
        %v2315 = vld [vmem:[%s1210 + $0x24] sm:$0xf]
        %v2316 = vld [vmem:[%s1210 + $0x28] sm:$0xf]
        %v2317 = vld [vmem:[%s1210 + $0x30] sm:$0xf]
        %v2318 = vld [vmem:[%s1210 + $0x34] sm:$0xf]
        %v2319 = vld [vmem:[%s1210 + $0x3c] sm:$0xf]
        %v2320 = vld [vmem:[%s1210 + $0x40] sm:$0xf]
        %v2321 = vld [vmem:[%s1210 + $0x48] sm:$0xf]
        %v2322 = vld [vmem:[%s1210 + $0x4c] sm:$0xf]
        %v2323 = vld [vmem:[%s1210 + $0x54] sm:$0xf]
        %v2324 = vld [vmem:[%s1210 + $0x58] sm:$0xf]
        %v2325 = vld [vmem:[%s1210 + $0x60] sm:$0xf]
        %v2326 = vld [vmem:[%s1210 + $0x64] sm:$0xf]
        %v2327 = vld [vmem:[%s1210 + $0x6c] sm:$0xf]
        %v2328 = vld [vmem:[%s1210 + $0x70] sm:$0xf]
        %v2329 = vld [vmem:[%s1210 + $0x78] sm:$0xf]
        %v2330 = vld [vmem:[%s1210 + $0x7c] sm:$0xf]
        %v2331 = vld [vmem:[%s1210 + $0x84] sm:$0xf]
        %v2332 = vld [vmem:[%s1210 + $0x88] sm:$0xf]
        %v2333 = vld [vmem:[%s1210 + $0x90] sm:$0xf]
        %v2334 = vld [vmem:[%s1210 + $0x94] sm:$0xf]
        %v2335 = vld [vmem:[%s1210 + $0x9c] sm:$0xf]
        %v2336 = vld [vmem:[%s1210 + $0xa0] sm:$0xf]
        %v2337 = vld [vmem:[%s1210 + $0xa8] sm:$0xf]
        %v2338 = vld [vmem:[%s1210 + $0xac] sm:$0xf]
        %v2339 = vld [vmem:[%s1210 + $0xb4] sm:$0xf]
        %v2340 = vld [vmem:[%s1210 + $0xb8] sm:$0xf]
        %v2373 = vunpack.c.l.b16 %v2309
        %v2374 = vunpack.c.l.b16 %v2310
        %v2375 = vunpack.c.l.b16 %v2311
        %v2376 = vunpack.c.l.b16 %v2312
        %v2377 = vunpack.c.l.b16 %v2313
        %v2378 = vunpack.c.l.b16 %v2314
        %v2379 = vunpack.c.l.b16 %v2315
        %v2380 = vunpack.c.l.b16 %v2316
        %v2381 = vunpack.c.l.b16 %v2317
        %v2382 = vunpack.c.l.b16 %v2318
        %v2383 = vunpack.c.l.b16 %v2319
        %v2384 = vunpack.c.l.b16 %v2320
        %v2385 = vunpack.c.l.b16 %v2321
        %v2386 = vunpack.c.l.b16 %v2322
        %v2387 = vunpack.c.l.b16 %v2323
        %v2388 = vunpack.c.l.b16 %v2324
        %v2389 = vunpack.c.l.b16 %v2325
        %v2390 = vunpack.c.l.b16 %v2326
        %v2391 = vunpack.c.l.b16 %v2327
        %v2392 = vunpack.c.l.b16 %v2328
        %v2393 = vunpack.c.l.b16 %v2329
        %v2394 = vunpack.c.l.b16 %v2330
        %v2395 = vunpack.c.l.b16 %v2331
        %v2396 = vunpack.c.l.b16 %v2332
        %v2397 = vunpack.c.l.b16 %v2333
        %v2398 = vunpack.c.l.b16 %v2334
        %v2399 = vunpack.c.l.b16 %v2335
        %v2400 = vunpack.c.l.b16 %v2336
        %v2401 = vunpack.c.l.b16 %v2337
        %v2402 = vunpack.c.l.b16 %v2338
        %v2403 = vunpack.c.l.b16 %v2339
        %v2404 = vunpack.c.l.b16 %v2340
        %v2405 = vpack.c.b16 %v2374, %v2373
        %v2406 = vpack.c.b16 %v2376, %v2375
        %v2407 = vpack.c.b16 %v2378, %v2377
        %v2408 = vpack.c.b16 %v2380, %v2379
        %v2409 = vpack.c.b16 %v2382, %v2381
        %v2410 = vpack.c.b16 %v2384, %v2383
        %v2411 = vpack.c.b16 %v2386, %v2385
        %v2412 = vpack.c.b16 %v2388, %v2387
        %v2413 = vpack.c.b16 %v2390, %v2389
        %v2414 = vpack.c.b16 %v2392, %v2391
        %v2415 = vpack.c.b16 %v2394, %v2393
        %v2416 = vpack.c.b16 %v2396, %v2395
        %v2417 = vpack.c.b16 %v2398, %v2397
        %v2418 = vpack.c.b16 %v2400, %v2399
        %v2419 = vpack.c.b16 %v2402, %v2401
        %v2420 = vpack.c.b16 %v2404, %v2403
        %2421 = vrot.lane.b32.xlu0 %v2405, 64
        %v2422 = vpop.permute.xlu0 %2421
        %2423 = vrot.lane.b32.xlu0 %v2406, 64
        %v2424 = vpop.permute.xlu0 %2423
        %2425 = vrot.lane.b32.xlu0 %v2407, 64
        %v2426 = vpop.permute.xlu0 %2425
        %2427 = vrot.lane.b32.xlu0 %v2408, 64
        %v2428 = vpop.permute.xlu0 %2427
        %2429 = vrot.lane.b32.xlu0 %v2409, 64
        %v2430 = vpop.permute.xlu0 %2429
        %2431 = vrot.lane.b32.xlu0 %v2410, 64
        %v2432 = vpop.permute.xlu0 %2431
        %2433 = vrot.lane.b32.xlu0 %v2411, 64
        %v2434 = vpop.permute.xlu0 %2433
        %2435 = vrot.lane.b32.xlu0 %v2412, 64
        %v2436 = vpop.permute.xlu0 %2435
        %2437 = vrot.lane.b32.xlu0 %v2413, 64
        %v2438 = vpop.permute.xlu0 %2437
        %2439 = vrot.lane.b32.xlu0 %v2414, 64
        %v2440 = vpop.permute.xlu0 %2439
        %2441 = vrot.lane.b32.xlu0 %v2415, 64
        %v2442 = vpop.permute.xlu0 %2441
        %2443 = vrot.lane.b32.xlu0 %v2416, 64
        %v2444 = vpop.permute.xlu0 %2443
        %2445 = vrot.lane.b32.xlu0 %v2417, 64
        %v2446 = vpop.permute.xlu0 %2445
        %2447 = vrot.lane.b32.xlu0 %v2418, 64
        %v2448 = vpop.permute.xlu0 %2447
        %2449 = vrot.lane.b32.xlu0 %v2419, 64
        %v2450 = vpop.permute.xlu0 %2449
        %2451 = vrot.lane.b32.xlu0 %v2420, 64
        %v2452 = vpop.permute.xlu0 %2451
        %2469 = vst.msk [vmem:[#allocation3 + $0x8] sm:$0xff] %vm2001, %v2422
        %2470 = vst.msk [vmem:[#allocation3 + $0x30] sm:$0xff] %vm2001, %v2424
        %2471 = vst.msk [vmem:[#allocation3 + $0x58] sm:$0xff] %vm2001, %v2426
        %2472 = vst.msk [vmem:[#allocation3 + $0x80] sm:$0xff] %vm2001, %v2428
        %2473 = vst.msk [vmem:[#allocation3 + $0xa8] sm:$0xff] %vm2001, %v2430
        %2474 = vst.msk [vmem:[#allocation3 + $0xd0] sm:$0xff] %vm2001, %v2432
        %2475 = vst.msk [vmem:[#allocation3 + $0xf8] sm:$0xff] %vm2001, %v2434
        %2476 = vst.msk [vmem:[#allocation3 + $0x120] sm:$0xff] %vm2001, %v2436
        %2477 = vst.msk [vmem:[#allocation3 + $0x148] sm:$0xff] %vm2001, %v2438
        %2478 = vst.msk [vmem:[#allocation3 + $0x170] sm:$0xff] %vm2001, %v2440
        %2479 = vst.msk [vmem:[#allocation3 + $0x198] sm:$0xff] %vm2001, %v2442
        %2480 = vst.msk [vmem:[#allocation3 + $0x1c0] sm:$0xff] %vm2001, %v2444
        %2481 = vst.msk [vmem:[#allocation3 + $0x1e8] sm:$0xff] %vm2001, %v2446
        %2482 = vst.msk [vmem:[#allocation3 + $0x210] sm:$0xff] %vm2001, %v2448
        %2483 = vst.msk [vmem:[#allocation3 + $0x238] sm:$0xff] %vm2001, %v2450
        %2484 = vst.msk [vmem:[#allocation3 + $0x260] sm:$0xff] %vm2001, %v2452
        %v2485 = vld [vmem:[%s1210] sm:$0xf]
        %v2486 = vld [vmem:[%s1210 + $0x4] sm:$0xf]
        %v2487 = vld [vmem:[%s1210 + $0x8] sm:$0x1]
        %v2488 = vld [vmem:[%s1210 + $0xc] sm:$0xf]
        %v2489 = vld [vmem:[%s1210 + $0x10] sm:$0xf]
        %v2490 = vld [vmem:[%s1210 + $0x14] sm:$0x1]
        %v2491 = vld [vmem:[%s1210 + $0x18] sm:$0xf]
        %v2492 = vld [vmem:[%s1210 + $0x1c] sm:$0xf]
        %v2493 = vld [vmem:[%s1210 + $0x20] sm:$0x1]
        %v2494 = vld [vmem:[%s1210 + $0x24] sm:$0xf]
        %v2495 = vld [vmem:[%s1210 + $0x28] sm:$0xf]
        %v2496 = vld [vmem:[%s1210 + $0x2c] sm:$0x1]
        %v2497 = vld [vmem:[%s1210 + $0x30] sm:$0xf]
        %v2498 = vld [vmem:[%s1210 + $0x34] sm:$0xf]
        %v2499 = vld [vmem:[%s1210 + $0x38] sm:$0x1]
        %v2500 = vld [vmem:[%s1210 + $0x3c] sm:$0xf]
        %v2501 = vld [vmem:[%s1210 + $0x40] sm:$0xf]
        %v2502 = vld [vmem:[%s1210 + $0x44] sm:$0x1]
        %v2503 = vld [vmem:[%s1210 + $0x48] sm:$0xf]
        %v2504 = vld [vmem:[%s1210 + $0x4c] sm:$0xf]
        %v2505 = vld [vmem:[%s1210 + $0x50] sm:$0x1]
        %v2506 = vld [vmem:[%s1210 + $0x54] sm:$0xf]
        %v2507 = vld [vmem:[%s1210 + $0x58] sm:$0xf]
        %v2508 = vld [vmem:[%s1210 + $0x5c] sm:$0x1]
        %v2509 = vld [vmem:[%s1210 + $0x60] sm:$0xf]
        %v2510 = vld [vmem:[%s1210 + $0x64] sm:$0xf]
        %v2511 = vld [vmem:[%s1210 + $0x68] sm:$0x1]
        %v2512 = vld [vmem:[%s1210 + $0x6c] sm:$0xf]
        %v2513 = vld [vmem:[%s1210 + $0x70] sm:$0xf]
        %v2514 = vld [vmem:[%s1210 + $0x74] sm:$0x1]
        %v2515 = vld [vmem:[%s1210 + $0x78] sm:$0xf]
        %v2516 = vld [vmem:[%s1210 + $0x7c] sm:$0xf]
        %v2517 = vld [vmem:[%s1210 + $0x80] sm:$0x1]
        %v2518 = vld [vmem:[%s1210 + $0x84] sm:$0xf]
        %v2519 = vld [vmem:[%s1210 + $0x88] sm:$0xf]
        %v2520 = vld [vmem:[%s1210 + $0x8c] sm:$0x1]
        %v2521 = vld [vmem:[%s1210 + $0x90] sm:$0xf]
        %v2522 = vld [vmem:[%s1210 + $0x94] sm:$0xf]
        %v2523 = vld [vmem:[%s1210 + $0x98] sm:$0x1]
        %v2524 = vld [vmem:[%s1210 + $0x9c] sm:$0xf]
        %v2525 = vld [vmem:[%s1210 + $0xa0] sm:$0xf]
        %v2526 = vld [vmem:[%s1210 + $0xa4] sm:$0x1]
        %v2527 = vld [vmem:[%s1210 + $0xa8] sm:$0xf]
        %v2528 = vld [vmem:[%s1210 + $0xac] sm:$0xf]
        %v2529 = vld [vmem:[%s1210 + $0xb0] sm:$0x1]
        %v2530 = vld [vmem:[%s1210 + $0xb4] sm:$0xf]
        %v2531 = vld [vmem:[%s1210 + $0xb8] sm:$0xf]
        %v2532 = vld [vmem:[%s1210 + $0xbc] sm:$0x1]
        %v2534 = vshrl.u32 %v2485, 16
        %v2536 = vrot.slane %v2534, 4
        %v2537 = vshll.u32 %v2485, 16
        %v2539 = vrot.slane %v2537, 5
        %v2540 = vor.u32 %v2536, %v2539
        %v2541 = vrot.slane %v2540, 4
        %v2543 = vshll.u32 %v2486, 16
        %v2545 = vrot.slane %v2543, 5
        %v2546 = vsel %vm1520, %v2541, %v2545
        %v2547 = vshrl.u32 %v2486, 16
        %v2549 = vrot.slane %v2547, 4
        %v2550 = vor.u32 %v2549, %v2545
        %v2551 = vrot.slane %v2550, 4
        %v2553 = vshll.u32 %v2487, 16
        %v2555 = vrot.slane %v2553, 5
        %v2556 = vsel %vm1520, %v2551, %v2555
        %v2558 = vshrl.u32 %v2488, 16
        %v2560 = vrot.slane %v2558, 4
        %v2561 = vshll.u32 %v2488, 16
        %v2563 = vrot.slane %v2561, 5
        %v2564 = vor.u32 %v2560, %v2563
        %v2565 = vrot.slane %v2564, 4
        %v2567 = vshll.u32 %v2489, 16
        %v2569 = vrot.slane %v2567, 5
        %v2570 = vsel %vm1520, %v2565, %v2569
        %v2571 = vshrl.u32 %v2489, 16
        %v2573 = vrot.slane %v2571, 4
        %v2574 = vor.u32 %v2573, %v2569
        %v2575 = vrot.slane %v2574, 4
        %v2577 = vshll.u32 %v2490, 16
        %v2579 = vrot.slane %v2577, 5
        %v2580 = vsel %vm1520, %v2575, %v2579
        %v2582 = vshrl.u32 %v2491, 16
        %v2584 = vrot.slane %v2582, 4
        %v2585 = vshll.u32 %v2491, 16
        %v2587 = vrot.slane %v2585, 5
        %v2588 = vor.u32 %v2584, %v2587
        %v2589 = vrot.slane %v2588, 4
        %v2591 = vshll.u32 %v2492, 16
        %v2593 = vrot.slane %v2591, 5
        %v2594 = vsel %vm1520, %v2589, %v2593
        %v2595 = vshrl.u32 %v2492, 16
        %v2597 = vrot.slane %v2595, 4
        %v2598 = vor.u32 %v2597, %v2593
        %v2599 = vrot.slane %v2598, 4
        %v2601 = vshll.u32 %v2493, 16
        %v2603 = vrot.slane %v2601, 5
        %v2604 = vsel %vm1520, %v2599, %v2603
        %v2606 = vshrl.u32 %v2494, 16
        %v2608 = vrot.slane %v2606, 4
        %v2609 = vshll.u32 %v2494, 16
        %v2611 = vrot.slane %v2609, 5
        %v2612 = vor.u32 %v2608, %v2611
        %v2613 = vrot.slane %v2612, 4
        %v2615 = vshll.u32 %v2495, 16
        %v2617 = vrot.slane %v2615, 5
        %v2618 = vsel %vm1520, %v2613, %v2617
        %v2619 = vshrl.u32 %v2495, 16
        %v2621 = vrot.slane %v2619, 4
        %v2622 = vor.u32 %v2621, %v2617
        %v2623 = vrot.slane %v2622, 4
        %v2625 = vshll.u32 %v2496, 16
        %v2627 = vrot.slane %v2625, 5
        %v2628 = vsel %vm1520, %v2623, %v2627
        %v2630 = vshrl.u32 %v2497, 16
        %v2632 = vrot.slane %v2630, 4
        %v2633 = vshll.u32 %v2497, 16
        %v2635 = vrot.slane %v2633, 5
        %v2636 = vor.u32 %v2632, %v2635
        %v2637 = vrot.slane %v2636, 4
        %v2639 = vshll.u32 %v2498, 16
        %v2641 = vrot.slane %v2639, 5
        %v2642 = vsel %vm1520, %v2637, %v2641
        %v2643 = vshrl.u32 %v2498, 16
        %v2645 = vrot.slane %v2643, 4
        %v2646 = vor.u32 %v2645, %v2641
        %v2647 = vrot.slane %v2646, 4
        %v2649 = vshll.u32 %v2499, 16
        %v2651 = vrot.slane %v2649, 5
        %v2652 = vsel %vm1520, %v2647, %v2651
        %v2654 = vshrl.u32 %v2500, 16
        %v2656 = vrot.slane %v2654, 4
        %v2657 = vshll.u32 %v2500, 16
        %v2659 = vrot.slane %v2657, 5
        %v2660 = vor.u32 %v2656, %v2659
        %v2661 = vrot.slane %v2660, 4
        %v2663 = vshll.u32 %v2501, 16
        %v2665 = vrot.slane %v2663, 5
        %v2666 = vsel %vm1520, %v2661, %v2665
        %v2667 = vshrl.u32 %v2501, 16
        %v2669 = vrot.slane %v2667, 4
        %v2670 = vor.u32 %v2669, %v2665
        %v2671 = vrot.slane %v2670, 4
        %v2673 = vshll.u32 %v2502, 16
        %v2675 = vrot.slane %v2673, 5
        %v2676 = vsel %vm1520, %v2671, %v2675
        %v2678 = vshrl.u32 %v2503, 16
        %v2680 = vrot.slane %v2678, 4
        %v2681 = vshll.u32 %v2503, 16
        %v2683 = vrot.slane %v2681, 5
        %v2684 = vor.u32 %v2680, %v2683
        %v2685 = vrot.slane %v2684, 4
        %v2687 = vshll.u32 %v2504, 16
        %v2689 = vrot.slane %v2687, 5
        %v2690 = vsel %vm1520, %v2685, %v2689
        %v2691 = vshrl.u32 %v2504, 16
        %v2693 = vrot.slane %v2691, 4
        %v2694 = vor.u32 %v2693, %v2689
        %v2695 = vrot.slane %v2694, 4
        %v2697 = vshll.u32 %v2505, 16
        %v2699 = vrot.slane %v2697, 5
        %v2700 = vsel %vm1520, %v2695, %v2699
        %v2702 = vshrl.u32 %v2506, 16
        %v2704 = vrot.slane %v2702, 4
        %v2705 = vshll.u32 %v2506, 16
        %v2707 = vrot.slane %v2705, 5
        %v2708 = vor.u32 %v2704, %v2707
        %v2709 = vrot.slane %v2708, 4
        %v2711 = vshll.u32 %v2507, 16
        %v2713 = vrot.slane %v2711, 5
        %v2714 = vsel %vm1520, %v2709, %v2713
        %v2715 = vshrl.u32 %v2507, 16
        %v2717 = vrot.slane %v2715, 4
        %v2718 = vor.u32 %v2717, %v2713
        %v2719 = vrot.slane %v2718, 4
        %v2721 = vshll.u32 %v2508, 16
        %v2723 = vrot.slane %v2721, 5
        %v2724 = vsel %vm1520, %v2719, %v2723
        %v2726 = vshrl.u32 %v2509, 16
        %v2728 = vrot.slane %v2726, 4
        %v2729 = vshll.u32 %v2509, 16
        %v2731 = vrot.slane %v2729, 5
        %v2732 = vor.u32 %v2728, %v2731
        %v2733 = vrot.slane %v2732, 4
        %v2735 = vshll.u32 %v2510, 16
        %v2737 = vrot.slane %v2735, 5
        %v2738 = vsel %vm1520, %v2733, %v2737
        %v2739 = vshrl.u32 %v2510, 16
        %v2741 = vrot.slane %v2739, 4
        %v2742 = vor.u32 %v2741, %v2737
        %v2743 = vrot.slane %v2742, 4
        %v2745 = vshll.u32 %v2511, 16
        %v2747 = vrot.slane %v2745, 5
        %v2748 = vsel %vm1520, %v2743, %v2747
        %v2750 = vshrl.u32 %v2512, 16
        %v2752 = vrot.slane %v2750, 4
        %v2753 = vshll.u32 %v2512, 16
        %v2755 = vrot.slane %v2753, 5
        %v2756 = vor.u32 %v2752, %v2755
        %v2757 = vrot.slane %v2756, 4
        %v2759 = vshll.u32 %v2513, 16
        %v2761 = vrot.slane %v2759, 5
        %v2762 = vsel %vm1520, %v2757, %v2761
        %v2763 = vshrl.u32 %v2513, 16
        %v2765 = vrot.slane %v2763, 4
        %v2766 = vor.u32 %v2765, %v2761
        %v2767 = vrot.slane %v2766, 4
        %v2769 = vshll.u32 %v2514, 16
        %v2771 = vrot.slane %v2769, 5
        %v2772 = vsel %vm1520, %v2767, %v2771
        %v2774 = vshrl.u32 %v2515, 16
        %v2776 = vrot.slane %v2774, 4
        %v2777 = vshll.u32 %v2515, 16
        %v2779 = vrot.slane %v2777, 5
        %v2780 = vor.u32 %v2776, %v2779
        %v2781 = vrot.slane %v2780, 4
        %v2783 = vshll.u32 %v2516, 16
        %v2785 = vrot.slane %v2783, 5
        %v2786 = vsel %vm1520, %v2781, %v2785
        %v2787 = vshrl.u32 %v2516, 16
        %v2789 = vrot.slane %v2787, 4
        %v2790 = vor.u32 %v2789, %v2785
        %v2791 = vrot.slane %v2790, 4
        %v2793 = vshll.u32 %v2517, 16
        %v2795 = vrot.slane %v2793, 5
        %v2796 = vsel %vm1520, %v2791, %v2795
        %v2798 = vshrl.u32 %v2518, 16
        %v2800 = vrot.slane %v2798, 4
        %v2801 = vshll.u32 %v2518, 16
        %v2803 = vrot.slane %v2801, 5
        %v2804 = vor.u32 %v2800, %v2803
        %v2805 = vrot.slane %v2804, 4
        %v2807 = vshll.u32 %v2519, 16
        %v2809 = vrot.slane %v2807, 5
        %v2810 = vsel %vm1520, %v2805, %v2809
        %v2811 = vshrl.u32 %v2519, 16
        %v2813 = vrot.slane %v2811, 4
        %v2814 = vor.u32 %v2813, %v2809
        %v2815 = vrot.slane %v2814, 4
        %v2817 = vshll.u32 %v2520, 16
        %v2819 = vrot.slane %v2817, 5
        %v2820 = vsel %vm1520, %v2815, %v2819
        %v2822 = vshrl.u32 %v2521, 16
        %v2824 = vrot.slane %v2822, 4
        %v2825 = vshll.u32 %v2521, 16
        %v2827 = vrot.slane %v2825, 5
        %v2828 = vor.u32 %v2824, %v2827
        %v2829 = vrot.slane %v2828, 4
        %v2831 = vshll.u32 %v2522, 16
        %v2833 = vrot.slane %v2831, 5
        %v2834 = vsel %vm1520, %v2829, %v2833
        %v2835 = vshrl.u32 %v2522, 16
        %v2837 = vrot.slane %v2835, 4
        %v2838 = vor.u32 %v2837, %v2833
        %v2839 = vrot.slane %v2838, 4
        %v2841 = vshll.u32 %v2523, 16
        %v2843 = vrot.slane %v2841, 5
        %v2844 = vsel %vm1520, %v2839, %v2843
        %v2846 = vshrl.u32 %v2524, 16
        %v2848 = vrot.slane %v2846, 4
        %v2849 = vshll.u32 %v2524, 16
        %v2851 = vrot.slane %v2849, 5
        %v2852 = vor.u32 %v2848, %v2851
        %v2853 = vrot.slane %v2852, 4
        %v2855 = vshll.u32 %v2525, 16
        %v2857 = vrot.slane %v2855, 5
        %v2858 = vsel %vm1520, %v2853, %v2857
        %v2859 = vshrl.u32 %v2525, 16
        %v2861 = vrot.slane %v2859, 4
        %v2862 = vor.u32 %v2861, %v2857
        %v2863 = vrot.slane %v2862, 4
        %v2865 = vshll.u32 %v2526, 16
        %v2867 = vrot.slane %v2865, 5
        %v2868 = vsel %vm1520, %v2863, %v2867
        %v2870 = vshrl.u32 %v2527, 16
        %v2872 = vrot.slane %v2870, 4
        %v2873 = vshll.u32 %v2527, 16
        %v2875 = vrot.slane %v2873, 5
        %v2876 = vor.u32 %v2872, %v2875
        %v2877 = vrot.slane %v2876, 4
        %v2879 = vshll.u32 %v2528, 16
        %v2881 = vrot.slane %v2879, 5
        %v2882 = vsel %vm1520, %v2877, %v2881
        %v2883 = vshrl.u32 %v2528, 16
        %v2885 = vrot.slane %v2883, 4
        %v2886 = vor.u32 %v2885, %v2881
        %v2887 = vrot.slane %v2886, 4
        %v2889 = vshll.u32 %v2529, 16
        %v2891 = vrot.slane %v2889, 5
        %v2892 = vsel %vm1520, %v2887, %v2891
        %v2894 = vshrl.u32 %v2530, 16
        %v2896 = vrot.slane %v2894, 4
        %v2897 = vshll.u32 %v2530, 16
        %v2899 = vrot.slane %v2897, 5
        %v2900 = vor.u32 %v2896, %v2899
        %v2901 = vrot.slane %v2900, 4
        %v2903 = vshll.u32 %v2531, 16
        %v2905 = vrot.slane %v2903, 5
        %v2906 = vsel %vm1520, %v2901, %v2905
        %v2907 = vshrl.u32 %v2531, 16
        %v2909 = vrot.slane %v2907, 4
        %v2910 = vor.u32 %v2909, %v2905
        %v2911 = vrot.slane %v2910, 4
        %v2913 = vshll.u32 %v2532, 16
        %v2915 = vrot.slane %v2913, 5
        %v2916 = vsel %vm1520, %v2911, %v2915
        %v2917 = vunpack.c.l.b16 %v2546
        %v2918 = vunpack.c.l.b16 %v2556
        %v2919 = vunpack.c.l.b16 %v2570
        %v2920 = vunpack.c.l.b16 %v2580
        %v2921 = vunpack.c.l.b16 %v2594
        %v2922 = vunpack.c.l.b16 %v2604
        %v2923 = vunpack.c.l.b16 %v2618
        %v2924 = vunpack.c.l.b16 %v2628
        %v2925 = vunpack.c.l.b16 %v2642
        %v2926 = vunpack.c.l.b16 %v2652
        %v2927 = vunpack.c.l.b16 %v2666
        %v2928 = vunpack.c.l.b16 %v2676
        %v2929 = vunpack.c.l.b16 %v2690
        %v2930 = vunpack.c.l.b16 %v2700
        %v2931 = vunpack.c.l.b16 %v2714
        %v2932 = vunpack.c.l.b16 %v2724
        %v2933 = vunpack.c.l.b16 %v2738
        %v2934 = vunpack.c.l.b16 %v2748
        %v2935 = vunpack.c.l.b16 %v2762
        %v2936 = vunpack.c.l.b16 %v2772
        %v2937 = vunpack.c.l.b16 %v2786
        %v2938 = vunpack.c.l.b16 %v2796
        %v2939 = vunpack.c.l.b16 %v2810
        %v2940 = vunpack.c.l.b16 %v2820
        %v2941 = vunpack.c.l.b16 %v2834
        %v2942 = vunpack.c.l.b16 %v2844
        %v2943 = vunpack.c.l.b16 %v2858
        %v2944 = vunpack.c.l.b16 %v2868
        %v2945 = vunpack.c.l.b16 %v2882
        %v2946 = vunpack.c.l.b16 %v2892
        %v2947 = vunpack.c.l.b16 %v2906
        %v2948 = vunpack.c.l.b16 %v2916
        %v2949 = vpack.c.b16 %v2918, %v2917
        %v2950 = vpack.c.b16 %v2920, %v2919
        %v2951 = vpack.c.b16 %v2922, %v2921
        %v2952 = vpack.c.b16 %v2924, %v2923
        %v2953 = vpack.c.b16 %v2926, %v2925
        %v2954 = vpack.c.b16 %v2928, %v2927
        %v2955 = vpack.c.b16 %v2930, %v2929
        %v2956 = vpack.c.b16 %v2932, %v2931
        %v2957 = vpack.c.b16 %v2934, %v2933
        %v2958 = vpack.c.b16 %v2936, %v2935
        %v2959 = vpack.c.b16 %v2938, %v2937
        %v2960 = vpack.c.b16 %v2940, %v2939
        %v2961 = vpack.c.b16 %v2942, %v2941
        %v2962 = vpack.c.b16 %v2944, %v2943
        %v2963 = vpack.c.b16 %v2946, %v2945
        %v2964 = vpack.c.b16 %v2948, %v2947
        %2981 = vst.msk [vmem:[#allocation3 + $0x10] sm:$0xff] %vm1453, %v2949
        %2982 = vst.msk [vmem:[#allocation3 + $0x38] sm:$0xff] %vm1453, %v2950
        %2983 = vst.msk [vmem:[#allocation3 + $0x60] sm:$0xff] %vm1453, %v2951
        %2984 = vst.msk [vmem:[#allocation3 + $0x88] sm:$0xff] %vm1453, %v2952
        %2985 = vst.msk [vmem:[#allocation3 + $0xb0] sm:$0xff] %vm1453, %v2953
        %2986 = vst.msk [vmem:[#allocation3 + $0xd8] sm:$0xff] %vm1453, %v2954
        %2987 = vst.msk [vmem:[#allocation3 + $0x100] sm:$0xff] %vm1453, %v2955
        %2988 = vst.msk [vmem:[#allocation3 + $0x128] sm:$0xff] %vm1453, %v2956
        %2989 = vst.msk [vmem:[#allocation3 + $0x150] sm:$0xff] %vm1453, %v2957
        %2990 = vst.msk [vmem:[#allocation3 + $0x178] sm:$0xff] %vm1453, %v2958
        %2991 = vst.msk [vmem:[#allocation3 + $0x1a0] sm:$0xff] %vm1453, %v2959
        %2992 = vst.msk [vmem:[#allocation3 + $0x1c8] sm:$0xff] %vm1453, %v2960
        %2993 = vst.msk [vmem:[#allocation3 + $0x1f0] sm:$0xff] %vm1453, %v2961
        %2994 = vst.msk [vmem:[#allocation3 + $0x218] sm:$0xff] %vm1453, %v2962
        %2995 = vst.msk [vmem:[#allocation3 + $0x240] sm:$0xff] %vm1453, %v2963
        %2996 = vst.msk [vmem:[#allocation3 + $0x268] sm:$0xff] %vm1453, %v2964
        %v2997 = vld [vmem:[%s1210] sm:$0xe]
        %v2998 = vld [vmem:[%s1210 + $0x4] sm:$0xf]
        %v2999 = vld [vmem:[%s1210 + $0x8] sm:$0x1]
        %v3000 = vld [vmem:[%s1210 + $0xc] sm:$0xe]
        %v3001 = vld [vmem:[%s1210 + $0x10] sm:$0xf]
        %v3002 = vld [vmem:[%s1210 + $0x14] sm:$0x1]
        %v3003 = vld [vmem:[%s1210 + $0x18] sm:$0xe]
        %v3004 = vld [vmem:[%s1210 + $0x1c] sm:$0xf]
        %v3005 = vld [vmem:[%s1210 + $0x20] sm:$0x1]
        %v3006 = vld [vmem:[%s1210 + $0x24] sm:$0xe]
        %v3007 = vld [vmem:[%s1210 + $0x28] sm:$0xf]
        %v3008 = vld [vmem:[%s1210 + $0x2c] sm:$0x1]
        %v3009 = vld [vmem:[%s1210 + $0x30] sm:$0xe]
        %v3010 = vld [vmem:[%s1210 + $0x34] sm:$0xf]
        %v3011 = vld [vmem:[%s1210 + $0x38] sm:$0x1]
        %v3012 = vld [vmem:[%s1210 + $0x3c] sm:$0xe]
        %v3013 = vld [vmem:[%s1210 + $0x40] sm:$0xf]
        %v3014 = vld [vmem:[%s1210 + $0x44] sm:$0x1]
        %v3015 = vld [vmem:[%s1210 + $0x48] sm:$0xe]
        %v3016 = vld [vmem:[%s1210 + $0x4c] sm:$0xf]
        %v3017 = vld [vmem:[%s1210 + $0x50] sm:$0x1]
        %v3018 = vld [vmem:[%s1210 + $0x54] sm:$0xe]
        %v3019 = vld [vmem:[%s1210 + $0x58] sm:$0xf]
        %v3020 = vld [vmem:[%s1210 + $0x5c] sm:$0x1]
        %v3021 = vld [vmem:[%s1210 + $0x60] sm:$0xe]
        %v3022 = vld [vmem:[%s1210 + $0x64] sm:$0xf]
        %v3023 = vld [vmem:[%s1210 + $0x68] sm:$0x1]
        %v3024 = vld [vmem:[%s1210 + $0x6c] sm:$0xe]
        %v3025 = vld [vmem:[%s1210 + $0x70] sm:$0xf]
        %v3026 = vld [vmem:[%s1210 + $0x74] sm:$0x1]
        %v3027 = vld [vmem:[%s1210 + $0x78] sm:$0xe]
        %v3028 = vld [vmem:[%s1210 + $0x7c] sm:$0xf]
        %v3029 = vld [vmem:[%s1210 + $0x80] sm:$0x1]
        %v3030 = vld [vmem:[%s1210 + $0x84] sm:$0xe]
        %v3031 = vld [vmem:[%s1210 + $0x88] sm:$0xf]
        %v3032 = vld [vmem:[%s1210 + $0x8c] sm:$0x1]
        %v3033 = vld [vmem:[%s1210 + $0x90] sm:$0xe]
        %v3034 = vld [vmem:[%s1210 + $0x94] sm:$0xf]
        %v3035 = vld [vmem:[%s1210 + $0x98] sm:$0x1]
        %v3036 = vld [vmem:[%s1210 + $0x9c] sm:$0xe]
        %v3037 = vld [vmem:[%s1210 + $0xa0] sm:$0xf]
        %v3038 = vld [vmem:[%s1210 + $0xa4] sm:$0x1]
        %v3039 = vld [vmem:[%s1210 + $0xa8] sm:$0xe]
        %v3040 = vld [vmem:[%s1210 + $0xac] sm:$0xf]
        %v3041 = vld [vmem:[%s1210 + $0xb0] sm:$0x1]
        %v3042 = vld [vmem:[%s1210 + $0xb4] sm:$0xe]
        %v3043 = vld [vmem:[%s1210 + $0xb8] sm:$0xf]
        %v3044 = vld [vmem:[%s1210 + $0xbc] sm:$0x1]
        %v3093 = vrot.slane %v2997, 5
        %v3094 = vrot.slane %v3093, 4
        %v3095 = vrot.slane %v2998, 5
        %v3096 = vsel %vm2116, %v3094, %v3095
        %v3097 = vrot.slane %v3095, 4
        %v3098 = vrot.slane %v2999, 5
        %v3099 = vsel %vm2116, %v3097, %v3098
        %v3100 = vrot.slane %v3000, 5
        %v3101 = vrot.slane %v3100, 4
        %v3102 = vrot.slane %v3001, 5
        %v3103 = vsel %vm2116, %v3101, %v3102
        %v3104 = vrot.slane %v3102, 4
        %v3105 = vrot.slane %v3002, 5
        %v3106 = vsel %vm2116, %v3104, %v3105
        %v3107 = vrot.slane %v3003, 5
        %v3108 = vrot.slane %v3107, 4
        %v3109 = vrot.slane %v3004, 5
        %v3110 = vsel %vm2116, %v3108, %v3109
        %v3111 = vrot.slane %v3109, 4
        %v3112 = vrot.slane %v3005, 5
        %v3113 = vsel %vm2116, %v3111, %v3112
        %v3114 = vrot.slane %v3006, 5
        %v3115 = vrot.slane %v3114, 4
        %v3116 = vrot.slane %v3007, 5
        %v3117 = vsel %vm2116, %v3115, %v3116
        %v3118 = vrot.slane %v3116, 4
        %v3119 = vrot.slane %v3008, 5
        %v3120 = vsel %vm2116, %v3118, %v3119
        %v3121 = vrot.slane %v3009, 5
        %v3122 = vrot.slane %v3121, 4
        %v3123 = vrot.slane %v3010, 5
        %v3124 = vsel %vm2116, %v3122, %v3123
        %v3125 = vrot.slane %v3123, 4
        %v3126 = vrot.slane %v3011, 5
        %v3127 = vsel %vm2116, %v3125, %v3126
        %v3128 = vrot.slane %v3012, 5
        %v3129 = vrot.slane %v3128, 4
        %v3130 = vrot.slane %v3013, 5
        %v3131 = vsel %vm2116, %v3129, %v3130
        %v3132 = vrot.slane %v3130, 4
        %v3133 = vrot.slane %v3014, 5
        %v3134 = vsel %vm2116, %v3132, %v3133
        %v3135 = vrot.slane %v3015, 5
        %v3136 = vrot.slane %v3135, 4
        %v3137 = vrot.slane %v3016, 5
        %v3138 = vsel %vm2116, %v3136, %v3137
        %v3139 = vrot.slane %v3137, 4
        %v3140 = vrot.slane %v3017, 5
        %v3141 = vsel %vm2116, %v3139, %v3140
        %v3142 = vrot.slane %v3018, 5
        %v3143 = vrot.slane %v3142, 4
        %v3144 = vrot.slane %v3019, 5
        %v3145 = vsel %vm2116, %v3143, %v3144
        %v3146 = vrot.slane %v3144, 4
        %v3147 = vrot.slane %v3020, 5
        %v3148 = vsel %vm2116, %v3146, %v3147
        %v3149 = vrot.slane %v3021, 5
        %v3150 = vrot.slane %v3149, 4
        %v3151 = vrot.slane %v3022, 5
        %v3152 = vsel %vm2116, %v3150, %v3151
        %v3153 = vrot.slane %v3151, 4
        %v3154 = vrot.slane %v3023, 5
        %v3155 = vsel %vm2116, %v3153, %v3154
        %v3156 = vrot.slane %v3024, 5
        %v3157 = vrot.slane %v3156, 4
        %v3158 = vrot.slane %v3025, 5
        %v3159 = vsel %vm2116, %v3157, %v3158
        %v3160 = vrot.slane %v3158, 4
        %v3161 = vrot.slane %v3026, 5
        %v3162 = vsel %vm2116, %v3160, %v3161
        %v3163 = vrot.slane %v3027, 5
        %v3164 = vrot.slane %v3163, 4
        %v3165 = vrot.slane %v3028, 5
        %v3166 = vsel %vm2116, %v3164, %v3165
        %v3167 = vrot.slane %v3165, 4
        %v3168 = vrot.slane %v3029, 5
        %v3169 = vsel %vm2116, %v3167, %v3168
        %v3170 = vrot.slane %v3030, 5
        %v3171 = vrot.slane %v3170, 4
        %v3172 = vrot.slane %v3031, 5
        %v3173 = vsel %vm2116, %v3171, %v3172
        %v3174 = vrot.slane %v3172, 4
        %v3175 = vrot.slane %v3032, 5
        %v3176 = vsel %vm2116, %v3174, %v3175
        %v3177 = vrot.slane %v3033, 5
        %v3178 = vrot.slane %v3177, 4
        %v3179 = vrot.slane %v3034, 5
        %v3180 = vsel %vm2116, %v3178, %v3179
        %v3181 = vrot.slane %v3179, 4
        %v3182 = vrot.slane %v3035, 5
        %v3183 = vsel %vm2116, %v3181, %v3182
        %v3184 = vrot.slane %v3036, 5
        %v3185 = vrot.slane %v3184, 4
        %v3186 = vrot.slane %v3037, 5
        %v3187 = vsel %vm2116, %v3185, %v3186
        %v3188 = vrot.slane %v3186, 4
        %v3189 = vrot.slane %v3038, 5
        %v3190 = vsel %vm2116, %v3188, %v3189
        %v3191 = vrot.slane %v3039, 5
        %v3192 = vrot.slane %v3191, 4
        %v3193 = vrot.slane %v3040, 5
        %v3194 = vsel %vm2116, %v3192, %v3193
        %v3195 = vrot.slane %v3193, 4
        %v3196 = vrot.slane %v3041, 5
        %v3197 = vsel %vm2116, %v3195, %v3196
        %v3198 = vrot.slane %v3042, 5
        %v3199 = vrot.slane %v3198, 4
        %v3200 = vrot.slane %v3043, 5
        %v3201 = vsel %vm2116, %v3199, %v3200
        %v3202 = vrot.slane %v3200, 4
        %v3203 = vrot.slane %v3044, 5
        %v3204 = vsel %vm2116, %v3202, %v3203
        %v3205 = vunpack.c.l.b16 %v3096
        %v3206 = vunpack.c.l.b16 %v3099
        %v3207 = vunpack.c.l.b16 %v3103
        %v3208 = vunpack.c.l.b16 %v3106
        %v3209 = vunpack.c.l.b16 %v3110
        %v3210 = vunpack.c.l.b16 %v3113
        %v3211 = vunpack.c.l.b16 %v3117
        %v3212 = vunpack.c.l.b16 %v3120
        %v3213 = vunpack.c.l.b16 %v3124
        %v3214 = vunpack.c.l.b16 %v3127
        %v3215 = vunpack.c.l.b16 %v3131
        %v3216 = vunpack.c.l.b16 %v3134
        %v3217 = vunpack.c.l.b16 %v3138
        %v3218 = vunpack.c.l.b16 %v3141
        %v3219 = vunpack.c.l.b16 %v3145
        %v3220 = vunpack.c.l.b16 %v3148
        %v3221 = vunpack.c.l.b16 %v3152
        %v3222 = vunpack.c.l.b16 %v3155
        %v3223 = vunpack.c.l.b16 %v3159
        %v3224 = vunpack.c.l.b16 %v3162
        %v3225 = vunpack.c.l.b16 %v3166
        %v3226 = vunpack.c.l.b16 %v3169
        %v3227 = vunpack.c.l.b16 %v3173
        %v3228 = vunpack.c.l.b16 %v3176
        %v3229 = vunpack.c.l.b16 %v3180
        %v3230 = vunpack.c.l.b16 %v3183
        %v3231 = vunpack.c.l.b16 %v3187
        %v3232 = vunpack.c.l.b16 %v3190
        %v3233 = vunpack.c.l.b16 %v3194
        %v3234 = vunpack.c.l.b16 %v3197
        %v3235 = vunpack.c.l.b16 %v3201
        %v3236 = vunpack.c.l.b16 %v3204
        %v3237 = vpack.c.b16 %v3206, %v3205
        %v3238 = vpack.c.b16 %v3208, %v3207
        %v3239 = vpack.c.b16 %v3210, %v3209
        %v3240 = vpack.c.b16 %v3212, %v3211
        %v3241 = vpack.c.b16 %v3214, %v3213
        %v3242 = vpack.c.b16 %v3216, %v3215
        %v3243 = vpack.c.b16 %v3218, %v3217
        %v3244 = vpack.c.b16 %v3220, %v3219
        %v3245 = vpack.c.b16 %v3222, %v3221
        %v3246 = vpack.c.b16 %v3224, %v3223
        %v3247 = vpack.c.b16 %v3226, %v3225
        %v3248 = vpack.c.b16 %v3228, %v3227
        %v3249 = vpack.c.b16 %v3230, %v3229
        %v3250 = vpack.c.b16 %v3232, %v3231
        %v3251 = vpack.c.b16 %v3234, %v3233
        %v3252 = vpack.c.b16 %v3236, %v3235
        %3253 = vrot.lane.b32.xlu0 %v3237, 64
        %v3254 = vpop.permute.xlu0 %3253
        %3255 = vrot.lane.b32.xlu0 %v3238, 64
        %v3256 = vpop.permute.xlu0 %3255
        %3257 = vrot.lane.b32.xlu0 %v3239, 64
        %v3258 = vpop.permute.xlu0 %3257
        %3259 = vrot.lane.b32.xlu0 %v3240, 64
        %v3260 = vpop.permute.xlu0 %3259
        %3261 = vrot.lane.b32.xlu0 %v3241, 64
        %v3262 = vpop.permute.xlu0 %3261
        %3263 = vrot.lane.b32.xlu0 %v3242, 64
        %v3264 = vpop.permute.xlu0 %3263
        %3265 = vrot.lane.b32.xlu0 %v3243, 64
        %v3266 = vpop.permute.xlu0 %3265
        %3267 = vrot.lane.b32.xlu0 %v3244, 64
        %v3268 = vpop.permute.xlu0 %3267
        %3269 = vrot.lane.b32.xlu0 %v3245, 64
        %v3270 = vpop.permute.xlu0 %3269
        %3271 = vrot.lane.b32.xlu0 %v3246, 64
        %v3272 = vpop.permute.xlu0 %3271
        %3273 = vrot.lane.b32.xlu0 %v3247, 64
        %v3274 = vpop.permute.xlu0 %3273
        %3275 = vrot.lane.b32.xlu0 %v3248, 64
        %v3276 = vpop.permute.xlu0 %3275
        %3277 = vrot.lane.b32.xlu0 %v3249, 64
        %v3278 = vpop.permute.xlu0 %3277
        %3279 = vrot.lane.b32.xlu0 %v3250, 64
        %v3280 = vpop.permute.xlu0 %3279
        %3281 = vrot.lane.b32.xlu0 %v3251, 64
        %v3282 = vpop.permute.xlu0 %3281
        %3283 = vrot.lane.b32.xlu0 %v3252, 64
        %v3284 = vpop.permute.xlu0 %3283
        %3301 = vst.msk [vmem:[#allocation3 + $0x10] sm:$0xff] %vm2001, %v3254
        %3302 = vst.msk [vmem:[#allocation3 + $0x38] sm:$0xff] %vm2001, %v3256
        %3303 = vst.msk [vmem:[#allocation3 + $0x60] sm:$0xff] %vm2001, %v3258
        %3304 = vst.msk [vmem:[#allocation3 + $0x88] sm:$0xff] %vm2001, %v3260
        %3305 = vst.msk [vmem:[#allocation3 + $0xb0] sm:$0xff] %vm2001, %v3262
        %3306 = vst.msk [vmem:[#allocation3 + $0xd8] sm:$0xff] %vm2001, %v3264
        %3307 = vst.msk [vmem:[#allocation3 + $0x100] sm:$0xff] %vm2001, %v3266
        %3308 = vst.msk [vmem:[#allocation3 + $0x128] sm:$0xff] %vm2001, %v3268
        %3309 = vst.msk [vmem:[#allocation3 + $0x150] sm:$0xff] %vm2001, %v3270
        %3310 = vst.msk [vmem:[#allocation3 + $0x178] sm:$0xff] %vm2001, %v3272
        %3311 = vst.msk [vmem:[#allocation3 + $0x1a0] sm:$0xff] %vm2001, %v3274
        %3312 = vst.msk [vmem:[#allocation3 + $0x1c8] sm:$0xff] %vm2001, %v3276
        %3313 = vst.msk [vmem:[#allocation3 + $0x1f0] sm:$0xff] %vm2001, %v3278
        %3314 = vst.msk [vmem:[#allocation3 + $0x218] sm:$0xff] %vm2001, %v3280
        %3315 = vst.msk [vmem:[#allocation3 + $0x240] sm:$0xff] %vm2001, %v3282
        %3316 = vst.msk [vmem:[#allocation3 + $0x268] sm:$0xff] %vm2001, %v3284
        %s3317 = scalar_lea.vmem [#allocation2], 24
        %v3318 = vld [vmem:[%s3317] sm:$0xf]
        %v3319 = vld [vmem:[%s3317 + $0x4] sm:$0xf]
        %v3320 = vld [vmem:[%s3317 + $0xc] sm:$0xf]
        %v3321 = vld [vmem:[%s3317 + $0x10] sm:$0xf]
        %v3322 = vld [vmem:[%s3317 + $0x18] sm:$0xf]
        %v3323 = vld [vmem:[%s3317 + $0x1c] sm:$0xf]
        %v3324 = vld [vmem:[%s3317 + $0x24] sm:$0xf]
        %v3325 = vld [vmem:[%s3317 + $0x28] sm:$0xf]
        %v3326 = vld [vmem:[%s3317 + $0x30] sm:$0xf]
        %v3327 = vld [vmem:[%s3317 + $0x34] sm:$0xf]
        %v3328 = vld [vmem:[%s3317 + $0x3c] sm:$0xf]
        %v3329 = vld [vmem:[%s3317 + $0x40] sm:$0xf]
        %v3330 = vld [vmem:[%s3317 + $0x48] sm:$0xf]
        %v3331 = vld [vmem:[%s3317 + $0x4c] sm:$0xf]
        %v3332 = vld [vmem:[%s3317 + $0x54] sm:$0xf]
        %v3333 = vld [vmem:[%s3317 + $0x58] sm:$0xf]
        %v3334 = vld [vmem:[%s3317 + $0x60] sm:$0xf]
        %v3335 = vld [vmem:[%s3317 + $0x64] sm:$0xf]
        %v3336 = vld [vmem:[%s3317 + $0x6c] sm:$0xf]
        %v3337 = vld [vmem:[%s3317 + $0x70] sm:$0xf]
        %v3338 = vld [vmem:[%s3317 + $0x78] sm:$0xf]
        %v3339 = vld [vmem:[%s3317 + $0x7c] sm:$0xf]
        %v3340 = vld [vmem:[%s3317 + $0x84] sm:$0xf]
        %v3341 = vld [vmem:[%s3317 + $0x88] sm:$0xf]
        %v3342 = vld [vmem:[%s3317 + $0x90] sm:$0xf]
        %v3343 = vld [vmem:[%s3317 + $0x94] sm:$0xf]
        %v3344 = vld [vmem:[%s3317 + $0x9c] sm:$0xf]
        %v3345 = vld [vmem:[%s3317 + $0xa0] sm:$0xf]
        %v3346 = vld [vmem:[%s3317 + $0xa8] sm:$0xf]
        %v3347 = vld [vmem:[%s3317 + $0xac] sm:$0xf]
        %v3348 = vld [vmem:[%s3317 + $0xb4] sm:$0xf]
        %v3349 = vld [vmem:[%s3317 + $0xb8] sm:$0xf]
        %v3382 = vunpack.c.l.b16 %v3318
        %v3383 = vunpack.c.l.b16 %v3319
        %v3384 = vunpack.c.l.b16 %v3320
        %v3385 = vunpack.c.l.b16 %v3321
        %v3386 = vunpack.c.l.b16 %v3322
        %v3387 = vunpack.c.l.b16 %v3323
        %v3388 = vunpack.c.l.b16 %v3324
        %v3389 = vunpack.c.l.b16 %v3325
        %v3390 = vunpack.c.l.b16 %v3326
        %v3391 = vunpack.c.l.b16 %v3327
        %v3392 = vunpack.c.l.b16 %v3328
        %v3393 = vunpack.c.l.b16 %v3329
        %v3394 = vunpack.c.l.b16 %v3330
        %v3395 = vunpack.c.l.b16 %v3331
        %v3396 = vunpack.c.l.b16 %v3332
        %v3397 = vunpack.c.l.b16 %v3333
        %v3398 = vunpack.c.l.b16 %v3334
        %v3399 = vunpack.c.l.b16 %v3335
        %v3400 = vunpack.c.l.b16 %v3336
        %v3401 = vunpack.c.l.b16 %v3337
        %v3402 = vunpack.c.l.b16 %v3338
        %v3403 = vunpack.c.l.b16 %v3339
        %v3404 = vunpack.c.l.b16 %v3340
        %v3405 = vunpack.c.l.b16 %v3341
        %v3406 = vunpack.c.l.b16 %v3342
        %v3407 = vunpack.c.l.b16 %v3343
        %v3408 = vunpack.c.l.b16 %v3344
        %v3409 = vunpack.c.l.b16 %v3345
        %v3410 = vunpack.c.l.b16 %v3346
        %v3411 = vunpack.c.l.b16 %v3347
        %v3412 = vunpack.c.l.b16 %v3348
        %v3413 = vunpack.c.l.b16 %v3349
        %v3414 = vpack.c.b16 %v3383, %v3382
        %v3415 = vpack.c.b16 %v3385, %v3384
        %v3416 = vpack.c.b16 %v3387, %v3386
        %v3417 = vpack.c.b16 %v3389, %v3388
        %v3418 = vpack.c.b16 %v3391, %v3390
        %v3419 = vpack.c.b16 %v3393, %v3392
        %v3420 = vpack.c.b16 %v3395, %v3394
        %v3421 = vpack.c.b16 %v3397, %v3396
        %v3422 = vpack.c.b16 %v3399, %v3398
        %v3423 = vpack.c.b16 %v3401, %v3400
        %v3424 = vpack.c.b16 %v3403, %v3402
        %v3425 = vpack.c.b16 %v3405, %v3404
        %v3426 = vpack.c.b16 %v3407, %v3406
        %v3427 = vpack.c.b16 %v3409, %v3408
        %v3428 = vpack.c.b16 %v3411, %v3410
        %v3429 = vpack.c.b16 %v3413, %v3412
        %3446 = vst.msk [vmem:[#allocation3 + $0x18] sm:$0xff] %vm1453, %v3414
        %3447 = vst.msk [vmem:[#allocation3 + $0x40] sm:$0xff] %vm1453, %v3415
        %3448 = vst.msk [vmem:[#allocation3 + $0x68] sm:$0xff] %vm1453, %v3416
        %3449 = vst.msk [vmem:[#allocation3 + $0x90] sm:$0xff] %vm1453, %v3417
        %3450 = vst.msk [vmem:[#allocation3 + $0xb8] sm:$0xff] %vm1453, %v3418
        %3451 = vst.msk [vmem:[#allocation3 + $0xe0] sm:$0xff] %vm1453, %v3419
        %3452 = vst.msk [vmem:[#allocation3 + $0x108] sm:$0xff] %vm1453, %v3420
        %3453 = vst.msk [vmem:[#allocation3 + $0x130] sm:$0xff] %vm1453, %v3421
        %3454 = vst.msk [vmem:[#allocation3 + $0x158] sm:$0xff] %vm1453, %v3422
        %3455 = vst.msk [vmem:[#allocation3 + $0x180] sm:$0xff] %vm1453, %v3423
        %3456 = vst.msk [vmem:[#allocation3 + $0x1a8] sm:$0xff] %vm1453, %v3424
        %3457 = vst.msk [vmem:[#allocation3 + $0x1d0] sm:$0xff] %vm1453, %v3425
        %3458 = vst.msk [vmem:[#allocation3 + $0x1f8] sm:$0xff] %vm1453, %v3426
        %3459 = vst.msk [vmem:[#allocation3 + $0x220] sm:$0xff] %vm1453, %v3427
        %3460 = vst.msk [vmem:[#allocation3 + $0x248] sm:$0xff] %vm1453, %v3428
        %3461 = vst.msk [vmem:[#allocation3 + $0x270] sm:$0xff] %vm1453, %v3429
        %v3462 = vld [vmem:[%s3317] sm:$0xf]
        %v3463 = vld [vmem:[%s3317 + $0x4] sm:$0xf]
        %v3464 = vld [vmem:[%s3317 + $0x8] sm:$0x1]
        %v3465 = vld [vmem:[%s3317 + $0xc] sm:$0xf]
        %v3466 = vld [vmem:[%s3317 + $0x10] sm:$0xf]
        %v3467 = vld [vmem:[%s3317 + $0x14] sm:$0x1]
        %v3468 = vld [vmem:[%s3317 + $0x18] sm:$0xf]
        %v3469 = vld [vmem:[%s3317 + $0x1c] sm:$0xf]
        %v3470 = vld [vmem:[%s3317 + $0x20] sm:$0x1]
        %v3471 = vld [vmem:[%s3317 + $0x24] sm:$0xf]
        %v3472 = vld [vmem:[%s3317 + $0x28] sm:$0xf]
        %v3473 = vld [vmem:[%s3317 + $0x2c] sm:$0x1]
        %v3474 = vld [vmem:[%s3317 + $0x30] sm:$0xf]
        %v3475 = vld [vmem:[%s3317 + $0x34] sm:$0xf]
        %v3476 = vld [vmem:[%s3317 + $0x38] sm:$0x1]
        %v3477 = vld [vmem:[%s3317 + $0x3c] sm:$0xf]
        %v3478 = vld [vmem:[%s3317 + $0x40] sm:$0xf]
        %v3479 = vld [vmem:[%s3317 + $0x44] sm:$0x1]
        %v3480 = vld [vmem:[%s3317 + $0x48] sm:$0xf]
        %v3481 = vld [vmem:[%s3317 + $0x4c] sm:$0xf]
        %v3482 = vld [vmem:[%s3317 + $0x50] sm:$0x1]
        %v3483 = vld [vmem:[%s3317 + $0x54] sm:$0xf]
        %v3484 = vld [vmem:[%s3317 + $0x58] sm:$0xf]
        %v3485 = vld [vmem:[%s3317 + $0x5c] sm:$0x1]
        %v3486 = vld [vmem:[%s3317 + $0x60] sm:$0xf]
        %v3487 = vld [vmem:[%s3317 + $0x64] sm:$0xf]
        %v3488 = vld [vmem:[%s3317 + $0x68] sm:$0x1]
        %v3489 = vld [vmem:[%s3317 + $0x6c] sm:$0xf]
        %v3490 = vld [vmem:[%s3317 + $0x70] sm:$0xf]
        %v3491 = vld [vmem:[%s3317 + $0x74] sm:$0x1]
        %v3492 = vld [vmem:[%s3317 + $0x78] sm:$0xf]
        %v3493 = vld [vmem:[%s3317 + $0x7c] sm:$0xf]
        %v3494 = vld [vmem:[%s3317 + $0x80] sm:$0x1]
        %v3495 = vld [vmem:[%s3317 + $0x84] sm:$0xf]
        %v3496 = vld [vmem:[%s3317 + $0x88] sm:$0xf]
        %v3497 = vld [vmem:[%s3317 + $0x8c] sm:$0x1]
        %v3498 = vld [vmem:[%s3317 + $0x90] sm:$0xf]
        %v3499 = vld [vmem:[%s3317 + $0x94] sm:$0xf]
        %v3500 = vld [vmem:[%s3317 + $0x98] sm:$0x1]
        %v3501 = vld [vmem:[%s3317 + $0x9c] sm:$0xf]
        %v3502 = vld [vmem:[%s3317 + $0xa0] sm:$0xf]
        %v3503 = vld [vmem:[%s3317 + $0xa4] sm:$0x1]
        %v3504 = vld [vmem:[%s3317 + $0xa8] sm:$0xf]
        %v3505 = vld [vmem:[%s3317 + $0xac] sm:$0xf]
        %v3506 = vld [vmem:[%s3317 + $0xb0] sm:$0x1]
        %v3507 = vld [vmem:[%s3317 + $0xb4] sm:$0xf]
        %v3508 = vld [vmem:[%s3317 + $0xb8] sm:$0xf]
        %v3509 = vld [vmem:[%s3317 + $0xbc] sm:$0x1]
        %v3511 = vshrl.u32 %v3462, 16
        %v3513 = vrot.slane %v3511, 4
        %v3514 = vshll.u32 %v3462, 16
        %v3516 = vrot.slane %v3514, 5
        %v3517 = vor.u32 %v3513, %v3516
        %v3518 = vrot.slane %v3517, 4
        %v3520 = vshll.u32 %v3463, 16
        %v3522 = vrot.slane %v3520, 5
        %v3523 = vsel %vm1520, %v3518, %v3522
        %v3524 = vshrl.u32 %v3463, 16
        %v3526 = vrot.slane %v3524, 4
        %v3527 = vor.u32 %v3526, %v3522
        %v3528 = vrot.slane %v3527, 4
        %v3530 = vshll.u32 %v3464, 16
        %v3532 = vrot.slane %v3530, 5
        %v3533 = vsel %vm1520, %v3528, %v3532
        %v3535 = vshrl.u32 %v3465, 16
        %v3537 = vrot.slane %v3535, 4
        %v3538 = vshll.u32 %v3465, 16
        %v3540 = vrot.slane %v3538, 5
        %v3541 = vor.u32 %v3537, %v3540
        %v3542 = vrot.slane %v3541, 4
        %v3544 = vshll.u32 %v3466, 16
        %v3546 = vrot.slane %v3544, 5
        %v3547 = vsel %vm1520, %v3542, %v3546
        %v3548 = vshrl.u32 %v3466, 16
        %v3550 = vrot.slane %v3548, 4
        %v3551 = vor.u32 %v3550, %v3546
        %v3552 = vrot.slane %v3551, 4
        %v3554 = vshll.u32 %v3467, 16
        %v3556 = vrot.slane %v3554, 5
        %v3557 = vsel %vm1520, %v3552, %v3556
        %v3559 = vshrl.u32 %v3468, 16
        %v3561 = vrot.slane %v3559, 4
        %v3562 = vshll.u32 %v3468, 16
        %v3564 = vrot.slane %v3562, 5
        %v3565 = vor.u32 %v3561, %v3564
        %v3566 = vrot.slane %v3565, 4
        %v3568 = vshll.u32 %v3469, 16
        %v3570 = vrot.slane %v3568, 5
        %v3571 = vsel %vm1520, %v3566, %v3570
        %v3572 = vshrl.u32 %v3469, 16
        %v3574 = vrot.slane %v3572, 4
        %v3575 = vor.u32 %v3574, %v3570
        %v3576 = vrot.slane %v3575, 4
        %v3578 = vshll.u32 %v3470, 16
        %v3580 = vrot.slane %v3578, 5
        %v3581 = vsel %vm1520, %v3576, %v3580
        %v3583 = vshrl.u32 %v3471, 16
        %v3585 = vrot.slane %v3583, 4
        %v3586 = vshll.u32 %v3471, 16
        %v3588 = vrot.slane %v3586, 5
        %v3589 = vor.u32 %v3585, %v3588
        %v3590 = vrot.slane %v3589, 4
        %v3592 = vshll.u32 %v3472, 16
        %v3594 = vrot.slane %v3592, 5
        %v3595 = vsel %vm1520, %v3590, %v3594
        %v3596 = vshrl.u32 %v3472, 16
        %v3598 = vrot.slane %v3596, 4
        %v3599 = vor.u32 %v3598, %v3594
        %v3600 = vrot.slane %v3599, 4
        %v3602 = vshll.u32 %v3473, 16
        %v3604 = vrot.slane %v3602, 5
        %v3605 = vsel %vm1520, %v3600, %v3604
        %v3607 = vshrl.u32 %v3474, 16
        %v3609 = vrot.slane %v3607, 4
        %v3610 = vshll.u32 %v3474, 16
        %v3612 = vrot.slane %v3610, 5
        %v3613 = vor.u32 %v3609, %v3612
        %v3614 = vrot.slane %v3613, 4
        %v3616 = vshll.u32 %v3475, 16
        %v3618 = vrot.slane %v3616, 5
        %v3619 = vsel %vm1520, %v3614, %v3618
        %v3620 = vshrl.u32 %v3475, 16
        %v3622 = vrot.slane %v3620, 4
        %v3623 = vor.u32 %v3622, %v3618
        %v3624 = vrot.slane %v3623, 4
        %v3626 = vshll.u32 %v3476, 16
        %v3628 = vrot.slane %v3626, 5
        %v3629 = vsel %vm1520, %v3624, %v3628
        %v3631 = vshrl.u32 %v3477, 16
        %v3633 = vrot.slane %v3631, 4
        %v3634 = vshll.u32 %v3477, 16
        %v3636 = vrot.slane %v3634, 5
        %v3637 = vor.u32 %v3633, %v3636
        %v3638 = vrot.slane %v3637, 4
        %v3640 = vshll.u32 %v3478, 16
        %v3642 = vrot.slane %v3640, 5
        %v3643 = vsel %vm1520, %v3638, %v3642
        %v3644 = vshrl.u32 %v3478, 16
        %v3646 = vrot.slane %v3644, 4
        %v3647 = vor.u32 %v3646, %v3642
        %v3648 = vrot.slane %v3647, 4
        %v3650 = vshll.u32 %v3479, 16
        %v3652 = vrot.slane %v3650, 5
        %v3653 = vsel %vm1520, %v3648, %v3652
        %v3655 = vshrl.u32 %v3480, 16
        %v3657 = vrot.slane %v3655, 4
        %v3658 = vshll.u32 %v3480, 16
        %v3660 = vrot.slane %v3658, 5
        %v3661 = vor.u32 %v3657, %v3660
        %v3662 = vrot.slane %v3661, 4
        %v3664 = vshll.u32 %v3481, 16
        %v3666 = vrot.slane %v3664, 5
        %v3667 = vsel %vm1520, %v3662, %v3666
        %v3668 = vshrl.u32 %v3481, 16
        %v3670 = vrot.slane %v3668, 4
        %v3671 = vor.u32 %v3670, %v3666
        %v3672 = vrot.slane %v3671, 4
        %v3674 = vshll.u32 %v3482, 16
        %v3676 = vrot.slane %v3674, 5
        %v3677 = vsel %vm1520, %v3672, %v3676
        %v3679 = vshrl.u32 %v3483, 16
        %v3681 = vrot.slane %v3679, 4
        %v3682 = vshll.u32 %v3483, 16
        %v3684 = vrot.slane %v3682, 5
        %v3685 = vor.u32 %v3681, %v3684
        %v3686 = vrot.slane %v3685, 4
        %v3688 = vshll.u32 %v3484, 16
        %v3690 = vrot.slane %v3688, 5
        %v3691 = vsel %vm1520, %v3686, %v3690
        %v3692 = vshrl.u32 %v3484, 16
        %v3694 = vrot.slane %v3692, 4
        %v3695 = vor.u32 %v3694, %v3690
        %v3696 = vrot.slane %v3695, 4
        %v3698 = vshll.u32 %v3485, 16
        %v3700 = vrot.slane %v3698, 5
        %v3701 = vsel %vm1520, %v3696, %v3700
        %v3703 = vshrl.u32 %v3486, 16
        %v3705 = vrot.slane %v3703, 4
        %v3706 = vshll.u32 %v3486, 16
        %v3708 = vrot.slane %v3706, 5
        %v3709 = vor.u32 %v3705, %v3708
        %v3710 = vrot.slane %v3709, 4
        %v3712 = vshll.u32 %v3487, 16
        %v3714 = vrot.slane %v3712, 5
        %v3715 = vsel %vm1520, %v3710, %v3714
        %v3716 = vshrl.u32 %v3487, 16
        %v3718 = vrot.slane %v3716, 4
        %v3719 = vor.u32 %v3718, %v3714
        %v3720 = vrot.slane %v3719, 4
        %v3722 = vshll.u32 %v3488, 16
        %v3724 = vrot.slane %v3722, 5
        %v3725 = vsel %vm1520, %v3720, %v3724
        %v3727 = vshrl.u32 %v3489, 16
        %v3729 = vrot.slane %v3727, 4
        %v3730 = vshll.u32 %v3489, 16
        %v3732 = vrot.slane %v3730, 5
        %v3733 = vor.u32 %v3729, %v3732
        %v3734 = vrot.slane %v3733, 4
        %v3736 = vshll.u32 %v3490, 16
        %v3738 = vrot.slane %v3736, 5
        %v3739 = vsel %vm1520, %v3734, %v3738
        %v3740 = vshrl.u32 %v3490, 16
        %v3742 = vrot.slane %v3740, 4
        %v3743 = vor.u32 %v3742, %v3738
        %v3744 = vrot.slane %v3743, 4
        %v3746 = vshll.u32 %v3491, 16
        %v3748 = vrot.slane %v3746, 5
        %v3749 = vsel %vm1520, %v3744, %v3748
        %v3751 = vshrl.u32 %v3492, 16
        %v3753 = vrot.slane %v3751, 4
        %v3754 = vshll.u32 %v3492, 16
        %v3756 = vrot.slane %v3754, 5
        %v3757 = vor.u32 %v3753, %v3756
        %v3758 = vrot.slane %v3757, 4
        %v3760 = vshll.u32 %v3493, 16
        %v3762 = vrot.slane %v3760, 5
        %v3763 = vsel %vm1520, %v3758, %v3762
        %v3764 = vshrl.u32 %v3493, 16
        %v3766 = vrot.slane %v3764, 4
        %v3767 = vor.u32 %v3766, %v3762
        %v3768 = vrot.slane %v3767, 4
        %v3770 = vshll.u32 %v3494, 16
        %v3772 = vrot.slane %v3770, 5
        %v3773 = vsel %vm1520, %v3768, %v3772
        %v3775 = vshrl.u32 %v3495, 16
        %v3777 = vrot.slane %v3775, 4
        %v3778 = vshll.u32 %v3495, 16
        %v3780 = vrot.slane %v3778, 5
        %v3781 = vor.u32 %v3777, %v3780
        %v3782 = vrot.slane %v3781, 4
        %v3784 = vshll.u32 %v3496, 16
        %v3786 = vrot.slane %v3784, 5
        %v3787 = vsel %vm1520, %v3782, %v3786
        %v3788 = vshrl.u32 %v3496, 16
        %v3790 = vrot.slane %v3788, 4
        %v3791 = vor.u32 %v3790, %v3786
        %v3792 = vrot.slane %v3791, 4
        %v3794 = vshll.u32 %v3497, 16
        %v3796 = vrot.slane %v3794, 5
        %v3797 = vsel %vm1520, %v3792, %v3796
        %v3799 = vshrl.u32 %v3498, 16
        %v3801 = vrot.slane %v3799, 4
        %v3802 = vshll.u32 %v3498, 16
        %v3804 = vrot.slane %v3802, 5
        %v3805 = vor.u32 %v3801, %v3804
        %v3806 = vrot.slane %v3805, 4
        %v3808 = vshll.u32 %v3499, 16
        %v3810 = vrot.slane %v3808, 5
        %v3811 = vsel %vm1520, %v3806, %v3810
        %v3812 = vshrl.u32 %v3499, 16
        %v3814 = vrot.slane %v3812, 4
        %v3815 = vor.u32 %v3814, %v3810
        %v3816 = vrot.slane %v3815, 4
        %v3818 = vshll.u32 %v3500, 16
        %v3820 = vrot.slane %v3818, 5
        %v3821 = vsel %vm1520, %v3816, %v3820
        %v3823 = vshrl.u32 %v3501, 16
        %v3825 = vrot.slane %v3823, 4
        %v3826 = vshll.u32 %v3501, 16
        %v3828 = vrot.slane %v3826, 5
        %v3829 = vor.u32 %v3825, %v3828
        %v3830 = vrot.slane %v3829, 4
        %v3832 = vshll.u32 %v3502, 16
        %v3834 = vrot.slane %v3832, 5
        %v3835 = vsel %vm1520, %v3830, %v3834
        %v3836 = vshrl.u32 %v3502, 16
        %v3838 = vrot.slane %v3836, 4
        %v3839 = vor.u32 %v3838, %v3834
        %v3840 = vrot.slane %v3839, 4
        %v3842 = vshll.u32 %v3503, 16
        %v3844 = vrot.slane %v3842, 5
        %v3845 = vsel %vm1520, %v3840, %v3844
        %v3847 = vshrl.u32 %v3504, 16
        %v3849 = vrot.slane %v3847, 4
        %v3850 = vshll.u32 %v3504, 16
        %v3852 = vrot.slane %v3850, 5
        %v3853 = vor.u32 %v3849, %v3852
        %v3854 = vrot.slane %v3853, 4
        %v3856 = vshll.u32 %v3505, 16
        %v3858 = vrot.slane %v3856, 5
        %v3859 = vsel %vm1520, %v3854, %v3858
        %v3860 = vshrl.u32 %v3505, 16
        %v3862 = vrot.slane %v3860, 4
        %v3863 = vor.u32 %v3862, %v3858
        %v3864 = vrot.slane %v3863, 4
        %v3866 = vshll.u32 %v3506, 16
        %v3868 = vrot.slane %v3866, 5
        %v3869 = vsel %vm1520, %v3864, %v3868
        %v3871 = vshrl.u32 %v3507, 16
        %v3873 = vrot.slane %v3871, 4
        %v3874 = vshll.u32 %v3507, 16
        %v3876 = vrot.slane %v3874, 5
        %v3877 = vor.u32 %v3873, %v3876
        %v3878 = vrot.slane %v3877, 4
        %v3880 = vshll.u32 %v3508, 16
        %v3882 = vrot.slane %v3880, 5
        %v3883 = vsel %vm1520, %v3878, %v3882
        %v3884 = vshrl.u32 %v3508, 16
        %v3886 = vrot.slane %v3884, 4
        %v3887 = vor.u32 %v3886, %v3882
        %v3888 = vrot.slane %v3887, 4
        %v3890 = vshll.u32 %v3509, 16
        %v3892 = vrot.slane %v3890, 5
        %v3893 = vsel %vm1520, %v3888, %v3892
        %v3894 = vunpack.c.l.b16 %v3523
        %v3895 = vunpack.c.l.b16 %v3533
        %v3896 = vunpack.c.l.b16 %v3547
        %v3897 = vunpack.c.l.b16 %v3557
        %v3898 = vunpack.c.l.b16 %v3571
        %v3899 = vunpack.c.l.b16 %v3581
        %v3900 = vunpack.c.l.b16 %v3595
        %v3901 = vunpack.c.l.b16 %v3605
        %v3902 = vunpack.c.l.b16 %v3619
        %v3903 = vunpack.c.l.b16 %v3629
        %v3904 = vunpack.c.l.b16 %v3643
        %v3905 = vunpack.c.l.b16 %v3653
        %v3906 = vunpack.c.l.b16 %v3667
        %v3907 = vunpack.c.l.b16 %v3677
        %v3908 = vunpack.c.l.b16 %v3691
        %v3909 = vunpack.c.l.b16 %v3701
        %v3910 = vunpack.c.l.b16 %v3715
        %v3911 = vunpack.c.l.b16 %v3725
        %v3912 = vunpack.c.l.b16 %v3739
        %v3913 = vunpack.c.l.b16 %v3749
        %v3914 = vunpack.c.l.b16 %v3763
        %v3915 = vunpack.c.l.b16 %v3773
        %v3916 = vunpack.c.l.b16 %v3787
        %v3917 = vunpack.c.l.b16 %v3797
        %v3918 = vunpack.c.l.b16 %v3811
        %v3919 = vunpack.c.l.b16 %v3821
        %v3920 = vunpack.c.l.b16 %v3835
        %v3921 = vunpack.c.l.b16 %v3845
        %v3922 = vunpack.c.l.b16 %v3859
        %v3923 = vunpack.c.l.b16 %v3869
        %v3924 = vunpack.c.l.b16 %v3883
        %v3925 = vunpack.c.l.b16 %v3893
        %v3926 = vpack.c.b16 %v3895, %v3894
        %v3927 = vpack.c.b16 %v3897, %v3896
        %v3928 = vpack.c.b16 %v3899, %v3898
        %v3929 = vpack.c.b16 %v3901, %v3900
        %v3930 = vpack.c.b16 %v3903, %v3902
        %v3931 = vpack.c.b16 %v3905, %v3904
        %v3932 = vpack.c.b16 %v3907, %v3906
        %v3933 = vpack.c.b16 %v3909, %v3908
        %v3934 = vpack.c.b16 %v3911, %v3910
        %v3935 = vpack.c.b16 %v3913, %v3912
        %v3936 = vpack.c.b16 %v3915, %v3914
        %v3937 = vpack.c.b16 %v3917, %v3916
        %v3938 = vpack.c.b16 %v3919, %v3918
        %v3939 = vpack.c.b16 %v3921, %v3920
        %v3940 = vpack.c.b16 %v3923, %v3922
        %v3941 = vpack.c.b16 %v3925, %v3924
        %3942 = vrot.lane.b32.xlu0 %v3926, 64
        %v3943 = vpop.permute.xlu0 %3942
        %3944 = vrot.lane.b32.xlu0 %v3927, 64
        %v3945 = vpop.permute.xlu0 %3944
        %3946 = vrot.lane.b32.xlu0 %v3928, 64
        %v3947 = vpop.permute.xlu0 %3946
        %3948 = vrot.lane.b32.xlu0 %v3929, 64
        %v3949 = vpop.permute.xlu0 %3948
        %3950 = vrot.lane.b32.xlu0 %v3930, 64
        %v3951 = vpop.permute.xlu0 %3950
        %3952 = vrot.lane.b32.xlu0 %v3931, 64
        %v3953 = vpop.permute.xlu0 %3952
        %3954 = vrot.lane.b32.xlu0 %v3932, 64
        %v3955 = vpop.permute.xlu0 %3954
        %3956 = vrot.lane.b32.xlu0 %v3933, 64
        %v3957 = vpop.permute.xlu0 %3956
        %3958 = vrot.lane.b32.xlu0 %v3934, 64
        %v3959 = vpop.permute.xlu0 %3958
        %3960 = vrot.lane.b32.xlu0 %v3935, 64
        %v3961 = vpop.permute.xlu0 %3960
        %3962 = vrot.lane.b32.xlu0 %v3936, 64
        %v3963 = vpop.permute.xlu0 %3962
        %3964 = vrot.lane.b32.xlu0 %v3937, 64
        %v3965 = vpop.permute.xlu0 %3964
        %3966 = vrot.lane.b32.xlu0 %v3938, 64
        %v3967 = vpop.permute.xlu0 %3966
        %3968 = vrot.lane.b32.xlu0 %v3939, 64
        %v3969 = vpop.permute.xlu0 %3968
        %3970 = vrot.lane.b32.xlu0 %v3940, 64
        %v3971 = vpop.permute.xlu0 %3970
        %3972 = vrot.lane.b32.xlu0 %v3941, 64
        %v3973 = vpop.permute.xlu0 %3972
        %3990 = vst.msk [vmem:[#allocation3 + $0x18] sm:$0xff] %vm2001, %v3943
        %3991 = vst.msk [vmem:[#allocation3 + $0x40] sm:$0xff] %vm2001, %v3945
        %3992 = vst.msk [vmem:[#allocation3 + $0x68] sm:$0xff] %vm2001, %v3947
        %3993 = vst.msk [vmem:[#allocation3 + $0x90] sm:$0xff] %vm2001, %v3949
        %3994 = vst.msk [vmem:[#allocation3 + $0xb8] sm:$0xff] %vm2001, %v3951
        %3995 = vst.msk [vmem:[#allocation3 + $0xe0] sm:$0xff] %vm2001, %v3953
        %3996 = vst.msk [vmem:[#allocation3 + $0x108] sm:$0xff] %vm2001, %v3955
        %3997 = vst.msk [vmem:[#allocation3 + $0x130] sm:$0xff] %vm2001, %v3957
        %3998 = vst.msk [vmem:[#allocation3 + $0x158] sm:$0xff] %vm2001, %v3959
        %3999 = vst.msk [vmem:[#allocation3 + $0x180] sm:$0xff] %vm2001, %v3961
        %4000 = vst.msk [vmem:[#allocation3 + $0x1a8] sm:$0xff] %vm2001, %v3963
        %4001 = vst.msk [vmem:[#allocation3 + $0x1d0] sm:$0xff] %vm2001, %v3965
        %4002 = vst.msk [vmem:[#allocation3 + $0x1f8] sm:$0xff] %vm2001, %v3967
        %4003 = vst.msk [vmem:[#allocation3 + $0x220] sm:$0xff] %vm2001, %v3969
        %4004 = vst.msk [vmem:[#allocation3 + $0x248] sm:$0xff] %vm2001, %v3971
        %4005 = vst.msk [vmem:[#allocation3 + $0x270] sm:$0xff] %vm2001, %v3973
        %v4006 = vld [vmem:[%s3317] sm:$0xe]
        %v4007 = vld [vmem:[%s3317 + $0x4] sm:$0xf]
        %v4008 = vld [vmem:[%s3317 + $0x8] sm:$0x1]
        %v4009 = vld [vmem:[%s3317 + $0xc] sm:$0xe]
        %v4010 = vld [vmem:[%s3317 + $0x10] sm:$0xf]
        %v4011 = vld [vmem:[%s3317 + $0x14] sm:$0x1]
        %v4012 = vld [vmem:[%s3317 + $0x18] sm:$0xe]
        %v4013 = vld [vmem:[%s3317 + $0x1c] sm:$0xf]
        %v4014 = vld [vmem:[%s3317 + $0x20] sm:$0x1]
        %v4015 = vld [vmem:[%s3317 + $0x24] sm:$0xe]
        %v4016 = vld [vmem:[%s3317 + $0x28] sm:$0xf]
        %v4017 = vld [vmem:[%s3317 + $0x2c] sm:$0x1]
        %v4018 = vld [vmem:[%s3317 + $0x30] sm:$0xe]
        %v4019 = vld [vmem:[%s3317 + $0x34] sm:$0xf]
        %v4020 = vld [vmem:[%s3317 + $0x38] sm:$0x1]
        %v4021 = vld [vmem:[%s3317 + $0x3c] sm:$0xe]
        %v4022 = vld [vmem:[%s3317 + $0x40] sm:$0xf]
        %v4023 = vld [vmem:[%s3317 + $0x44] sm:$0x1]
        %v4024 = vld [vmem:[%s3317 + $0x48] sm:$0xe]
        %v4025 = vld [vmem:[%s3317 + $0x4c] sm:$0xf]
        %v4026 = vld [vmem:[%s3317 + $0x50] sm:$0x1]
        %v4027 = vld [vmem:[%s3317 + $0x54] sm:$0xe]
        %v4028 = vld [vmem:[%s3317 + $0x58] sm:$0xf]
        %v4029 = vld [vmem:[%s3317 + $0x5c] sm:$0x1]
        %v4030 = vld [vmem:[%s3317 + $0x60] sm:$0xe]
        %v4031 = vld [vmem:[%s3317 + $0x64] sm:$0xf]
        %v4032 = vld [vmem:[%s3317 + $0x68] sm:$0x1]
        %v4033 = vld [vmem:[%s3317 + $0x6c] sm:$0xe]
        %v4034 = vld [vmem:[%s3317 + $0x70] sm:$0xf]
        %v4035 = vld [vmem:[%s3317 + $0x74] sm:$0x1]
        %v4036 = vld [vmem:[%s3317 + $0x78] sm:$0xe]
        %v4037 = vld [vmem:[%s3317 + $0x7c] sm:$0xf]
        %v4038 = vld [vmem:[%s3317 + $0x80] sm:$0x1]
        %v4039 = vld [vmem:[%s3317 + $0x84] sm:$0xe]
        %v4040 = vld [vmem:[%s3317 + $0x88] sm:$0xf]
        %v4041 = vld [vmem:[%s3317 + $0x8c] sm:$0x1]
        %v4042 = vld [vmem:[%s3317 + $0x90] sm:$0xe]
        %v4043 = vld [vmem:[%s3317 + $0x94] sm:$0xf]
        %v4044 = vld [vmem:[%s3317 + $0x98] sm:$0x1]
        %v4045 = vld [vmem:[%s3317 + $0x9c] sm:$0xe]
        %v4046 = vld [vmem:[%s3317 + $0xa0] sm:$0xf]
        %v4047 = vld [vmem:[%s3317 + $0xa4] sm:$0x1]
        %v4048 = vld [vmem:[%s3317 + $0xa8] sm:$0xe]
        %v4049 = vld [vmem:[%s3317 + $0xac] sm:$0xf]
        %v4050 = vld [vmem:[%s3317 + $0xb0] sm:$0x1]
        %v4051 = vld [vmem:[%s3317 + $0xb4] sm:$0xe]
        %v4052 = vld [vmem:[%s3317 + $0xb8] sm:$0xf]
        %v4053 = vld [vmem:[%s3317 + $0xbc] sm:$0x1]
        %v4102 = vrot.slane %v4006, 5
        %v4103 = vrot.slane %v4102, 4
        %v4104 = vrot.slane %v4007, 5
        %v4105 = vsel %vm2116, %v4103, %v4104
        %v4106 = vrot.slane %v4104, 4
        %v4107 = vrot.slane %v4008, 5
        %v4108 = vsel %vm2116, %v4106, %v4107
        %v4109 = vrot.slane %v4009, 5
        %v4110 = vrot.slane %v4109, 4
        %v4111 = vrot.slane %v4010, 5
        %v4112 = vsel %vm2116, %v4110, %v4111
        %v4113 = vrot.slane %v4111, 4
        %v4114 = vrot.slane %v4011, 5
        %v4115 = vsel %vm2116, %v4113, %v4114
        %v4116 = vrot.slane %v4012, 5
        %v4117 = vrot.slane %v4116, 4
        %v4118 = vrot.slane %v4013, 5
        %v4119 = vsel %vm2116, %v4117, %v4118
        %v4120 = vrot.slane %v4118, 4
        %v4121 = vrot.slane %v4014, 5
        %v4122 = vsel %vm2116, %v4120, %v4121
        %v4123 = vrot.slane %v4015, 5
        %v4124 = vrot.slane %v4123, 4
        %v4125 = vrot.slane %v4016, 5
        %v4126 = vsel %vm2116, %v4124, %v4125
        %v4127 = vrot.slane %v4125, 4
        %v4128 = vrot.slane %v4017, 5
        %v4129 = vsel %vm2116, %v4127, %v4128
        %v4130 = vrot.slane %v4018, 5
        %v4131 = vrot.slane %v4130, 4
        %v4132 = vrot.slane %v4019, 5
        %v4133 = vsel %vm2116, %v4131, %v4132
        %v4134 = vrot.slane %v4132, 4
        %v4135 = vrot.slane %v4020, 5
        %v4136 = vsel %vm2116, %v4134, %v4135
        %v4137 = vrot.slane %v4021, 5
        %v4138 = vrot.slane %v4137, 4
        %v4139 = vrot.slane %v4022, 5
        %v4140 = vsel %vm2116, %v4138, %v4139
        %v4141 = vrot.slane %v4139, 4
        %v4142 = vrot.slane %v4023, 5
        %v4143 = vsel %vm2116, %v4141, %v4142
        %v4144 = vrot.slane %v4024, 5
        %v4145 = vrot.slane %v4144, 4
        %v4146 = vrot.slane %v4025, 5
        %v4147 = vsel %vm2116, %v4145, %v4146
        %v4148 = vrot.slane %v4146, 4
        %v4149 = vrot.slane %v4026, 5
        %v4150 = vsel %vm2116, %v4148, %v4149
        %v4151 = vrot.slane %v4027, 5
        %v4152 = vrot.slane %v4151, 4
        %v4153 = vrot.slane %v4028, 5
        %v4154 = vsel %vm2116, %v4152, %v4153
        %v4155 = vrot.slane %v4153, 4
        %v4156 = vrot.slane %v4029, 5
        %v4157 = vsel %vm2116, %v4155, %v4156
        %v4158 = vrot.slane %v4030, 5
        %v4159 = vrot.slane %v4158, 4
        %v4160 = vrot.slane %v4031, 5
        %v4161 = vsel %vm2116, %v4159, %v4160
        %v4162 = vrot.slane %v4160, 4
        %v4163 = vrot.slane %v4032, 5
        %v4164 = vsel %vm2116, %v4162, %v4163
        %v4165 = vrot.slane %v4033, 5
        %v4166 = vrot.slane %v4165, 4
        %v4167 = vrot.slane %v4034, 5
        %v4168 = vsel %vm2116, %v4166, %v4167
        %v4169 = vrot.slane %v4167, 4
        %v4170 = vrot.slane %v4035, 5
        %v4171 = vsel %vm2116, %v4169, %v4170
        %v4172 = vrot.slane %v4036, 5
        %v4173 = vrot.slane %v4172, 4
        %v4174 = vrot.slane %v4037, 5
        %v4175 = vsel %vm2116, %v4173, %v4174
        %v4176 = vrot.slane %v4174, 4
        %v4177 = vrot.slane %v4038, 5
        %v4178 = vsel %vm2116, %v4176, %v4177
        %v4179 = vrot.slane %v4039, 5
        %v4180 = vrot.slane %v4179, 4
        %v4181 = vrot.slane %v4040, 5
        %v4182 = vsel %vm2116, %v4180, %v4181
        %v4183 = vrot.slane %v4181, 4
        %v4184 = vrot.slane %v4041, 5
        %v4185 = vsel %vm2116, %v4183, %v4184
        %v4186 = vrot.slane %v4042, 5
        %v4187 = vrot.slane %v4186, 4
        %v4188 = vrot.slane %v4043, 5
        %v4189 = vsel %vm2116, %v4187, %v4188
        %v4190 = vrot.slane %v4188, 4
        %v4191 = vrot.slane %v4044, 5
        %v4192 = vsel %vm2116, %v4190, %v4191
        %v4193 = vrot.slane %v4045, 5
        %v4194 = vrot.slane %v4193, 4
        %v4195 = vrot.slane %v4046, 5
        %v4196 = vsel %vm2116, %v4194, %v4195
        %v4197 = vrot.slane %v4195, 4
        %v4198 = vrot.slane %v4047, 5
        %v4199 = vsel %vm2116, %v4197, %v4198
        %v4200 = vrot.slane %v4048, 5
        %v4201 = vrot.slane %v4200, 4
        %v4202 = vrot.slane %v4049, 5
        %v4203 = vsel %vm2116, %v4201, %v4202
        %v4204 = vrot.slane %v4202, 4
        %v4205 = vrot.slane %v4050, 5
        %v4206 = vsel %vm2116, %v4204, %v4205
        %v4207 = vrot.slane %v4051, 5
        %v4208 = vrot.slane %v4207, 4
        %v4209 = vrot.slane %v4052, 5
        %v4210 = vsel %vm2116, %v4208, %v4209
        %v4211 = vrot.slane %v4209, 4
        %v4212 = vrot.slane %v4053, 5
        %v4213 = vsel %vm2116, %v4211, %v4212
        %v4214 = vunpack.c.l.b16 %v4105
        %v4215 = vunpack.c.l.b16 %v4108
        %v4216 = vunpack.c.l.b16 %v4112
        %v4217 = vunpack.c.l.b16 %v4115
        %v4218 = vunpack.c.l.b16 %v4119
        %v4219 = vunpack.c.l.b16 %v4122
        %v4220 = vunpack.c.l.b16 %v4126
        %v4221 = vunpack.c.l.b16 %v4129
        %v4222 = vunpack.c.l.b16 %v4133
        %v4223 = vunpack.c.l.b16 %v4136
        %v4224 = vunpack.c.l.b16 %v4140
        %v4225 = vunpack.c.l.b16 %v4143
        %v4226 = vunpack.c.l.b16 %v4147
        %v4227 = vunpack.c.l.b16 %v4150
        %v4228 = vunpack.c.l.b16 %v4154
        %v4229 = vunpack.c.l.b16 %v4157
        %v4230 = vunpack.c.l.b16 %v4161
        %v4231 = vunpack.c.l.b16 %v4164
        %v4232 = vunpack.c.l.b16 %v4168
        %v4233 = vunpack.c.l.b16 %v4171
        %v4234 = vunpack.c.l.b16 %v4175
        %v4235 = vunpack.c.l.b16 %v4178
        %v4236 = vunpack.c.l.b16 %v4182
        %v4237 = vunpack.c.l.b16 %v4185
        %v4238 = vunpack.c.l.b16 %v4189
        %v4239 = vunpack.c.l.b16 %v4192
        %v4240 = vunpack.c.l.b16 %v4196
        %v4241 = vunpack.c.l.b16 %v4199
        %v4242 = vunpack.c.l.b16 %v4203
        %v4243 = vunpack.c.l.b16 %v4206
        %v4244 = vunpack.c.l.b16 %v4210
        %v4245 = vunpack.c.l.b16 %v4213
        %v4246 = vpack.c.b16 %v4215, %v4214
        %v4247 = vpack.c.b16 %v4217, %v4216
        %v4248 = vpack.c.b16 %v4219, %v4218
        %v4249 = vpack.c.b16 %v4221, %v4220
        %v4250 = vpack.c.b16 %v4223, %v4222
        %v4251 = vpack.c.b16 %v4225, %v4224
        %v4252 = vpack.c.b16 %v4227, %v4226
        %v4253 = vpack.c.b16 %v4229, %v4228
        %v4254 = vpack.c.b16 %v4231, %v4230
        %v4255 = vpack.c.b16 %v4233, %v4232
        %v4256 = vpack.c.b16 %v4235, %v4234
        %v4257 = vpack.c.b16 %v4237, %v4236
        %v4258 = vpack.c.b16 %v4239, %v4238
        %v4259 = vpack.c.b16 %v4241, %v4240
        %v4260 = vpack.c.b16 %v4243, %v4242
        %v4261 = vpack.c.b16 %v4245, %v4244
        %4278 = vst.msk [vmem:[#allocation3 + $0x20] sm:$0xff] %vm1453, %v4246
        %4279 = vst.msk [vmem:[#allocation3 + $0x48] sm:$0xff] %vm1453, %v4247
        %4280 = vst.msk [vmem:[#allocation3 + $0x70] sm:$0xff] %vm1453, %v4248
        %4281 = vst.msk [vmem:[#allocation3 + $0x98] sm:$0xff] %vm1453, %v4249
        %4282 = vst.msk [vmem:[#allocation3 + $0xc0] sm:$0xff] %vm1453, %v4250
        %4283 = vst.msk [vmem:[#allocation3 + $0xe8] sm:$0xff] %vm1453, %v4251
        %4284 = vst.msk [vmem:[#allocation3 + $0x110] sm:$0xff] %vm1453, %v4252
        %4285 = vst.msk [vmem:[#allocation3 + $0x138] sm:$0xff] %vm1453, %v4253
        %4286 = vst.msk [vmem:[#allocation3 + $0x160] sm:$0xff] %vm1453, %v4254
        %4287 = vst.msk [vmem:[#allocation3 + $0x188] sm:$0xff] %vm1453, %v4255
        %4288 = vst.msk [vmem:[#allocation3 + $0x1b0] sm:$0xff] %vm1453, %v4256
        %4289 = vst.msk [vmem:[#allocation3 + $0x1d8] sm:$0xff] %vm1453, %v4257
        %4290 = vst.msk [vmem:[#allocation3 + $0x200] sm:$0xff] %vm1453, %v4258
        %4291 = vst.msk [vmem:[#allocation3 + $0x228] sm:$0xff] %vm1453, %v4259
        %4292 = vst.msk [vmem:[#allocation3 + $0x250] sm:$0xff] %vm1453, %v4260
        %4293 = vst.msk [vmem:[#allocation3 + $0x278] sm:$0xff] %vm1453, %v4261
        %v4294 = vld [vmem:[#allocation3] sm:$0xff]
        %v4295 = vld [vmem:[#allocation3 + $0x8] sm:$0xff]
        %v4296 = vld [vmem:[#allocation3 + $0x10] sm:$0xff]
        %v4297 = vld [vmem:[#allocation3 + $0x18] sm:$0xff]
        %v4298 = vld [vmem:[#allocation3 + $0x20] sm:$0xff]
        %v4299 = vld [vmem:[#allocation3 + $0x28] sm:$0xff]
        %v4300 = vld [vmem:[#allocation3 + $0x30] sm:$0xff]
        %v4301 = vld [vmem:[#allocation3 + $0x38] sm:$0xff]
        %v4302 = vld [vmem:[#allocation3 + $0x40] sm:$0xff]
        %v4303 = vld [vmem:[#allocation3 + $0x48] sm:$0xff]
        %v4304 = vld [vmem:[#allocation3 + $0x50] sm:$0xff]
        %v4305 = vld [vmem:[#allocation3 + $0x58] sm:$0xff]
        %v4306 = vld [vmem:[#allocation3 + $0x60] sm:$0xff]
        %v4307 = vld [vmem:[#allocation3 + $0x68] sm:$0xff]
        %v4308 = vld [vmem:[#allocation3 + $0x70] sm:$0xff]
        %v4309 = vld [vmem:[#allocation3 + $0x78] sm:$0xff]
        %v4310 = vld [vmem:[#allocation3 + $0x80] sm:$0xff]
        %v4311 = vld [vmem:[#allocation3 + $0x88] sm:$0xff]
        %v4312 = vld [vmem:[#allocation3 + $0x90] sm:$0xff]
        %v4313 = vld [vmem:[#allocation3 + $0x98] sm:$0xff]
        %v4314 = vld [vmem:[#allocation3 + $0xa0] sm:$0xff]
        %v4315 = vld [vmem:[#allocation3 + $0xa8] sm:$0xff]
        %v4316 = vld [vmem:[#allocation3 + $0xb0] sm:$0xff]
        %v4317 = vld [vmem:[#allocation3 + $0xb8] sm:$0xff]
        %v4318 = vld [vmem:[#allocation3 + $0xc0] sm:$0xff]
        %v4319 = vld [vmem:[#allocation3 + $0xc8] sm:$0xff]
        %v4320 = vld [vmem:[#allocation3 + $0xd0] sm:$0xff]
        %v4321 = vld [vmem:[#allocation3 + $0xd8] sm:$0xff]
        %v4322 = vld [vmem:[#allocation3 + $0xe0] sm:$0xff]
        %v4323 = vld [vmem:[#allocation3 + $0xe8] sm:$0xff]
        %v4324 = vld [vmem:[#allocation3 + $0xf0] sm:$0xff]
        %v4325 = vld [vmem:[#allocation3 + $0xf8] sm:$0xff]
        %v4326 = vld [vmem:[#allocation3 + $0x100] sm:$0xff]
        %v4327 = vld [vmem:[#allocation3 + $0x108] sm:$0xff]
        %v4328 = vld [vmem:[#allocation3 + $0x110] sm:$0xff]
        %v4329 = vld [vmem:[#allocation3 + $0x118] sm:$0xff]
        %v4330 = vld [vmem:[#allocation3 + $0x120] sm:$0xff]
        %v4331 = vld [vmem:[#allocation3 + $0x128] sm:$0xff]
        %v4332 = vld [vmem:[#allocation3 + $0x130] sm:$0xff]
        %v4333 = vld [vmem:[#allocation3 + $0x138] sm:$0xff]
        %v4334 = vld [vmem:[#allocation3 + $0x140] sm:$0xff]
        %v4335 = vld [vmem:[#allocation3 + $0x148] sm:$0xff]
        %v4336 = vld [vmem:[#allocation3 + $0x150] sm:$0xff]
        %v4337 = vld [vmem:[#allocation3 + $0x158] sm:$0xff]
        %v4338 = vld [vmem:[#allocation3 + $0x160] sm:$0xff]
        %v4339 = vld [vmem:[#allocation3 + $0x168] sm:$0xff]
        %v4340 = vld [vmem:[#allocation3 + $0x170] sm:$0xff]
        %v4341 = vld [vmem:[#allocation3 + $0x178] sm:$0xff]
        %v4342 = vld [vmem:[#allocation3 + $0x180] sm:$0xff]
        %v4343 = vld [vmem:[#allocation3 + $0x188] sm:$0xff]
        %v4344 = vld [vmem:[#allocation3 + $0x190] sm:$0xff]
        %v4345 = vld [vmem:[#allocation3 + $0x198] sm:$0xff]
        %v4346 = vld [vmem:[#allocation3 + $0x1a0] sm:$0xff]
        %v4347 = vld [vmem:[#allocation3 + $0x1a8] sm:$0xff]
        %v4348 = vld [vmem:[#allocation3 + $0x1b0] sm:$0xff]
        %v4349 = vld [vmem:[#allocation3 + $0x1b8] sm:$0xff]
        %v4350 = vld [vmem:[#allocation3 + $0x1c0] sm:$0xff]
        %v4351 = vld [vmem:[#allocation3 + $0x1c8] sm:$0xff]
        %v4352 = vld [vmem:[#allocation3 + $0x1d0] sm:$0xff]
        %v4353 = vld [vmem:[#allocation3 + $0x1d8] sm:$0xff]
        %v4354 = vld [vmem:[#allocation3 + $0x1e0] sm:$0xff]
        %v4355 = vld [vmem:[#allocation3 + $0x1e8] sm:$0xff]
        %v4356 = vld [vmem:[#allocation3 + $0x1f0] sm:$0xff]
        %v4357 = vld [vmem:[#allocation3 + $0x1f8] sm:$0xff]
        %v4358 = vld [vmem:[#allocation3 + $0x200] sm:$0xff]
        %v4359 = vld [vmem:[#allocation3 + $0x208] sm:$0xff]
        %v4360 = vld [vmem:[#allocation3 + $0x210] sm:$0xff]
        %v4361 = vld [vmem:[#allocation3 + $0x218] sm:$0xff]
        %v4362 = vld [vmem:[#allocation3 + $0x220] sm:$0xff]
        %v4363 = vld [vmem:[#allocation3 + $0x228] sm:$0xff]
        %v4364 = vld [vmem:[#allocation3 + $0x230] sm:$0xff]
        %v4365 = vld [vmem:[#allocation3 + $0x238] sm:$0xff]
        %v4366 = vld [vmem:[#allocation3 + $0x240] sm:$0xff]
        %v4367 = vld [vmem:[#allocation3 + $0x248] sm:$0xff]
        %v4368 = vld [vmem:[#allocation3 + $0x250] sm:$0xff]
        %v4369 = vld [vmem:[#allocation3 + $0x258] sm:$0xff]
        %v4370 = vld [vmem:[#allocation3 + $0x260] sm:$0xff]
        %v4371 = vld [vmem:[#allocation3 + $0x268] sm:$0xff]
        %v4372 = vld [vmem:[#allocation3 + $0x270] sm:$0xff]
        %v4373 = vld [vmem:[#allocation3 + $0x278] sm:$0xff]
        %v4374 = vld [vmem:[%s3] sm:$0xf]
        %v4375 = vld [vmem:[%s3 + $0x4] sm:$0xf]
        %v4376 = vld [vmem:[%s3 + $0x8] sm:$0xf]
        %v4377 = vld [vmem:[%s3 + $0xc] sm:$0xf]
        %v4378 = vld [vmem:[%s3 + $0x10] sm:$0xf]
        %v4379 = vld [vmem:[%s3 + $0x14] sm:$0xf]
        %v4380 = vld [vmem:[%s3 + $0x18] sm:$0xf]
        %v4381 = vld [vmem:[%s3 + $0x1c] sm:$0xf]
        %v4382 = vld [vmem:[%s3 + $0x20] sm:$0xf]
        %v4383 = vld [vmem:[%s3 + $0x24] sm:$0xf]
        %v4384 = vld [vmem:[%s3 + $0x28] sm:$0xf]
        %v4385 = vld [vmem:[%s3 + $0x2c] sm:$0xf]
        %v4386 = vld [vmem:[%s3 + $0x30] sm:$0xf]
        %v4387 = vld [vmem:[%s3 + $0x34] sm:$0xf]
        %v4388 = vld [vmem:[%s3 + $0x38] sm:$0xf]
        %v4389 = vld [vmem:[%s3 + $0x3c] sm:$0xf]
        %v4390 = vld [vmem:[%s3 + $0x40] sm:$0xf]
        %v4391 = vld [vmem:[%s3 + $0x44] sm:$0xf]
        %v4392 = vld [vmem:[%s3 + $0x48] sm:$0xf]
        %v4393 = vld [vmem:[%s3 + $0x4c] sm:$0xf]
        %v4394 = vld [vmem:[%s3 + $0x50] sm:$0xf]
        %v4395 = vld [vmem:[%s3 + $0x54] sm:$0xf]
        %v4396 = vld [vmem:[%s3 + $0x58] sm:$0xf]
        %v4397 = vld [vmem:[%s3 + $0x5c] sm:$0xf]
        %v4398 = vld [vmem:[%s3 + $0x60] sm:$0xf]
        %v4399 = vld [vmem:[%s3 + $0x64] sm:$0xf]
        %v4400 = vld [vmem:[%s3 + $0x68] sm:$0xf]
        %v4401 = vld [vmem:[%s3 + $0x6c] sm:$0xf]
        %v4402 = vld [vmem:[%s3 + $0x70] sm:$0xf]
        %v4403 = vld [vmem:[%s3 + $0x74] sm:$0xf]
        %v4404 = vld [vmem:[%s3 + $0x78] sm:$0xf]
        %v4405 = vld [vmem:[%s3 + $0x7c] sm:$0xf]
        %v4406 = vld [vmem:[%s3 + $0x80] sm:$0xf]
        %v4407 = vld [vmem:[%s3 + $0x84] sm:$0xf]
        %v4408 = vld [vmem:[%s3 + $0x88] sm:$0xf]
        %v4409 = vld [vmem:[%s3 + $0x8c] sm:$0xf]
        %v4410 = vld [vmem:[%s3 + $0x90] sm:$0xf]
        %v4411 = vld [vmem:[%s3 + $0x94] sm:$0xf]
        %v4412 = vld [vmem:[%s3 + $0x98] sm:$0xf]
        %v4413 = vld [vmem:[%s3 + $0x9c] sm:$0xf]
        %v4414 = vld [vmem:[%s3 + $0xa0] sm:$0xf]
        %v4415 = vld [vmem:[%s3 + $0xa4] sm:$0xf]
        %v4416 = vld [vmem:[%s3 + $0xa8] sm:$0xf]
        %v4417 = vld [vmem:[%s3 + $0xac] sm:$0xf]
        %v4418 = vld [vmem:[%s3 + $0xb0] sm:$0xf]
        %v4419 = vld [vmem:[%s3 + $0xb4] sm:$0xf]
        %v4420 = vld [vmem:[%s3 + $0xb8] sm:$0xf]
        %v4421 = vld [vmem:[%s3 + $0xbc] sm:$0xf]
        %v4422 = vld [vmem:[%s3 + $0xc0] sm:$0xf]
        %v4423 = vld [vmem:[%s3 + $0xc4] sm:$0xf]
        %v4424 = vld [vmem:[%s3 + $0xc8] sm:$0xf]
        %v4425 = vld [vmem:[%s3 + $0xcc] sm:$0xf]
        %v4426 = vld [vmem:[%s3 + $0xd0] sm:$0xf]
        %v4427 = vld [vmem:[%s3 + $0xd4] sm:$0xf]
        %v4428 = vld [vmem:[%s3 + $0xd8] sm:$0xf]
        %v4429 = vld [vmem:[%s3 + $0xdc] sm:$0xf]
        %v4430 = vld [vmem:[%s3 + $0xe0] sm:$0xf]
        %v4431 = vld [vmem:[%s3 + $0xe4] sm:$0xf]
        %v4432 = vld [vmem:[%s3 + $0xe8] sm:$0xf]
        %v4433 = vld [vmem:[%s3 + $0xec] sm:$0xf]
        %v4434 = vld [vmem:[%s3 + $0xf0] sm:$0xf]
        %v4435 = vld [vmem:[%s3 + $0xf4] sm:$0xf]
        %v4436 = vld [vmem:[%s3 + $0xf8] sm:$0xf]
        %v4437 = vld [vmem:[%s3 + $0xfc] sm:$0xf]
        %v4438 = vld [vmem:[%s3 + $0x100] sm:$0xf]
        %v4439 = vld [vmem:[%s3 + $0x104] sm:$0xf]
        %v4440 = vld [vmem:[%s3 + $0x108] sm:$0xf]
        %v4441 = vld [vmem:[%s3 + $0x10c] sm:$0xf]
        %v4442 = vld [vmem:[%s3 + $0x110] sm:$0xf]
        %v4443 = vld [vmem:[%s3 + $0x114] sm:$0xf]
        %v4444 = vld [vmem:[%s3 + $0x118] sm:$0xf]
        %v4445 = vld [vmem:[%s3 + $0x11c] sm:$0xf]
        %v4446 = vld [vmem:[%s4] sm:$0x1]
        %v4448 = vlaneseq
        %v4449 = vshrl.u32 %v4448, 7
        %v4450 = vsub.s32 0, %v4449
        %v4451 = vrot.slane %v4446, %v4450
        %v4525 = vunpack.c.l.b16 %v4374
        %v4526 = vunpack.c.l.b16 %v4375
        %v4527 = vunpack.c.l.b16 %v4376
        %v4528 = vunpack.c.l.b16 %v4377
        %v4529 = vunpack.c.l.b16 %v4378
        %v4530 = vunpack.c.l.b16 %v4379
        %v4531 = vunpack.c.l.b16 %v4380
        %v4532 = vunpack.c.l.b16 %v4381
        %v4533 = vunpack.c.l.b16 %v4382
        %v4534 = vunpack.c.l.b16 %v4383
        %v4535 = vunpack.c.l.b16 %v4384
        %v4536 = vunpack.c.l.b16 %v4385
        %v4537 = vunpack.c.l.b16 %v4386
        %v4538 = vunpack.c.l.b16 %v4387
        %v4539 = vunpack.c.l.b16 %v4388
        %v4540 = vunpack.c.l.b16 %v4389
        %v4541 = vunpack.c.l.b16 %v4390
        %v4542 = vunpack.c.l.b16 %v4391
        %v4543 = vunpack.c.l.b16 %v4392
        %v4544 = vunpack.c.l.b16 %v4393
        %v4545 = vunpack.c.l.b16 %v4394
        %v4546 = vunpack.c.l.b16 %v4395
        %v4547 = vunpack.c.l.b16 %v4396
        %v4548 = vunpack.c.l.b16 %v4397
        %v4549 = vunpack.c.l.b16 %v4398
        %v4550 = vunpack.c.l.b16 %v4399
        %v4551 = vunpack.c.l.b16 %v4400
        %v4552 = vunpack.c.l.b16 %v4401
        %v4553 = vunpack.c.l.b16 %v4402
        %v4554 = vunpack.c.l.b16 %v4403
        %v4555 = vunpack.c.l.b16 %v4404
        %v4556 = vunpack.c.l.b16 %v4405
        %v4557 = vunpack.c.l.b16 %v4406
        %v4558 = vunpack.c.l.b16 %v4407
        %v4559 = vunpack.c.l.b16 %v4408
        %v4560 = vunpack.c.l.b16 %v4409
        %v4561 = vunpack.c.l.b16 %v4410
        %v4562 = vunpack.c.l.b16 %v4411
        %v4563 = vunpack.c.l.b16 %v4412
        %v4564 = vunpack.c.l.b16 %v4413
        %v4565 = vunpack.c.l.b16 %v4414
        %v4566 = vunpack.c.l.b16 %v4415
        %v4567 = vunpack.c.l.b16 %v4416
        %v4568 = vunpack.c.l.b16 %v4417
        %v4569 = vunpack.c.l.b16 %v4418
        %v4570 = vunpack.c.l.b16 %v4419
        %v4571 = vunpack.c.l.b16 %v4420
        %v4572 = vunpack.c.l.b16 %v4421
        %v4573 = vunpack.c.l.b16 %v4422
        %v4574 = vunpack.c.l.b16 %v4423
        %v4575 = vunpack.c.l.b16 %v4424
        %v4576 = vunpack.c.l.b16 %v4425
        %v4577 = vunpack.c.l.b16 %v4426
        %v4578 = vunpack.c.l.b16 %v4427
        %v4579 = vunpack.c.l.b16 %v4428
        %v4580 = vunpack.c.l.b16 %v4429
        %v4581 = vunpack.c.l.b16 %v4430
        %v4582 = vunpack.c.l.b16 %v4431
        %v4583 = vunpack.c.l.b16 %v4432
        %v4584 = vunpack.c.l.b16 %v4433
        %v4585 = vunpack.c.l.b16 %v4434
        %v4586 = vunpack.c.l.b16 %v4435
        %v4587 = vunpack.c.l.b16 %v4436
        %v4588 = vunpack.c.l.b16 %v4437
        %v4589 = vunpack.c.l.b16 %v4438
        %v4590 = vunpack.c.l.b16 %v4439
        %v4591 = vunpack.c.l.b16 %v4440
        %v4592 = vunpack.c.l.b16 %v4441
        %v4593 = vunpack.c.l.b16 %v4442
        %v4594 = vunpack.c.l.b16 %v4443
        %v4595 = vunpack.c.l.b16 %v4444
        %v4596 = vunpack.c.l.b16 %v4445
        %v4597 = vpack.c.b16 %v4526, %v4525
        %v4598 = vpack.c.b16 %v4528, %v4527
        %v4599 = vpack.c.b16 %v4530, %v4529
        %v4600 = vpack.c.b16 %v4532, %v4531
        %v4601 = vpack.c.b16 %v4534, %v4533
        %v4602 = vpack.c.b16 %v4536, %v4535
        %v4603 = vpack.c.b16 %v4538, %v4537
        %v4604 = vpack.c.b16 %v4540, %v4539
        %v4605 = vpack.c.b16 %v4542, %v4541
        %v4606 = vpack.c.b16 %v4544, %v4543
        %v4607 = vpack.c.b16 %v4546, %v4545
        %v4608 = vpack.c.b16 %v4548, %v4547
        %v4609 = vpack.c.b16 %v4550, %v4549
        %v4610 = vpack.c.b16 %v4552, %v4551
        %v4611 = vpack.c.b16 %v4554, %v4553
        %v4612 = vpack.c.b16 %v4556, %v4555
        %v4613 = vpack.c.b16 %v4558, %v4557
        %v4614 = vpack.c.b16 %v4560, %v4559
        %v4615 = vpack.c.b16 %v4562, %v4561
        %v4616 = vpack.c.b16 %v4564, %v4563
        %v4617 = vpack.c.b16 %v4566, %v4565
        %v4618 = vpack.c.b16 %v4568, %v4567
        %v4619 = vpack.c.b16 %v4570, %v4569
        %v4620 = vpack.c.b16 %v4572, %v4571
        %v4621 = vpack.c.b16 %v4574, %v4573
        %v4622 = vpack.c.b16 %v4576, %v4575
        %v4623 = vpack.c.b16 %v4578, %v4577
        %v4624 = vpack.c.b16 %v4580, %v4579
        %v4625 = vpack.c.b16 %v4582, %v4581
        %v4626 = vpack.c.b16 %v4584, %v4583
        %v4627 = vpack.c.b16 %v4586, %v4585
        %v4628 = vpack.c.b16 %v4588, %v4587
        %v4629 = vpack.c.b16 %v4590, %v4589
        %v4630 = vpack.c.b16 %v4592, %v4591
        %v4631 = vpack.c.b16 %v4594, %v4593
        %v4632 = vpack.c.b16 %v4596, %v4595
        %v4670 = vsel %vm1453, %v4298, 0
        %v4673 = vsel %vm1453, %v4303, 0
        %v4676 = vsel %vm1453, %v4308, 0
        %v4679 = vsel %vm1453, %v4313, 0
        %v4682 = vsel %vm1453, %v4318, 0
        %v4685 = vsel %vm1453, %v4323, 0
        %v4688 = vsel %vm1453, %v4328, 0
        %v4691 = vsel %vm1453, %v4333, 0
        %v4694 = vsel %vm1453, %v4338, 0
        %v4697 = vsel %vm1453, %v4343, 0
        %v4700 = vsel %vm1453, %v4348, 0
        %v4703 = vsel %vm1453, %v4353, 0
        %v4706 = vsel %vm1453, %v4358, 0
        %v4709 = vsel %vm1453, %v4363, 0
        %v4712 = vsel %vm1453, %v4368, 0
        %v4715 = vsel %vm1453, %v4373, 0
        %4717 = vmatprep.subr.bf16.mxu0 0
        %4718 = vmatpush1.bf16.msra.mxu0 %v4597
        %4719 = vmatprep.subr.bf16.mxu0 0
        %4720 = vmatpush1.bf16.msra.mxu0 %v4598
        %4721 = vmatprep.subr.bf16.mxu0 0
        %4722 = vmatpush1.bf16.msra.mxu0 %v4599
        %4723 = vmatprep.subr.bf16.mxu0 0
        %4724 = vmatpush1.bf16.msra.mxu0 %v4600
        %4725 = vmatprep.subr.bf16.mxu0 0
        %4726 = vmatpush1.bf16.msra.mxu0 %v4601
        %4727 = vmatprep.subr.bf16.mxu0 0
        %4728 = vmatpush1.bf16.msra.mxu0 %v4602
        %4729 = vmatprep.subr.bf16.mxu0 0
        %4730 = vmatpush1.bf16.msra.mxu0 %v4603
        %4731 = vmatprep.subr.bf16.mxu0 0
        %4732 = vmatpush1.bf16.msra.mxu0 %v4604
        %4733 = vmatprep.subr.bf16.mxu0 0
        %4734 = vmatpush1.bf16.msra.mxu0 %v4605
        %4735 = vmatprep.subr.bf16.mxu0 0
        %4736 = vmatpush1.bf16.msra.mxu0 %v4606
        %4737 = vmatprep.subr.bf16.mxu0 0
        %4738 = vmatpush1.bf16.msra.mxu0 %v4607
        %4739 = vmatprep.subr.bf16.mxu0 0
        %4740 = vmatpush1.bf16.msra.mxu0 %v4608
        %4741 = vmatprep.subr.bf16.mxu0 0
        %4742 = vmatpush1.bf16.msra.mxu0 %v4609
        %4743 = vmatprep.subr.bf16.mxu0 0
        %4744 = vmatpush1.bf16.msra.mxu0 %v4610
        %4745 = vmatprep.subr.bf16.mxu0 0
        %4746 = vmatpush1.bf16.msra.mxu0 %v4611
        %4747 = vmatprep.subr.bf16.mxu0 0
        %4748 = vmatpush1.bf16.msra.mxu0 %v4612
        %4749 = vmatprep.mubr.bf16.mxu0 %v4295
        %4750 = vmatmul.mubr.bf16.gmra.mrb[0].mxu0 %v4294
        %v4751 = vpop.f32.mrb[0].mxu0
        %v4752 = vadd.f32 %v4451, %v4751
        %v4753 = vpop.f32.mrb[0].mxu0
        %v4754 = vpop.f32.mrb[0].mxu0
        %v4755 = vadd.f32 %v4451, %v4754
        %v4756 = vpop.f32.mrb[0].mxu0
        %4757 = vmatprep.mubr.bf16.mxu0 %v4300
        %4758 = vmatmul.mubr.bf16.gmra.mrb[0].mxu0 %v4299
        %v4759 = vpop.f32.mrb[0].mxu0
        %v4760 = vadd.f32 %v4451, %v4759
        %v4761 = vpop.f32.mrb[0].mxu0
        %v4762 = vpop.f32.mrb[0].mxu0
        %v4763 = vadd.f32 %v4451, %v4762
        %v4764 = vpop.f32.mrb[0].mxu0
        %4765 = vmatprep.mubr.bf16.mxu0 %v4305
        %4766 = vmatmul.mubr.bf16.gmra.mrb[0].mxu0 %v4304
        %v4767 = vpop.f32.mrb[0].mxu0
        %v4768 = vadd.f32 %v4451, %v4767
        %v4769 = vpop.f32.mrb[0].mxu0
        %v4770 = vpop.f32.mrb[0].mxu0
        %v4771 = vadd.f32 %v4451, %v4770
        %v4772 = vpop.f32.mrb[0].mxu0
        %4773 = vmatprep.mubr.bf16.mxu0 %v4310
        %4774 = vmatmul.mubr.bf16.gmra.mrb[0].mxu0 %v4309
        %v4775 = vpop.f32.mrb[0].mxu0
        %v4776 = vadd.f32 %v4451, %v4775
        %v4777 = vpop.f32.mrb[0].mxu0
        %v4778 = vpop.f32.mrb[0].mxu0
        %v4779 = vadd.f32 %v4451, %v4778
        %v4780 = vpop.f32.mrb[0].mxu0
        %4781 = vmatprep.mubr.bf16.mxu0 %v4315
        %4782 = vmatmul.mubr.bf16.gmra.mrb[0].mxu0 %v4314
        %v4783 = vpop.f32.mrb[0].mxu0
        %v4784 = vadd.f32 %v4451, %v4783
        %v4785 = vpop.f32.mrb[0].mxu0
        %v4786 = vpop.f32.mrb[0].mxu0
        %v4787 = vadd.f32 %v4451, %v4786
        %v4788 = vpop.f32.mrb[0].mxu0
        %4789 = vmatprep.mubr.bf16.mxu0 %v4320
        %4790 = vmatmul.mubr.bf16.gmra.mrb[0].mxu0 %v4319
        %v4791 = vpop.f32.mrb[0].mxu0
        %v4792 = vadd.f32 %v4451, %v4791
        %v4793 = vpop.f32.mrb[0].mxu0
        %v4794 = vpop.f32.mrb[0].mxu0
        %v4795 = vadd.f32 %v4451, %v4794
        %v4796 = vpop.f32.mrb[0].mxu0
        %4797 = vmatprep.mubr.bf16.mxu0 %v4325
        %4798 = vmatmul.mubr.bf16.gmra.mrb[0].mxu0 %v4324
        %v4799 = vpop.f32.mrb[0].mxu0
        %v4800 = vadd.f32 %v4451, %v4799
        %v4801 = vpop.f32.mrb[0].mxu0
        %v4802 = vpop.f32.mrb[0].mxu0
        %v4803 = vadd.f32 %v4451, %v4802
        %v4804 = vpop.f32.mrb[0].mxu0
        %4805 = vmatprep.mubr.bf16.mxu0 %v4330
        %4806 = vmatmul.mubr.bf16.gmra.mrb[0].mxu0 %v4329
        %v4807 = vpop.f32.mrb[0].mxu0
        %v4808 = vadd.f32 %v4451, %v4807
        %v4809 = vpop.f32.mrb[0].mxu0
        %v4810 = vpop.f32.mrb[0].mxu0
        %v4811 = vadd.f32 %v4451, %v4810
        %v4812 = vpop.f32.mrb[0].mxu0
        %4813 = vmatprep.mubr.bf16.mxu0 %v4335
        %4814 = vmatmul.mubr.bf16.gmra.mrb[0].mxu0 %v4334
        %v4815 = vpop.f32.mrb[0].mxu0
        %v4816 = vadd.f32 %v4451, %v4815
        %v4817 = vpop.f32.mrb[0].mxu0
        %v4818 = vpop.f32.mrb[0].mxu0
        %v4819 = vadd.f32 %v4451, %v4818
        %v4820 = vpop.f32.mrb[0].mxu0
        %4821 = vmatprep.mubr.bf16.mxu0 %v4340
        %4822 = vmatmul.mubr.bf16.gmra.mrb[0].mxu0 %v4339
        %v4823 = vpop.f32.mrb[0].mxu0
        %v4824 = vadd.f32 %v4451, %v4823
        %v4825 = vpop.f32.mrb[0].mxu0
        %v4826 = vpop.f32.mrb[0].mxu0
        %v4827 = vadd.f32 %v4451, %v4826
        %v4828 = vpop.f32.mrb[0].mxu0
        %4829 = vmatprep.mubr.bf16.mxu0 %v4345
        %4830 = vmatmul.mubr.bf16.gmra.mrb[0].mxu0 %v4344
        %v4831 = vpop.f32.mrb[0].mxu0
        %v4832 = vadd.f32 %v4451, %v4831
        %v4833 = vpop.f32.mrb[0].mxu0
        %v4834 = vpop.f32.mrb[0].mxu0
        %v4835 = vadd.f32 %v4451, %v4834
        %v4836 = vpop.f32.mrb[0].mxu0
        %4837 = vmatprep.mubr.bf16.mxu0 %v4350
        %4838 = vmatmul.mubr.bf16.gmra.mrb[0].mxu0 %v4349
        %v4839 = vpop.f32.mrb[0].mxu0
        %v4840 = vadd.f32 %v4451, %v4839
        %v4841 = vpop.f32.mrb[0].mxu0
        %v4842 = vpop.f32.mrb[0].mxu0
        %v4843 = vadd.f32 %v4451, %v4842
        %v4844 = vpop.f32.mrb[0].mxu0
        %4845 = vmatprep.mubr.bf16.mxu0 %v4355
        %4846 = vmatmul.mubr.bf16.gmra.mrb[0].mxu0 %v4354
        %v4847 = vpop.f32.mrb[0].mxu0
        %v4848 = vadd.f32 %v4451, %v4847
        %v4849 = vpop.f32.mrb[0].mxu0
        %v4850 = vpop.f32.mrb[0].mxu0
        %v4851 = vadd.f32 %v4451, %v4850
        %v4852 = vpop.f32.mrb[0].mxu0
        %4853 = vmatprep.mubr.bf16.mxu0 %v4360
        %4854 = vmatmul.mubr.bf16.gmra.mrb[0].mxu0 %v4359
        %v4855 = vpop.f32.mrb[0].mxu0
        %v4856 = vadd.f32 %v4451, %v4855
        %v4857 = vpop.f32.mrb[0].mxu0
        %v4858 = vpop.f32.mrb[0].mxu0
        %v4859 = vadd.f32 %v4451, %v4858
        %v4860 = vpop.f32.mrb[0].mxu0
        %4861 = vmatprep.mubr.bf16.mxu0 %v4365
        %4862 = vmatmul.mubr.bf16.gmra.mrb[0].mxu0 %v4364
        %v4863 = vpop.f32.mrb[0].mxu0
        %v4864 = vadd.f32 %v4451, %v4863
        %v4865 = vpop.f32.mrb[0].mxu0
        %v4866 = vpop.f32.mrb[0].mxu0
        %v4867 = vadd.f32 %v4451, %v4866
        %v4868 = vpop.f32.mrb[0].mxu0
        %4869 = vmatprep.mubr.bf16.mxu0 %v4370
        %4870 = vmatmul.mubr.bf16.gmra.mrb[0].mxu0 %v4369
        %v4871 = vpop.f32.mrb[0].mxu0
        %v4872 = vadd.f32 %v4451, %v4871
        %v4873 = vpop.f32.mrb[0].mxu0
        %v4874 = vpop.f32.mrb[0].mxu0
        %v4875 = vadd.f32 %v4451, %v4874
        %v4876 = vpop.f32.mrb[0].mxu0
        %4877 = vdwg.mxu0
        %4878 = vmatprep.subr.bf16.mxu0 0
        %4879 = vmatpush1.bf16.msra.mxu0 %v4613
        %4880 = vmatprep.subr.bf16.mxu0 0
        %4881 = vmatpush1.bf16.msra.mxu0 %v4614
        %4882 = vmatprep.subr.bf16.mxu0 0
        %4883 = vmatpush1.bf16.msra.mxu0 %v4615
        %4884 = vmatprep.subr.bf16.mxu0 0
        %4885 = vmatpush1.bf16.msra.mxu0 %v4616
        %4886 = vmatprep.subr.bf16.mxu0 0
        %4887 = vmatpush1.bf16.msra.mxu0 %v4617
        %4888 = vmatprep.subr.bf16.mxu0 0
        %4889 = vmatpush1.bf16.msra.mxu0 %v4618
        %4890 = vmatprep.subr.bf16.mxu0 0
        %4891 = vmatpush1.bf16.msra.mxu0 %v4619
        %4892 = vmatprep.subr.bf16.mxu0 0
        %4893 = vmatpush1.bf16.msra.mxu0 %v4620
        %4894 = vmatprep.subr.bf16.mxu0 0
        %4895 = vmatpush1.bf16.msra.mxu0 %v4621
        %4896 = vmatprep.subr.bf16.mxu0 0
        %4897 = vmatpush1.bf16.msra.mxu0 %v4622
        %4898 = vmatprep.subr.bf16.mxu0 0
        %4899 = vmatpush1.bf16.msra.mxu0 %v4623
        %4900 = vmatprep.subr.bf16.mxu0 0
        %4901 = vmatpush1.bf16.msra.mxu0 %v4624
        %4902 = vmatprep.subr.bf16.mxu0 0
        %4903 = vmatpush1.bf16.msra.mxu0 %v4625
        %4904 = vmatprep.subr.bf16.mxu0 0
        %4905 = vmatpush1.bf16.msra.mxu0 %v4626
        %4906 = vmatprep.subr.bf16.mxu0 0
        %4907 = vmatpush1.bf16.msra.mxu0 %v4627
        %4908 = vmatprep.subr.bf16.mxu0 0
        %4909 = vmatpush1.bf16.msra.mxu0 %v4628
        %4910 = vmatprep.mubr.bf16.mxu0 %v4297
        %4911 = vmatmul.mubr.bf16.gmra.mrb[0].mxu0 %v4296
        %v4912 = vpop.f32.mrb[0].mxu0
        %v4913 = vadd.f32 %v4752, %v4912
        %v4914 = vpop.f32.mrb[0].mxu0
        %v4915 = vpop.f32.mrb[0].mxu0
        %v4916 = vadd.f32 %v4755, %v4915
        %v4917 = vpop.f32.mrb[0].mxu0
        %4918 = vmatprep.mubr.bf16.mxu0 %v4302
        %4919 = vmatmul.mubr.bf16.gmra.mrb[0].mxu0 %v4301
        %v4920 = vpop.f32.mrb[0].mxu0
        %v4921 = vadd.f32 %v4760, %v4920
        %v4922 = vpop.f32.mrb[0].mxu0
        %v4923 = vpop.f32.mrb[0].mxu0
        %v4924 = vadd.f32 %v4763, %v4923
        %v4925 = vpop.f32.mrb[0].mxu0
        %4926 = vmatprep.mubr.bf16.mxu0 %v4307
        %4927 = vmatmul.mubr.bf16.gmra.mrb[0].mxu0 %v4306
        %v4928 = vpop.f32.mrb[0].mxu0
        %v4929 = vadd.f32 %v4768, %v4928
        %v4930 = vpop.f32.mrb[0].mxu0
        %v4931 = vpop.f32.mrb[0].mxu0
        %v4932 = vadd.f32 %v4771, %v4931
        %v4933 = vpop.f32.mrb[0].mxu0
        %4934 = vmatprep.mubr.bf16.mxu0 %v4312
        %4935 = vmatmul.mubr.bf16.gmra.mrb[0].mxu0 %v4311
        %v4936 = vpop.f32.mrb[0].mxu0
        %v4937 = vadd.f32 %v4776, %v4936
        %v4938 = vpop.f32.mrb[0].mxu0
        %v4939 = vpop.f32.mrb[0].mxu0
        %v4940 = vadd.f32 %v4779, %v4939
        %v4941 = vpop.f32.mrb[0].mxu0
        %4942 = vmatprep.mubr.bf16.mxu0 %v4317
        %4943 = vmatmul.mubr.bf16.gmra.mrb[0].mxu0 %v4316
        %v4944 = vpop.f32.mrb[0].mxu0
        %v4945 = vadd.f32 %v4784, %v4944
        %v4946 = vpop.f32.mrb[0].mxu0
        %v4947 = vpop.f32.mrb[0].mxu0
        %v4948 = vadd.f32 %v4787, %v4947
        %v4949 = vpop.f32.mrb[0].mxu0
        %4950 = vmatprep.mubr.bf16.mxu0 %v4322
        %4951 = vmatmul.mubr.bf16.gmra.mrb[0].mxu0 %v4321
        %v4952 = vpop.f32.mrb[0].mxu0
        %v4953 = vadd.f32 %v4792, %v4952
        %v4954 = vpop.f32.mrb[0].mxu0
        %v4955 = vpop.f32.mrb[0].mxu0
        %v4956 = vadd.f32 %v4795, %v4955
        %v4957 = vpop.f32.mrb[0].mxu0
        %4958 = vmatprep.mubr.bf16.mxu0 %v4327
        %4959 = vmatmul.mubr.bf16.gmra.mrb[0].mxu0 %v4326
        %v4960 = vpop.f32.mrb[0].mxu0
        %v4961 = vadd.f32 %v4800, %v4960
        %v4962 = vpop.f32.mrb[0].mxu0
        %v4963 = vpop.f32.mrb[0].mxu0
        %v4964 = vadd.f32 %v4803, %v4963
        %v4965 = vpop.f32.mrb[0].mxu0
        %4966 = vmatprep.mubr.bf16.mxu0 %v4332
        %4967 = vmatmul.mubr.bf16.gmra.mrb[0].mxu0 %v4331
        %v4968 = vpop.f32.mrb[0].mxu0
        %v4969 = vadd.f32 %v4808, %v4968
        %v4970 = vpop.f32.mrb[0].mxu0
        %v4971 = vpop.f32.mrb[0].mxu0
        %v4972 = vadd.f32 %v4811, %v4971
        %v4973 = vpop.f32.mrb[0].mxu0
        %4974 = vmatprep.mubr.bf16.mxu0 %v4337
        %4975 = vmatmul.mubr.bf16.gmra.mrb[0].mxu0 %v4336
        %v4976 = vpop.f32.mrb[0].mxu0
        %v4977 = vadd.f32 %v4816, %v4976
        %v4978 = vpop.f32.mrb[0].mxu0
        %v4979 = vpop.f32.mrb[0].mxu0
        %v4980 = vadd.f32 %v4819, %v4979
        %v4981 = vpop.f32.mrb[0].mxu0
        %4982 = vmatprep.mubr.bf16.mxu0 %v4342
        %4983 = vmatmul.mubr.bf16.gmra.mrb[0].mxu0 %v4341
        %v4984 = vpop.f32.mrb[0].mxu0
        %v4985 = vadd.f32 %v4824, %v4984
        %v4986 = vpop.f32.mrb[0].mxu0
        %v4987 = vpop.f32.mrb[0].mxu0
        %v4988 = vadd.f32 %v4827, %v4987
        %v4989 = vpop.f32.mrb[0].mxu0
        %4990 = vmatprep.mubr.bf16.mxu0 %v4347
        %4991 = vmatmul.mubr.bf16.gmra.mrb[0].mxu0 %v4346
        %v4992 = vpop.f32.mrb[0].mxu0
        %v4993 = vadd.f32 %v4832, %v4992
        %v4994 = vpop.f32.mrb[0].mxu0
        %v4995 = vpop.f32.mrb[0].mxu0
        %v4996 = vadd.f32 %v4835, %v4995
        %v4997 = vpop.f32.mrb[0].mxu0
        %4998 = vmatprep.mubr.bf16.mxu0 %v4352
        %4999 = vmatmul.mubr.bf16.gmra.mrb[0].mxu0 %v4351
        %v5000 = vpop.f32.mrb[0].mxu0
        %v5001 = vadd.f32 %v4840, %v5000
        %v5002 = vpop.f32.mrb[0].mxu0
        %v5003 = vpop.f32.mrb[0].mxu0
        %v5004 = vadd.f32 %v4843, %v5003
        %v5005 = vpop.f32.mrb[0].mxu0
        %5006 = vmatprep.mubr.bf16.mxu0 %v4357
        %5007 = vmatmul.mubr.bf16.gmra.mrb[0].mxu0 %v4356
        %v5008 = vpop.f32.mrb[0].mxu0
        %v5009 = vadd.f32 %v4848, %v5008
        %v5010 = vpop.f32.mrb[0].mxu0
        %v5011 = vpop.f32.mrb[0].mxu0
        %v5012 = vadd.f32 %v4851, %v5011
        %v5013 = vpop.f32.mrb[0].mxu0
        %5014 = vmatprep.mubr.bf16.mxu0 %v4362
        %5015 = vmatmul.mubr.bf16.gmra.mrb[0].mxu0 %v4361
        %v5016 = vpop.f32.mrb[0].mxu0
        %v5017 = vadd.f32 %v4856, %v5016
        %v5018 = vpop.f32.mrb[0].mxu0
        %v5019 = vpop.f32.mrb[0].mxu0
        %v5020 = vadd.f32 %v4859, %v5019
        %v5021 = vpop.f32.mrb[0].mxu0
        %5022 = vmatprep.mubr.bf16.mxu0 %v4367
        %5023 = vmatmul.mubr.bf16.gmra.mrb[0].mxu0 %v4366
        %v5024 = vpop.f32.mrb[0].mxu0
        %v5025 = vadd.f32 %v4864, %v5024
        %v5026 = vpop.f32.mrb[0].mxu0
        %v5027 = vpop.f32.mrb[0].mxu0
        %v5028 = vadd.f32 %v4867, %v5027
        %v5029 = vpop.f32.mrb[0].mxu0
        %5030 = vmatprep.mubr.bf16.mxu0 %v4372
        %5031 = vmatmul.mubr.bf16.gmra.mrb[0].mxu0 %v4371
        %v5032 = vpop.f32.mrb[0].mxu0
        %v5033 = vadd.f32 %v4872, %v5032
        %v5034 = vpop.f32.mrb[0].mxu0
        %v5035 = vpop.f32.mrb[0].mxu0
        %v5036 = vadd.f32 %v4875, %v5035
        %v5037 = vpop.f32.mrb[0].mxu0
        %5038 = vdwg.mxu0
        %5039 = vmatprep.subr.bf16.mxu0 0
        %5040 = vmatpush1.bf16.msra.mxu0 %v4629
        %5041 = vmatprep.subr.bf16.mxu0 0
        %5042 = vmatpush1.bf16.msra.mxu0 %v4630
        %5043 = vmatprep.subr.bf16.mxu0 0
        %5044 = vmatpush1.bf16.msra.mxu0 %v4631
        %5045 = vmatprep.subr.bf16.mxu0 0
        %5046 = vmatpush1.bf16.msra.mxu0 %v4632
        %5047 = vmatprep.subr.bf16.mxu0 0
        %5048 = vmatpush1.bf16.msra.mxu0 0
        %5049 = vmatprep.subr.bf16.mxu0 0
        %5050 = vmatpush1.bf16.msra.mxu0 0
        %5051 = vmatprep.subr.bf16.mxu0 0
        %5052 = vmatpush1.bf16.msra.mxu0 0
        %5053 = vmatprep.subr.bf16.mxu0 0
        %5054 = vmatpush1.bf16.msra.mxu0 0
        %5055 = vmatprep.subr.bf16.mxu0 0
        %5056 = vmatpush1.bf16.msra.mxu0 0
        %5057 = vmatprep.subr.bf16.mxu0 0
        %5058 = vmatpush1.bf16.msra.mxu0 0
        %5059 = vmatprep.subr.bf16.mxu0 0
        %5060 = vmatpush1.bf16.msra.mxu0 0
        %5061 = vmatprep.subr.bf16.mxu0 0
        %5062 = vmatpush1.bf16.msra.mxu0 0
        %5063 = vmatprep.subr.bf16.mxu0 0
        %5064 = vmatpush1.bf16.msra.mxu0 0
        %5065 = vmatprep.subr.bf16.mxu0 0
        %5066 = vmatpush1.bf16.msra.mxu0 0
        %5067 = vmatprep.subr.bf16.mxu0 0
        %5068 = vmatpush1.bf16.msra.mxu0 0
        %5069 = vmatprep.subr.bf16.mxu0 0
        %5070 = vmatpush1.bf16.msra.mxu0 0
        %5071 = vmatprep.mubr.bf16.mxu0 0
        %5072 = vmatmul.mubr.bf16.gmra.mrb[0].mxu0 %v4670
        %v5073 = vpop.f32.mrb[0].mxu0
        %v5074 = vadd.f32 %v4913, %v5073
        %v5075 = vpop.f32.mrb[0].mxu0
        %v5076 = vpop.f32.mrb[0].mxu0
        %v5077 = vadd.f32 %v4916, %v5076
        %v5078 = vpop.f32.mrb[0].mxu0
        %5079 = vmatprep.mubr.bf16.mxu0 0
        %5080 = vmatmul.mubr.bf16.gmra.mrb[0].mxu0 %v4673
        %v5081 = vpop.f32.mrb[0].mxu0
        %v5082 = vadd.f32 %v4921, %v5081
        %v5083 = vpop.f32.mrb[0].mxu0
        %v5084 = vpop.f32.mrb[0].mxu0
        %v5085 = vadd.f32 %v4924, %v5084
        %v5086 = vpop.f32.mrb[0].mxu0
        %5087 = vmatprep.mubr.bf16.mxu0 0
        %5088 = vmatmul.mubr.bf16.gmra.mrb[0].mxu0 %v4676
        %v5089 = vpop.f32.mrb[0].mxu0
        %v5090 = vadd.f32 %v4929, %v5089
        %v5091 = vpop.f32.mrb[0].mxu0
        %v5092 = vpop.f32.mrb[0].mxu0
        %v5093 = vadd.f32 %v4932, %v5092
        %v5094 = vpop.f32.mrb[0].mxu0
        %5095 = vmatprep.mubr.bf16.mxu0 0
        %5096 = vmatmul.mubr.bf16.gmra.mrb[0].mxu0 %v4679
        %v5097 = vpop.f32.mrb[0].mxu0
        %v5098 = vadd.f32 %v4937, %v5097
        %v5099 = vpop.f32.mrb[0].mxu0
        %v5100 = vpop.f32.mrb[0].mxu0
        %v5101 = vadd.f32 %v4940, %v5100
        %v5102 = vpop.f32.mrb[0].mxu0
        %5103 = vmatprep.mubr.bf16.mxu0 0
        %5104 = vmatmul.mubr.bf16.gmra.mrb[0].mxu0 %v4682
        %v5105 = vpop.f32.mrb[0].mxu0
        %v5106 = vadd.f32 %v4945, %v5105
        %v5107 = vpop.f32.mrb[0].mxu0
        %v5108 = vpop.f32.mrb[0].mxu0
        %v5109 = vadd.f32 %v4948, %v5108
        %v5110 = vpop.f32.mrb[0].mxu0
        %5111 = vmatprep.mubr.bf16.mxu0 0
        %5112 = vmatmul.mubr.bf16.gmra.mrb[0].mxu0 %v4685
        %v5113 = vpop.f32.mrb[0].mxu0
        %v5114 = vadd.f32 %v4953, %v5113
        %v5115 = vpop.f32.mrb[0].mxu0
        %v5116 = vpop.f32.mrb[0].mxu0
        %v5117 = vadd.f32 %v4956, %v5116
        %v5118 = vpop.f32.mrb[0].mxu0
        %5119 = vmatprep.mubr.bf16.mxu0 0
        %5120 = vmatmul.mubr.bf16.gmra.mrb[0].mxu0 %v4688
        %v5121 = vpop.f32.mrb[0].mxu0
        %v5122 = vadd.f32 %v4961, %v5121
        %v5123 = vpop.f32.mrb[0].mxu0
        %v5124 = vpop.f32.mrb[0].mxu0
        %v5125 = vadd.f32 %v4964, %v5124
        %v5126 = vpop.f32.mrb[0].mxu0
        %5127 = vmatprep.mubr.bf16.mxu0 0
        %5128 = vmatmul.mubr.bf16.gmra.mrb[0].mxu0 %v4691
        %v5129 = vpop.f32.mrb[0].mxu0
        %v5130 = vadd.f32 %v4969, %v5129
        %v5131 = vpop.f32.mrb[0].mxu0
        %v5132 = vpop.f32.mrb[0].mxu0
        %v5133 = vadd.f32 %v4972, %v5132
        %v5134 = vpop.f32.mrb[0].mxu0
        %5135 = vmatprep.mubr.bf16.mxu0 0
        %5136 = vmatmul.mubr.bf16.gmra.mrb[0].mxu0 %v4694
        %v5137 = vpop.f32.mrb[0].mxu0
        %v5138 = vadd.f32 %v4977, %v5137
        %v5139 = vpop.f32.mrb[0].mxu0
        %v5140 = vpop.f32.mrb[0].mxu0
        %v5141 = vadd.f32 %v4980, %v5140
        %v5142 = vpop.f32.mrb[0].mxu0
        %5143 = vmatprep.mubr.bf16.mxu0 0
        %5144 = vmatmul.mubr.bf16.gmra.mrb[0].mxu0 %v4697
        %v5145 = vpop.f32.mrb[0].mxu0
        %v5146 = vadd.f32 %v4985, %v5145
        %v5147 = vpop.f32.mrb[0].mxu0
        %v5148 = vpop.f32.mrb[0].mxu0
        %v5149 = vadd.f32 %v4988, %v5148
        %v5150 = vpop.f32.mrb[0].mxu0
        %5151 = vmatprep.mubr.bf16.mxu0 0
        %5152 = vmatmul.mubr.bf16.gmra.mrb[0].mxu0 %v4700
        %v5153 = vpop.f32.mrb[0].mxu0
        %v5154 = vadd.f32 %v4993, %v5153
        %v5155 = vpop.f32.mrb[0].mxu0
        %v5156 = vpop.f32.mrb[0].mxu0
        %v5157 = vadd.f32 %v4996, %v5156
        %v5158 = vpop.f32.mrb[0].mxu0
        %5159 = vmatprep.mubr.bf16.mxu0 0
        %5160 = vmatmul.mubr.bf16.gmra.mrb[0].mxu0 %v4703
        %v5161 = vpop.f32.mrb[0].mxu0
        %v5162 = vadd.f32 %v5001, %v5161
        %v5163 = vpop.f32.mrb[0].mxu0
        %v5164 = vpop.f32.mrb[0].mxu0
        %v5165 = vadd.f32 %v5004, %v5164
        %v5166 = vpop.f32.mrb[0].mxu0
        %5167 = vmatprep.mubr.bf16.mxu0 0
        %5168 = vmatmul.mubr.bf16.gmra.mrb[0].mxu0 %v4706
        %v5169 = vpop.f32.mrb[0].mxu0
        %v5170 = vadd.f32 %v5009, %v5169
        %v5171 = vpop.f32.mrb[0].mxu0
        %v5172 = vpop.f32.mrb[0].mxu0
        %v5173 = vadd.f32 %v5012, %v5172
        %v5174 = vpop.f32.mrb[0].mxu0
        %5175 = vmatprep.mubr.bf16.mxu0 0
        %5176 = vmatmul.mubr.bf16.gmra.mrb[0].mxu0 %v4709
        %v5177 = vpop.f32.mrb[0].mxu0
        %v5178 = vadd.f32 %v5017, %v5177
        %v5179 = vpop.f32.mrb[0].mxu0
        %v5180 = vpop.f32.mrb[0].mxu0
        %v5181 = vadd.f32 %v5020, %v5180
        %v5182 = vpop.f32.mrb[0].mxu0
        %5183 = vmatprep.mubr.bf16.mxu0 0
        %5184 = vmatmul.mubr.bf16.gmra.mrb[0].mxu0 %v4712
        %v5185 = vpop.f32.mrb[0].mxu0
        %v5186 = vadd.f32 %v5025, %v5185
        %v5187 = vpop.f32.mrb[0].mxu0
        %v5188 = vpop.f32.mrb[0].mxu0
        %v5189 = vadd.f32 %v5028, %v5188
        %v5190 = vpop.f32.mrb[0].mxu0
        %5191 = vmatprep.mubr.bf16.mxu0 0
        %5192 = vmatmul.mubr.bf16.gmra.mrb[0].mxu0 %v4715
        %v5193 = vpop.f32.mrb[0].mxu0
        %v5194 = vadd.f32 %v5033, %v5193
        %v5195 = vpop.f32.mrb[0].mxu0
        %v5196 = vpop.f32.mrb[0].mxu0
        %v5197 = vadd.f32 %v5036, %v5196
        %v5198 = vpop.f32.mrb[0].mxu0
        %5199 = vdwg.mxu0
        %v5200 = vmax.f32 %v5074, 0.0
        %v5201 = vmax.f32 %v5077, 0.0
        %v5202 = vmax.f32 %v5082, 0.0
        %v5203 = vmax.f32 %v5085, 0.0
        %v5204 = vmax.f32 %v5090, 0.0
        %v5205 = vmax.f32 %v5093, 0.0
        %v5206 = vmax.f32 %v5098, 0.0
        %v5207 = vmax.f32 %v5101, 0.0
        %v5208 = vmax.f32 %v5106, 0.0
        %v5209 = vmax.f32 %v5109, 0.0
        %v5210 = vmax.f32 %v5114, 0.0
        %v5211 = vmax.f32 %v5117, 0.0
        %v5212 = vmax.f32 %v5122, 0.0
        %v5213 = vmax.f32 %v5125, 0.0
        %v5214 = vmax.f32 %v5130, 0.0
        %v5215 = vmax.f32 %v5133, 0.0
        %v5216 = vmax.f32 %v5138, 0.0
        %v5217 = vmax.f32 %v5141, 0.0
        %v5218 = vmax.f32 %v5146, 0.0
        %v5219 = vmax.f32 %v5149, 0.0
        %v5220 = vmax.f32 %v5154, 0.0
        %v5221 = vmax.f32 %v5157, 0.0
        %v5222 = vmax.f32 %v5162, 0.0
        %v5223 = vmax.f32 %v5165, 0.0
        %v5224 = vmax.f32 %v5170, 0.0
        %v5225 = vmax.f32 %v5173, 0.0
        %v5226 = vmax.f32 %v5178, 0.0
        %v5227 = vmax.f32 %v5181, 0.0
        %v5228 = vmax.f32 %v5186, 0.0
        %v5229 = vmax.f32 %v5189, 0.0
        %v5230 = vmax.f32 %v5194, 0.0
        %v5231 = vmax.f32 %v5197, 0.0
        %v5232 = vpack.c.bf16 %v5201, %v5200
        %v5233 = vpack.c.bf16 %v5203, %v5202
        %v5234 = vpack.c.bf16 %v5205, %v5204
        %v5235 = vpack.c.bf16 %v5207, %v5206
        %v5236 = vpack.c.bf16 %v5209, %v5208
        %v5237 = vpack.c.bf16 %v5211, %v5210
        %v5238 = vpack.c.bf16 %v5213, %v5212
        %v5239 = vpack.c.bf16 %v5215, %v5214
        %v5240 = vpack.c.bf16 %v5217, %v5216
        %v5241 = vpack.c.bf16 %v5219, %v5218
        %v5242 = vpack.c.bf16 %v5221, %v5220
        %v5243 = vpack.c.bf16 %v5223, %v5222
        %v5244 = vpack.c.bf16 %v5225, %v5224
        %v5245 = vpack.c.bf16 %v5227, %v5226
        %v5246 = vpack.c.bf16 %v5229, %v5228
        %v5247 = vpack.c.bf16 %v5231, %v5230
        %v5264 = vunpack.c.l.b16 %v5232
        %v5265 = vunpack.c.h.b16 %v5232
        %v5266 = vunpack.c.l.b16 %v5233
        %v5267 = vunpack.c.h.b16 %v5233
        %v5268 = vunpack.c.l.b16 %v5234
        %v5269 = vunpack.c.h.b16 %v5234
        %v5270 = vunpack.c.l.b16 %v5235
        %v5271 = vunpack.c.h.b16 %v5235
        %v5272 = vunpack.c.l.b16 %v5236
        %v5273 = vunpack.c.h.b16 %v5236
        %v5274 = vunpack.c.l.b16 %v5237
        %v5275 = vunpack.c.h.b16 %v5237
        %v5276 = vunpack.c.l.b16 %v5238
        %v5277 = vunpack.c.h.b16 %v5238
        %v5278 = vunpack.c.l.b16 %v5239
        %v5279 = vunpack.c.h.b16 %v5239
        %v5280 = vunpack.c.l.b16 %v5240
        %v5281 = vunpack.c.h.b16 %v5240
        %v5282 = vunpack.c.l.b16 %v5241
        %v5283 = vunpack.c.h.b16 %v5241
        %v5284 = vunpack.c.l.b16 %v5242
        %v5285 = vunpack.c.h.b16 %v5242
        %v5286 = vunpack.c.l.b16 %v5243
        %v5287 = vunpack.c.h.b16 %v5243
        %v5288 = vunpack.c.l.b16 %v5244
        %v5289 = vunpack.c.h.b16 %v5244
        %v5290 = vunpack.c.l.b16 %v5245
        %v5291 = vunpack.c.h.b16 %v5245
        %v5292 = vunpack.c.l.b16 %v5246
        %v5293 = vunpack.c.h.b16 %v5246
        %v5294 = vunpack.c.l.b16 %v5247
        %v5295 = vunpack.c.h.b16 %v5247
        %v5296 = vpack.c.b16 %v5264, %v5264
        %v5297 = vpack.c.b16 %v5265, %v5265
        %v5298 = vpack.c.b16 %v5266, %v5266
        %v5299 = vpack.c.b16 %v5267, %v5267
        %v5300 = vpack.c.b16 %v5268, %v5268
        %v5301 = vpack.c.b16 %v5269, %v5269
        %v5302 = vpack.c.b16 %v5270, %v5270
        %v5303 = vpack.c.b16 %v5271, %v5271
        %v5304 = vpack.c.b16 %v5272, %v5272
        %v5305 = vpack.c.b16 %v5273, %v5273
        %v5306 = vpack.c.b16 %v5274, %v5274
        %v5307 = vpack.c.b16 %v5275, %v5275
        %v5308 = vpack.c.b16 %v5276, %v5276
        %v5309 = vpack.c.b16 %v5277, %v5277
        %v5310 = vpack.c.b16 %v5278, %v5278
        %v5311 = vpack.c.b16 %v5279, %v5279
        %v5312 = vpack.c.b16 %v5280, %v5280
        %v5313 = vpack.c.b16 %v5281, %v5281
        %v5314 = vpack.c.b16 %v5282, %v5282
        %v5315 = vpack.c.b16 %v5283, %v5283
        %v5316 = vpack.c.b16 %v5284, %v5284
        %v5317 = vpack.c.b16 %v5285, %v5285
        %v5318 = vpack.c.b16 %v5286, %v5286
        %v5319 = vpack.c.b16 %v5287, %v5287
        %v5320 = vpack.c.b16 %v5288, %v5288
        %v5321 = vpack.c.b16 %v5289, %v5289
        %v5322 = vpack.c.b16 %v5290, %v5290
        %v5323 = vpack.c.b16 %v5291, %v5291
        %v5324 = vpack.c.b16 %v5292, %v5292
        %v5325 = vpack.c.b16 %v5293, %v5293
        %v5326 = vpack.c.b16 %v5294, %v5294
        %v5327 = vpack.c.b16 %v5295, %v5295
        %v5329 = vshrl.u32 %v5296, 16
        %v5331 = vrot.slane %v5329, 7
        %v5332 = vshll.u32 %v5296, 16
        %v5334 = vor.u32 %v5331, %v5332
        %v5335 = vrot.slane %v5331, 4
        %v5337 = vshrl.u32 %v5297, 16
        %v5339 = vrot.slane %v5337, 7
        %v5340 = vshll.u32 %v5297, 16
        %v5342 = vor.u32 %v5339, %v5340
        %v5343 = vsel %vm889, %v5335, %v5342
        %v5344 = vrot.slane %v5339, 4
        %v5346 = vshrl.u32 %v5298, 16
        %v5348 = vrot.slane %v5346, 7
        %v5349 = vshll.u32 %v5298, 16
        %v5351 = vor.u32 %v5348, %v5349
        %v5352 = vrot.slane %v5348, 4
        %v5354 = vshrl.u32 %v5299, 16
        %v5356 = vrot.slane %v5354, 7
        %v5357 = vshll.u32 %v5299, 16
        %v5359 = vor.u32 %v5356, %v5357
        %v5360 = vsel %vm889, %v5352, %v5359
        %v5361 = vrot.slane %v5356, 4
        %v5363 = vshrl.u32 %v5300, 16
        %v5365 = vrot.slane %v5363, 7
        %v5366 = vshll.u32 %v5300, 16
        %v5368 = vor.u32 %v5365, %v5366
        %v5369 = vrot.slane %v5365, 4
        %v5371 = vshrl.u32 %v5301, 16
        %v5373 = vrot.slane %v5371, 7
        %v5374 = vshll.u32 %v5301, 16
        %v5376 = vor.u32 %v5373, %v5374
        %v5377 = vsel %vm889, %v5369, %v5376
        %v5378 = vrot.slane %v5373, 4
        %v5380 = vshrl.u32 %v5302, 16
        %v5382 = vrot.slane %v5380, 7
        %v5383 = vshll.u32 %v5302, 16
        %v5385 = vor.u32 %v5382, %v5383
        %v5386 = vrot.slane %v5382, 4
        %v5388 = vshrl.u32 %v5303, 16
        %v5390 = vrot.slane %v5388, 7
        %v5391 = vshll.u32 %v5303, 16
        %v5393 = vor.u32 %v5390, %v5391
        %v5394 = vsel %vm889, %v5386, %v5393
        %v5395 = vrot.slane %v5390, 4
        %v5397 = vshrl.u32 %v5304, 16
        %v5399 = vrot.slane %v5397, 7
        %v5400 = vshll.u32 %v5304, 16
        %v5402 = vor.u32 %v5399, %v5400
        %v5403 = vrot.slane %v5399, 4
        %v5405 = vshrl.u32 %v5305, 16
        %v5407 = vrot.slane %v5405, 7
        %v5408 = vshll.u32 %v5305, 16
        %v5410 = vor.u32 %v5407, %v5408
        %v5411 = vsel %vm889, %v5403, %v5410
        %v5412 = vrot.slane %v5407, 4
        %v5414 = vshrl.u32 %v5306, 16
        %v5416 = vrot.slane %v5414, 7
        %v5417 = vshll.u32 %v5306, 16
        %v5419 = vor.u32 %v5416, %v5417
        %v5420 = vrot.slane %v5416, 4
        %v5422 = vshrl.u32 %v5307, 16
        %v5424 = vrot.slane %v5422, 7
        %v5425 = vshll.u32 %v5307, 16
        %v5427 = vor.u32 %v5424, %v5425
        %v5428 = vsel %vm889, %v5420, %v5427
        %v5429 = vrot.slane %v5424, 4
        %v5431 = vshrl.u32 %v5308, 16
        %v5433 = vrot.slane %v5431, 7
        %v5434 = vshll.u32 %v5308, 16
        %v5436 = vor.u32 %v5433, %v5434
        %v5437 = vrot.slane %v5433, 4
        %v5439 = vshrl.u32 %v5309, 16
        %v5441 = vrot.slane %v5439, 7
        %v5442 = vshll.u32 %v5309, 16
        %v5444 = vor.u32 %v5441, %v5442
        %v5445 = vsel %vm889, %v5437, %v5444
        %v5446 = vrot.slane %v5441, 4
        %v5448 = vshrl.u32 %v5310, 16
        %v5450 = vrot.slane %v5448, 7
        %v5451 = vshll.u32 %v5310, 16
        %v5453 = vor.u32 %v5450, %v5451
        %v5454 = vrot.slane %v5450, 4
        %v5456 = vshrl.u32 %v5311, 16
        %v5458 = vrot.slane %v5456, 7
        %v5459 = vshll.u32 %v5311, 16
        %v5461 = vor.u32 %v5458, %v5459
        %v5462 = vsel %vm889, %v5454, %v5461
        %v5463 = vrot.slane %v5458, 4
        %v5465 = vshrl.u32 %v5312, 16
        %v5467 = vrot.slane %v5465, 7
        %v5468 = vshll.u32 %v5312, 16
        %v5470 = vor.u32 %v5467, %v5468
        %v5471 = vrot.slane %v5467, 4
        %v5473 = vshrl.u32 %v5313, 16
        %v5475 = vrot.slane %v5473, 7
        %v5476 = vshll.u32 %v5313, 16
        %v5478 = vor.u32 %v5475, %v5476
        %v5479 = vsel %vm889, %v5471, %v5478
        %v5480 = vrot.slane %v5475, 4
        %v5482 = vshrl.u32 %v5314, 16
        %v5484 = vrot.slane %v5482, 7
        %v5485 = vshll.u32 %v5314, 16
        %v5487 = vor.u32 %v5484, %v5485
        %v5488 = vrot.slane %v5484, 4
        %v5490 = vshrl.u32 %v5315, 16
        %v5492 = vrot.slane %v5490, 7
        %v5493 = vshll.u32 %v5315, 16
        %v5495 = vor.u32 %v5492, %v5493
        %v5496 = vsel %vm889, %v5488, %v5495
        %v5497 = vrot.slane %v5492, 4
        %v5499 = vshrl.u32 %v5316, 16
        %v5501 = vrot.slane %v5499, 7
        %v5502 = vshll.u32 %v5316, 16
        %v5504 = vor.u32 %v5501, %v5502
        %v5505 = vrot.slane %v5501, 4
        %v5507 = vshrl.u32 %v5317, 16
        %v5509 = vrot.slane %v5507, 7
        %v5510 = vshll.u32 %v5317, 16
        %v5512 = vor.u32 %v5509, %v5510
        %v5513 = vsel %vm889, %v5505, %v5512
        %v5514 = vrot.slane %v5509, 4
        %v5516 = vshrl.u32 %v5318, 16
        %v5518 = vrot.slane %v5516, 7
        %v5519 = vshll.u32 %v5318, 16
        %v5521 = vor.u32 %v5518, %v5519
        %v5522 = vrot.slane %v5518, 4
        %v5524 = vshrl.u32 %v5319, 16
        %v5526 = vrot.slane %v5524, 7
        %v5527 = vshll.u32 %v5319, 16
        %v5529 = vor.u32 %v5526, %v5527
        %v5530 = vsel %vm889, %v5522, %v5529
        %v5531 = vrot.slane %v5526, 4
        %v5533 = vshrl.u32 %v5320, 16
        %v5535 = vrot.slane %v5533, 7
        %v5536 = vshll.u32 %v5320, 16
        %v5538 = vor.u32 %v5535, %v5536
        %v5539 = vrot.slane %v5535, 4
        %v5541 = vshrl.u32 %v5321, 16
        %v5543 = vrot.slane %v5541, 7
        %v5544 = vshll.u32 %v5321, 16
        %v5546 = vor.u32 %v5543, %v5544
        %v5547 = vsel %vm889, %v5539, %v5546
        %v5548 = vrot.slane %v5543, 4
        %v5550 = vshrl.u32 %v5322, 16
        %v5552 = vrot.slane %v5550, 7
        %v5553 = vshll.u32 %v5322, 16
        %v5555 = vor.u32 %v5552, %v5553
        %v5556 = vrot.slane %v5552, 4
        %v5558 = vshrl.u32 %v5323, 16
        %v5560 = vrot.slane %v5558, 7
        %v5561 = vshll.u32 %v5323, 16
        %v5563 = vor.u32 %v5560, %v5561
        %v5564 = vsel %vm889, %v5556, %v5563
        %v5565 = vrot.slane %v5560, 4
        %v5567 = vshrl.u32 %v5324, 16
        %v5569 = vrot.slane %v5567, 7
        %v5570 = vshll.u32 %v5324, 16
        %v5572 = vor.u32 %v5569, %v5570
        %v5573 = vrot.slane %v5569, 4
        %v5575 = vshrl.u32 %v5325, 16
        %v5577 = vrot.slane %v5575, 7
        %v5578 = vshll.u32 %v5325, 16
        %v5580 = vor.u32 %v5577, %v5578
        %v5581 = vsel %vm889, %v5573, %v5580
        %v5582 = vrot.slane %v5577, 4
        %v5584 = vshrl.u32 %v5326, 16
        %v5586 = vrot.slane %v5584, 7
        %v5587 = vshll.u32 %v5326, 16
        %v5589 = vor.u32 %v5586, %v5587
        %v5590 = vrot.slane %v5586, 4
        %v5592 = vshrl.u32 %v5327, 16
        %v5594 = vrot.slane %v5592, 7
        %v5595 = vshll.u32 %v5327, 16
        %v5597 = vor.u32 %v5594, %v5595
        %v5598 = vsel %vm889, %v5590, %v5597
        %v5599 = vrot.slane %v5594, 4
        %v5648 = vld [vmem:[%s1210] sm:$0xf]
        %v5649 = vsel %vm1212, %v5334, %v5648
        %5650 = vst [vmem:[%s1210] sm:$0xf] %v5649
        %5651 = vst.msk [vmem:[%s1210 + $0x4] sm:$0xf] %vm278, %v5343
        %v5652 = vld [vmem:[%s1210 + $0x8] sm:$0x1]
        %v5653 = vsel %vm289, %v5344, %v5652
        %5654 = vst [vmem:[%s1210 + $0x8] sm:$0x1] %v5653
        %v5655 = vld [vmem:[%s1210 + $0xc] sm:$0xf]
        %v5656 = vsel %vm1212, %v5351, %v5655
        %5657 = vst [vmem:[%s1210 + $0xc] sm:$0xf] %v5656
        %5658 = vst.msk [vmem:[%s1210 + $0x10] sm:$0xf] %vm278, %v5360
        %v5659 = vld [vmem:[%s1210 + $0x14] sm:$0x1]
        %v5660 = vsel %vm289, %v5361, %v5659
        %5661 = vst [vmem:[%s1210 + $0x14] sm:$0x1] %v5660
        %v5662 = vld [vmem:[%s1210 + $0x18] sm:$0xf]
        %v5663 = vsel %vm1212, %v5368, %v5662
        %5664 = vst [vmem:[%s1210 + $0x18] sm:$0xf] %v5663
        %5665 = vst.msk [vmem:[%s1210 + $0x1c] sm:$0xf] %vm278, %v5377
        %v5666 = vld [vmem:[%s1210 + $0x20] sm:$0x1]
        %v5667 = vsel %vm289, %v5378, %v5666
        %5668 = vst [vmem:[%s1210 + $0x20] sm:$0x1] %v5667
        %v5669 = vld [vmem:[%s1210 + $0x24] sm:$0xf]
        %v5670 = vsel %vm1212, %v5385, %v5669
        %5671 = vst [vmem:[%s1210 + $0x24] sm:$0xf] %v5670
        %5672 = vst.msk [vmem:[%s1210 + $0x28] sm:$0xf] %vm278, %v5394
        %v5673 = vld [vmem:[%s1210 + $0x2c] sm:$0x1]
        %v5674 = vsel %vm289, %v5395, %v5673
        %5675 = vst [vmem:[%s1210 + $0x2c] sm:$0x1] %v5674
        %v5676 = vld [vmem:[%s1210 + $0x30] sm:$0xf]
        %v5677 = vsel %vm1212, %v5402, %v5676
        %5678 = vst [vmem:[%s1210 + $0x30] sm:$0xf] %v5677
        %5679 = vst.msk [vmem:[%s1210 + $0x34] sm:$0xf] %vm278, %v5411
        %v5680 = vld [vmem:[%s1210 + $0x38] sm:$0x1]
        %v5681 = vsel %vm289, %v5412, %v5680
        %5682 = vst [vmem:[%s1210 + $0x38] sm:$0x1] %v5681
        %v5683 = vld [vmem:[%s1210 + $0x3c] sm:$0xf]
        %v5684 = vsel %vm1212, %v5419, %v5683
        %5685 = vst [vmem:[%s1210 + $0x3c] sm:$0xf] %v5684
        %5686 = vst.msk [vmem:[%s1210 + $0x40] sm:$0xf] %vm278, %v5428
        %v5687 = vld [vmem:[%s1210 + $0x44] sm:$0x1]
        %v5688 = vsel %vm289, %v5429, %v5687
        %5689 = vst [vmem:[%s1210 + $0x44] sm:$0x1] %v5688
        %v5690 = vld [vmem:[%s1210 + $0x48] sm:$0xf]
        %v5691 = vsel %vm1212, %v5436, %v5690
        %5692 = vst [vmem:[%s1210 + $0x48] sm:$0xf] %v5691
        %5693 = vst.msk [vmem:[%s1210 + $0x4c] sm:$0xf] %vm278, %v5445
        %v5694 = vld [vmem:[%s1210 + $0x50] sm:$0x1]
        %v5695 = vsel %vm289, %v5446, %v5694
        %5696 = vst [vmem:[%s1210 + $0x50] sm:$0x1] %v5695
        %v5697 = vld [vmem:[%s1210 + $0x54] sm:$0xf]
        %v5698 = vsel %vm1212, %v5453, %v5697
        %5699 = vst [vmem:[%s1210 + $0x54] sm:$0xf] %v5698
        %5700 = vst.msk [vmem:[%s1210 + $0x58] sm:$0xf] %vm278, %v5462
        %v5701 = vld [vmem:[%s1210 + $0x5c] sm:$0x1]
        %v5702 = vsel %vm289, %v5463, %v5701
        %5703 = vst [vmem:[%s1210 + $0x5c] sm:$0x1] %v5702
        %v5704 = vld [vmem:[%s1210 + $0x60] sm:$0xf]
        %v5705 = vsel %vm1212, %v5470, %v5704
        %5706 = vst [vmem:[%s1210 + $0x60] sm:$0xf] %v5705
        %5707 = vst.msk [vmem:[%s1210 + $0x64] sm:$0xf] %vm278, %v5479
        %v5708 = vld [vmem:[%s1210 + $0x68] sm:$0x1]
        %v5709 = vsel %vm289, %v5480, %v5708
        %5710 = vst [vmem:[%s1210 + $0x68] sm:$0x1] %v5709
        %v5711 = vld [vmem:[%s1210 + $0x6c] sm:$0xf]
        %v5712 = vsel %vm1212, %v5487, %v5711
        %5713 = vst [vmem:[%s1210 + $0x6c] sm:$0xf] %v5712
        %5714 = vst.msk [vmem:[%s1210 + $0x70] sm:$0xf] %vm278, %v5496
        %v5715 = vld [vmem:[%s1210 + $0x74] sm:$0x1]
        %v5716 = vsel %vm289, %v5497, %v5715
        %5717 = vst [vmem:[%s1210 + $0x74] sm:$0x1] %v5716
        %v5718 = vld [vmem:[%s1210 + $0x78] sm:$0xf]
        %v5719 = vsel %vm1212, %v5504, %v5718
        %5720 = vst [vmem:[%s1210 + $0x78] sm:$0xf] %v5719
        %5721 = vst.msk [vmem:[%s1210 + $0x7c] sm:$0xf] %vm278, %v5513
        %v5722 = vld [vmem:[%s1210 + $0x80] sm:$0x1]
        %v5723 = vsel %vm289, %v5514, %v5722
        %5724 = vst [vmem:[%s1210 + $0x80] sm:$0x1] %v5723
        %v5725 = vld [vmem:[%s1210 + $0x84] sm:$0xf]
        %v5726 = vsel %vm1212, %v5521, %v5725
        %5727 = vst [vmem:[%s1210 + $0x84] sm:$0xf] %v5726
        %5728 = vst.msk [vmem:[%s1210 + $0x88] sm:$0xf] %vm278, %v5530
        %v5729 = vld [vmem:[%s1210 + $0x8c] sm:$0x1]
        %v5730 = vsel %vm289, %v5531, %v5729
        %5731 = vst [vmem:[%s1210 + $0x8c] sm:$0x1] %v5730
        %v5732 = vld [vmem:[%s1210 + $0x90] sm:$0xf]
        %v5733 = vsel %vm1212, %v5538, %v5732
        %5734 = vst [vmem:[%s1210 + $0x90] sm:$0xf] %v5733
        %5735 = vst.msk [vmem:[%s1210 + $0x94] sm:$0xf] %vm278, %v5547
        %v5736 = vld [vmem:[%s1210 + $0x98] sm:$0x1]
        %v5737 = vsel %vm289, %v5548, %v5736
        %5738 = vst [vmem:[%s1210 + $0x98] sm:$0x1] %v5737
        %v5739 = vld [vmem:[%s1210 + $0x9c] sm:$0xf]
        %v5740 = vsel %vm1212, %v5555, %v5739
        %5741 = vst [vmem:[%s1210 + $0x9c] sm:$0xf] %v5740
        %5742 = vst.msk [vmem:[%s1210 + $0xa0] sm:$0xf] %vm278, %v5564
        %v5743 = vld [vmem:[%s1210 + $0xa4] sm:$0x1]
        %v5744 = vsel %vm289, %v5565, %v5743
        %5745 = vst [vmem:[%s1210 + $0xa4] sm:$0x1] %v5744
        %v5746 = vld [vmem:[%s1210 + $0xa8] sm:$0xf]
        %v5747 = vsel %vm1212, %v5572, %v5746
        %5748 = vst [vmem:[%s1210 + $0xa8] sm:$0xf] %v5747
        %5749 = vst.msk [vmem:[%s1210 + $0xac] sm:$0xf] %vm278, %v5581
        %v5750 = vld [vmem:[%s1210 + $0xb0] sm:$0x1]
        %v5751 = vsel %vm289, %v5582, %v5750
        %5752 = vst [vmem:[%s1210 + $0xb0] sm:$0x1] %v5751
        %v5753 = vld [vmem:[%s1210 + $0xb4] sm:$0xf]
        %v5754 = vsel %vm1212, %v5589, %v5753
        %5755 = vst [vmem:[%s1210 + $0xb4] sm:$0xf] %v5754
        %5756 = vst.msk [vmem:[%s1210 + $0xb8] sm:$0xf] %vm278, %v5598
        %v5757 = vld [vmem:[%s1210 + $0xbc] sm:$0x1]
        %v5758 = vsel %vm289, %v5599, %v5757
        %5759 = vst [vmem:[%s1210 + $0xbc] sm:$0x1] %v5758
        %v5760 = vld [vmem:[#allocation2] sm:$0xf]
        %v5761 = vld [vmem:[#allocation2 + $0x4] sm:$0xf]
        %v5762 = vld [vmem:[#allocation2 + $0xc] sm:$0xf]
        %v5763 = vld [vmem:[#allocation2 + $0x10] sm:$0xf]
        %v5764 = vld [vmem:[#allocation2 + $0x18] sm:$0xf]
        %v5765 = vld [vmem:[#allocation2 + $0x1c] sm:$0xf]
        %v5766 = vld [vmem:[#allocation2 + $0x24] sm:$0xf]
        %v5767 = vld [vmem:[#allocation2 + $0x28] sm:$0xf]
        %v5768 = vld [vmem:[#allocation2 + $0x30] sm:$0xf]
        %v5769 = vld [vmem:[#allocation2 + $0x34] sm:$0xf]
        %v5770 = vld [vmem:[#allocation2 + $0x3c] sm:$0xf]
        %v5771 = vld [vmem:[#allocation2 + $0x40] sm:$0xf]
        %v5772 = vld [vmem:[#allocation2 + $0x48] sm:$0xf]
        %v5773 = vld [vmem:[#allocation2 + $0x4c] sm:$0xf]
        %v5774 = vld [vmem:[#allocation2 + $0x54] sm:$0xf]
        %v5775 = vld [vmem:[#allocation2 + $0x58] sm:$0xf]
        %v5776 = vld [vmem:[#allocation2 + $0x60] sm:$0xf]
        %v5777 = vld [vmem:[#allocation2 + $0x64] sm:$0xf]
        %v5778 = vld [vmem:[#allocation2 + $0x6c] sm:$0xf]
        %v5779 = vld [vmem:[#allocation2 + $0x70] sm:$0xf]
        %v5780 = vld [vmem:[#allocation2 + $0x78] sm:$0xf]
        %v5781 = vld [vmem:[#allocation2 + $0x7c] sm:$0xf]
        %v5782 = vld [vmem:[#allocation2 + $0x84] sm:$0xf]
        %v5783 = vld [vmem:[#allocation2 + $0x88] sm:$0xf]
        %v5784 = vld [vmem:[#allocation2 + $0x90] sm:$0xf]
        %v5785 = vld [vmem:[#allocation2 + $0x94] sm:$0xf]
        %v5786 = vld [vmem:[#allocation2 + $0x9c] sm:$0xf]
        %v5787 = vld [vmem:[#allocation2 + $0xa0] sm:$0xf]
        %v5788 = vld [vmem:[#allocation2 + $0xa8] sm:$0xf]
        %v5789 = vld [vmem:[#allocation2 + $0xac] sm:$0xf]
        %v5790 = vld [vmem:[#allocation2 + $0xb4] sm:$0xf]
        %v5791 = vld [vmem:[#allocation2 + $0xb8] sm:$0xf]
        %v5824 = vunpack.c.l.b16 %v5760
        %v5825 = vunpack.c.l.b16 %v5761
        %v5826 = vunpack.c.l.b16 %v5762
        %v5827 = vunpack.c.l.b16 %v5763
        %v5828 = vunpack.c.l.b16 %v5764
        %v5829 = vunpack.c.l.b16 %v5765
        %v5830 = vunpack.c.l.b16 %v5766
        %v5831 = vunpack.c.l.b16 %v5767
        %v5832 = vunpack.c.l.b16 %v5768
        %v5833 = vunpack.c.l.b16 %v5769
        %v5834 = vunpack.c.l.b16 %v5770
        %v5835 = vunpack.c.l.b16 %v5771
        %v5836 = vunpack.c.l.b16 %v5772
        %v5837 = vunpack.c.l.b16 %v5773
        %v5838 = vunpack.c.l.b16 %v5774
        %v5839 = vunpack.c.l.b16 %v5775
        %v5840 = vunpack.c.l.b16 %v5776
        %v5841 = vunpack.c.l.b16 %v5777
        %v5842 = vunpack.c.l.b16 %v5778
        %v5843 = vunpack.c.l.b16 %v5779
        %v5844 = vunpack.c.l.b16 %v5780
        %v5845 = vunpack.c.l.b16 %v5781
        %v5846 = vunpack.c.l.b16 %v5782
        %v5847 = vunpack.c.l.b16 %v5783
        %v5848 = vunpack.c.l.b16 %v5784
        %v5849 = vunpack.c.l.b16 %v5785
        %v5850 = vunpack.c.l.b16 %v5786
        %v5851 = vunpack.c.l.b16 %v5787
        %v5852 = vunpack.c.l.b16 %v5788
        %v5853 = vunpack.c.l.b16 %v5789
        %v5854 = vunpack.c.l.b16 %v5790
        %v5855 = vunpack.c.l.b16 %v5791
        %v5856 = vpack.c.b16 %v5825, %v5824
        %v5857 = vpack.c.b16 %v5827, %v5826
        %v5858 = vpack.c.b16 %v5829, %v5828
        %v5859 = vpack.c.b16 %v5831, %v5830
        %v5860 = vpack.c.b16 %v5833, %v5832
        %v5861 = vpack.c.b16 %v5835, %v5834
        %v5862 = vpack.c.b16 %v5837, %v5836
        %v5863 = vpack.c.b16 %v5839, %v5838
        %v5864 = vpack.c.b16 %v5841, %v5840
        %v5865 = vpack.c.b16 %v5843, %v5842
        %v5866 = vpack.c.b16 %v5845, %v5844
        %v5867 = vpack.c.b16 %v5847, %v5846
        %v5868 = vpack.c.b16 %v5849, %v5848
        %v5869 = vpack.c.b16 %v5851, %v5850
        %v5870 = vpack.c.b16 %v5853, %v5852
        %v5871 = vpack.c.b16 %v5855, %v5854
        %5888 = vst.msk [vmem:[#allocation3] sm:$0xff] %vm1453, %v5856
        %5889 = vst.msk [vmem:[#allocation3 + $0x28] sm:$0xff] %vm1453, %v5857
        %5890 = vst.msk [vmem:[#allocation3 + $0x50] sm:$0xff] %vm1453, %v5858
        %5891 = vst.msk [vmem:[#allocation3 + $0x78] sm:$0xff] %vm1453, %v5859
        %5892 = vst.msk [vmem:[#allocation3 + $0xa0] sm:$0xff] %vm1453, %v5860
        %5893 = vst.msk [vmem:[#allocation3 + $0xc8] sm:$0xff] %vm1453, %v5861
        %5894 = vst.msk [vmem:[#allocation3 + $0xf0] sm:$0xff] %vm1453, %v5862
        %5895 = vst.msk [vmem:[#allocation3 + $0x118] sm:$0xff] %vm1453, %v5863
        %5896 = vst.msk [vmem:[#allocation3 + $0x140] sm:$0xff] %vm1453, %v5864
        %5897 = vst.msk [vmem:[#allocation3 + $0x168] sm:$0xff] %vm1453, %v5865
        %5898 = vst.msk [vmem:[#allocation3 + $0x190] sm:$0xff] %vm1453, %v5866
        %5899 = vst.msk [vmem:[#allocation3 + $0x1b8] sm:$0xff] %vm1453, %v5867
        %5900 = vst.msk [vmem:[#allocation3 + $0x1e0] sm:$0xff] %vm1453, %v5868
        %5901 = vst.msk [vmem:[#allocation3 + $0x208] sm:$0xff] %vm1453, %v5869
        %5902 = vst.msk [vmem:[#allocation3 + $0x230] sm:$0xff] %vm1453, %v5870
        %5903 = vst.msk [vmem:[#allocation3 + $0x258] sm:$0xff] %vm1453, %v5871
        %v5904 = vld [vmem:[#allocation2] sm:$0xf]
        %v5905 = vld [vmem:[#allocation2 + $0x4] sm:$0xf]
        %v5906 = vld [vmem:[#allocation2 + $0x8] sm:$0x1]
        %v5907 = vld [vmem:[#allocation2 + $0xc] sm:$0xf]
        %v5908 = vld [vmem:[#allocation2 + $0x10] sm:$0xf]
        %v5909 = vld [vmem:[#allocation2 + $0x14] sm:$0x1]
        %v5910 = vld [vmem:[#allocation2 + $0x18] sm:$0xf]
        %v5911 = vld [vmem:[#allocation2 + $0x1c] sm:$0xf]
        %v5912 = vld [vmem:[#allocation2 + $0x20] sm:$0x1]
        %v5913 = vld [vmem:[#allocation2 + $0x24] sm:$0xf]
        %v5914 = vld [vmem:[#allocation2 + $0x28] sm:$0xf]
        %v5915 = vld [vmem:[#allocation2 + $0x2c] sm:$0x1]
        %v5916 = vld [vmem:[#allocation2 + $0x30] sm:$0xf]
        %v5917 = vld [vmem:[#allocation2 + $0x34] sm:$0xf]
        %v5918 = vld [vmem:[#allocation2 + $0x38] sm:$0x1]
        %v5919 = vld [vmem:[#allocation2 + $0x3c] sm:$0xf]
        %v5920 = vld [vmem:[#allocation2 + $0x40] sm:$0xf]
        %v5921 = vld [vmem:[#allocation2 + $0x44] sm:$0x1]
        %v5922 = vld [vmem:[#allocation2 + $0x48] sm:$0xf]
        %v5923 = vld [vmem:[#allocation2 + $0x4c] sm:$0xf]
        %v5924 = vld [vmem:[#allocation2 + $0x50] sm:$0x1]
        %v5925 = vld [vmem:[#allocation2 + $0x54] sm:$0xf]
        %v5926 = vld [vmem:[#allocation2 + $0x58] sm:$0xf]
        %v5927 = vld [vmem:[#allocation2 + $0x5c] sm:$0x1]
        %v5928 = vld [vmem:[#allocation2 + $0x60] sm:$0xf]
        %v5929 = vld [vmem:[#allocation2 + $0x64] sm:$0xf]
        %v5930 = vld [vmem:[#allocation2 + $0x68] sm:$0x1]
        %v5931 = vld [vmem:[#allocation2 + $0x6c] sm:$0xf]
        %v5932 = vld [vmem:[#allocation2 + $0x70] sm:$0xf]
        %v5933 = vld [vmem:[#allocation2 + $0x74] sm:$0x1]
        %v5934 = vld [vmem:[#allocation2 + $0x78] sm:$0xf]
        %v5935 = vld [vmem:[#allocation2 + $0x7c] sm:$0xf]
        %v5936 = vld [vmem:[#allocation2 + $0x80] sm:$0x1]
        %v5937 = vld [vmem:[#allocation2 + $0x84] sm:$0xf]
        %v5938 = vld [vmem:[#allocation2 + $0x88] sm:$0xf]
        %v5939 = vld [vmem:[#allocation2 + $0x8c] sm:$0x1]
        %v5940 = vld [vmem:[#allocation2 + $0x90] sm:$0xf]
        %v5941 = vld [vmem:[#allocation2 + $0x94] sm:$0xf]
        %v5942 = vld [vmem:[#allocation2 + $0x98] sm:$0x1]
        %v5943 = vld [vmem:[#allocation2 + $0x9c] sm:$0xf]
        %v5944 = vld [vmem:[#allocation2 + $0xa0] sm:$0xf]
        %v5945 = vld [vmem:[#allocation2 + $0xa4] sm:$0x1]
        %v5946 = vld [vmem:[#allocation2 + $0xa8] sm:$0xf]
        %v5947 = vld [vmem:[#allocation2 + $0xac] sm:$0xf]
        %v5948 = vld [vmem:[#allocation2 + $0xb0] sm:$0x1]
        %v5949 = vld [vmem:[#allocation2 + $0xb4] sm:$0xf]
        %v5950 = vld [vmem:[#allocation2 + $0xb8] sm:$0xf]
        %v5951 = vld [vmem:[#allocation2 + $0xbc] sm:$0x1]
        %v5953 = vshrl.u32 %v5904, 16
        %v5955 = vrot.slane %v5953, 4
        %v5956 = vshll.u32 %v5904, 16
        %v5958 = vrot.slane %v5956, 5
        %v5959 = vor.u32 %v5955, %v5958
        %v5960 = vrot.slane %v5959, 4
        %v5962 = vshll.u32 %v5905, 16
        %v5964 = vrot.slane %v5962, 5
        %v5965 = vsel %vm1520, %v5960, %v5964
        %v5966 = vshrl.u32 %v5905, 16
        %v5968 = vrot.slane %v5966, 4
        %v5969 = vor.u32 %v5968, %v5964
        %v5970 = vrot.slane %v5969, 4
        %v5972 = vshll.u32 %v5906, 16
        %v5974 = vrot.slane %v5972, 5
        %v5975 = vsel %vm1520, %v5970, %v5974
        %v5977 = vshrl.u32 %v5907, 16
        %v5979 = vrot.slane %v5977, 4
        %v5980 = vshll.u32 %v5907, 16
        %v5982 = vrot.slane %v5980, 5
        %v5983 = vor.u32 %v5979, %v5982
        %v5984 = vrot.slane %v5983, 4
        %v5986 = vshll.u32 %v5908, 16
        %v5988 = vrot.slane %v5986, 5
        %v5989 = vsel %vm1520, %v5984, %v5988
        %v5990 = vshrl.u32 %v5908, 16
        %v5992 = vrot.slane %v5990, 4
        %v5993 = vor.u32 %v5992, %v5988
        %v5994 = vrot.slane %v5993, 4
        %v5996 = vshll.u32 %v5909, 16
        %v5998 = vrot.slane %v5996, 5
        %v5999 = vsel %vm1520, %v5994, %v5998
        %v6001 = vshrl.u32 %v5910, 16
        %v6003 = vrot.slane %v6001, 4
        %v6004 = vshll.u32 %v5910, 16
        %v6006 = vrot.slane %v6004, 5
        %v6007 = vor.u32 %v6003, %v6006
        %v6008 = vrot.slane %v6007, 4
        %v6010 = vshll.u32 %v5911, 16
        %v6012 = vrot.slane %v6010, 5
        %v6013 = vsel %vm1520, %v6008, %v6012
        %v6014 = vshrl.u32 %v5911, 16
        %v6016 = vrot.slane %v6014, 4
        %v6017 = vor.u32 %v6016, %v6012
        %v6018 = vrot.slane %v6017, 4
        %v6020 = vshll.u32 %v5912, 16
        %v6022 = vrot.slane %v6020, 5
        %v6023 = vsel %vm1520, %v6018, %v6022
        %v6025 = vshrl.u32 %v5913, 16
        %v6027 = vrot.slane %v6025, 4
        %v6028 = vshll.u32 %v5913, 16
        %v6030 = vrot.slane %v6028, 5
        %v6031 = vor.u32 %v6027, %v6030
        %v6032 = vrot.slane %v6031, 4
        %v6034 = vshll.u32 %v5914, 16
        %v6036 = vrot.slane %v6034, 5
        %v6037 = vsel %vm1520, %v6032, %v6036
        %v6038 = vshrl.u32 %v5914, 16
        %v6040 = vrot.slane %v6038, 4
        %v6041 = vor.u32 %v6040, %v6036
        %v6042 = vrot.slane %v6041, 4
        %v6044 = vshll.u32 %v5915, 16
        %v6046 = vrot.slane %v6044, 5
        %v6047 = vsel %vm1520, %v6042, %v6046
        %v6049 = vshrl.u32 %v5916, 16
        %v6051 = vrot.slane %v6049, 4
        %v6052 = vshll.u32 %v5916, 16
        %v6054 = vrot.slane %v6052, 5
        %v6055 = vor.u32 %v6051, %v6054
        %v6056 = vrot.slane %v6055, 4
        %v6058 = vshll.u32 %v5917, 16
        %v6060 = vrot.slane %v6058, 5
        %v6061 = vsel %vm1520, %v6056, %v6060
        %v6062 = vshrl.u32 %v5917, 16
        %v6064 = vrot.slane %v6062, 4
        %v6065 = vor.u32 %v6064, %v6060
        %v6066 = vrot.slane %v6065, 4
        %v6068 = vshll.u32 %v5918, 16
        %v6070 = vrot.slane %v6068, 5
        %v6071 = vsel %vm1520, %v6066, %v6070
        %v6073 = vshrl.u32 %v5919, 16
        %v6075 = vrot.slane %v6073, 4
        %v6076 = vshll.u32 %v5919, 16
        %v6078 = vrot.slane %v6076, 5
        %v6079 = vor.u32 %v6075, %v6078
        %v6080 = vrot.slane %v6079, 4
        %v6082 = vshll.u32 %v5920, 16
        %v6084 = vrot.slane %v6082, 5
        %v6085 = vsel %vm1520, %v6080, %v6084
        %v6086 = vshrl.u32 %v5920, 16
        %v6088 = vrot.slane %v6086, 4
        %v6089 = vor.u32 %v6088, %v6084
        %v6090 = vrot.slane %v6089, 4
        %v6092 = vshll.u32 %v5921, 16
        %v6094 = vrot.slane %v6092, 5
        %v6095 = vsel %vm1520, %v6090, %v6094
        %v6097 = vshrl.u32 %v5922, 16
        %v6099 = vrot.slane %v6097, 4
        %v6100 = vshll.u32 %v5922, 16
        %v6102 = vrot.slane %v6100, 5
        %v6103 = vor.u32 %v6099, %v6102
        %v6104 = vrot.slane %v6103, 4
        %v6106 = vshll.u32 %v5923, 16
        %v6108 = vrot.slane %v6106, 5
        %v6109 = vsel %vm1520, %v6104, %v6108
        %v6110 = vshrl.u32 %v5923, 16
        %v6112 = vrot.slane %v6110, 4
        %v6113 = vor.u32 %v6112, %v6108
        %v6114 = vrot.slane %v6113, 4
        %v6116 = vshll.u32 %v5924, 16
        %v6118 = vrot.slane %v6116, 5
        %v6119 = vsel %vm1520, %v6114, %v6118
        %v6121 = vshrl.u32 %v5925, 16
        %v6123 = vrot.slane %v6121, 4
        %v6124 = vshll.u32 %v5925, 16
        %v6126 = vrot.slane %v6124, 5
        %v6127 = vor.u32 %v6123, %v6126
        %v6128 = vrot.slane %v6127, 4
        %v6130 = vshll.u32 %v5926, 16
        %v6132 = vrot.slane %v6130, 5
        %v6133 = vsel %vm1520, %v6128, %v6132
        %v6134 = vshrl.u32 %v5926, 16
        %v6136 = vrot.slane %v6134, 4
        %v6137 = vor.u32 %v6136, %v6132
        %v6138 = vrot.slane %v6137, 4
        %v6140 = vshll.u32 %v5927, 16
        %v6142 = vrot.slane %v6140, 5
        %v6143 = vsel %vm1520, %v6138, %v6142
        %v6145 = vshrl.u32 %v5928, 16
        %v6147 = vrot.slane %v6145, 4
        %v6148 = vshll.u32 %v5928, 16
        %v6150 = vrot.slane %v6148, 5
        %v6151 = vor.u32 %v6147, %v6150
        %v6152 = vrot.slane %v6151, 4
        %v6154 = vshll.u32 %v5929, 16
        %v6156 = vrot.slane %v6154, 5
        %v6157 = vsel %vm1520, %v6152, %v6156
        %v6158 = vshrl.u32 %v5929, 16
        %v6160 = vrot.slane %v6158, 4
        %v6161 = vor.u32 %v6160, %v6156
        %v6162 = vrot.slane %v6161, 4
        %v6164 = vshll.u32 %v5930, 16
        %v6166 = vrot.slane %v6164, 5
        %v6167 = vsel %vm1520, %v6162, %v6166
        %v6169 = vshrl.u32 %v5931, 16
        %v6171 = vrot.slane %v6169, 4
        %v6172 = vshll.u32 %v5931, 16
        %v6174 = vrot.slane %v6172, 5
        %v6175 = vor.u32 %v6171, %v6174
        %v6176 = vrot.slane %v6175, 4
        %v6178 = vshll.u32 %v5932, 16
        %v6180 = vrot.slane %v6178, 5
        %v6181 = vsel %vm1520, %v6176, %v6180
        %v6182 = vshrl.u32 %v5932, 16
        %v6184 = vrot.slane %v6182, 4
        %v6185 = vor.u32 %v6184, %v6180
        %v6186 = vrot.slane %v6185, 4
        %v6188 = vshll.u32 %v5933, 16
        %v6190 = vrot.slane %v6188, 5
        %v6191 = vsel %vm1520, %v6186, %v6190
        %v6193 = vshrl.u32 %v5934, 16
        %v6195 = vrot.slane %v6193, 4
        %v6196 = vshll.u32 %v5934, 16
        %v6198 = vrot.slane %v6196, 5
        %v6199 = vor.u32 %v6195, %v6198
        %v6200 = vrot.slane %v6199, 4
        %v6202 = vshll.u32 %v5935, 16
        %v6204 = vrot.slane %v6202, 5
        %v6205 = vsel %vm1520, %v6200, %v6204
        %v6206 = vshrl.u32 %v5935, 16
        %v6208 = vrot.slane %v6206, 4
        %v6209 = vor.u32 %v6208, %v6204
        %v6210 = vrot.slane %v6209, 4
        %v6212 = vshll.u32 %v5936, 16
        %v6214 = vrot.slane %v6212, 5
        %v6215 = vsel %vm1520, %v6210, %v6214
        %v6217 = vshrl.u32 %v5937, 16
        %v6219 = vrot.slane %v6217, 4
        %v6220 = vshll.u32 %v5937, 16
        %v6222 = vrot.slane %v6220, 5
        %v6223 = vor.u32 %v6219, %v6222
        %v6224 = vrot.slane %v6223, 4
        %v6226 = vshll.u32 %v5938, 16
        %v6228 = vrot.slane %v6226, 5
        %v6229 = vsel %vm1520, %v6224, %v6228
        %v6230 = vshrl.u32 %v5938, 16
        %v6232 = vrot.slane %v6230, 4
        %v6233 = vor.u32 %v6232, %v6228
        %v6234 = vrot.slane %v6233, 4
        %v6236 = vshll.u32 %v5939, 16
        %v6238 = vrot.slane %v6236, 5
        %v6239 = vsel %vm1520, %v6234, %v6238
        %v6241 = vshrl.u32 %v5940, 16
        %v6243 = vrot.slane %v6241, 4
        %v6244 = vshll.u32 %v5940, 16
        %v6246 = vrot.slane %v6244, 5
        %v6247 = vor.u32 %v6243, %v6246
        %v6248 = vrot.slane %v6247, 4
        %v6250 = vshll.u32 %v5941, 16
        %v6252 = vrot.slane %v6250, 5
        %v6253 = vsel %vm1520, %v6248, %v6252
        %v6254 = vshrl.u32 %v5941, 16
        %v6256 = vrot.slane %v6254, 4
        %v6257 = vor.u32 %v6256, %v6252
        %v6258 = vrot.slane %v6257, 4
        %v6260 = vshll.u32 %v5942, 16
        %v6262 = vrot.slane %v6260, 5
        %v6263 = vsel %vm1520, %v6258, %v6262
        %v6265 = vshrl.u32 %v5943, 16
        %v6267 = vrot.slane %v6265, 4
        %v6268 = vshll.u32 %v5943, 16
        %v6270 = vrot.slane %v6268, 5
        %v6271 = vor.u32 %v6267, %v6270
        %v6272 = vrot.slane %v6271, 4
        %v6274 = vshll.u32 %v5944, 16
        %v6276 = vrot.slane %v6274, 5
        %v6277 = vsel %vm1520, %v6272, %v6276
        %v6278 = vshrl.u32 %v5944, 16
        %v6280 = vrot.slane %v6278, 4
        %v6281 = vor.u32 %v6280, %v6276
        %v6282 = vrot.slane %v6281, 4
        %v6284 = vshll.u32 %v5945, 16
        %v6286 = vrot.slane %v6284, 5
        %v6287 = vsel %vm1520, %v6282, %v6286
        %v6289 = vshrl.u32 %v5946, 16
        %v6291 = vrot.slane %v6289, 4
        %v6292 = vshll.u32 %v5946, 16
        %v6294 = vrot.slane %v6292, 5
        %v6295 = vor.u32 %v6291, %v6294
        %v6296 = vrot.slane %v6295, 4
        %v6298 = vshll.u32 %v5947, 16
        %v6300 = vrot.slane %v6298, 5
        %v6301 = vsel %vm1520, %v6296, %v6300
        %v6302 = vshrl.u32 %v5947, 16
        %v6304 = vrot.slane %v6302, 4
        %v6305 = vor.u32 %v6304, %v6300
        %v6306 = vrot.slane %v6305, 4
        %v6308 = vshll.u32 %v5948, 16
        %v6310 = vrot.slane %v6308, 5
        %v6311 = vsel %vm1520, %v6306, %v6310
        %v6313 = vshrl.u32 %v5949, 16
        %v6315 = vrot.slane %v6313, 4
        %v6316 = vshll.u32 %v5949, 16
        %v6318 = vrot.slane %v6316, 5
        %v6319 = vor.u32 %v6315, %v6318
        %v6320 = vrot.slane %v6319, 4
        %v6322 = vshll.u32 %v5950, 16
        %v6324 = vrot.slane %v6322, 5
        %v6325 = vsel %vm1520, %v6320, %v6324
        %v6326 = vshrl.u32 %v5950, 16
        %v6328 = vrot.slane %v6326, 4
        %v6329 = vor.u32 %v6328, %v6324
        %v6330 = vrot.slane %v6329, 4
        %v6332 = vshll.u32 %v5951, 16
        %v6334 = vrot.slane %v6332, 5
        %v6335 = vsel %vm1520, %v6330, %v6334
        %v6336 = vunpack.c.l.b16 %v5965
        %v6337 = vunpack.c.l.b16 %v5975
        %v6338 = vunpack.c.l.b16 %v5989
        %v6339 = vunpack.c.l.b16 %v5999
        %v6340 = vunpack.c.l.b16 %v6013
        %v6341 = vunpack.c.l.b16 %v6023
        %v6342 = vunpack.c.l.b16 %v6037
        %v6343 = vunpack.c.l.b16 %v6047
        %v6344 = vunpack.c.l.b16 %v6061
        %v6345 = vunpack.c.l.b16 %v6071
        %v6346 = vunpack.c.l.b16 %v6085
        %v6347 = vunpack.c.l.b16 %v6095
        %v6348 = vunpack.c.l.b16 %v6109
        %v6349 = vunpack.c.l.b16 %v6119
        %v6350 = vunpack.c.l.b16 %v6133
        %v6351 = vunpack.c.l.b16 %v6143
        %v6352 = vunpack.c.l.b16 %v6157
        %v6353 = vunpack.c.l.b16 %v6167
        %v6354 = vunpack.c.l.b16 %v6181
        %v6355 = vunpack.c.l.b16 %v6191
        %v6356 = vunpack.c.l.b16 %v6205
        %v6357 = vunpack.c.l.b16 %v6215
        %v6358 = vunpack.c.l.b16 %v6229
        %v6359 = vunpack.c.l.b16 %v6239
        %v6360 = vunpack.c.l.b16 %v6253
        %v6361 = vunpack.c.l.b16 %v6263
        %v6362 = vunpack.c.l.b16 %v6277
        %v6363 = vunpack.c.l.b16 %v6287
        %v6364 = vunpack.c.l.b16 %v6301
        %v6365 = vunpack.c.l.b16 %v6311
        %v6366 = vunpack.c.l.b16 %v6325
        %v6367 = vunpack.c.l.b16 %v6335
        %v6368 = vpack.c.b16 %v6337, %v6336
        %v6369 = vpack.c.b16 %v6339, %v6338
        %v6370 = vpack.c.b16 %v6341, %v6340
        %v6371 = vpack.c.b16 %v6343, %v6342
        %v6372 = vpack.c.b16 %v6345, %v6344
        %v6373 = vpack.c.b16 %v6347, %v6346
        %v6374 = vpack.c.b16 %v6349, %v6348
        %v6375 = vpack.c.b16 %v6351, %v6350
        %v6376 = vpack.c.b16 %v6353, %v6352
        %v6377 = vpack.c.b16 %v6355, %v6354
        %v6378 = vpack.c.b16 %v6357, %v6356
        %v6379 = vpack.c.b16 %v6359, %v6358
        %v6380 = vpack.c.b16 %v6361, %v6360
        %v6381 = vpack.c.b16 %v6363, %v6362
        %v6382 = vpack.c.b16 %v6365, %v6364
        %v6383 = vpack.c.b16 %v6367, %v6366
        %6384 = vrot.lane.b32.xlu0 %v6368, 64
        %v6385 = vpop.permute.xlu0 %6384
        %6386 = vrot.lane.b32.xlu0 %v6369, 64
        %v6387 = vpop.permute.xlu0 %6386
        %6388 = vrot.lane.b32.xlu0 %v6370, 64
        %v6389 = vpop.permute.xlu0 %6388
        %6390 = vrot.lane.b32.xlu0 %v6371, 64
        %v6391 = vpop.permute.xlu0 %6390
        %6392 = vrot.lane.b32.xlu0 %v6372, 64
        %v6393 = vpop.permute.xlu0 %6392
        %6394 = vrot.lane.b32.xlu0 %v6373, 64
        %v6395 = vpop.permute.xlu0 %6394
        %6396 = vrot.lane.b32.xlu0 %v6374, 64
        %v6397 = vpop.permute.xlu0 %6396
        %6398 = vrot.lane.b32.xlu0 %v6375, 64
        %v6399 = vpop.permute.xlu0 %6398
        %6400 = vrot.lane.b32.xlu0 %v6376, 64
        %v6401 = vpop.permute.xlu0 %6400
        %6402 = vrot.lane.b32.xlu0 %v6377, 64
        %v6403 = vpop.permute.xlu0 %6402
        %6404 = vrot.lane.b32.xlu0 %v6378, 64
        %v6405 = vpop.permute.xlu0 %6404
        %6406 = vrot.lane.b32.xlu0 %v6379, 64
        %v6407 = vpop.permute.xlu0 %6406
        %6408 = vrot.lane.b32.xlu0 %v6380, 64
        %v6409 = vpop.permute.xlu0 %6408
        %6410 = vrot.lane.b32.xlu0 %v6381, 64
        %v6411 = vpop.permute.xlu0 %6410
        %6412 = vrot.lane.b32.xlu0 %v6382, 64
        %v6413 = vpop.permute.xlu0 %6412
        %6414 = vrot.lane.b32.xlu0 %v6383, 64
        %v6415 = vpop.permute.xlu0 %6414
        %6432 = vst.msk [vmem:[#allocation3] sm:$0xff] %vm2001, %v6385
        %6433 = vst.msk [vmem:[#allocation3 + $0x28] sm:$0xff] %vm2001, %v6387
        %6434 = vst.msk [vmem:[#allocation3 + $0x50] sm:$0xff] %vm2001, %v6389
        %6435 = vst.msk [vmem:[#allocation3 + $0x78] sm:$0xff] %vm2001, %v6391
        %6436 = vst.msk [vmem:[#allocation3 + $0xa0] sm:$0xff] %vm2001, %v6393
        %6437 = vst.msk [vmem:[#allocation3 + $0xc8] sm:$0xff] %vm2001, %v6395
        %6438 = vst.msk [vmem:[#allocation3 + $0xf0] sm:$0xff] %vm2001, %v6397
        %6439 = vst.msk [vmem:[#allocation3 + $0x118] sm:$0xff] %vm2001, %v6399
        %6440 = vst.msk [vmem:[#allocation3 + $0x140] sm:$0xff] %vm2001, %v6401
        %6441 = vst.msk [vmem:[#allocation3 + $0x168] sm:$0xff] %vm2001, %v6403
        %6442 = vst.msk [vmem:[#allocation3 + $0x190] sm:$0xff] %vm2001, %v6405
        %6443 = vst.msk [vmem:[#allocation3 + $0x1b8] sm:$0xff] %vm2001, %v6407
        %6444 = vst.msk [vmem:[#allocation3 + $0x1e0] sm:$0xff] %vm2001, %v6409
        %6445 = vst.msk [vmem:[#allocation3 + $0x208] sm:$0xff] %vm2001, %v6411
        %6446 = vst.msk [vmem:[#allocation3 + $0x230] sm:$0xff] %vm2001, %v6413
        %6447 = vst.msk [vmem:[#allocation3 + $0x258] sm:$0xff] %vm2001, %v6415
        %v6448 = vld [vmem:[#allocation2] sm:$0xe]
        %v6449 = vld [vmem:[#allocation2 + $0x4] sm:$0xf]
        %v6450 = vld [vmem:[#allocation2 + $0x8] sm:$0x1]
        %v6451 = vld [vmem:[#allocation2 + $0xc] sm:$0xe]
        %v6452 = vld [vmem:[#allocation2 + $0x10] sm:$0xf]
        %v6453 = vld [vmem:[#allocation2 + $0x14] sm:$0x1]
        %v6454 = vld [vmem:[#allocation2 + $0x18] sm:$0xe]
        %v6455 = vld [vmem:[#allocation2 + $0x1c] sm:$0xf]
        %v6456 = vld [vmem:[#allocation2 + $0x20] sm:$0x1]
        %v6457 = vld [vmem:[#allocation2 + $0x24] sm:$0xe]
        %v6458 = vld [vmem:[#allocation2 + $0x28] sm:$0xf]
        %v6459 = vld [vmem:[#allocation2 + $0x2c] sm:$0x1]
        %v6460 = vld [vmem:[#allocation2 + $0x30] sm:$0xe]
        %v6461 = vld [vmem:[#allocation2 + $0x34] sm:$0xf]
        %v6462 = vld [vmem:[#allocation2 + $0x38] sm:$0x1]
        %v6463 = vld [vmem:[#allocation2 + $0x3c] sm:$0xe]
        %v6464 = vld [vmem:[#allocation2 + $0x40] sm:$0xf]
        %v6465 = vld [vmem:[#allocation2 + $0x44] sm:$0x1]
        %v6466 = vld [vmem:[#allocation2 + $0x48] sm:$0xe]
        %v6467 = vld [vmem:[#allocation2 + $0x4c] sm:$0xf]
        %v6468 = vld [vmem:[#allocation2 + $0x50] sm:$0x1]
        %v6469 = vld [vmem:[#allocation2 + $0x54] sm:$0xe]
        %v6470 = vld [vmem:[#allocation2 + $0x58] sm:$0xf]
        %v6471 = vld [vmem:[#allocation2 + $0x5c] sm:$0x1]
        %v6472 = vld [vmem:[#allocation2 + $0x60] sm:$0xe]
        %v6473 = vld [vmem:[#allocation2 + $0x64] sm:$0xf]
        %v6474 = vld [vmem:[#allocation2 + $0x68] sm:$0x1]
        %v6475 = vld [vmem:[#allocation2 + $0x6c] sm:$0xe]
        %v6476 = vld [vmem:[#allocation2 + $0x70] sm:$0xf]
        %v6477 = vld [vmem:[#allocation2 + $0x74] sm:$0x1]
        %v6478 = vld [vmem:[#allocation2 + $0x78] sm:$0xe]
        %v6479 = vld [vmem:[#allocation2 + $0x7c] sm:$0xf]
        %v6480 = vld [vmem:[#allocation2 + $0x80] sm:$0x1]
        %v6481 = vld [vmem:[#allocation2 + $0x84] sm:$0xe]
        %v6482 = vld [vmem:[#allocation2 + $0x88] sm:$0xf]
        %v6483 = vld [vmem:[#allocation2 + $0x8c] sm:$0x1]
        %v6484 = vld [vmem:[#allocation2 + $0x90] sm:$0xe]
        %v6485 = vld [vmem:[#allocation2 + $0x94] sm:$0xf]
        %v6486 = vld [vmem:[#allocation2 + $0x98] sm:$0x1]
        %v6487 = vld [vmem:[#allocation2 + $0x9c] sm:$0xe]
        %v6488 = vld [vmem:[#allocation2 + $0xa0] sm:$0xf]
        %v6489 = vld [vmem:[#allocation2 + $0xa4] sm:$0x1]
        %v6490 = vld [vmem:[#allocation2 + $0xa8] sm:$0xe]
        %v6491 = vld [vmem:[#allocation2 + $0xac] sm:$0xf]
        %v6492 = vld [vmem:[#allocation2 + $0xb0] sm:$0x1]
        %v6493 = vld [vmem:[#allocation2 + $0xb4] sm:$0xe]
        %v6494 = vld [vmem:[#allocation2 + $0xb8] sm:$0xf]
        %v6495 = vld [vmem:[#allocation2 + $0xbc] sm:$0x1]
        %v6544 = vrot.slane %v6448, 5
        %v6545 = vrot.slane %v6544, 4
        %v6546 = vrot.slane %v6449, 5
        %v6547 = vsel %vm2116, %v6545, %v6546
        %v6548 = vrot.slane %v6546, 4
        %v6549 = vrot.slane %v6450, 5
        %v6550 = vsel %vm2116, %v6548, %v6549
        %v6551 = vrot.slane %v6451, 5
        %v6552 = vrot.slane %v6551, 4
        %v6553 = vrot.slane %v6452, 5
        %v6554 = vsel %vm2116, %v6552, %v6553
        %v6555 = vrot.slane %v6553, 4
        %v6556 = vrot.slane %v6453, 5
        %v6557 = vsel %vm2116, %v6555, %v6556
        %v6558 = vrot.slane %v6454, 5
        %v6559 = vrot.slane %v6558, 4
        %v6560 = vrot.slane %v6455, 5
        %v6561 = vsel %vm2116, %v6559, %v6560
        %v6562 = vrot.slane %v6560, 4
        %v6563 = vrot.slane %v6456, 5
        %v6564 = vsel %vm2116, %v6562, %v6563
        %v6565 = vrot.slane %v6457, 5
        %v6566 = vrot.slane %v6565, 4
        %v6567 = vrot.slane %v6458, 5
        %v6568 = vsel %vm2116, %v6566, %v6567
        %v6569 = vrot.slane %v6567, 4
        %v6570 = vrot.slane %v6459, 5
        %v6571 = vsel %vm2116, %v6569, %v6570
        %v6572 = vrot.slane %v6460, 5
        %v6573 = vrot.slane %v6572, 4
        %v6574 = vrot.slane %v6461, 5
        %v6575 = vsel %vm2116, %v6573, %v6574
        %v6576 = vrot.slane %v6574, 4
        %v6577 = vrot.slane %v6462, 5
        %v6578 = vsel %vm2116, %v6576, %v6577
        %v6579 = vrot.slane %v6463, 5
        %v6580 = vrot.slane %v6579, 4
        %v6581 = vrot.slane %v6464, 5
        %v6582 = vsel %vm2116, %v6580, %v6581
        %v6583 = vrot.slane %v6581, 4
        %v6584 = vrot.slane %v6465, 5
        %v6585 = vsel %vm2116, %v6583, %v6584
        %v6586 = vrot.slane %v6466, 5
        %v6587 = vrot.slane %v6586, 4
        %v6588 = vrot.slane %v6467, 5
        %v6589 = vsel %vm2116, %v6587, %v6588
        %v6590 = vrot.slane %v6588, 4
        %v6591 = vrot.slane %v6468, 5
        %v6592 = vsel %vm2116, %v6590, %v6591
        %v6593 = vrot.slane %v6469, 5
        %v6594 = vrot.slane %v6593, 4
        %v6595 = vrot.slane %v6470, 5
        %v6596 = vsel %vm2116, %v6594, %v6595
        %v6597 = vrot.slane %v6595, 4
        %v6598 = vrot.slane %v6471, 5
        %v6599 = vsel %vm2116, %v6597, %v6598
        %v6600 = vrot.slane %v6472, 5
        %v6601 = vrot.slane %v6600, 4
        %v6602 = vrot.slane %v6473, 5
        %v6603 = vsel %vm2116, %v6601, %v6602
        %v6604 = vrot.slane %v6602, 4
        %v6605 = vrot.slane %v6474, 5
        %v6606 = vsel %vm2116, %v6604, %v6605
        %v6607 = vrot.slane %v6475, 5
        %v6608 = vrot.slane %v6607, 4
        %v6609 = vrot.slane %v6476, 5
        %v6610 = vsel %vm2116, %v6608, %v6609
        %v6611 = vrot.slane %v6609, 4
        %v6612 = vrot.slane %v6477, 5
        %v6613 = vsel %vm2116, %v6611, %v6612
        %v6614 = vrot.slane %v6478, 5
        %v6615 = vrot.slane %v6614, 4
        %v6616 = vrot.slane %v6479, 5
        %v6617 = vsel %vm2116, %v6615, %v6616
        %v6618 = vrot.slane %v6616, 4
        %v6619 = vrot.slane %v6480, 5
        %v6620 = vsel %vm2116, %v6618, %v6619
        %v6621 = vrot.slane %v6481, 5
        %v6622 = vrot.slane %v6621, 4
        %v6623 = vrot.slane %v6482, 5
        %v6624 = vsel %vm2116, %v6622, %v6623
        %v6625 = vrot.slane %v6623, 4
        %v6626 = vrot.slane %v6483, 5
        %v6627 = vsel %vm2116, %v6625, %v6626
        %v6628 = vrot.slane %v6484, 5
        %v6629 = vrot.slane %v6628, 4
        %v6630 = vrot.slane %v6485, 5
        %v6631 = vsel %vm2116, %v6629, %v6630
        %v6632 = vrot.slane %v6630, 4
        %v6633 = vrot.slane %v6486, 5
        %v6634 = vsel %vm2116, %v6632, %v6633
        %v6635 = vrot.slane %v6487, 5
        %v6636 = vrot.slane %v6635, 4
        %v6637 = vrot.slane %v6488, 5
        %v6638 = vsel %vm2116, %v6636, %v6637
        %v6639 = vrot.slane %v6637, 4
        %v6640 = vrot.slane %v6489, 5
        %v6641 = vsel %vm2116, %v6639, %v6640
        %v6642 = vrot.slane %v6490, 5
        %v6643 = vrot.slane %v6642, 4
        %v6644 = vrot.slane %v6491, 5
        %v6645 = vsel %vm2116, %v6643, %v6644
        %v6646 = vrot.slane %v6644, 4
        %v6647 = vrot.slane %v6492, 5
        %v6648 = vsel %vm2116, %v6646, %v6647
        %v6649 = vrot.slane %v6493, 5
        %v6650 = vrot.slane %v6649, 4
        %v6651 = vrot.slane %v6494, 5
        %v6652 = vsel %vm2116, %v6650, %v6651
        %v6653 = vrot.slane %v6651, 4
        %v6654 = vrot.slane %v6495, 5
        %v6655 = vsel %vm2116, %v6653, %v6654
        %v6656 = vunpack.c.l.b16 %v6547
        %v6657 = vunpack.c.l.b16 %v6550
        %v6658 = vunpack.c.l.b16 %v6554
        %v6659 = vunpack.c.l.b16 %v6557
        %v6660 = vunpack.c.l.b16 %v6561
        %v6661 = vunpack.c.l.b16 %v6564
        %v6662 = vunpack.c.l.b16 %v6568
        %v6663 = vunpack.c.l.b16 %v6571
        %v6664 = vunpack.c.l.b16 %v6575
        %v6665 = vunpack.c.l.b16 %v6578
        %v6666 = vunpack.c.l.b16 %v6582
        %v6667 = vunpack.c.l.b16 %v6585
        %v6668 = vunpack.c.l.b16 %v6589
        %v6669 = vunpack.c.l.b16 %v6592
        %v6670 = vunpack.c.l.b16 %v6596
        %v6671 = vunpack.c.l.b16 %v6599
        %v6672 = vunpack.c.l.b16 %v6603
        %v6673 = vunpack.c.l.b16 %v6606
        %v6674 = vunpack.c.l.b16 %v6610
        %v6675 = vunpack.c.l.b16 %v6613
        %v6676 = vunpack.c.l.b16 %v6617
        %v6677 = vunpack.c.l.b16 %v6620
        %v6678 = vunpack.c.l.b16 %v6624
        %v6679 = vunpack.c.l.b16 %v6627
        %v6680 = vunpack.c.l.b16 %v6631
        %v6681 = vunpack.c.l.b16 %v6634
        %v6682 = vunpack.c.l.b16 %v6638
        %v6683 = vunpack.c.l.b16 %v6641
        %v6684 = vunpack.c.l.b16 %v6645
        %v6685 = vunpack.c.l.b16 %v6648
        %v6686 = vunpack.c.l.b16 %v6652
        %v6687 = vunpack.c.l.b16 %v6655
        %v6688 = vpack.c.b16 %v6657, %v6656
        %v6689 = vpack.c.b16 %v6659, %v6658
        %v6690 = vpack.c.b16 %v6661, %v6660
        %v6691 = vpack.c.b16 %v6663, %v6662
        %v6692 = vpack.c.b16 %v6665, %v6664
        %v6693 = vpack.c.b16 %v6667, %v6666
        %v6694 = vpack.c.b16 %v6669, %v6668
        %v6695 = vpack.c.b16 %v6671, %v6670
        %v6696 = vpack.c.b16 %v6673, %v6672
        %v6697 = vpack.c.b16 %v6675, %v6674
        %v6698 = vpack.c.b16 %v6677, %v6676
        %v6699 = vpack.c.b16 %v6679, %v6678
        %v6700 = vpack.c.b16 %v6681, %v6680
        %v6701 = vpack.c.b16 %v6683, %v6682
        %v6702 = vpack.c.b16 %v6685, %v6684
        %v6703 = vpack.c.b16 %v6687, %v6686
        %6720 = vst.msk [vmem:[#allocation3 + $0x8] sm:$0xff] %vm1453, %v6688
        %6721 = vst.msk [vmem:[#allocation3 + $0x30] sm:$0xff] %vm1453, %v6689
        %6722 = vst.msk [vmem:[#allocation3 + $0x58] sm:$0xff] %vm1453, %v6690
        %6723 = vst.msk [vmem:[#allocation3 + $0x80] sm:$0xff] %vm1453, %v6691
        %6724 = vst.msk [vmem:[#allocation3 + $0xa8] sm:$0xff] %vm1453, %v6692
        %6725 = vst.msk [vmem:[#allocation3 + $0xd0] sm:$0xff] %vm1453, %v6693
        %6726 = vst.msk [vmem:[#allocation3 + $0xf8] sm:$0xff] %vm1453, %v6694
        %6727 = vst.msk [vmem:[#allocation3 + $0x120] sm:$0xff] %vm1453, %v6695
        %6728 = vst.msk [vmem:[#allocation3 + $0x148] sm:$0xff] %vm1453, %v6696
        %6729 = vst.msk [vmem:[#allocation3 + $0x170] sm:$0xff] %vm1453, %v6697
        %6730 = vst.msk [vmem:[#allocation3 + $0x198] sm:$0xff] %vm1453, %v6698
        %6731 = vst.msk [vmem:[#allocation3 + $0x1c0] sm:$0xff] %vm1453, %v6699
        %6732 = vst.msk [vmem:[#allocation3 + $0x1e8] sm:$0xff] %vm1453, %v6700
        %6733 = vst.msk [vmem:[#allocation3 + $0x210] sm:$0xff] %vm1453, %v6701
        %6734 = vst.msk [vmem:[#allocation3 + $0x238] sm:$0xff] %vm1453, %v6702
        %6735 = vst.msk [vmem:[#allocation3 + $0x260] sm:$0xff] %vm1453, %v6703
        %v6736 = vld [vmem:[%s1210] sm:$0xf]
        %v6737 = vld [vmem:[%s1210 + $0x4] sm:$0xf]
        %v6738 = vld [vmem:[%s1210 + $0xc] sm:$0xf]
        %v6739 = vld [vmem:[%s1210 + $0x10] sm:$0xf]
        %v6740 = vld [vmem:[%s1210 + $0x18] sm:$0xf]
        %v6741 = vld [vmem:[%s1210 + $0x1c] sm:$0xf]
        %v6742 = vld [vmem:[%s1210 + $0x24] sm:$0xf]
        %v6743 = vld [vmem:[%s1210 + $0x28] sm:$0xf]
        %v6744 = vld [vmem:[%s1210 + $0x30] sm:$0xf]
        %v6745 = vld [vmem:[%s1210 + $0x34] sm:$0xf]
        %v6746 = vld [vmem:[%s1210 + $0x3c] sm:$0xf]
        %v6747 = vld [vmem:[%s1210 + $0x40] sm:$0xf]
        %v6748 = vld [vmem:[%s1210 + $0x48] sm:$0xf]
        %v6749 = vld [vmem:[%s1210 + $0x4c] sm:$0xf]
        %v6750 = vld [vmem:[%s1210 + $0x54] sm:$0xf]
        %v6751 = vld [vmem:[%s1210 + $0x58] sm:$0xf]
        %v6752 = vld [vmem:[%s1210 + $0x60] sm:$0xf]
        %v6753 = vld [vmem:[%s1210 + $0x64] sm:$0xf]
        %v6754 = vld [vmem:[%s1210 + $0x6c] sm:$0xf]
        %v6755 = vld [vmem:[%s1210 + $0x70] sm:$0xf]
        %v6756 = vld [vmem:[%s1210 + $0x78] sm:$0xf]
        %v6757 = vld [vmem:[%s1210 + $0x7c] sm:$0xf]
        %v6758 = vld [vmem:[%s1210 + $0x84] sm:$0xf]
        %v6759 = vld [vmem:[%s1210 + $0x88] sm:$0xf]
        %v6760 = vld [vmem:[%s1210 + $0x90] sm:$0xf]
        %v6761 = vld [vmem:[%s1210 + $0x94] sm:$0xf]
        %v6762 = vld [vmem:[%s1210 + $0x9c] sm:$0xf]
        %v6763 = vld [vmem:[%s1210 + $0xa0] sm:$0xf]
        %v6764 = vld [vmem:[%s1210 + $0xa8] sm:$0xf]
        %v6765 = vld [vmem:[%s1210 + $0xac] sm:$0xf]
        %v6766 = vld [vmem:[%s1210 + $0xb4] sm:$0xf]
        %v6767 = vld [vmem:[%s1210 + $0xb8] sm:$0xf]
        %v6800 = vunpack.c.l.b16 %v6736
        %v6801 = vunpack.c.l.b16 %v6737
        %v6802 = vunpack.c.l.b16 %v6738
        %v6803 = vunpack.c.l.b16 %v6739
        %v6804 = vunpack.c.l.b16 %v6740
        %v6805 = vunpack.c.l.b16 %v6741
        %v6806 = vunpack.c.l.b16 %v6742
        %v6807 = vunpack.c.l.b16 %v6743
        %v6808 = vunpack.c.l.b16 %v6744
        %v6809 = vunpack.c.l.b16 %v6745
        %v6810 = vunpack.c.l.b16 %v6746
        %v6811 = vunpack.c.l.b16 %v6747
        %v6812 = vunpack.c.l.b16 %v6748
        %v6813 = vunpack.c.l.b16 %v6749
        %v6814 = vunpack.c.l.b16 %v6750
        %v6815 = vunpack.c.l.b16 %v6751
        %v6816 = vunpack.c.l.b16 %v6752
        %v6817 = vunpack.c.l.b16 %v6753
        %v6818 = vunpack.c.l.b16 %v6754
        %v6819 = vunpack.c.l.b16 %v6755
        %v6820 = vunpack.c.l.b16 %v6756
        %v6821 = vunpack.c.l.b16 %v6757
        %v6822 = vunpack.c.l.b16 %v6758
        %v6823 = vunpack.c.l.b16 %v6759
        %v6824 = vunpack.c.l.b16 %v6760
        %v6825 = vunpack.c.l.b16 %v6761
        %v6826 = vunpack.c.l.b16 %v6762
        %v6827 = vunpack.c.l.b16 %v6763
        %v6828 = vunpack.c.l.b16 %v6764
        %v6829 = vunpack.c.l.b16 %v6765
        %v6830 = vunpack.c.l.b16 %v6766
        %v6831 = vunpack.c.l.b16 %v6767
        %v6832 = vpack.c.b16 %v6801, %v6800
        %v6833 = vpack.c.b16 %v6803, %v6802
        %v6834 = vpack.c.b16 %v6805, %v6804
        %v6835 = vpack.c.b16 %v6807, %v6806
        %v6836 = vpack.c.b16 %v6809, %v6808
        %v6837 = vpack.c.b16 %v6811, %v6810
        %v6838 = vpack.c.b16 %v6813, %v6812
        %v6839 = vpack.c.b16 %v6815, %v6814
        %v6840 = vpack.c.b16 %v6817, %v6816
        %v6841 = vpack.c.b16 %v6819, %v6818
        %v6842 = vpack.c.b16 %v6821, %v6820
        %v6843 = vpack.c.b16 %v6823, %v6822
        %v6844 = vpack.c.b16 %v6825, %v6824
        %v6845 = vpack.c.b16 %v6827, %v6826
        %v6846 = vpack.c.b16 %v6829, %v6828
        %v6847 = vpack.c.b16 %v6831, %v6830
        %6848 = vrot.lane.b32.xlu0 %v6832, 64
        %v6849 = vpop.permute.xlu0 %6848
        %6850 = vrot.lane.b32.xlu0 %v6833, 64
        %v6851 = vpop.permute.xlu0 %6850
        %6852 = vrot.lane.b32.xlu0 %v6834, 64
        %v6853 = vpop.permute.xlu0 %6852
        %6854 = vrot.lane.b32.xlu0 %v6835, 64
        %v6855 = vpop.permute.xlu0 %6854
        %6856 = vrot.lane.b32.xlu0 %v6836, 64
        %v6857 = vpop.permute.xlu0 %6856
        %6858 = vrot.lane.b32.xlu0 %v6837, 64
        %v6859 = vpop.permute.xlu0 %6858
        %6860 = vrot.lane.b32.xlu0 %v6838, 64
        %v6861 = vpop.permute.xlu0 %6860
        %6862 = vrot.lane.b32.xlu0 %v6839, 64
        %v6863 = vpop.permute.xlu0 %6862
        %6864 = vrot.lane.b32.xlu0 %v6840, 64
        %v6865 = vpop.permute.xlu0 %6864
        %6866 = vrot.lane.b32.xlu0 %v6841, 64
        %v6867 = vpop.permute.xlu0 %6866
        %6868 = vrot.lane.b32.xlu0 %v6842, 64
        %v6869 = vpop.permute.xlu0 %6868
        %6870 = vrot.lane.b32.xlu0 %v6843, 64
        %v6871 = vpop.permute.xlu0 %6870
        %6872 = vrot.lane.b32.xlu0 %v6844, 64
        %v6873 = vpop.permute.xlu0 %6872
        %6874 = vrot.lane.b32.xlu0 %v6845, 64
        %v6875 = vpop.permute.xlu0 %6874
        %6876 = vrot.lane.b32.xlu0 %v6846, 64
        %v6877 = vpop.permute.xlu0 %6876
        %6878 = vrot.lane.b32.xlu0 %v6847, 64
        %v6879 = vpop.permute.xlu0 %6878
        %6896 = vst.msk [vmem:[#allocation3 + $0x8] sm:$0xff] %vm2001, %v6849
        %6897 = vst.msk [vmem:[#allocation3 + $0x30] sm:$0xff] %vm2001, %v6851
        %6898 = vst.msk [vmem:[#allocation3 + $0x58] sm:$0xff] %vm2001, %v6853
        %6899 = vst.msk [vmem:[#allocation3 + $0x80] sm:$0xff] %vm2001, %v6855
        %6900 = vst.msk [vmem:[#allocation3 + $0xa8] sm:$0xff] %vm2001, %v6857
        %6901 = vst.msk [vmem:[#allocation3 + $0xd0] sm:$0xff] %vm2001, %v6859
        %6902 = vst.msk [vmem:[#allocation3 + $0xf8] sm:$0xff] %vm2001, %v6861
        %6903 = vst.msk [vmem:[#allocation3 + $0x120] sm:$0xff] %vm2001, %v6863
        %6904 = vst.msk [vmem:[#allocation3 + $0x148] sm:$0xff] %vm2001, %v6865
        %6905 = vst.msk [vmem:[#allocation3 + $0x170] sm:$0xff] %vm2001, %v6867
        %6906 = vst.msk [vmem:[#allocation3 + $0x198] sm:$0xff] %vm2001, %v6869
        %6907 = vst.msk [vmem:[#allocation3 + $0x1c0] sm:$0xff] %vm2001, %v6871
        %6908 = vst.msk [vmem:[#allocation3 + $0x1e8] sm:$0xff] %vm2001, %v6873
        %6909 = vst.msk [vmem:[#allocation3 + $0x210] sm:$0xff] %vm2001, %v6875
        %6910 = vst.msk [vmem:[#allocation3 + $0x238] sm:$0xff] %vm2001, %v6877
        %6911 = vst.msk [vmem:[#allocation3 + $0x260] sm:$0xff] %vm2001, %v6879
        %v6912 = vld [vmem:[%s1210] sm:$0xf]
        %v6913 = vld [vmem:[%s1210 + $0x4] sm:$0xf]
        %v6914 = vld [vmem:[%s1210 + $0x8] sm:$0x1]
        %v6915 = vld [vmem:[%s1210 + $0xc] sm:$0xf]
        %v6916 = vld [vmem:[%s1210 + $0x10] sm:$0xf]
        %v6917 = vld [vmem:[%s1210 + $0x14] sm:$0x1]
        %v6918 = vld [vmem:[%s1210 + $0x18] sm:$0xf]
        %v6919 = vld [vmem:[%s1210 + $0x1c] sm:$0xf]
        %v6920 = vld [vmem:[%s1210 + $0x20] sm:$0x1]
        %v6921 = vld [vmem:[%s1210 + $0x24] sm:$0xf]
        %v6922 = vld [vmem:[%s1210 + $0x28] sm:$0xf]
        %v6923 = vld [vmem:[%s1210 + $0x2c] sm:$0x1]
        %v6924 = vld [vmem:[%s1210 + $0x30] sm:$0xf]
        %v6925 = vld [vmem:[%s1210 + $0x34] sm:$0xf]
        %v6926 = vld [vmem:[%s1210 + $0x38] sm:$0x1]
        %v6927 = vld [vmem:[%s1210 + $0x3c] sm:$0xf]
        %v6928 = vld [vmem:[%s1210 + $0x40] sm:$0xf]
        %v6929 = vld [vmem:[%s1210 + $0x44] sm:$0x1]
        %v6930 = vld [vmem:[%s1210 + $0x48] sm:$0xf]
        %v6931 = vld [vmem:[%s1210 + $0x4c] sm:$0xf]
        %v6932 = vld [vmem:[%s1210 + $0x50] sm:$0x1]
        %v6933 = vld [vmem:[%s1210 + $0x54] sm:$0xf]
        %v6934 = vld [vmem:[%s1210 + $0x58] sm:$0xf]
        %v6935 = vld [vmem:[%s1210 + $0x5c] sm:$0x1]
        %v6936 = vld [vmem:[%s1210 + $0x60] sm:$0xf]
        %v6937 = vld [vmem:[%s1210 + $0x64] sm:$0xf]
        %v6938 = vld [vmem:[%s1210 + $0x68] sm:$0x1]
        %v6939 = vld [vmem:[%s1210 + $0x6c] sm:$0xf]
        %v6940 = vld [vmem:[%s1210 + $0x70] sm:$0xf]
        %v6941 = vld [vmem:[%s1210 + $0x74] sm:$0x1]
        %v6942 = vld [vmem:[%s1210 + $0x78] sm:$0xf]
        %v6943 = vld [vmem:[%s1210 + $0x7c] sm:$0xf]
        %v6944 = vld [vmem:[%s1210 + $0x80] sm:$0x1]
        %v6945 = vld [vmem:[%s1210 + $0x84] sm:$0xf]
        %v6946 = vld [vmem:[%s1210 + $0x88] sm:$0xf]
        %v6947 = vld [vmem:[%s1210 + $0x8c] sm:$0x1]
        %v6948 = vld [vmem:[%s1210 + $0x90] sm:$0xf]
        %v6949 = vld [vmem:[%s1210 + $0x94] sm:$0xf]
        %v6950 = vld [vmem:[%s1210 + $0x98] sm:$0x1]
        %v6951 = vld [vmem:[%s1210 + $0x9c] sm:$0xf]
        %v6952 = vld [vmem:[%s1210 + $0xa0] sm:$0xf]
        %v6953 = vld [vmem:[%s1210 + $0xa4] sm:$0x1]
        %v6954 = vld [vmem:[%s1210 + $0xa8] sm:$0xf]
        %v6955 = vld [vmem:[%s1210 + $0xac] sm:$0xf]
        %v6956 = vld [vmem:[%s1210 + $0xb0] sm:$0x1]
        %v6957 = vld [vmem:[%s1210 + $0xb4] sm:$0xf]
        %v6958 = vld [vmem:[%s1210 + $0xb8] sm:$0xf]
        %v6959 = vld [vmem:[%s1210 + $0xbc] sm:$0x1]
        %v6961 = vshrl.u32 %v6912, 16
        %v6963 = vrot.slane %v6961, 4
        %v6964 = vshll.u32 %v6912, 16
        %v6966 = vrot.slane %v6964, 5
        %v6967 = vor.u32 %v6963, %v6966
        %v6968 = vrot.slane %v6967, 4
        %v6970 = vshll.u32 %v6913, 16
        %v6972 = vrot.slane %v6970, 5
        %v6973 = vsel %vm1520, %v6968, %v6972
        %v6974 = vshrl.u32 %v6913, 16
        %v6976 = vrot.slane %v6974, 4
        %v6977 = vor.u32 %v6976, %v6972
        %v6978 = vrot.slane %v6977, 4
        %v6980 = vshll.u32 %v6914, 16
        %v6982 = vrot.slane %v6980, 5
        %v6983 = vsel %vm1520, %v6978, %v6982
        %v6985 = vshrl.u32 %v6915, 16
        %v6987 = vrot.slane %v6985, 4
        %v6988 = vshll.u32 %v6915, 16
        %v6990 = vrot.slane %v6988, 5
        %v6991 = vor.u32 %v6987, %v6990
        %v6992 = vrot.slane %v6991, 4
        %v6994 = vshll.u32 %v6916, 16
        %v6996 = vrot.slane %v6994, 5
        %v6997 = vsel %vm1520, %v6992, %v6996
        %v6998 = vshrl.u32 %v6916, 16
        %v7000 = vrot.slane %v6998, 4
        %v7001 = vor.u32 %v7000, %v6996
        %v7002 = vrot.slane %v7001, 4
        %v7004 = vshll.u32 %v6917, 16
        %v7006 = vrot.slane %v7004, 5
        %v7007 = vsel %vm1520, %v7002, %v7006
        %v7009 = vshrl.u32 %v6918, 16
        %v7011 = vrot.slane %v7009, 4
        %v7012 = vshll.u32 %v6918, 16
        %v7014 = vrot.slane %v7012, 5
        %v7015 = vor.u32 %v7011, %v7014
        %v7016 = vrot.slane %v7015, 4
        %v7018 = vshll.u32 %v6919, 16
        %v7020 = vrot.slane %v7018, 5
        %v7021 = vsel %vm1520, %v7016, %v7020
        %v7022 = vshrl.u32 %v6919, 16
        %v7024 = vrot.slane %v7022, 4
        %v7025 = vor.u32 %v7024, %v7020
        %v7026 = vrot.slane %v7025, 4
        %v7028 = vshll.u32 %v6920, 16
        %v7030 = vrot.slane %v7028, 5
        %v7031 = vsel %vm1520, %v7026, %v7030
        %v7033 = vshrl.u32 %v6921, 16
        %v7035 = vrot.slane %v7033, 4
        %v7036 = vshll.u32 %v6921, 16
        %v7038 = vrot.slane %v7036, 5
        %v7039 = vor.u32 %v7035, %v7038
        %v7040 = vrot.slane %v7039, 4
        %v7042 = vshll.u32 %v6922, 16
        %v7044 = vrot.slane %v7042, 5
        %v7045 = vsel %vm1520, %v7040, %v7044
        %v7046 = vshrl.u32 %v6922, 16
        %v7048 = vrot.slane %v7046, 4
        %v7049 = vor.u32 %v7048, %v7044
        %v7050 = vrot.slane %v7049, 4
        %v7052 = vshll.u32 %v6923, 16
        %v7054 = vrot.slane %v7052, 5
        %v7055 = vsel %vm1520, %v7050, %v7054
        %v7057 = vshrl.u32 %v6924, 16
        %v7059 = vrot.slane %v7057, 4
        %v7060 = vshll.u32 %v6924, 16
        %v7062 = vrot.slane %v7060, 5
        %v7063 = vor.u32 %v7059, %v7062
        %v7064 = vrot.slane %v7063, 4
        %v7066 = vshll.u32 %v6925, 16
        %v7068 = vrot.slane %v7066, 5
        %v7069 = vsel %vm1520, %v7064, %v7068
        %v7070 = vshrl.u32 %v6925, 16
        %v7072 = vrot.slane %v7070, 4
        %v7073 = vor.u32 %v7072, %v7068
        %v7074 = vrot.slane %v7073, 4
        %v7076 = vshll.u32 %v6926, 16
        %v7078 = vrot.slane %v7076, 5
        %v7079 = vsel %vm1520, %v7074, %v7078
        %v7081 = vshrl.u32 %v6927, 16
        %v7083 = vrot.slane %v7081, 4
        %v7084 = vshll.u32 %v6927, 16
        %v7086 = vrot.slane %v7084, 5
        %v7087 = vor.u32 %v7083, %v7086
        %v7088 = vrot.slane %v7087, 4
        %v7090 = vshll.u32 %v6928, 16
        %v7092 = vrot.slane %v7090, 5
        %v7093 = vsel %vm1520, %v7088, %v7092
        %v7094 = vshrl.u32 %v6928, 16
        %v7096 = vrot.slane %v7094, 4
        %v7097 = vor.u32 %v7096, %v7092
        %v7098 = vrot.slane %v7097, 4
        %v7100 = vshll.u32 %v6929, 16
        %v7102 = vrot.slane %v7100, 5
        %v7103 = vsel %vm1520, %v7098, %v7102
        %v7105 = vshrl.u32 %v6930, 16
        %v7107 = vrot.slane %v7105, 4
        %v7108 = vshll.u32 %v6930, 16
        %v7110 = vrot.slane %v7108, 5
        %v7111 = vor.u32 %v7107, %v7110
        %v7112 = vrot.slane %v7111, 4
        %v7114 = vshll.u32 %v6931, 16
        %v7116 = vrot.slane %v7114, 5
        %v7117 = vsel %vm1520, %v7112, %v7116
        %v7118 = vshrl.u32 %v6931, 16
        %v7120 = vrot.slane %v7118, 4
        %v7121 = vor.u32 %v7120, %v7116
        %v7122 = vrot.slane %v7121, 4
        %v7124 = vshll.u32 %v6932, 16
        %v7126 = vrot.slane %v7124, 5
        %v7127 = vsel %vm1520, %v7122, %v7126
        %v7129 = vshrl.u32 %v6933, 16
        %v7131 = vrot.slane %v7129, 4
        %v7132 = vshll.u32 %v6933, 16
        %v7134 = vrot.slane %v7132, 5
        %v7135 = vor.u32 %v7131, %v7134
        %v7136 = vrot.slane %v7135, 4
        %v7138 = vshll.u32 %v6934, 16
        %v7140 = vrot.slane %v7138, 5
        %v7141 = vsel %vm1520, %v7136, %v7140
        %v7142 = vshrl.u32 %v6934, 16
        %v7144 = vrot.slane %v7142, 4
        %v7145 = vor.u32 %v7144, %v7140
        %v7146 = vrot.slane %v7145, 4
        %v7148 = vshll.u32 %v6935, 16
        %v7150 = vrot.slane %v7148, 5
        %v7151 = vsel %vm1520, %v7146, %v7150
        %v7153 = vshrl.u32 %v6936, 16
        %v7155 = vrot.slane %v7153, 4
        %v7156 = vshll.u32 %v6936, 16
        %v7158 = vrot.slane %v7156, 5
        %v7159 = vor.u32 %v7155, %v7158
        %v7160 = vrot.slane %v7159, 4
        %v7162 = vshll.u32 %v6937, 16
        %v7164 = vrot.slane %v7162, 5
        %v7165 = vsel %vm1520, %v7160, %v7164
        %v7166 = vshrl.u32 %v6937, 16
        %v7168 = vrot.slane %v7166, 4
        %v7169 = vor.u32 %v7168, %v7164
        %v7170 = vrot.slane %v7169, 4
        %v7172 = vshll.u32 %v6938, 16
        %v7174 = vrot.slane %v7172, 5
        %v7175 = vsel %vm1520, %v7170, %v7174
        %v7177 = vshrl.u32 %v6939, 16
        %v7179 = vrot.slane %v7177, 4
        %v7180 = vshll.u32 %v6939, 16
        %v7182 = vrot.slane %v7180, 5
        %v7183 = vor.u32 %v7179, %v7182
        %v7184 = vrot.slane %v7183, 4
        %v7186 = vshll.u32 %v6940, 16
        %v7188 = vrot.slane %v7186, 5
        %v7189 = vsel %vm1520, %v7184, %v7188
        %v7190 = vshrl.u32 %v6940, 16
        %v7192 = vrot.slane %v7190, 4
        %v7193 = vor.u32 %v7192, %v7188
        %v7194 = vrot.slane %v7193, 4
        %v7196 = vshll.u32 %v6941, 16
        %v7198 = vrot.slane %v7196, 5
        %v7199 = vsel %vm1520, %v7194, %v7198
        %v7201 = vshrl.u32 %v6942, 16
        %v7203 = vrot.slane %v7201, 4
        %v7204 = vshll.u32 %v6942, 16
        %v7206 = vrot.slane %v7204, 5
        %v7207 = vor.u32 %v7203, %v7206
        %v7208 = vrot.slane %v7207, 4
        %v7210 = vshll.u32 %v6943, 16
        %v7212 = vrot.slane %v7210, 5
        %v7213 = vsel %vm1520, %v7208, %v7212
        %v7214 = vshrl.u32 %v6943, 16
        %v7216 = vrot.slane %v7214, 4
        %v7217 = vor.u32 %v7216, %v7212
        %v7218 = vrot.slane %v7217, 4
        %v7220 = vshll.u32 %v6944, 16
        %v7222 = vrot.slane %v7220, 5
        %v7223 = vsel %vm1520, %v7218, %v7222
        %v7225 = vshrl.u32 %v6945, 16
        %v7227 = vrot.slane %v7225, 4
        %v7228 = vshll.u32 %v6945, 16
        %v7230 = vrot.slane %v7228, 5
        %v7231 = vor.u32 %v7227, %v7230
        %v7232 = vrot.slane %v7231, 4
        %v7234 = vshll.u32 %v6946, 16
        %v7236 = vrot.slane %v7234, 5
        %v7237 = vsel %vm1520, %v7232, %v7236
        %v7238 = vshrl.u32 %v6946, 16
        %v7240 = vrot.slane %v7238, 4
        %v7241 = vor.u32 %v7240, %v7236
        %v7242 = vrot.slane %v7241, 4
        %v7244 = vshll.u32 %v6947, 16
        %v7246 = vrot.slane %v7244, 5
        %v7247 = vsel %vm1520, %v7242, %v7246
        %v7249 = vshrl.u32 %v6948, 16
        %v7251 = vrot.slane %v7249, 4
        %v7252 = vshll.u32 %v6948, 16
        %v7254 = vrot.slane %v7252, 5
        %v7255 = vor.u32 %v7251, %v7254
        %v7256 = vrot.slane %v7255, 4
        %v7258 = vshll.u32 %v6949, 16
        %v7260 = vrot.slane %v7258, 5
        %v7261 = vsel %vm1520, %v7256, %v7260
        %v7262 = vshrl.u32 %v6949, 16
        %v7264 = vrot.slane %v7262, 4
        %v7265 = vor.u32 %v7264, %v7260
        %v7266 = vrot.slane %v7265, 4
        %v7268 = vshll.u32 %v6950, 16
        %v7270 = vrot.slane %v7268, 5
        %v7271 = vsel %vm1520, %v7266, %v7270
        %v7273 = vshrl.u32 %v6951, 16
        %v7275 = vrot.slane %v7273, 4
        %v7276 = vshll.u32 %v6951, 16
        %v7278 = vrot.slane %v7276, 5
        %v7279 = vor.u32 %v7275, %v7278
        %v7280 = vrot.slane %v7279, 4
        %v7282 = vshll.u32 %v6952, 16
        %v7284 = vrot.slane %v7282, 5
        %v7285 = vsel %vm1520, %v7280, %v7284
        %v7286 = vshrl.u32 %v6952, 16
        %v7288 = vrot.slane %v7286, 4
        %v7289 = vor.u32 %v7288, %v7284
        %v7290 = vrot.slane %v7289, 4
        %v7292 = vshll.u32 %v6953, 16
        %v7294 = vrot.slane %v7292, 5
        %v7295 = vsel %vm1520, %v7290, %v7294
        %v7297 = vshrl.u32 %v6954, 16
        %v7299 = vrot.slane %v7297, 4
        %v7300 = vshll.u32 %v6954, 16
        %v7302 = vrot.slane %v7300, 5
        %v7303 = vor.u32 %v7299, %v7302
        %v7304 = vrot.slane %v7303, 4
        %v7306 = vshll.u32 %v6955, 16
        %v7308 = vrot.slane %v7306, 5
        %v7309 = vsel %vm1520, %v7304, %v7308
        %v7310 = vshrl.u32 %v6955, 16
        %v7312 = vrot.slane %v7310, 4
        %v7313 = vor.u32 %v7312, %v7308
        %v7314 = vrot.slane %v7313, 4
        %v7316 = vshll.u32 %v6956, 16
        %v7318 = vrot.slane %v7316, 5
        %v7319 = vsel %vm1520, %v7314, %v7318
        %v7321 = vshrl.u32 %v6957, 16
        %v7323 = vrot.slane %v7321, 4
        %v7324 = vshll.u32 %v6957, 16
        %v7326 = vrot.slane %v7324, 5
        %v7327 = vor.u32 %v7323, %v7326
        %v7328 = vrot.slane %v7327, 4
        %v7330 = vshll.u32 %v6958, 16
        %v7332 = vrot.slane %v7330, 5
        %v7333 = vsel %vm1520, %v7328, %v7332
        %v7334 = vshrl.u32 %v6958, 16
        %v7336 = vrot.slane %v7334, 4
        %v7337 = vor.u32 %v7336, %v7332
        %v7338 = vrot.slane %v7337, 4
        %v7340 = vshll.u32 %v6959, 16
        %v7342 = vrot.slane %v7340, 5
        %v7343 = vsel %vm1520, %v7338, %v7342
        %v7344 = vunpack.c.l.b16 %v6973
        %v7345 = vunpack.c.l.b16 %v6983
        %v7346 = vunpack.c.l.b16 %v6997
        %v7347 = vunpack.c.l.b16 %v7007
        %v7348 = vunpack.c.l.b16 %v7021
        %v7349 = vunpack.c.l.b16 %v7031
        %v7350 = vunpack.c.l.b16 %v7045
        %v7351 = vunpack.c.l.b16 %v7055
        %v7352 = vunpack.c.l.b16 %v7069
        %v7353 = vunpack.c.l.b16 %v7079
        %v7354 = vunpack.c.l.b16 %v7093
        %v7355 = vunpack.c.l.b16 %v7103
        %v7356 = vunpack.c.l.b16 %v7117
        %v7357 = vunpack.c.l.b16 %v7127
        %v7358 = vunpack.c.l.b16 %v7141
        %v7359 = vunpack.c.l.b16 %v7151
        %v7360 = vunpack.c.l.b16 %v7165
        %v7361 = vunpack.c.l.b16 %v7175
        %v7362 = vunpack.c.l.b16 %v7189
        %v7363 = vunpack.c.l.b16 %v7199
        %v7364 = vunpack.c.l.b16 %v7213
        %v7365 = vunpack.c.l.b16 %v7223
        %v7366 = vunpack.c.l.b16 %v7237
        %v7367 = vunpack.c.l.b16 %v7247
        %v7368 = vunpack.c.l.b16 %v7261
        %v7369 = vunpack.c.l.b16 %v7271
        %v7370 = vunpack.c.l.b16 %v7285
        %v7371 = vunpack.c.l.b16 %v7295
        %v7372 = vunpack.c.l.b16 %v7309
        %v7373 = vunpack.c.l.b16 %v7319
        %v7374 = vunpack.c.l.b16 %v7333
        %v7375 = vunpack.c.l.b16 %v7343
        %v7376 = vpack.c.b16 %v7345, %v7344
        %v7377 = vpack.c.b16 %v7347, %v7346
        %v7378 = vpack.c.b16 %v7349, %v7348
        %v7379 = vpack.c.b16 %v7351, %v7350
        %v7380 = vpack.c.b16 %v7353, %v7352
        %v7381 = vpack.c.b16 %v7355, %v7354
        %v7382 = vpack.c.b16 %v7357, %v7356
        %v7383 = vpack.c.b16 %v7359, %v7358
        %v7384 = vpack.c.b16 %v7361, %v7360
        %v7385 = vpack.c.b16 %v7363, %v7362
        %v7386 = vpack.c.b16 %v7365, %v7364
        %v7387 = vpack.c.b16 %v7367, %v7366
        %v7388 = vpack.c.b16 %v7369, %v7368
        %v7389 = vpack.c.b16 %v7371, %v7370
        %v7390 = vpack.c.b16 %v7373, %v7372
        %v7391 = vpack.c.b16 %v7375, %v7374
        %7408 = vst.msk [vmem:[#allocation3 + $0x10] sm:$0xff] %vm1453, %v7376
        %7409 = vst.msk [vmem:[#allocation3 + $0x38] sm:$0xff] %vm1453, %v7377
        %7410 = vst.msk [vmem:[#allocation3 + $0x60] sm:$0xff] %vm1453, %v7378
        %7411 = vst.msk [vmem:[#allocation3 + $0x88] sm:$0xff] %vm1453, %v7379
        %7412 = vst.msk [vmem:[#allocation3 + $0xb0] sm:$0xff] %vm1453, %v7380
        %7413 = vst.msk [vmem:[#allocation3 + $0xd8] sm:$0xff] %vm1453, %v7381
        %7414 = vst.msk [vmem:[#allocation3 + $0x100] sm:$0xff] %vm1453, %v7382
        %7415 = vst.msk [vmem:[#allocation3 + $0x128] sm:$0xff] %vm1453, %v7383
        %7416 = vst.msk [vmem:[#allocation3 + $0x150] sm:$0xff] %vm1453, %v7384
        %7417 = vst.msk [vmem:[#allocation3 + $0x178] sm:$0xff] %vm1453, %v7385
        %7418 = vst.msk [vmem:[#allocation3 + $0x1a0] sm:$0xff] %vm1453, %v7386
        %7419 = vst.msk [vmem:[#allocation3 + $0x1c8] sm:$0xff] %vm1453, %v7387
        %7420 = vst.msk [vmem:[#allocation3 + $0x1f0] sm:$0xff] %vm1453, %v7388
        %7421 = vst.msk [vmem:[#allocation3 + $0x218] sm:$0xff] %vm1453, %v7389
        %7422 = vst.msk [vmem:[#allocation3 + $0x240] sm:$0xff] %vm1453, %v7390
        %7423 = vst.msk [vmem:[#allocation3 + $0x268] sm:$0xff] %vm1453, %v7391
        %v7424 = vld [vmem:[%s1210] sm:$0xe]
        %v7425 = vld [vmem:[%s1210 + $0x4] sm:$0xf]
        %v7426 = vld [vmem:[%s1210 + $0x8] sm:$0x1]
        %v7427 = vld [vmem:[%s1210 + $0xc] sm:$0xe]
        %v7428 = vld [vmem:[%s1210 + $0x10] sm:$0xf]
        %v7429 = vld [vmem:[%s1210 + $0x14] sm:$0x1]
        %v7430 = vld [vmem:[%s1210 + $0x18] sm:$0xe]
        %v7431 = vld [vmem:[%s1210 + $0x1c] sm:$0xf]
        %v7432 = vld [vmem:[%s1210 + $0x20] sm:$0x1]
        %v7433 = vld [vmem:[%s1210 + $0x24] sm:$0xe]
        %v7434 = vld [vmem:[%s1210 + $0x28] sm:$0xf]
        %v7435 = vld [vmem:[%s1210 + $0x2c] sm:$0x1]
        %v7436 = vld [vmem:[%s1210 + $0x30] sm:$0xe]
        %v7437 = vld [vmem:[%s1210 + $0x34] sm:$0xf]
        %v7438 = vld [vmem:[%s1210 + $0x38] sm:$0x1]
        %v7439 = vld [vmem:[%s1210 + $0x3c] sm:$0xe]
        %v7440 = vld [vmem:[%s1210 + $0x40] sm:$0xf]
        %v7441 = vld [vmem:[%s1210 + $0x44] sm:$0x1]
        %v7442 = vld [vmem:[%s1210 + $0x48] sm:$0xe]
        %v7443 = vld [vmem:[%s1210 + $0x4c] sm:$0xf]
        %v7444 = vld [vmem:[%s1210 + $0x50] sm:$0x1]
        %v7445 = vld [vmem:[%s1210 + $0x54] sm:$0xe]
        %v7446 = vld [vmem:[%s1210 + $0x58] sm:$0xf]
        %v7447 = vld [vmem:[%s1210 + $0x5c] sm:$0x1]
        %v7448 = vld [vmem:[%s1210 + $0x60] sm:$0xe]
        %v7449 = vld [vmem:[%s1210 + $0x64] sm:$0xf]
        %v7450 = vld [vmem:[%s1210 + $0x68] sm:$0x1]
        %v7451 = vld [vmem:[%s1210 + $0x6c] sm:$0xe]
        %v7452 = vld [vmem:[%s1210 + $0x70] sm:$0xf]
        %v7453 = vld [vmem:[%s1210 + $0x74] sm:$0x1]
        %v7454 = vld [vmem:[%s1210 + $0x78] sm:$0xe]
        %v7455 = vld [vmem:[%s1210 + $0x7c] sm:$0xf]
        %v7456 = vld [vmem:[%s1210 + $0x80] sm:$0x1]
        %v7457 = vld [vmem:[%s1210 + $0x84] sm:$0xe]
        %v7458 = vld [vmem:[%s1210 + $0x88] sm:$0xf]
        %v7459 = vld [vmem:[%s1210 + $0x8c] sm:$0x1]
        %v7460 = vld [vmem:[%s1210 + $0x90] sm:$0xe]
        %v7461 = vld [vmem:[%s1210 + $0x94] sm:$0xf]
        %v7462 = vld [vmem:[%s1210 + $0x98] sm:$0x1]
        %v7463 = vld [vmem:[%s1210 + $0x9c] sm:$0xe]
        %v7464 = vld [vmem:[%s1210 + $0xa0] sm:$0xf]
        %v7465 = vld [vmem:[%s1210 + $0xa4] sm:$0x1]
        %v7466 = vld [vmem:[%s1210 + $0xa8] sm:$0xe]
        %v7467 = vld [vmem:[%s1210 + $0xac] sm:$0xf]
        %v7468 = vld [vmem:[%s1210 + $0xb0] sm:$0x1]
        %v7469 = vld [vmem:[%s1210 + $0xb4] sm:$0xe]
        %v7470 = vld [vmem:[%s1210 + $0xb8] sm:$0xf]
        %v7471 = vld [vmem:[%s1210 + $0xbc] sm:$0x1]
        %v7520 = vrot.slane %v7424, 5
        %v7521 = vrot.slane %v7520, 4
        %v7522 = vrot.slane %v7425, 5
        %v7523 = vsel %vm2116, %v7521, %v7522
        %v7524 = vrot.slane %v7522, 4
        %v7525 = vrot.slane %v7426, 5
        %v7526 = vsel %vm2116, %v7524, %v7525
        %v7527 = vrot.slane %v7427, 5
        %v7528 = vrot.slane %v7527, 4
        %v7529 = vrot.slane %v7428, 5
        %v7530 = vsel %vm2116, %v7528, %v7529
        %v7531 = vrot.slane %v7529, 4
        %v7532 = vrot.slane %v7429, 5
        %v7533 = vsel %vm2116, %v7531, %v7532
        %v7534 = vrot.slane %v7430, 5
        %v7535 = vrot.slane %v7534, 4
        %v7536 = vrot.slane %v7431, 5
        %v7537 = vsel %vm2116, %v7535, %v7536
        %v7538 = vrot.slane %v7536, 4
        %v7539 = vrot.slane %v7432, 5
        %v7540 = vsel %vm2116, %v7538, %v7539
        %v7541 = vrot.slane %v7433, 5
        %v7542 = vrot.slane %v7541, 4
        %v7543 = vrot.slane %v7434, 5
        %v7544 = vsel %vm2116, %v7542, %v7543
        %v7545 = vrot.slane %v7543, 4
        %v7546 = vrot.slane %v7435, 5
        %v7547 = vsel %vm2116, %v7545, %v7546
        %v7548 = vrot.slane %v7436, 5
        %v7549 = vrot.slane %v7548, 4
        %v7550 = vrot.slane %v7437, 5
        %v7551 = vsel %vm2116, %v7549, %v7550
        %v7552 = vrot.slane %v7550, 4
        %v7553 = vrot.slane %v7438, 5
        %v7554 = vsel %vm2116, %v7552, %v7553
        %v7555 = vrot.slane %v7439, 5
        %v7556 = vrot.slane %v7555, 4
        %v7557 = vrot.slane %v7440, 5
        %v7558 = vsel %vm2116, %v7556, %v7557
        %v7559 = vrot.slane %v7557, 4
        %v7560 = vrot.slane %v7441, 5
        %v7561 = vsel %vm2116, %v7559, %v7560
        %v7562 = vrot.slane %v7442, 5
        %v7563 = vrot.slane %v7562, 4
        %v7564 = vrot.slane %v7443, 5
        %v7565 = vsel %vm2116, %v7563, %v7564
        %v7566 = vrot.slane %v7564, 4
        %v7567 = vrot.slane %v7444, 5
        %v7568 = vsel %vm2116, %v7566, %v7567
        %v7569 = vrot.slane %v7445, 5
        %v7570 = vrot.slane %v7569, 4
        %v7571 = vrot.slane %v7446, 5
        %v7572 = vsel %vm2116, %v7570, %v7571
        %v7573 = vrot.slane %v7571, 4
        %v7574 = vrot.slane %v7447, 5
        %v7575 = vsel %vm2116, %v7573, %v7574
        %v7576 = vrot.slane %v7448, 5
        %v7577 = vrot.slane %v7576, 4
        %v7578 = vrot.slane %v7449, 5
        %v7579 = vsel %vm2116, %v7577, %v7578
        %v7580 = vrot.slane %v7578, 4
        %v7581 = vrot.slane %v7450, 5
        %v7582 = vsel %vm2116, %v7580, %v7581
        %v7583 = vrot.slane %v7451, 5
        %v7584 = vrot.slane %v7583, 4
        %v7585 = vrot.slane %v7452, 5
        %v7586 = vsel %vm2116, %v7584, %v7585
        %v7587 = vrot.slane %v7585, 4
        %v7588 = vrot.slane %v7453, 5
        %v7589 = vsel %vm2116, %v7587, %v7588
        %v7590 = vrot.slane %v7454, 5
        %v7591 = vrot.slane %v7590, 4
        %v7592 = vrot.slane %v7455, 5
        %v7593 = vsel %vm2116, %v7591, %v7592
        %v7594 = vrot.slane %v7592, 4
        %v7595 = vrot.slane %v7456, 5
        %v7596 = vsel %vm2116, %v7594, %v7595
        %v7597 = vrot.slane %v7457, 5
        %v7598 = vrot.slane %v7597, 4
        %v7599 = vrot.slane %v7458, 5
        %v7600 = vsel %vm2116, %v7598, %v7599
        %v7601 = vrot.slane %v7599, 4
        %v7602 = vrot.slane %v7459, 5
        %v7603 = vsel %vm2116, %v7601, %v7602
        %v7604 = vrot.slane %v7460, 5
        %v7605 = vrot.slane %v7604, 4
        %v7606 = vrot.slane %v7461, 5
        %v7607 = vsel %vm2116, %v7605, %v7606
        %v7608 = vrot.slane %v7606, 4
        %v7609 = vrot.slane %v7462, 5
        %v7610 = vsel %vm2116, %v7608, %v7609
        %v7611 = vrot.slane %v7463, 5
        %v7612 = vrot.slane %v7611, 4
        %v7613 = vrot.slane %v7464, 5
        %v7614 = vsel %vm2116, %v7612, %v7613
        %v7615 = vrot.slane %v7613, 4
        %v7616 = vrot.slane %v7465, 5
        %v7617 = vsel %vm2116, %v7615, %v7616
        %v7618 = vrot.slane %v7466, 5
        %v7619 = vrot.slane %v7618, 4
        %v7620 = vrot.slane %v7467, 5
        %v7621 = vsel %vm2116, %v7619, %v7620
        %v7622 = vrot.slane %v7620, 4
        %v7623 = vrot.slane %v7468, 5
        %v7624 = vsel %vm2116, %v7622, %v7623
        %v7625 = vrot.slane %v7469, 5
        %v7626 = vrot.slane %v7625, 4
        %v7627 = vrot.slane %v7470, 5
        %v7628 = vsel %vm2116, %v7626, %v7627
        %v7629 = vrot.slane %v7627, 4
        %v7630 = vrot.slane %v7471, 5
        %v7631 = vsel %vm2116, %v7629, %v7630
        %v7632 = vunpack.c.l.b16 %v7523
        %v7633 = vunpack.c.l.b16 %v7526
        %v7634 = vunpack.c.l.b16 %v7530
        %v7635 = vunpack.c.l.b16 %v7533
        %v7636 = vunpack.c.l.b16 %v7537
        %v7637 = vunpack.c.l.b16 %v7540
        %v7638 = vunpack.c.l.b16 %v7544
        %v7639 = vunpack.c.l.b16 %v7547
        %v7640 = vunpack.c.l.b16 %v7551
        %v7641 = vunpack.c.l.b16 %v7554
        %v7642 = vunpack.c.l.b16 %v7558
        %v7643 = vunpack.c.l.b16 %v7561
        %v7644 = vunpack.c.l.b16 %v7565
        %v7645 = vunpack.c.l.b16 %v7568
        %v7646 = vunpack.c.l.b16 %v7572
        %v7647 = vunpack.c.l.b16 %v7575
        %v7648 = vunpack.c.l.b16 %v7579
        %v7649 = vunpack.c.l.b16 %v7582
        %v7650 = vunpack.c.l.b16 %v7586
        %v7651 = vunpack.c.l.b16 %v7589
        %v7652 = vunpack.c.l.b16 %v7593
        %v7653 = vunpack.c.l.b16 %v7596
        %v7654 = vunpack.c.l.b16 %v7600
        %v7655 = vunpack.c.l.b16 %v7603
        %v7656 = vunpack.c.l.b16 %v7607
        %v7657 = vunpack.c.l.b16 %v7610
        %v7658 = vunpack.c.l.b16 %v7614
        %v7659 = vunpack.c.l.b16 %v7617
        %v7660 = vunpack.c.l.b16 %v7621
        %v7661 = vunpack.c.l.b16 %v7624
        %v7662 = vunpack.c.l.b16 %v7628
        %v7663 = vunpack.c.l.b16 %v7631
        %v7664 = vpack.c.b16 %v7633, %v7632
        %v7665 = vpack.c.b16 %v7635, %v7634
        %v7666 = vpack.c.b16 %v7637, %v7636
        %v7667 = vpack.c.b16 %v7639, %v7638
        %v7668 = vpack.c.b16 %v7641, %v7640
        %v7669 = vpack.c.b16 %v7643, %v7642
        %v7670 = vpack.c.b16 %v7645, %v7644
        %v7671 = vpack.c.b16 %v7647, %v7646
        %v7672 = vpack.c.b16 %v7649, %v7648
        %v7673 = vpack.c.b16 %v7651, %v7650
        %v7674 = vpack.c.b16 %v7653, %v7652
        %v7675 = vpack.c.b16 %v7655, %v7654
        %v7676 = vpack.c.b16 %v7657, %v7656
        %v7677 = vpack.c.b16 %v7659, %v7658
        %v7678 = vpack.c.b16 %v7661, %v7660
        %v7679 = vpack.c.b16 %v7663, %v7662
        %7680 = vrot.lane.b32.xlu0 %v7664, 64
        %v7681 = vpop.permute.xlu0 %7680
        %7682 = vrot.lane.b32.xlu0 %v7665, 64
        %v7683 = vpop.permute.xlu0 %7682
        %7684 = vrot.lane.b32.xlu0 %v7666, 64
        %v7685 = vpop.permute.xlu0 %7684
        %7686 = vrot.lane.b32.xlu0 %v7667, 64
        %v7687 = vpop.permute.xlu0 %7686
        %7688 = vrot.lane.b32.xlu0 %v7668, 64
        %v7689 = vpop.permute.xlu0 %7688
        %7690 = vrot.lane.b32.xlu0 %v7669, 64
        %v7691 = vpop.permute.xlu0 %7690
        %7692 = vrot.lane.b32.xlu0 %v7670, 64
        %v7693 = vpop.permute.xlu0 %7692
        %7694 = vrot.lane.b32.xlu0 %v7671, 64
        %v7695 = vpop.permute.xlu0 %7694
        %7696 = vrot.lane.b32.xlu0 %v7672, 64
        %v7697 = vpop.permute.xlu0 %7696
        %7698 = vrot.lane.b32.xlu0 %v7673, 64
        %v7699 = vpop.permute.xlu0 %7698
        %7700 = vrot.lane.b32.xlu0 %v7674, 64
        %v7701 = vpop.permute.xlu0 %7700
        %7702 = vrot.lane.b32.xlu0 %v7675, 64
        %v7703 = vpop.permute.xlu0 %7702
        %7704 = vrot.lane.b32.xlu0 %v7676, 64
        %v7705 = vpop.permute.xlu0 %7704
        %7706 = vrot.lane.b32.xlu0 %v7677, 64
        %v7707 = vpop.permute.xlu0 %7706
        %7708 = vrot.lane.b32.xlu0 %v7678, 64
        %v7709 = vpop.permute.xlu0 %7708
        %7710 = vrot.lane.b32.xlu0 %v7679, 64
        %v7711 = vpop.permute.xlu0 %7710
        %7728 = vst.msk [vmem:[#allocation3 + $0x10] sm:$0xff] %vm2001, %v7681
        %7729 = vst.msk [vmem:[#allocation3 + $0x38] sm:$0xff] %vm2001, %v7683
        %7730 = vst.msk [vmem:[#allocation3 + $0x60] sm:$0xff] %vm2001, %v7685
        %7731 = vst.msk [vmem:[#allocation3 + $0x88] sm:$0xff] %vm2001, %v7687
        %7732 = vst.msk [vmem:[#allocation3 + $0xb0] sm:$0xff] %vm2001, %v7689
        %7733 = vst.msk [vmem:[#allocation3 + $0xd8] sm:$0xff] %vm2001, %v7691
        %7734 = vst.msk [vmem:[#allocation3 + $0x100] sm:$0xff] %vm2001, %v7693
        %7735 = vst.msk [vmem:[#allocation3 + $0x128] sm:$0xff] %vm2001, %v7695
        %7736 = vst.msk [vmem:[#allocation3 + $0x150] sm:$0xff] %vm2001, %v7697
        %7737 = vst.msk [vmem:[#allocation3 + $0x178] sm:$0xff] %vm2001, %v7699
        %7738 = vst.msk [vmem:[#allocation3 + $0x1a0] sm:$0xff] %vm2001, %v7701
        %7739 = vst.msk [vmem:[#allocation3 + $0x1c8] sm:$0xff] %vm2001, %v7703
        %7740 = vst.msk [vmem:[#allocation3 + $0x1f0] sm:$0xff] %vm2001, %v7705
        %7741 = vst.msk [vmem:[#allocation3 + $0x218] sm:$0xff] %vm2001, %v7707
        %7742 = vst.msk [vmem:[#allocation3 + $0x240] sm:$0xff] %vm2001, %v7709
        %7743 = vst.msk [vmem:[#allocation3 + $0x268] sm:$0xff] %vm2001, %v7711
        %v7744 = vld [vmem:[%s3317] sm:$0xf]
        %v7745 = vld [vmem:[%s3317 + $0x4] sm:$0xf]
        %v7746 = vld [vmem:[%s3317 + $0xc] sm:$0xf]
        %v7747 = vld [vmem:[%s3317 + $0x10] sm:$0xf]
        %v7748 = vld [vmem:[%s3317 + $0x18] sm:$0xf]
        %v7749 = vld [vmem:[%s3317 + $0x1c] sm:$0xf]
        %v7750 = vld [vmem:[%s3317 + $0x24] sm:$0xf]
        %v7751 = vld [vmem:[%s3317 + $0x28] sm:$0xf]
        %v7752 = vld [vmem:[%s3317 + $0x30] sm:$0xf]
        %v7753 = vld [vmem:[%s3317 + $0x34] sm:$0xf]
        %v7754 = vld [vmem:[%s3317 + $0x3c] sm:$0xf]
        %v7755 = vld [vmem:[%s3317 + $0x40] sm:$0xf]
        %v7756 = vld [vmem:[%s3317 + $0x48] sm:$0xf]
        %v7757 = vld [vmem:[%s3317 + $0x4c] sm:$0xf]
        %v7758 = vld [vmem:[%s3317 + $0x54] sm:$0xf]
        %v7759 = vld [vmem:[%s3317 + $0x58] sm:$0xf]
        %v7760 = vld [vmem:[%s3317 + $0x60] sm:$0xf]
        %v7761 = vld [vmem:[%s3317 + $0x64] sm:$0xf]
        %v7762 = vld [vmem:[%s3317 + $0x6c] sm:$0xf]
        %v7763 = vld [vmem:[%s3317 + $0x70] sm:$0xf]
        %v7764 = vld [vmem:[%s3317 + $0x78] sm:$0xf]
        %v7765 = vld [vmem:[%s3317 + $0x7c] sm:$0xf]
        %v7766 = vld [vmem:[%s3317 + $0x84] sm:$0xf]
        %v7767 = vld [vmem:[%s3317 + $0x88] sm:$0xf]
        %v7768 = vld [vmem:[%s3317 + $0x90] sm:$0xf]
        %v7769 = vld [vmem:[%s3317 + $0x94] sm:$0xf]
        %v7770 = vld [vmem:[%s3317 + $0x9c] sm:$0xf]
        %v7771 = vld [vmem:[%s3317 + $0xa0] sm:$0xf]
        %v7772 = vld [vmem:[%s3317 + $0xa8] sm:$0xf]
        %v7773 = vld [vmem:[%s3317 + $0xac] sm:$0xf]
        %v7774 = vld [vmem:[%s3317 + $0xb4] sm:$0xf]
        %v7775 = vld [vmem:[%s3317 + $0xb8] sm:$0xf]
        %v7808 = vunpack.c.l.b16 %v7744
        %v7809 = vunpack.c.l.b16 %v7745
        %v7810 = vunpack.c.l.b16 %v7746
        %v7811 = vunpack.c.l.b16 %v7747
        %v7812 = vunpack.c.l.b16 %v7748
        %v7813 = vunpack.c.l.b16 %v7749
        %v7814 = vunpack.c.l.b16 %v7750
        %v7815 = vunpack.c.l.b16 %v7751
        %v7816 = vunpack.c.l.b16 %v7752
        %v7817 = vunpack.c.l.b16 %v7753
        %v7818 = vunpack.c.l.b16 %v7754
        %v7819 = vunpack.c.l.b16 %v7755
        %v7820 = vunpack.c.l.b16 %v7756
        %v7821 = vunpack.c.l.b16 %v7757
        %v7822 = vunpack.c.l.b16 %v7758
        %v7823 = vunpack.c.l.b16 %v7759
        %v7824 = vunpack.c.l.b16 %v7760
        %v7825 = vunpack.c.l.b16 %v7761
        %v7826 = vunpack.c.l.b16 %v7762
        %v7827 = vunpack.c.l.b16 %v7763
        %v7828 = vunpack.c.l.b16 %v7764
        %v7829 = vunpack.c.l.b16 %v7765
        %v7830 = vunpack.c.l.b16 %v7766
        %v7831 = vunpack.c.l.b16 %v7767
        %v7832 = vunpack.c.l.b16 %v7768
        %v7833 = vunpack.c.l.b16 %v7769
        %v7834 = vunpack.c.l.b16 %v7770
        %v7835 = vunpack.c.l.b16 %v7771
        %v7836 = vunpack.c.l.b16 %v7772
        %v7837 = vunpack.c.l.b16 %v7773
        %v7838 = vunpack.c.l.b16 %v7774
        %v7839 = vunpack.c.l.b16 %v7775
        %v7840 = vpack.c.b16 %v7809, %v7808
        %v7841 = vpack.c.b16 %v7811, %v7810
        %v7842 = vpack.c.b16 %v7813, %v7812
        %v7843 = vpack.c.b16 %v7815, %v7814
        %v7844 = vpack.c.b16 %v7817, %v7816
        %v7845 = vpack.c.b16 %v7819, %v7818
        %v7846 = vpack.c.b16 %v7821, %v7820
        %v7847 = vpack.c.b16 %v7823, %v7822
        %v7848 = vpack.c.b16 %v7825, %v7824
        %v7849 = vpack.c.b16 %v7827, %v7826
        %v7850 = vpack.c.b16 %v7829, %v7828
        %v7851 = vpack.c.b16 %v7831, %v7830
        %v7852 = vpack.c.b16 %v7833, %v7832
        %v7853 = vpack.c.b16 %v7835, %v7834
        %v7854 = vpack.c.b16 %v7837, %v7836
        %v7855 = vpack.c.b16 %v7839, %v7838
        %7872 = vst.msk [vmem:[#allocation3 + $0x18] sm:$0xff] %vm1453, %v7840
        %7873 = vst.msk [vmem:[#allocation3 + $0x40] sm:$0xff] %vm1453, %v7841
        %7874 = vst.msk [vmem:[#allocation3 + $0x68] sm:$0xff] %vm1453, %v7842
        %7875 = vst.msk [vmem:[#allocation3 + $0x90] sm:$0xff] %vm1453, %v7843
        %7876 = vst.msk [vmem:[#allocation3 + $0xb8] sm:$0xff] %vm1453, %v7844
        %7877 = vst.msk [vmem:[#allocation3 + $0xe0] sm:$0xff] %vm1453, %v7845
        %7878 = vst.msk [vmem:[#allocation3 + $0x108] sm:$0xff] %vm1453, %v7846
        %7879 = vst.msk [vmem:[#allocation3 + $0x130] sm:$0xff] %vm1453, %v7847
        %7880 = vst.msk [vmem:[#allocation3 + $0x158] sm:$0xff] %vm1453, %v7848
        %7881 = vst.msk [vmem:[#allocation3 + $0x180] sm:$0xff] %vm1453, %v7849
        %7882 = vst.msk [vmem:[#allocation3 + $0x1a8] sm:$0xff] %vm1453, %v7850
        %7883 = vst.msk [vmem:[#allocation3 + $0x1d0] sm:$0xff] %vm1453, %v7851
        %7884 = vst.msk [vmem:[#allocation3 + $0x1f8] sm:$0xff] %vm1453, %v7852
        %7885 = vst.msk [vmem:[#allocation3 + $0x220] sm:$0xff] %vm1453, %v7853
        %7886 = vst.msk [vmem:[#allocation3 + $0x248] sm:$0xff] %vm1453, %v7854
        %7887 = vst.msk [vmem:[#allocation3 + $0x270] sm:$0xff] %vm1453, %v7855
        %v7888 = vld [vmem:[%s3317] sm:$0xf]
        %v7889 = vld [vmem:[%s3317 + $0x4] sm:$0xf]
        %v7890 = vld [vmem:[%s3317 + $0x8] sm:$0x1]
        %v7891 = vld [vmem:[%s3317 + $0xc] sm:$0xf]
        %v7892 = vld [vmem:[%s3317 + $0x10] sm:$0xf]
        %v7893 = vld [vmem:[%s3317 + $0x14] sm:$0x1]
        %v7894 = vld [vmem:[%s3317 + $0x18] sm:$0xf]
        %v7895 = vld [vmem:[%s3317 + $0x1c] sm:$0xf]
        %v7896 = vld [vmem:[%s3317 + $0x20] sm:$0x1]
        %v7897 = vld [vmem:[%s3317 + $0x24] sm:$0xf]
        %v7898 = vld [vmem:[%s3317 + $0x28] sm:$0xf]
        %v7899 = vld [vmem:[%s3317 + $0x2c] sm:$0x1]
        %v7900 = vld [vmem:[%s3317 + $0x30] sm:$0xf]
        %v7901 = vld [vmem:[%s3317 + $0x34] sm:$0xf]
        %v7902 = vld [vmem:[%s3317 + $0x38] sm:$0x1]
        %v7903 = vld [vmem:[%s3317 + $0x3c] sm:$0xf]
        %v7904 = vld [vmem:[%s3317 + $0x40] sm:$0xf]
        %v7905 = vld [vmem:[%s3317 + $0x44] sm:$0x1]
        %v7906 = vld [vmem:[%s3317 + $0x48] sm:$0xf]
        %v7907 = vld [vmem:[%s3317 + $0x4c] sm:$0xf]
        %v7908 = vld [vmem:[%s3317 + $0x50] sm:$0x1]
        %v7909 = vld [vmem:[%s3317 + $0x54] sm:$0xf]
        %v7910 = vld [vmem:[%s3317 + $0x58] sm:$0xf]
        %v7911 = vld [vmem:[%s3317 + $0x5c] sm:$0x1]
        %v7912 = vld [vmem:[%s3317 + $0x60] sm:$0xf]
        %v7913 = vld [vmem:[%s3317 + $0x64] sm:$0xf]
        %v7914 = vld [vmem:[%s3317 + $0x68] sm:$0x1]
        %v7915 = vld [vmem:[%s3317 + $0x6c] sm:$0xf]
        %v7916 = vld [vmem:[%s3317 + $0x70] sm:$0xf]
        %v7917 = vld [vmem:[%s3317 + $0x74] sm:$0x1]
        %v7918 = vld [vmem:[%s3317 + $0x78] sm:$0xf]
        %v7919 = vld [vmem:[%s3317 + $0x7c] sm:$0xf]
        %v7920 = vld [vmem:[%s3317 + $0x80] sm:$0x1]
        %v7921 = vld [vmem:[%s3317 + $0x84] sm:$0xf]
        %v7922 = vld [vmem:[%s3317 + $0x88] sm:$0xf]
        %v7923 = vld [vmem:[%s3317 + $0x8c] sm:$0x1]
        %v7924 = vld [vmem:[%s3317 + $0x90] sm:$0xf]
        %v7925 = vld [vmem:[%s3317 + $0x94] sm:$0xf]
        %v7926 = vld [vmem:[%s3317 + $0x98] sm:$0x1]
        %v7927 = vld [vmem:[%s3317 + $0x9c] sm:$0xf]
        %v7928 = vld [vmem:[%s3317 + $0xa0] sm:$0xf]
        %v7929 = vld [vmem:[%s3317 + $0xa4] sm:$0x1]
        %v7930 = vld [vmem:[%s3317 + $0xa8] sm:$0xf]
        %v7931 = vld [vmem:[%s3317 + $0xac] sm:$0xf]
        %v7932 = vld [vmem:[%s3317 + $0xb0] sm:$0x1]
        %v7933 = vld [vmem:[%s3317 + $0xb4] sm:$0xf]
        %v7934 = vld [vmem:[%s3317 + $0xb8] sm:$0xf]
        %v7935 = vld [vmem:[%s3317 + $0xbc] sm:$0x1]
        %v7937 = vshrl.u32 %v7888, 16
        %v7939 = vrot.slane %v7937, 4
        %v7940 = vshll.u32 %v7888, 16
        %v7942 = vrot.slane %v7940, 5
        %v7943 = vor.u32 %v7939, %v7942
        %v7944 = vrot.slane %v7943, 4
        %v7946 = vshll.u32 %v7889, 16
        %v7948 = vrot.slane %v7946, 5
        %v7949 = vsel %vm1520, %v7944, %v7948
        %v7950 = vshrl.u32 %v7889, 16
        %v7952 = vrot.slane %v7950, 4
        %v7953 = vor.u32 %v7952, %v7948
        %v7954 = vrot.slane %v7953, 4
        %v7956 = vshll.u32 %v7890, 16
        %v7958 = vrot.slane %v7956, 5
        %v7959 = vsel %vm1520, %v7954, %v7958
        %v7961 = vshrl.u32 %v7891, 16
        %v7963 = vrot.slane %v7961, 4
        %v7964 = vshll.u32 %v7891, 16
        %v7966 = vrot.slane %v7964, 5
        %v7967 = vor.u32 %v7963, %v7966
        %v7968 = vrot.slane %v7967, 4
        %v7970 = vshll.u32 %v7892, 16
        %v7972 = vrot.slane %v7970, 5
        %v7973 = vsel %vm1520, %v7968, %v7972
        %v7974 = vshrl.u32 %v7892, 16
        %v7976 = vrot.slane %v7974, 4
        %v7977 = vor.u32 %v7976, %v7972
        %v7978 = vrot.slane %v7977, 4
        %v7980 = vshll.u32 %v7893, 16
        %v7982 = vrot.slane %v7980, 5
        %v7983 = vsel %vm1520, %v7978, %v7982
        %v7985 = vshrl.u32 %v7894, 16
        %v7987 = vrot.slane %v7985, 4
        %v7988 = vshll.u32 %v7894, 16
        %v7990 = vrot.slane %v7988, 5
        %v7991 = vor.u32 %v7987, %v7990
        %v7992 = vrot.slane %v7991, 4
        %v7994 = vshll.u32 %v7895, 16
        %v7996 = vrot.slane %v7994, 5
        %v7997 = vsel %vm1520, %v7992, %v7996
        %v7998 = vshrl.u32 %v7895, 16
        %v8000 = vrot.slane %v7998, 4
        %v8001 = vor.u32 %v8000, %v7996
        %v8002 = vrot.slane %v8001, 4
        %v8004 = vshll.u32 %v7896, 16
        %v8006 = vrot.slane %v8004, 5
        %v8007 = vsel %vm1520, %v8002, %v8006
        %v8009 = vshrl.u32 %v7897, 16
        %v8011 = vrot.slane %v8009, 4
        %v8012 = vshll.u32 %v7897, 16
        %v8014 = vrot.slane %v8012, 5
        %v8015 = vor.u32 %v8011, %v8014
        %v8016 = vrot.slane %v8015, 4
        %v8018 = vshll.u32 %v7898, 16
        %v8020 = vrot.slane %v8018, 5
        %v8021 = vsel %vm1520, %v8016, %v8020
        %v8022 = vshrl.u32 %v7898, 16
        %v8024 = vrot.slane %v8022, 4
        %v8025 = vor.u32 %v8024, %v8020
        %v8026 = vrot.slane %v8025, 4
        %v8028 = vshll.u32 %v7899, 16
        %v8030 = vrot.slane %v8028, 5
        %v8031 = vsel %vm1520, %v8026, %v8030
        %v8033 = vshrl.u32 %v7900, 16
        %v8035 = vrot.slane %v8033, 4
        %v8036 = vshll.u32 %v7900, 16
        %v8038 = vrot.slane %v8036, 5
        %v8039 = vor.u32 %v8035, %v8038
        %v8040 = vrot.slane %v8039, 4
        %v8042 = vshll.u32 %v7901, 16
        %v8044 = vrot.slane %v8042, 5
        %v8045 = vsel %vm1520, %v8040, %v8044
        %v8046 = vshrl.u32 %v7901, 16
        %v8048 = vrot.slane %v8046, 4
        %v8049 = vor.u32 %v8048, %v8044
        %v8050 = vrot.slane %v8049, 4
        %v8052 = vshll.u32 %v7902, 16
        %v8054 = vrot.slane %v8052, 5
        %v8055 = vsel %vm1520, %v8050, %v8054
        %v8057 = vshrl.u32 %v7903, 16
        %v8059 = vrot.slane %v8057, 4
        %v8060 = vshll.u32 %v7903, 16
        %v8062 = vrot.slane %v8060, 5
        %v8063 = vor.u32 %v8059, %v8062
        %v8064 = vrot.slane %v8063, 4
        %v8066 = vshll.u32 %v7904, 16
        %v8068 = vrot.slane %v8066, 5
        %v8069 = vsel %vm1520, %v8064, %v8068
        %v8070 = vshrl.u32 %v7904, 16
        %v8072 = vrot.slane %v8070, 4
        %v8073 = vor.u32 %v8072, %v8068
        %v8074 = vrot.slane %v8073, 4
        %v8076 = vshll.u32 %v7905, 16
        %v8078 = vrot.slane %v8076, 5
        %v8079 = vsel %vm1520, %v8074, %v8078
        %v8081 = vshrl.u32 %v7906, 16
        %v8083 = vrot.slane %v8081, 4
        %v8084 = vshll.u32 %v7906, 16
        %v8086 = vrot.slane %v8084, 5
        %v8087 = vor.u32 %v8083, %v8086
        %v8088 = vrot.slane %v8087, 4
        %v8090 = vshll.u32 %v7907, 16
        %v8092 = vrot.slane %v8090, 5
        %v8093 = vsel %vm1520, %v8088, %v8092
        %v8094 = vshrl.u32 %v7907, 16
        %v8096 = vrot.slane %v8094, 4
        %v8097 = vor.u32 %v8096, %v8092
        %v8098 = vrot.slane %v8097, 4
        %v8100 = vshll.u32 %v7908, 16
        %v8102 = vrot.slane %v8100, 5
        %v8103 = vsel %vm1520, %v8098, %v8102
        %v8105 = vshrl.u32 %v7909, 16
        %v8107 = vrot.slane %v8105, 4
        %v8108 = vshll.u32 %v7909, 16
        %v8110 = vrot.slane %v8108, 5
        %v8111 = vor.u32 %v8107, %v8110
        %v8112 = vrot.slane %v8111, 4
        %v8114 = vshll.u32 %v7910, 16
        %v8116 = vrot.slane %v8114, 5
        %v8117 = vsel %vm1520, %v8112, %v8116
        %v8118 = vshrl.u32 %v7910, 16
        %v8120 = vrot.slane %v8118, 4
        %v8121 = vor.u32 %v8120, %v8116
        %v8122 = vrot.slane %v8121, 4
        %v8124 = vshll.u32 %v7911, 16
        %v8126 = vrot.slane %v8124, 5
        %v8127 = vsel %vm1520, %v8122, %v8126
        %v8129 = vshrl.u32 %v7912, 16
        %v8131 = vrot.slane %v8129, 4
        %v8132 = vshll.u32 %v7912, 16
        %v8134 = vrot.slane %v8132, 5
        %v8135 = vor.u32 %v8131, %v8134
        %v8136 = vrot.slane %v8135, 4
        %v8138 = vshll.u32 %v7913, 16
        %v8140 = vrot.slane %v8138, 5
        %v8141 = vsel %vm1520, %v8136, %v8140
        %v8142 = vshrl.u32 %v7913, 16
        %v8144 = vrot.slane %v8142, 4
        %v8145 = vor.u32 %v8144, %v8140
        %v8146 = vrot.slane %v8145, 4
        %v8148 = vshll.u32 %v7914, 16
        %v8150 = vrot.slane %v8148, 5
        %v8151 = vsel %vm1520, %v8146, %v8150
        %v8153 = vshrl.u32 %v7915, 16
        %v8155 = vrot.slane %v8153, 4
        %v8156 = vshll.u32 %v7915, 16
        %v8158 = vrot.slane %v8156, 5
        %v8159 = vor.u32 %v8155, %v8158
        %v8160 = vrot.slane %v8159, 4
        %v8162 = vshll.u32 %v7916, 16
        %v8164 = vrot.slane %v8162, 5
        %v8165 = vsel %vm1520, %v8160, %v8164
        %v8166 = vshrl.u32 %v7916, 16
        %v8168 = vrot.slane %v8166, 4
        %v8169 = vor.u32 %v8168, %v8164
        %v8170 = vrot.slane %v8169, 4
        %v8172 = vshll.u32 %v7917, 16
        %v8174 = vrot.slane %v8172, 5
        %v8175 = vsel %vm1520, %v8170, %v8174
        %v8177 = vshrl.u32 %v7918, 16
        %v8179 = vrot.slane %v8177, 4
        %v8180 = vshll.u32 %v7918, 16
        %v8182 = vrot.slane %v8180, 5
        %v8183 = vor.u32 %v8179, %v8182
        %v8184 = vrot.slane %v8183, 4
        %v8186 = vshll.u32 %v7919, 16
        %v8188 = vrot.slane %v8186, 5
        %v8189 = vsel %vm1520, %v8184, %v8188
        %v8190 = vshrl.u32 %v7919, 16
        %v8192 = vrot.slane %v8190, 4
        %v8193 = vor.u32 %v8192, %v8188
        %v8194 = vrot.slane %v8193, 4
        %v8196 = vshll.u32 %v7920, 16
        %v8198 = vrot.slane %v8196, 5
        %v8199 = vsel %vm1520, %v8194, %v8198
        %v8201 = vshrl.u32 %v7921, 16
        %v8203 = vrot.slane %v8201, 4
        %v8204 = vshll.u32 %v7921, 16
        %v8206 = vrot.slane %v8204, 5
        %v8207 = vor.u32 %v8203, %v8206
        %v8208 = vrot.slane %v8207, 4
        %v8210 = vshll.u32 %v7922, 16
        %v8212 = vrot.slane %v8210, 5
        %v8213 = vsel %vm1520, %v8208, %v8212
        %v8214 = vshrl.u32 %v7922, 16
        %v8216 = vrot.slane %v8214, 4
        %v8217 = vor.u32 %v8216, %v8212
        %v8218 = vrot.slane %v8217, 4
        %v8220 = vshll.u32 %v7923, 16
        %v8222 = vrot.slane %v8220, 5
        %v8223 = vsel %vm1520, %v8218, %v8222
        %v8225 = vshrl.u32 %v7924, 16
        %v8227 = vrot.slane %v8225, 4
        %v8228 = vshll.u32 %v7924, 16
        %v8230 = vrot.slane %v8228, 5
        %v8231 = vor.u32 %v8227, %v8230
        %v8232 = vrot.slane %v8231, 4
        %v8234 = vshll.u32 %v7925, 16
        %v8236 = vrot.slane %v8234, 5
        %v8237 = vsel %vm1520, %v8232, %v8236
        %v8238 = vshrl.u32 %v7925, 16
        %v8240 = vrot.slane %v8238, 4
        %v8241 = vor.u32 %v8240, %v8236
        %v8242 = vrot.slane %v8241, 4
        %v8244 = vshll.u32 %v7926, 16
        %v8246 = vrot.slane %v8244, 5
        %v8247 = vsel %vm1520, %v8242, %v8246
        %v8249 = vshrl.u32 %v7927, 16
        %v8251 = vrot.slane %v8249, 4
        %v8252 = vshll.u32 %v7927, 16
        %v8254 = vrot.slane %v8252, 5
        %v8255 = vor.u32 %v8251, %v8254
        %v8256 = vrot.slane %v8255, 4
        %v8258 = vshll.u32 %v7928, 16
        %v8260 = vrot.slane %v8258, 5
        %v8261 = vsel %vm1520, %v8256, %v8260
        %v8262 = vshrl.u32 %v7928, 16
        %v8264 = vrot.slane %v8262, 4
        %v8265 = vor.u32 %v8264, %v8260
        %v8266 = vrot.slane %v8265, 4
        %v8268 = vshll.u32 %v7929, 16
        %v8270 = vrot.slane %v8268, 5
        %v8271 = vsel %vm1520, %v8266, %v8270
        %v8273 = vshrl.u32 %v7930, 16
        %v8275 = vrot.slane %v8273, 4
        %v8276 = vshll.u32 %v7930, 16
        %v8278 = vrot.slane %v8276, 5
        %v8279 = vor.u32 %v8275, %v8278
        %v8280 = vrot.slane %v8279, 4
        %v8282 = vshll.u32 %v7931, 16
        %v8284 = vrot.slane %v8282, 5
        %v8285 = vsel %vm1520, %v8280, %v8284
        %v8286 = vshrl.u32 %v7931, 16
        %v8288 = vrot.slane %v8286, 4
        %v8289 = vor.u32 %v8288, %v8284
        %v8290 = vrot.slane %v8289, 4
        %v8292 = vshll.u32 %v7932, 16
        %v8294 = vrot.slane %v8292, 5
        %v8295 = vsel %vm1520, %v8290, %v8294
        %v8297 = vshrl.u32 %v7933, 16
        %v8299 = vrot.slane %v8297, 4
        %v8300 = vshll.u32 %v7933, 16
        %v8302 = vrot.slane %v8300, 5
        %v8303 = vor.u32 %v8299, %v8302
        %v8304 = vrot.slane %v8303, 4
        %v8306 = vshll.u32 %v7934, 16
        %v8308 = vrot.slane %v8306, 5
        %v8309 = vsel %vm1520, %v8304, %v8308
        %v8310 = vshrl.u32 %v7934, 16
        %v8312 = vrot.slane %v8310, 4
        %v8313 = vor.u32 %v8312, %v8308
        %v8314 = vrot.slane %v8313, 4
        %v8316 = vshll.u32 %v7935, 16
        %v8318 = vrot.slane %v8316, 5
        %v8319 = vsel %vm1520, %v8314, %v8318
        %v8320 = vunpack.c.l.b16 %v7949
        %v8321 = vunpack.c.l.b16 %v7959
        %v8322 = vunpack.c.l.b16 %v7973
        %v8323 = vunpack.c.l.b16 %v7983
        %v8324 = vunpack.c.l.b16 %v7997
        %v8325 = vunpack.c.l.b16 %v8007
        %v8326 = vunpack.c.l.b16 %v8021
        %v8327 = vunpack.c.l.b16 %v8031
        %v8328 = vunpack.c.l.b16 %v8045
        %v8329 = vunpack.c.l.b16 %v8055
        %v8330 = vunpack.c.l.b16 %v8069
        %v8331 = vunpack.c.l.b16 %v8079
        %v8332 = vunpack.c.l.b16 %v8093
        %v8333 = vunpack.c.l.b16 %v8103
        %v8334 = vunpack.c.l.b16 %v8117
        %v8335 = vunpack.c.l.b16 %v8127
        %v8336 = vunpack.c.l.b16 %v8141
        %v8337 = vunpack.c.l.b16 %v8151
        %v8338 = vunpack.c.l.b16 %v8165
        %v8339 = vunpack.c.l.b16 %v8175
        %v8340 = vunpack.c.l.b16 %v8189
        %v8341 = vunpack.c.l.b16 %v8199
        %v8342 = vunpack.c.l.b16 %v8213
        %v8343 = vunpack.c.l.b16 %v8223
        %v8344 = vunpack.c.l.b16 %v8237
        %v8345 = vunpack.c.l.b16 %v8247
        %v8346 = vunpack.c.l.b16 %v8261
        %v8347 = vunpack.c.l.b16 %v8271
        %v8348 = vunpack.c.l.b16 %v8285
        %v8349 = vunpack.c.l.b16 %v8295
        %v8350 = vunpack.c.l.b16 %v8309
        %v8351 = vunpack.c.l.b16 %v8319
        %v8352 = vpack.c.b16 %v8321, %v8320
        %v8353 = vpack.c.b16 %v8323, %v8322
        %v8354 = vpack.c.b16 %v8325, %v8324
        %v8355 = vpack.c.b16 %v8327, %v8326
        %v8356 = vpack.c.b16 %v8329, %v8328
        %v8357 = vpack.c.b16 %v8331, %v8330
        %v8358 = vpack.c.b16 %v8333, %v8332
        %v8359 = vpack.c.b16 %v8335, %v8334
        %v8360 = vpack.c.b16 %v8337, %v8336
        %v8361 = vpack.c.b16 %v8339, %v8338
        %v8362 = vpack.c.b16 %v8341, %v8340
        %v8363 = vpack.c.b16 %v8343, %v8342
        %v8364 = vpack.c.b16 %v8345, %v8344
        %v8365 = vpack.c.b16 %v8347, %v8346
        %v8366 = vpack.c.b16 %v8349, %v8348
        %v8367 = vpack.c.b16 %v8351, %v8350
        %8368 = vrot.lane.b32.xlu0 %v8352, 64
        %v8369 = vpop.permute.xlu0 %8368
        %8370 = vrot.lane.b32.xlu0 %v8353, 64
        %v8371 = vpop.permute.xlu0 %8370
        %8372 = vrot.lane.b32.xlu0 %v8354, 64
        %v8373 = vpop.permute.xlu0 %8372
        %8374 = vrot.lane.b32.xlu0 %v8355, 64
        %v8375 = vpop.permute.xlu0 %8374
        %8376 = vrot.lane.b32.xlu0 %v8356, 64
        %v8377 = vpop.permute.xlu0 %8376
        %8378 = vrot.lane.b32.xlu0 %v8357, 64
        %v8379 = vpop.permute.xlu0 %8378
        %8380 = vrot.lane.b32.xlu0 %v8358, 64
        %v8381 = vpop.permute.xlu0 %8380
        %8382 = vrot.lane.b32.xlu0 %v8359, 64
        %v8383 = vpop.permute.xlu0 %8382
        %8384 = vrot.lane.b32.xlu0 %v8360, 64
        %v8385 = vpop.permute.xlu0 %8384
        %8386 = vrot.lane.b32.xlu0 %v8361, 64
        %v8387 = vpop.permute.xlu0 %8386
        %8388 = vrot.lane.b32.xlu0 %v8362, 64
        %v8389 = vpop.permute.xlu0 %8388
        %8390 = vrot.lane.b32.xlu0 %v8363, 64
        %v8391 = vpop.permute.xlu0 %8390
        %8392 = vrot.lane.b32.xlu0 %v8364, 64
        %v8393 = vpop.permute.xlu0 %8392
        %8394 = vrot.lane.b32.xlu0 %v8365, 64
        %v8395 = vpop.permute.xlu0 %8394
        %8396 = vrot.lane.b32.xlu0 %v8366, 64
        %v8397 = vpop.permute.xlu0 %8396
        %8398 = vrot.lane.b32.xlu0 %v8367, 64
        %v8399 = vpop.permute.xlu0 %8398
        %8416 = vst.msk [vmem:[#allocation3 + $0x18] sm:$0xff] %vm2001, %v8369
        %8417 = vst.msk [vmem:[#allocation3 + $0x40] sm:$0xff] %vm2001, %v8371
        %8418 = vst.msk [vmem:[#allocation3 + $0x68] sm:$0xff] %vm2001, %v8373
        %8419 = vst.msk [vmem:[#allocation3 + $0x90] sm:$0xff] %vm2001, %v8375
        %8420 = vst.msk [vmem:[#allocation3 + $0xb8] sm:$0xff] %vm2001, %v8377
        %8421 = vst.msk [vmem:[#allocation3 + $0xe0] sm:$0xff] %vm2001, %v8379
        %8422 = vst.msk [vmem:[#allocation3 + $0x108] sm:$0xff] %vm2001, %v8381
        %8423 = vst.msk [vmem:[#allocation3 + $0x130] sm:$0xff] %vm2001, %v8383
        %8424 = vst.msk [vmem:[#allocation3 + $0x158] sm:$0xff] %vm2001, %v8385
        %8425 = vst.msk [vmem:[#allocation3 + $0x180] sm:$0xff] %vm2001, %v8387
        %8426 = vst.msk [vmem:[#allocation3 + $0x1a8] sm:$0xff] %vm2001, %v8389
        %8427 = vst.msk [vmem:[#allocation3 + $0x1d0] sm:$0xff] %vm2001, %v8391
        %8428 = vst.msk [vmem:[#allocation3 + $0x1f8] sm:$0xff] %vm2001, %v8393
        %8429 = vst.msk [vmem:[#allocation3 + $0x220] sm:$0xff] %vm2001, %v8395
        %8430 = vst.msk [vmem:[#allocation3 + $0x248] sm:$0xff] %vm2001, %v8397
        %8431 = vst.msk [vmem:[#allocation3 + $0x270] sm:$0xff] %vm2001, %v8399
        %v8432 = vld [vmem:[%s3317] sm:$0xe]
        %v8433 = vld [vmem:[%s3317 + $0x4] sm:$0xf]
        %v8434 = vld [vmem:[%s3317 + $0x8] sm:$0x1]
        %v8435 = vld [vmem:[%s3317 + $0xc] sm:$0xe]
        %v8436 = vld [vmem:[%s3317 + $0x10] sm:$0xf]
        %v8437 = vld [vmem:[%s3317 + $0x14] sm:$0x1]
        %v8438 = vld [vmem:[%s3317 + $0x18] sm:$0xe]
        %v8439 = vld [vmem:[%s3317 + $0x1c] sm:$0xf]
        %v8440 = vld [vmem:[%s3317 + $0x20] sm:$0x1]
        %v8441 = vld [vmem:[%s3317 + $0x24] sm:$0xe]
        %v8442 = vld [vmem:[%s3317 + $0x28] sm:$0xf]
        %v8443 = vld [vmem:[%s3317 + $0x2c] sm:$0x1]
        %v8444 = vld [vmem:[%s3317 + $0x30] sm:$0xe]
        %v8445 = vld [vmem:[%s3317 + $0x34] sm:$0xf]
        %v8446 = vld [vmem:[%s3317 + $0x38] sm:$0x1]
        %v8447 = vld [vmem:[%s3317 + $0x3c] sm:$0xe]
        %v8448 = vld [vmem:[%s3317 + $0x40] sm:$0xf]
        %v8449 = vld [vmem:[%s3317 + $0x44] sm:$0x1]
        %v8450 = vld [vmem:[%s3317 + $0x48] sm:$0xe]
        %v8451 = vld [vmem:[%s3317 + $0x4c] sm:$0xf]
        %v8452 = vld [vmem:[%s3317 + $0x50] sm:$0x1]
        %v8453 = vld [vmem:[%s3317 + $0x54] sm:$0xe]
        %v8454 = vld [vmem:[%s3317 + $0x58] sm:$0xf]
        %v8455 = vld [vmem:[%s3317 + $0x5c] sm:$0x1]
        %v8456 = vld [vmem:[%s3317 + $0x60] sm:$0xe]
        %v8457 = vld [vmem:[%s3317 + $0x64] sm:$0xf]
        %v8458 = vld [vmem:[%s3317 + $0x68] sm:$0x1]
        %v8459 = vld [vmem:[%s3317 + $0x6c] sm:$0xe]
        %v8460 = vld [vmem:[%s3317 + $0x70] sm:$0xf]
        %v8461 = vld [vmem:[%s3317 + $0x74] sm:$0x1]
        %v8462 = vld [vmem:[%s3317 + $0x78] sm:$0xe]
        %v8463 = vld [vmem:[%s3317 + $0x7c] sm:$0xf]
        %v8464 = vld [vmem:[%s3317 + $0x80] sm:$0x1]
        %v8465 = vld [vmem:[%s3317 + $0x84] sm:$0xe]
        %v8466 = vld [vmem:[%s3317 + $0x88] sm:$0xf]
        %v8467 = vld [vmem:[%s3317 + $0x8c] sm:$0x1]
        %v8468 = vld [vmem:[%s3317 + $0x90] sm:$0xe]
        %v8469 = vld [vmem:[%s3317 + $0x94] sm:$0xf]
        %v8470 = vld [vmem:[%s3317 + $0x98] sm:$0x1]
        %v8471 = vld [vmem:[%s3317 + $0x9c] sm:$0xe]
        %v8472 = vld [vmem:[%s3317 + $0xa0] sm:$0xf]
        %v8473 = vld [vmem:[%s3317 + $0xa4] sm:$0x1]
        %v8474 = vld [vmem:[%s3317 + $0xa8] sm:$0xe]
        %v8475 = vld [vmem:[%s3317 + $0xac] sm:$0xf]
        %v8476 = vld [vmem:[%s3317 + $0xb0] sm:$0x1]
        %v8477 = vld [vmem:[%s3317 + $0xb4] sm:$0xe]
        %v8478 = vld [vmem:[%s3317 + $0xb8] sm:$0xf]
        %v8479 = vld [vmem:[%s3317 + $0xbc] sm:$0x1]
        %v8528 = vrot.slane %v8432, 5
        %v8529 = vrot.slane %v8528, 4
        %v8530 = vrot.slane %v8433, 5
        %v8531 = vsel %vm2116, %v8529, %v8530
        %v8532 = vrot.slane %v8530, 4
        %v8533 = vrot.slane %v8434, 5
        %v8534 = vsel %vm2116, %v8532, %v8533
        %v8535 = vrot.slane %v8435, 5
        %v8536 = vrot.slane %v8535, 4
        %v8537 = vrot.slane %v8436, 5
        %v8538 = vsel %vm2116, %v8536, %v8537
        %v8539 = vrot.slane %v8537, 4
        %v8540 = vrot.slane %v8437, 5
        %v8541 = vsel %vm2116, %v8539, %v8540
        %v8542 = vrot.slane %v8438, 5
        %v8543 = vrot.slane %v8542, 4
        %v8544 = vrot.slane %v8439, 5
        %v8545 = vsel %vm2116, %v8543, %v8544
        %v8546 = vrot.slane %v8544, 4
        %v8547 = vrot.slane %v8440, 5
        %v8548 = vsel %vm2116, %v8546, %v8547
        %v8549 = vrot.slane %v8441, 5
        %v8550 = vrot.slane %v8549, 4
        %v8551 = vrot.slane %v8442, 5
        %v8552 = vsel %vm2116, %v8550, %v8551
        %v8553 = vrot.slane %v8551, 4
        %v8554 = vrot.slane %v8443, 5
        %v8555 = vsel %vm2116, %v8553, %v8554
        %v8556 = vrot.slane %v8444, 5
        %v8557 = vrot.slane %v8556, 4
        %v8558 = vrot.slane %v8445, 5
        %v8559 = vsel %vm2116, %v8557, %v8558
        %v8560 = vrot.slane %v8558, 4
        %v8561 = vrot.slane %v8446, 5
        %v8562 = vsel %vm2116, %v8560, %v8561
        %v8563 = vrot.slane %v8447, 5
        %v8564 = vrot.slane %v8563, 4
        %v8565 = vrot.slane %v8448, 5
        %v8566 = vsel %vm2116, %v8564, %v8565
        %v8567 = vrot.slane %v8565, 4
        %v8568 = vrot.slane %v8449, 5
        %v8569 = vsel %vm2116, %v8567, %v8568
        %v8570 = vrot.slane %v8450, 5
        %v8571 = vrot.slane %v8570, 4
        %v8572 = vrot.slane %v8451, 5
        %v8573 = vsel %vm2116, %v8571, %v8572
        %v8574 = vrot.slane %v8572, 4
        %v8575 = vrot.slane %v8452, 5
        %v8576 = vsel %vm2116, %v8574, %v8575
        %v8577 = vrot.slane %v8453, 5
        %v8578 = vrot.slane %v8577, 4
        %v8579 = vrot.slane %v8454, 5
        %v8580 = vsel %vm2116, %v8578, %v8579
        %v8581 = vrot.slane %v8579, 4
        %v8582 = vrot.slane %v8455, 5
        %v8583 = vsel %vm2116, %v8581, %v8582
        %v8584 = vrot.slane %v8456, 5
        %v8585 = vrot.slane %v8584, 4
        %v8586 = vrot.slane %v8457, 5
        %v8587 = vsel %vm2116, %v8585, %v8586
        %v8588 = vrot.slane %v8586, 4
        %v8589 = vrot.slane %v8458, 5
        %v8590 = vsel %vm2116, %v8588, %v8589
        %v8591 = vrot.slane %v8459, 5
        %v8592 = vrot.slane %v8591, 4
        %v8593 = vrot.slane %v8460, 5
        %v8594 = vsel %vm2116, %v8592, %v8593
        %v8595 = vrot.slane %v8593, 4
        %v8596 = vrot.slane %v8461, 5
        %v8597 = vsel %vm2116, %v8595, %v8596
        %v8598 = vrot.slane %v8462, 5
        %v8599 = vrot.slane %v8598, 4
        %v8600 = vrot.slane %v8463, 5
        %v8601 = vsel %vm2116, %v8599, %v8600
        %v8602 = vrot.slane %v8600, 4
        %v8603 = vrot.slane %v8464, 5
        %v8604 = vsel %vm2116, %v8602, %v8603
        %v8605 = vrot.slane %v8465, 5
        %v8606 = vrot.slane %v8605, 4
        %v8607 = vrot.slane %v8466, 5
        %v8608 = vsel %vm2116, %v8606, %v8607
        %v8609 = vrot.slane %v8607, 4
        %v8610 = vrot.slane %v8467, 5
        %v8611 = vsel %vm2116, %v8609, %v8610
        %v8612 = vrot.slane %v8468, 5
        %v8613 = vrot.slane %v8612, 4
        %v8614 = vrot.slane %v8469, 5
        %v8615 = vsel %vm2116, %v8613, %v8614
        %v8616 = vrot.slane %v8614, 4
        %v8617 = vrot.slane %v8470, 5
        %v8618 = vsel %vm2116, %v8616, %v8617
        %v8619 = vrot.slane %v8471, 5
        %v8620 = vrot.slane %v8619, 4
        %v8621 = vrot.slane %v8472, 5
        %v8622 = vsel %vm2116, %v8620, %v8621
        %v8623 = vrot.slane %v8621, 4
        %v8624 = vrot.slane %v8473, 5
        %v8625 = vsel %vm2116, %v8623, %v8624
        %v8626 = vrot.slane %v8474, 5
        %v8627 = vrot.slane %v8626, 4
        %v8628 = vrot.slane %v8475, 5
        %v8629 = vsel %vm2116, %v8627, %v8628
        %v8630 = vrot.slane %v8628, 4
        %v8631 = vrot.slane %v8476, 5
        %v8632 = vsel %vm2116, %v8630, %v8631
        %v8633 = vrot.slane %v8477, 5
        %v8634 = vrot.slane %v8633, 4
        %v8635 = vrot.slane %v8478, 5
        %v8636 = vsel %vm2116, %v8634, %v8635
        %v8637 = vrot.slane %v8635, 4
        %v8638 = vrot.slane %v8479, 5
        %v8639 = vsel %vm2116, %v8637, %v8638
        %v8640 = vunpack.c.l.b16 %v8531
        %v8641 = vunpack.c.l.b16 %v8534
        %v8642 = vunpack.c.l.b16 %v8538
        %v8643 = vunpack.c.l.b16 %v8541
        %v8644 = vunpack.c.l.b16 %v8545
        %v8645 = vunpack.c.l.b16 %v8548
        %v8646 = vunpack.c.l.b16 %v8552
        %v8647 = vunpack.c.l.b16 %v8555
        %v8648 = vunpack.c.l.b16 %v8559
        %v8649 = vunpack.c.l.b16 %v8562
        %v8650 = vunpack.c.l.b16 %v8566
        %v8651 = vunpack.c.l.b16 %v8569
        %v8652 = vunpack.c.l.b16 %v8573
        %v8653 = vunpack.c.l.b16 %v8576
        %v8654 = vunpack.c.l.b16 %v8580
        %v8655 = vunpack.c.l.b16 %v8583
        %v8656 = vunpack.c.l.b16 %v8587
        %v8657 = vunpack.c.l.b16 %v8590
        %v8658 = vunpack.c.l.b16 %v8594
        %v8659 = vunpack.c.l.b16 %v8597
        %v8660 = vunpack.c.l.b16 %v8601
        %v8661 = vunpack.c.l.b16 %v8604
        %v8662 = vunpack.c.l.b16 %v8608
        %v8663 = vunpack.c.l.b16 %v8611
        %v8664 = vunpack.c.l.b16 %v8615
        %v8665 = vunpack.c.l.b16 %v8618
        %v8666 = vunpack.c.l.b16 %v8622
        %v8667 = vunpack.c.l.b16 %v8625
        %v8668 = vunpack.c.l.b16 %v8629
        %v8669 = vunpack.c.l.b16 %v8632
        %v8670 = vunpack.c.l.b16 %v8636
        %v8671 = vunpack.c.l.b16 %v8639
        %v8672 = vpack.c.b16 %v8641, %v8640
        %v8673 = vpack.c.b16 %v8643, %v8642
        %v8674 = vpack.c.b16 %v8645, %v8644
        %v8675 = vpack.c.b16 %v8647, %v8646
        %v8676 = vpack.c.b16 %v8649, %v8648
        %v8677 = vpack.c.b16 %v8651, %v8650
        %v8678 = vpack.c.b16 %v8653, %v8652
        %v8679 = vpack.c.b16 %v8655, %v8654
        %v8680 = vpack.c.b16 %v8657, %v8656
        %v8681 = vpack.c.b16 %v8659, %v8658
        %v8682 = vpack.c.b16 %v8661, %v8660
        %v8683 = vpack.c.b16 %v8663, %v8662
        %v8684 = vpack.c.b16 %v8665, %v8664
        %v8685 = vpack.c.b16 %v8667, %v8666
        %v8686 = vpack.c.b16 %v8669, %v8668
        %v8687 = vpack.c.b16 %v8671, %v8670
        %8704 = vst.msk [vmem:[#allocation3 + $0x20] sm:$0xff] %vm1453, %v8672
        %8705 = vst.msk [vmem:[#allocation3 + $0x48] sm:$0xff] %vm1453, %v8673
        %8706 = vst.msk [vmem:[#allocation3 + $0x70] sm:$0xff] %vm1453, %v8674
        %8707 = vst.msk [vmem:[#allocation3 + $0x98] sm:$0xff] %vm1453, %v8675
        %8708 = vst.msk [vmem:[#allocation3 + $0xc0] sm:$0xff] %vm1453, %v8676
        %8709 = vst.msk [vmem:[#allocation3 + $0xe8] sm:$0xff] %vm1453, %v8677
        %8710 = vst.msk [vmem:[#allocation3 + $0x110] sm:$0xff] %vm1453, %v8678
        %8711 = vst.msk [vmem:[#allocation3 + $0x138] sm:$0xff] %vm1453, %v8679
        %8712 = vst.msk [vmem:[#allocation3 + $0x160] sm:$0xff] %vm1453, %v8680
        %8713 = vst.msk [vmem:[#allocation3 + $0x188] sm:$0xff] %vm1453, %v8681
        %8714 = vst.msk [vmem:[#allocation3 + $0x1b0] sm:$0xff] %vm1453, %v8682
        %8715 = vst.msk [vmem:[#allocation3 + $0x1d8] sm:$0xff] %vm1453, %v8683
        %8716 = vst.msk [vmem:[#allocation3 + $0x200] sm:$0xff] %vm1453, %v8684
        %8717 = vst.msk [vmem:[#allocation3 + $0x228] sm:$0xff] %vm1453, %v8685
        %8718 = vst.msk [vmem:[#allocation3 + $0x250] sm:$0xff] %vm1453, %v8686
        %8719 = vst.msk [vmem:[#allocation3 + $0x278] sm:$0xff] %vm1453, %v8687
        %v8720 = vld [vmem:[#allocation3] sm:$0xff]
        %v8721 = vld [vmem:[#allocation3 + $0x8] sm:$0xff]
        %v8722 = vld [vmem:[#allocation3 + $0x10] sm:$0xff]
        %v8723 = vld [vmem:[#allocation3 + $0x18] sm:$0xff]
        %v8724 = vld [vmem:[#allocation3 + $0x20] sm:$0xff]
        %v8725 = vld [vmem:[#allocation3 + $0x28] sm:$0xff]
        %v8726 = vld [vmem:[#allocation3 + $0x30] sm:$0xff]
        %v8727 = vld [vmem:[#allocation3 + $0x38] sm:$0xff]
        %v8728 = vld [vmem:[#allocation3 + $0x40] sm:$0xff]
        %v8729 = vld [vmem:[#allocation3 + $0x48] sm:$0xff]
        %v8730 = vld [vmem:[#allocation3 + $0x50] sm:$0xff]
        %v8731 = vld [vmem:[#allocation3 + $0x58] sm:$0xff]
        %v8732 = vld [vmem:[#allocation3 + $0x60] sm:$0xff]
        %v8733 = vld [vmem:[#allocation3 + $0x68] sm:$0xff]
        %v8734 = vld [vmem:[#allocation3 + $0x70] sm:$0xff]
        %v8735 = vld [vmem:[#allocation3 + $0x78] sm:$0xff]
        %v8736 = vld [vmem:[#allocation3 + $0x80] sm:$0xff]
        %v8737 = vld [vmem:[#allocation3 + $0x88] sm:$0xff]
        %v8738 = vld [vmem:[#allocation3 + $0x90] sm:$0xff]
        %v8739 = vld [vmem:[#allocation3 + $0x98] sm:$0xff]
        %v8740 = vld [vmem:[#allocation3 + $0xa0] sm:$0xff]
        %v8741 = vld [vmem:[#allocation3 + $0xa8] sm:$0xff]
        %v8742 = vld [vmem:[#allocation3 + $0xb0] sm:$0xff]
        %v8743 = vld [vmem:[#allocation3 + $0xb8] sm:$0xff]
        %v8744 = vld [vmem:[#allocation3 + $0xc0] sm:$0xff]
        %v8745 = vld [vmem:[#allocation3 + $0xc8] sm:$0xff]
        %v8746 = vld [vmem:[#allocation3 + $0xd0] sm:$0xff]
        %v8747 = vld [vmem:[#allocation3 + $0xd8] sm:$0xff]
        %v8748 = vld [vmem:[#allocation3 + $0xe0] sm:$0xff]
        %v8749 = vld [vmem:[#allocation3 + $0xe8] sm:$0xff]
        %v8750 = vld [vmem:[#allocation3 + $0xf0] sm:$0xff]
        %v8751 = vld [vmem:[#allocation3 + $0xf8] sm:$0xff]
        %v8752 = vld [vmem:[#allocation3 + $0x100] sm:$0xff]
        %v8753 = vld [vmem:[#allocation3 + $0x108] sm:$0xff]
        %v8754 = vld [vmem:[#allocation3 + $0x110] sm:$0xff]
        %v8755 = vld [vmem:[#allocation3 + $0x118] sm:$0xff]
        %v8756 = vld [vmem:[#allocation3 + $0x120] sm:$0xff]
        %v8757 = vld [vmem:[#allocation3 + $0x128] sm:$0xff]
        %v8758 = vld [vmem:[#allocation3 + $0x130] sm:$0xff]
        %v8759 = vld [vmem:[#allocation3 + $0x138] sm:$0xff]
        %v8760 = vld [vmem:[#allocation3 + $0x140] sm:$0xff]
        %v8761 = vld [vmem:[#allocation3 + $0x148] sm:$0xff]
        %v8762 = vld [vmem:[#allocation3 + $0x150] sm:$0xff]
        %v8763 = vld [vmem:[#allocation3 + $0x158] sm:$0xff]
        %v8764 = vld [vmem:[#allocation3 + $0x160] sm:$0xff]
        %v8765 = vld [vmem:[#allocation3 + $0x168] sm:$0xff]
        %v8766 = vld [vmem:[#allocation3 + $0x170] sm:$0xff]
        %v8767 = vld [vmem:[#allocation3 + $0x178] sm:$0xff]
        %v8768 = vld [vmem:[#allocation3 + $0x180] sm:$0xff]
        %v8769 = vld [vmem:[#allocation3 + $0x188] sm:$0xff]
        %v8770 = vld [vmem:[#allocation3 + $0x190] sm:$0xff]
        %v8771 = vld [vmem:[#allocation3 + $0x198] sm:$0xff]
        %v8772 = vld [vmem:[#allocation3 + $0x1a0] sm:$0xff]
        %v8773 = vld [vmem:[#allocation3 + $0x1a8] sm:$0xff]
        %v8774 = vld [vmem:[#allocation3 + $0x1b0] sm:$0xff]
        %v8775 = vld [vmem:[#allocation3 + $0x1b8] sm:$0xff]
        %v8776 = vld [vmem:[#allocation3 + $0x1c0] sm:$0xff]
        %v8777 = vld [vmem:[#allocation3 + $0x1c8] sm:$0xff]
        %v8778 = vld [vmem:[#allocation3 + $0x1d0] sm:$0xff]
        %v8779 = vld [vmem:[#allocation3 + $0x1d8] sm:$0xff]
        %v8780 = vld [vmem:[#allocation3 + $0x1e0] sm:$0xff]
        %v8781 = vld [vmem:[#allocation3 + $0x1e8] sm:$0xff]
        %v8782 = vld [vmem:[#allocation3 + $0x1f0] sm:$0xff]
        %v8783 = vld [vmem:[#allocation3 + $0x1f8] sm:$0xff]
        %v8784 = vld [vmem:[#allocation3 + $0x200] sm:$0xff]
        %v8785 = vld [vmem:[#allocation3 + $0x208] sm:$0xff]
        %v8786 = vld [vmem:[#allocation3 + $0x210] sm:$0xff]
        %v8787 = vld [vmem:[#allocation3 + $0x218] sm:$0xff]
        %v8788 = vld [vmem:[#allocation3 + $0x220] sm:$0xff]
        %v8789 = vld [vmem:[#allocation3 + $0x228] sm:$0xff]
        %v8790 = vld [vmem:[#allocation3 + $0x230] sm:$0xff]
        %v8791 = vld [vmem:[#allocation3 + $0x238] sm:$0xff]
        %v8792 = vld [vmem:[#allocation3 + $0x240] sm:$0xff]
        %v8793 = vld [vmem:[#allocation3 + $0x248] sm:$0xff]
        %v8794 = vld [vmem:[#allocation3 + $0x250] sm:$0xff]
        %v8795 = vld [vmem:[#allocation3 + $0x258] sm:$0xff]
        %v8796 = vld [vmem:[#allocation3 + $0x260] sm:$0xff]
        %v8797 = vld [vmem:[#allocation3 + $0x268] sm:$0xff]
        %v8798 = vld [vmem:[#allocation3 + $0x270] sm:$0xff]
        %v8799 = vld [vmem:[#allocation3 + $0x278] sm:$0xff]
        %v8800 = vld [vmem:[%s5] sm:$0xf]
        %v8801 = vld [vmem:[%s5 + $0x4] sm:$0xf]
        %v8802 = vld [vmem:[%s5 + $0x8] sm:$0xf]
        %v8803 = vld [vmem:[%s5 + $0xc] sm:$0xf]
        %v8804 = vld [vmem:[%s5 + $0x10] sm:$0xf]
        %v8805 = vld [vmem:[%s5 + $0x14] sm:$0xf]
        %v8806 = vld [vmem:[%s5 + $0x18] sm:$0xf]
        %v8807 = vld [vmem:[%s5 + $0x1c] sm:$0xf]
        %v8808 = vld [vmem:[%s5 + $0x20] sm:$0xf]
        %v8809 = vld [vmem:[%s5 + $0x24] sm:$0xf]
        %v8810 = vld [vmem:[%s5 + $0x28] sm:$0xf]
        %v8811 = vld [vmem:[%s5 + $0x2c] sm:$0xf]
        %v8812 = vld [vmem:[%s5 + $0x30] sm:$0xf]
        %v8813 = vld [vmem:[%s5 + $0x34] sm:$0xf]
        %v8814 = vld [vmem:[%s5 + $0x38] sm:$0xf]
        %v8815 = vld [vmem:[%s5 + $0x3c] sm:$0xf]
        %v8816 = vld [vmem:[%s5 + $0x40] sm:$0xf]
        %v8817 = vld [vmem:[%s5 + $0x44] sm:$0xf]
        %v8818 = vld [vmem:[%s5 + $0x48] sm:$0xf]
        %v8819 = vld [vmem:[%s5 + $0x4c] sm:$0xf]
        %v8820 = vld [vmem:[%s5 + $0x50] sm:$0xf]
        %v8821 = vld [vmem:[%s5 + $0x54] sm:$0xf]
        %v8822 = vld [vmem:[%s5 + $0x58] sm:$0xf]
        %v8823 = vld [vmem:[%s5 + $0x5c] sm:$0xf]
        %v8824 = vld [vmem:[%s5 + $0x60] sm:$0xf]
        %v8825 = vld [vmem:[%s5 + $0x64] sm:$0xf]
        %v8826 = vld [vmem:[%s5 + $0x68] sm:$0xf]
        %v8827 = vld [vmem:[%s5 + $0x6c] sm:$0xf]
        %v8828 = vld [vmem:[%s5 + $0x70] sm:$0xf]
        %v8829 = vld [vmem:[%s5 + $0x74] sm:$0xf]
        %v8830 = vld [vmem:[%s5 + $0x78] sm:$0xf]
        %v8831 = vld [vmem:[%s5 + $0x7c] sm:$0xf]
        %v8832 = vld [vmem:[%s5 + $0x80] sm:$0xf]
        %v8833 = vld [vmem:[%s5 + $0x84] sm:$0xf]
        %v8834 = vld [vmem:[%s5 + $0x88] sm:$0xf]
        %v8835 = vld [vmem:[%s5 + $0x8c] sm:$0xf]
        %v8836 = vld [vmem:[%s5 + $0x90] sm:$0xf]
        %v8837 = vld [vmem:[%s5 + $0x94] sm:$0xf]
        %v8838 = vld [vmem:[%s5 + $0x98] sm:$0xf]
        %v8839 = vld [vmem:[%s5 + $0x9c] sm:$0xf]
        %v8840 = vld [vmem:[%s5 + $0xa0] sm:$0xf]
        %v8841 = vld [vmem:[%s5 + $0xa4] sm:$0xf]
        %v8842 = vld [vmem:[%s5 + $0xa8] sm:$0xf]
        %v8843 = vld [vmem:[%s5 + $0xac] sm:$0xf]
        %v8844 = vld [vmem:[%s5 + $0xb0] sm:$0xf]
        %v8845 = vld [vmem:[%s5 + $0xb4] sm:$0xf]
        %v8846 = vld [vmem:[%s5 + $0xb8] sm:$0xf]
        %v8847 = vld [vmem:[%s5 + $0xbc] sm:$0xf]
        %v8848 = vld [vmem:[%s5 + $0xc0] sm:$0xf]
        %v8849 = vld [vmem:[%s5 + $0xc4] sm:$0xf]
        %v8850 = vld [vmem:[%s5 + $0xc8] sm:$0xf]
        %v8851 = vld [vmem:[%s5 + $0xcc] sm:$0xf]
        %v8852 = vld [vmem:[%s5 + $0xd0] sm:$0xf]
        %v8853 = vld [vmem:[%s5 + $0xd4] sm:$0xf]
        %v8854 = vld [vmem:[%s5 + $0xd8] sm:$0xf]
        %v8855 = vld [vmem:[%s5 + $0xdc] sm:$0xf]
        %v8856 = vld [vmem:[%s5 + $0xe0] sm:$0xf]
        %v8857 = vld [vmem:[%s5 + $0xe4] sm:$0xf]
        %v8858 = vld [vmem:[%s5 + $0xe8] sm:$0xf]
        %v8859 = vld [vmem:[%s5 + $0xec] sm:$0xf]
        %v8860 = vld [vmem:[%s5 + $0xf0] sm:$0xf]
        %v8861 = vld [vmem:[%s5 + $0xf4] sm:$0xf]
        %v8862 = vld [vmem:[%s5 + $0xf8] sm:$0xf]
        %v8863 = vld [vmem:[%s5 + $0xfc] sm:$0xf]
        %v8864 = vld [vmem:[%s5 + $0x100] sm:$0xf]
        %v8865 = vld [vmem:[%s5 + $0x104] sm:$0xf]
        %v8866 = vld [vmem:[%s5 + $0x108] sm:$0xf]
        %v8867 = vld [vmem:[%s5 + $0x10c] sm:$0xf]
        %v8868 = vld [vmem:[%s5 + $0x110] sm:$0xf]
        %v8869 = vld [vmem:[%s5 + $0x114] sm:$0xf]
        %v8870 = vld [vmem:[%s5 + $0x118] sm:$0xf]
        %v8871 = vld [vmem:[%s5 + $0x11c] sm:$0xf]
        %v8872 = vld [vmem:[%s6] sm:$0x1]
        %v8874 = vlaneseq
        %v8875 = vshrl.u32 %v8874, 7
        %v8876 = vsub.s32 0, %v8875
        %v8877 = vrot.slane %v8872, %v8876
        %v8951 = vunpack.c.l.b16 %v8800
        %v8952 = vunpack.c.l.b16 %v8801
        %v8953 = vunpack.c.l.b16 %v8802
        %v8954 = vunpack.c.l.b16 %v8803
        %v8955 = vunpack.c.l.b16 %v8804
        %v8956 = vunpack.c.l.b16 %v8805
        %v8957 = vunpack.c.l.b16 %v8806
        %v8958 = vunpack.c.l.b16 %v8807
        %v8959 = vunpack.c.l.b16 %v8808
        %v8960 = vunpack.c.l.b16 %v8809
        %v8961 = vunpack.c.l.b16 %v8810
        %v8962 = vunpack.c.l.b16 %v8811
        %v8963 = vunpack.c.l.b16 %v8812
        %v8964 = vunpack.c.l.b16 %v8813
        %v8965 = vunpack.c.l.b16 %v8814
        %v8966 = vunpack.c.l.b16 %v8815
        %v8967 = vunpack.c.l.b16 %v8816
        %v8968 = vunpack.c.l.b16 %v8817
        %v8969 = vunpack.c.l.b16 %v8818
        %v8970 = vunpack.c.l.b16 %v8819
        %v8971 = vunpack.c.l.b16 %v8820
        %v8972 = vunpack.c.l.b16 %v8821
        %v8973 = vunpack.c.l.b16 %v8822
        %v8974 = vunpack.c.l.b16 %v8823
        %v8975 = vunpack.c.l.b16 %v8824
        %v8976 = vunpack.c.l.b16 %v8825
        %v8977 = vunpack.c.l.b16 %v8826
        %v8978 = vunpack.c.l.b16 %v8827
        %v8979 = vunpack.c.l.b16 %v8828
        %v8980 = vunpack.c.l.b16 %v8829
        %v8981 = vunpack.c.l.b16 %v8830
        %v8982 = vunpack.c.l.b16 %v8831
        %v8983 = vunpack.c.l.b16 %v8832
        %v8984 = vunpack.c.l.b16 %v8833
        %v8985 = vunpack.c.l.b16 %v8834
        %v8986 = vunpack.c.l.b16 %v8835
        %v8987 = vunpack.c.l.b16 %v8836
        %v8988 = vunpack.c.l.b16 %v8837
        %v8989 = vunpack.c.l.b16 %v8838
        %v8990 = vunpack.c.l.b16 %v8839
        %v8991 = vunpack.c.l.b16 %v8840
        %v8992 = vunpack.c.l.b16 %v8841
        %v8993 = vunpack.c.l.b16 %v8842
        %v8994 = vunpack.c.l.b16 %v8843
        %v8995 = vunpack.c.l.b16 %v8844
        %v8996 = vunpack.c.l.b16 %v8845
        %v8997 = vunpack.c.l.b16 %v8846
        %v8998 = vunpack.c.l.b16 %v8847
        %v8999 = vunpack.c.l.b16 %v8848
        %v9000 = vunpack.c.l.b16 %v8849
        %v9001 = vunpack.c.l.b16 %v8850
        %v9002 = vunpack.c.l.b16 %v8851
        %v9003 = vunpack.c.l.b16 %v8852
        %v9004 = vunpack.c.l.b16 %v8853
        %v9005 = vunpack.c.l.b16 %v8854
        %v9006 = vunpack.c.l.b16 %v8855
        %v9007 = vunpack.c.l.b16 %v8856
        %v9008 = vunpack.c.l.b16 %v8857
        %v9009 = vunpack.c.l.b16 %v8858
        %v9010 = vunpack.c.l.b16 %v8859
        %v9011 = vunpack.c.l.b16 %v8860
        %v9012 = vunpack.c.l.b16 %v8861
        %v9013 = vunpack.c.l.b16 %v8862
        %v9014 = vunpack.c.l.b16 %v8863
        %v9015 = vunpack.c.l.b16 %v8864
        %v9016 = vunpack.c.l.b16 %v8865
        %v9017 = vunpack.c.l.b16 %v8866
        %v9018 = vunpack.c.l.b16 %v8867
        %v9019 = vunpack.c.l.b16 %v8868
        %v9020 = vunpack.c.l.b16 %v8869
        %v9021 = vunpack.c.l.b16 %v8870
        %v9022 = vunpack.c.l.b16 %v8871
        %v9023 = vpack.c.b16 %v8952, %v8951
        %v9024 = vpack.c.b16 %v8954, %v8953
        %v9025 = vpack.c.b16 %v8956, %v8955
        %v9026 = vpack.c.b16 %v8958, %v8957
        %v9027 = vpack.c.b16 %v8960, %v8959
        %v9028 = vpack.c.b16 %v8962, %v8961
        %v9029 = vpack.c.b16 %v8964, %v8963
        %v9030 = vpack.c.b16 %v8966, %v8965
        %v9031 = vpack.c.b16 %v8968, %v8967
        %v9032 = vpack.c.b16 %v8970, %v8969
        %v9033 = vpack.c.b16 %v8972, %v8971
        %v9034 = vpack.c.b16 %v8974, %v8973
        %v9035 = vpack.c.b16 %v8976, %v8975
        %v9036 = vpack.c.b16 %v8978, %v8977
        %v9037 = vpack.c.b16 %v8980, %v8979
        %v9038 = vpack.c.b16 %v8982, %v8981
        %v9039 = vpack.c.b16 %v8984, %v8983
        %v9040 = vpack.c.b16 %v8986, %v8985
        %v9041 = vpack.c.b16 %v8988, %v8987
        %v9042 = vpack.c.b16 %v8990, %v8989
        %v9043 = vpack.c.b16 %v8992, %v8991
        %v9044 = vpack.c.b16 %v8994, %v8993
        %v9045 = vpack.c.b16 %v8996, %v8995
        %v9046 = vpack.c.b16 %v8998, %v8997
        %v9047 = vpack.c.b16 %v9000, %v8999
        %v9048 = vpack.c.b16 %v9002, %v9001
        %v9049 = vpack.c.b16 %v9004, %v9003
        %v9050 = vpack.c.b16 %v9006, %v9005
        %v9051 = vpack.c.b16 %v9008, %v9007
        %v9052 = vpack.c.b16 %v9010, %v9009
        %v9053 = vpack.c.b16 %v9012, %v9011
        %v9054 = vpack.c.b16 %v9014, %v9013
        %v9055 = vpack.c.b16 %v9016, %v9015
        %v9056 = vpack.c.b16 %v9018, %v9017
        %v9057 = vpack.c.b16 %v9020, %v9019
        %v9058 = vpack.c.b16 %v9022, %v9021
        %v9096 = vsel %vm1453, %v8724, 0
        %v9099 = vsel %vm1453, %v8729, 0
        %v9102 = vsel %vm1453, %v8734, 0
        %v9105 = vsel %vm1453, %v8739, 0
        %v9108 = vsel %vm1453, %v8744, 0
        %v9111 = vsel %vm1453, %v8749, 0
        %v9114 = vsel %vm1453, %v8754, 0
        %v9117 = vsel %vm1453, %v8759, 0
        %v9120 = vsel %vm1453, %v8764, 0
        %v9123 = vsel %vm1453, %v8769, 0
        %v9126 = vsel %vm1453, %v8774, 0
        %v9129 = vsel %vm1453, %v8779, 0
        %v9132 = vsel %vm1453, %v8784, 0
        %v9135 = vsel %vm1453, %v8789, 0
        %v9138 = vsel %vm1453, %v8794, 0
        %v9141 = vsel %vm1453, %v8799, 0
        %9143 = vmatprep.subr.bf16.mxu0 0
        %9144 = vmatpush1.bf16.msra.mxu0 %v9023
        %9145 = vmatprep.subr.bf16.mxu0 0
        %9146 = vmatpush1.bf16.msra.mxu0 %v9024
        %9147 = vmatprep.subr.bf16.mxu0 0
        %9148 = vmatpush1.bf16.msra.mxu0 %v9025
        %9149 = vmatprep.subr.bf16.mxu0 0
        %9150 = vmatpush1.bf16.msra.mxu0 %v9026
        %9151 = vmatprep.subr.bf16.mxu0 0
        %9152 = vmatpush1.bf16.msra.mxu0 %v9027
        %9153 = vmatprep.subr.bf16.mxu0 0
        %9154 = vmatpush1.bf16.msra.mxu0 %v9028
        %9155 = vmatprep.subr.bf16.mxu0 0
        %9156 = vmatpush1.bf16.msra.mxu0 %v9029
        %9157 = vmatprep.subr.bf16.mxu0 0
        %9158 = vmatpush1.bf16.msra.mxu0 %v9030
        %9159 = vmatprep.subr.bf16.mxu0 0
        %9160 = vmatpush1.bf16.msra.mxu0 %v9031
        %9161 = vmatprep.subr.bf16.mxu0 0
        %9162 = vmatpush1.bf16.msra.mxu0 %v9032
        %9163 = vmatprep.subr.bf16.mxu0 0
        %9164 = vmatpush1.bf16.msra.mxu0 %v9033
        %9165 = vmatprep.subr.bf16.mxu0 0
        %9166 = vmatpush1.bf16.msra.mxu0 %v9034
        %9167 = vmatprep.subr.bf16.mxu0 0
        %9168 = vmatpush1.bf16.msra.mxu0 %v9035
        %9169 = vmatprep.subr.bf16.mxu0 0
        %9170 = vmatpush1.bf16.msra.mxu0 %v9036
        %9171 = vmatprep.subr.bf16.mxu0 0
        %9172 = vmatpush1.bf16.msra.mxu0 %v9037
        %9173 = vmatprep.subr.bf16.mxu0 0
        %9174 = vmatpush1.bf16.msra.mxu0 %v9038
        %9175 = vmatprep.mubr.bf16.mxu0 %v8721
        %9176 = vmatmul.mubr.bf16.gmra.mrb[0].mxu0 %v8720
        %v9177 = vpop.f32.mrb[0].mxu0
        %v9178 = vadd.f32 %v8877, %v9177
        %v9179 = vpop.f32.mrb[0].mxu0
        %v9180 = vpop.f32.mrb[0].mxu0
        %v9181 = vadd.f32 %v8877, %v9180
        %v9182 = vpop.f32.mrb[0].mxu0
        %9183 = vmatprep.mubr.bf16.mxu0 %v8726
        %9184 = vmatmul.mubr.bf16.gmra.mrb[0].mxu0 %v8725
        %v9185 = vpop.f32.mrb[0].mxu0
        %v9186 = vadd.f32 %v8877, %v9185
        %v9187 = vpop.f32.mrb[0].mxu0
        %v9188 = vpop.f32.mrb[0].mxu0
        %v9189 = vadd.f32 %v8877, %v9188
        %v9190 = vpop.f32.mrb[0].mxu0
        %9191 = vmatprep.mubr.bf16.mxu0 %v8731
        %9192 = vmatmul.mubr.bf16.gmra.mrb[0].mxu0 %v8730
        %v9193 = vpop.f32.mrb[0].mxu0
        %v9194 = vadd.f32 %v8877, %v9193
        %v9195 = vpop.f32.mrb[0].mxu0
        %v9196 = vpop.f32.mrb[0].mxu0
        %v9197 = vadd.f32 %v8877, %v9196
        %v9198 = vpop.f32.mrb[0].mxu0
        %9199 = vmatprep.mubr.bf16.mxu0 %v8736
        %9200 = vmatmul.mubr.bf16.gmra.mrb[0].mxu0 %v8735
        %v9201 = vpop.f32.mrb[0].mxu0
        %v9202 = vadd.f32 %v8877, %v9201
        %v9203 = vpop.f32.mrb[0].mxu0
        %v9204 = vpop.f32.mrb[0].mxu0
        %v9205 = vadd.f32 %v8877, %v9204
        %v9206 = vpop.f32.mrb[0].mxu0
        %9207 = vmatprep.mubr.bf16.mxu0 %v8741
        %9208 = vmatmul.mubr.bf16.gmra.mrb[0].mxu0 %v8740
        %v9209 = vpop.f32.mrb[0].mxu0
        %v9210 = vadd.f32 %v8877, %v9209
        %v9211 = vpop.f32.mrb[0].mxu0
        %v9212 = vpop.f32.mrb[0].mxu0
        %v9213 = vadd.f32 %v8877, %v9212
        %v9214 = vpop.f32.mrb[0].mxu0
        %9215 = vmatprep.mubr.bf16.mxu0 %v8746
        %9216 = vmatmul.mubr.bf16.gmra.mrb[0].mxu0 %v8745
        %v9217 = vpop.f32.mrb[0].mxu0
        %v9218 = vadd.f32 %v8877, %v9217
        %v9219 = vpop.f32.mrb[0].mxu0
        %v9220 = vpop.f32.mrb[0].mxu0
        %v9221 = vadd.f32 %v8877, %v9220
        %v9222 = vpop.f32.mrb[0].mxu0
        %9223 = vmatprep.mubr.bf16.mxu0 %v8751
        %9224 = vmatmul.mubr.bf16.gmra.mrb[0].mxu0 %v8750
        %v9225 = vpop.f32.mrb[0].mxu0
        %v9226 = vadd.f32 %v8877, %v9225
        %v9227 = vpop.f32.mrb[0].mxu0
        %v9228 = vpop.f32.mrb[0].mxu0
        %v9229 = vadd.f32 %v8877, %v9228
        %v9230 = vpop.f32.mrb[0].mxu0
        %9231 = vmatprep.mubr.bf16.mxu0 %v8756
        %9232 = vmatmul.mubr.bf16.gmra.mrb[0].mxu0 %v8755
        %v9233 = vpop.f32.mrb[0].mxu0
        %v9234 = vadd.f32 %v8877, %v9233
        %v9235 = vpop.f32.mrb[0].mxu0
        %v9236 = vpop.f32.mrb[0].mxu0
        %v9237 = vadd.f32 %v8877, %v9236
        %v9238 = vpop.f32.mrb[0].mxu0
        %9239 = vmatprep.mubr.bf16.mxu0 %v8761
        %9240 = vmatmul.mubr.bf16.gmra.mrb[0].mxu0 %v8760
        %v9241 = vpop.f32.mrb[0].mxu0
        %v9242 = vadd.f32 %v8877, %v9241
        %v9243 = vpop.f32.mrb[0].mxu0
        %v9244 = vpop.f32.mrb[0].mxu0
        %v9245 = vadd.f32 %v8877, %v9244
        %v9246 = vpop.f32.mrb[0].mxu0
        %9247 = vmatprep.mubr.bf16.mxu0 %v8766
        %9248 = vmatmul.mubr.bf16.gmra.mrb[0].mxu0 %v8765
        %v9249 = vpop.f32.mrb[0].mxu0
        %v9250 = vadd.f32 %v8877, %v9249
        %v9251 = vpop.f32.mrb[0].mxu0
        %v9252 = vpop.f32.mrb[0].mxu0
        %v9253 = vadd.f32 %v8877, %v9252
        %v9254 = vpop.f32.mrb[0].mxu0
        %9255 = vmatprep.mubr.bf16.mxu0 %v8771
        %9256 = vmatmul.mubr.bf16.gmra.mrb[0].mxu0 %v8770
        %v9257 = vpop.f32.mrb[0].mxu0
        %v9258 = vadd.f32 %v8877, %v9257
        %v9259 = vpop.f32.mrb[0].mxu0
        %v9260 = vpop.f32.mrb[0].mxu0
        %v9261 = vadd.f32 %v8877, %v9260
        %v9262 = vpop.f32.mrb[0].mxu0
        %9263 = vmatprep.mubr.bf16.mxu0 %v8776
        %9264 = vmatmul.mubr.bf16.gmra.mrb[0].mxu0 %v8775
        %v9265 = vpop.f32.mrb[0].mxu0
        %v9266 = vadd.f32 %v8877, %v9265
        %v9267 = vpop.f32.mrb[0].mxu0
        %v9268 = vpop.f32.mrb[0].mxu0
        %v9269 = vadd.f32 %v8877, %v9268
        %v9270 = vpop.f32.mrb[0].mxu0
        %9271 = vmatprep.mubr.bf16.mxu0 %v8781
        %9272 = vmatmul.mubr.bf16.gmra.mrb[0].mxu0 %v8780
        %v9273 = vpop.f32.mrb[0].mxu0
        %v9274 = vadd.f32 %v8877, %v9273
        %v9275 = vpop.f32.mrb[0].mxu0
        %v9276 = vpop.f32.mrb[0].mxu0
        %v9277 = vadd.f32 %v8877, %v9276
        %v9278 = vpop.f32.mrb[0].mxu0
        %9279 = vmatprep.mubr.bf16.mxu0 %v8786
        %9280 = vmatmul.mubr.bf16.gmra.mrb[0].mxu0 %v8785
        %v9281 = vpop.f32.mrb[0].mxu0
        %v9282 = vadd.f32 %v8877, %v9281
        %v9283 = vpop.f32.mrb[0].mxu0
        %v9284 = vpop.f32.mrb[0].mxu0
        %v9285 = vadd.f32 %v8877, %v9284
        %v9286 = vpop.f32.mrb[0].mxu0
        %9287 = vmatprep.mubr.bf16.mxu0 %v8791
        %9288 = vmatmul.mubr.bf16.gmra.mrb[0].mxu0 %v8790
        %v9289 = vpop.f32.mrb[0].mxu0
        %v9290 = vadd.f32 %v8877, %v9289
        %v9291 = vpop.f32.mrb[0].mxu0
        %v9292 = vpop.f32.mrb[0].mxu0
        %v9293 = vadd.f32 %v8877, %v9292
        %v9294 = vpop.f32.mrb[0].mxu0
        %9295 = vmatprep.mubr.bf16.mxu0 %v8796
        %9296 = vmatmul.mubr.bf16.gmra.mrb[0].mxu0 %v8795
        %v9297 = vpop.f32.mrb[0].mxu0
        %v9298 = vadd.f32 %v8877, %v9297
        %v9299 = vpop.f32.mrb[0].mxu0
        %v9300 = vpop.f32.mrb[0].mxu0
        %v9301 = vadd.f32 %v8877, %v9300
        %v9302 = vpop.f32.mrb[0].mxu0
        %9303 = vdwg.mxu0
        %9304 = vmatprep.subr.bf16.mxu0 0
        %9305 = vmatpush1.bf16.msra.mxu0 %v9039
        %9306 = vmatprep.subr.bf16.mxu0 0
        %9307 = vmatpush1.bf16.msra.mxu0 %v9040
        %9308 = vmatprep.subr.bf16.mxu0 0
        %9309 = vmatpush1.bf16.msra.mxu0 %v9041
        %9310 = vmatprep.subr.bf16.mxu0 0
        %9311 = vmatpush1.bf16.msra.mxu0 %v9042
        %9312 = vmatprep.subr.bf16.mxu0 0
        %9313 = vmatpush1.bf16.msra.mxu0 %v9043
        %9314 = vmatprep.subr.bf16.mxu0 0
        %9315 = vmatpush1.bf16.msra.mxu0 %v9044
        %9316 = vmatprep.subr.bf16.mxu0 0
        %9317 = vmatpush1.bf16.msra.mxu0 %v9045
        %9318 = vmatprep.subr.bf16.mxu0 0
        %9319 = vmatpush1.bf16.msra.mxu0 %v9046
        %9320 = vmatprep.subr.bf16.mxu0 0
        %9321 = vmatpush1.bf16.msra.mxu0 %v9047
        %9322 = vmatprep.subr.bf16.mxu0 0
        %9323 = vmatpush1.bf16.msra.mxu0 %v9048
        %9324 = vmatprep.subr.bf16.mxu0 0
        %9325 = vmatpush1.bf16.msra.mxu0 %v9049
        %9326 = vmatprep.subr.bf16.mxu0 0
        %9327 = vmatpush1.bf16.msra.mxu0 %v9050
        %9328 = vmatprep.subr.bf16.mxu0 0
        %9329 = vmatpush1.bf16.msra.mxu0 %v9051
        %9330 = vmatprep.subr.bf16.mxu0 0
        %9331 = vmatpush1.bf16.msra.mxu0 %v9052
        %9332 = vmatprep.subr.bf16.mxu0 0
        %9333 = vmatpush1.bf16.msra.mxu0 %v9053
        %9334 = vmatprep.subr.bf16.mxu0 0
        %9335 = vmatpush1.bf16.msra.mxu0 %v9054
        %9336 = vmatprep.mubr.bf16.mxu0 %v8723
        %9337 = vmatmul.mubr.bf16.gmra.mrb[0].mxu0 %v8722
        %v9338 = vpop.f32.mrb[0].mxu0
        %v9339 = vadd.f32 %v9178, %v9338
        %v9340 = vpop.f32.mrb[0].mxu0
        %v9341 = vpop.f32.mrb[0].mxu0
        %v9342 = vadd.f32 %v9181, %v9341
        %v9343 = vpop.f32.mrb[0].mxu0
        %9344 = vmatprep.mubr.bf16.mxu0 %v8728
        %9345 = vmatmul.mubr.bf16.gmra.mrb[0].mxu0 %v8727
        %v9346 = vpop.f32.mrb[0].mxu0
        %v9347 = vadd.f32 %v9186, %v9346
        %v9348 = vpop.f32.mrb[0].mxu0
        %v9349 = vpop.f32.mrb[0].mxu0
        %v9350 = vadd.f32 %v9189, %v9349
        %v9351 = vpop.f32.mrb[0].mxu0
        %9352 = vmatprep.mubr.bf16.mxu0 %v8733
        %9353 = vmatmul.mubr.bf16.gmra.mrb[0].mxu0 %v8732
        %v9354 = vpop.f32.mrb[0].mxu0
        %v9355 = vadd.f32 %v9194, %v9354
        %v9356 = vpop.f32.mrb[0].mxu0
        %v9357 = vpop.f32.mrb[0].mxu0
        %v9358 = vadd.f32 %v9197, %v9357
        %v9359 = vpop.f32.mrb[0].mxu0
        %9360 = vmatprep.mubr.bf16.mxu0 %v8738
        %9361 = vmatmul.mubr.bf16.gmra.mrb[0].mxu0 %v8737
        %v9362 = vpop.f32.mrb[0].mxu0
        %v9363 = vadd.f32 %v9202, %v9362
        %v9364 = vpop.f32.mrb[0].mxu0
        %v9365 = vpop.f32.mrb[0].mxu0
        %v9366 = vadd.f32 %v9205, %v9365
        %v9367 = vpop.f32.mrb[0].mxu0
        %9368 = vmatprep.mubr.bf16.mxu0 %v8743
        %9369 = vmatmul.mubr.bf16.gmra.mrb[0].mxu0 %v8742
        %v9370 = vpop.f32.mrb[0].mxu0
        %v9371 = vadd.f32 %v9210, %v9370
        %v9372 = vpop.f32.mrb[0].mxu0
        %v9373 = vpop.f32.mrb[0].mxu0
        %v9374 = vadd.f32 %v9213, %v9373
        %v9375 = vpop.f32.mrb[0].mxu0
        %9376 = vmatprep.mubr.bf16.mxu0 %v8748
        %9377 = vmatmul.mubr.bf16.gmra.mrb[0].mxu0 %v8747
        %v9378 = vpop.f32.mrb[0].mxu0
        %v9379 = vadd.f32 %v9218, %v9378
        %v9380 = vpop.f32.mrb[0].mxu0
        %v9381 = vpop.f32.mrb[0].mxu0
        %v9382 = vadd.f32 %v9221, %v9381
        %v9383 = vpop.f32.mrb[0].mxu0
        %9384 = vmatprep.mubr.bf16.mxu0 %v8753
        %9385 = vmatmul.mubr.bf16.gmra.mrb[0].mxu0 %v8752
        %v9386 = vpop.f32.mrb[0].mxu0
        %v9387 = vadd.f32 %v9226, %v9386
        %v9388 = vpop.f32.mrb[0].mxu0
        %v9389 = vpop.f32.mrb[0].mxu0
        %v9390 = vadd.f32 %v9229, %v9389
        %v9391 = vpop.f32.mrb[0].mxu0
        %9392 = vmatprep.mubr.bf16.mxu0 %v8758
        %9393 = vmatmul.mubr.bf16.gmra.mrb[0].mxu0 %v8757
        %v9394 = vpop.f32.mrb[0].mxu0
        %v9395 = vadd.f32 %v9234, %v9394
        %v9396 = vpop.f32.mrb[0].mxu0
        %v9397 = vpop.f32.mrb[0].mxu0
        %v9398 = vadd.f32 %v9237, %v9397
        %v9399 = vpop.f32.mrb[0].mxu0
        %9400 = vmatprep.mubr.bf16.mxu0 %v8763
        %9401 = vmatmul.mubr.bf16.gmra.mrb[0].mxu0 %v8762
        %v9402 = vpop.f32.mrb[0].mxu0
        %v9403 = vadd.f32 %v9242, %v9402
        %v9404 = vpop.f32.mrb[0].mxu0
        %v9405 = vpop.f32.mrb[0].mxu0
        %v9406 = vadd.f32 %v9245, %v9405
        %v9407 = vpop.f32.mrb[0].mxu0
        %9408 = vmatprep.mubr.bf16.mxu0 %v8768
        %9409 = vmatmul.mubr.bf16.gmra.mrb[0].mxu0 %v8767
        %v9410 = vpop.f32.mrb[0].mxu0
        %v9411 = vadd.f32 %v9250, %v9410
        %v9412 = vpop.f32.mrb[0].mxu0
        %v9413 = vpop.f32.mrb[0].mxu0
        %v9414 = vadd.f32 %v9253, %v9413
        %v9415 = vpop.f32.mrb[0].mxu0
        %9416 = vmatprep.mubr.bf16.mxu0 %v8773
        %9417 = vmatmul.mubr.bf16.gmra.mrb[0].mxu0 %v8772
        %v9418 = vpop.f32.mrb[0].mxu0
        %v9419 = vadd.f32 %v9258, %v9418
        %v9420 = vpop.f32.mrb[0].mxu0
        %v9421 = vpop.f32.mrb[0].mxu0
        %v9422 = vadd.f32 %v9261, %v9421
        %v9423 = vpop.f32.mrb[0].mxu0
        %9424 = vmatprep.mubr.bf16.mxu0 %v8778
        %9425 = vmatmul.mubr.bf16.gmra.mrb[0].mxu0 %v8777
        %v9426 = vpop.f32.mrb[0].mxu0
        %v9427 = vadd.f32 %v9266, %v9426
        %v9428 = vpop.f32.mrb[0].mxu0
        %v9429 = vpop.f32.mrb[0].mxu0
        %v9430 = vadd.f32 %v9269, %v9429
        %v9431 = vpop.f32.mrb[0].mxu0
        %9432 = vmatprep.mubr.bf16.mxu0 %v8783
        %9433 = vmatmul.mubr.bf16.gmra.mrb[0].mxu0 %v8782
        %v9434 = vpop.f32.mrb[0].mxu0
        %v9435 = vadd.f32 %v9274, %v9434
        %v9436 = vpop.f32.mrb[0].mxu0
        %v9437 = vpop.f32.mrb[0].mxu0
        %v9438 = vadd.f32 %v9277, %v9437
        %v9439 = vpop.f32.mrb[0].mxu0
        %9440 = vmatprep.mubr.bf16.mxu0 %v8788
        %9441 = vmatmul.mubr.bf16.gmra.mrb[0].mxu0 %v8787
        %v9442 = vpop.f32.mrb[0].mxu0
        %v9443 = vadd.f32 %v9282, %v9442
        %v9444 = vpop.f32.mrb[0].mxu0
        %v9445 = vpop.f32.mrb[0].mxu0
        %v9446 = vadd.f32 %v9285, %v9445
        %v9447 = vpop.f32.mrb[0].mxu0
        %9448 = vmatprep.mubr.bf16.mxu0 %v8793
        %9449 = vmatmul.mubr.bf16.gmra.mrb[0].mxu0 %v8792
        %v9450 = vpop.f32.mrb[0].mxu0
        %v9451 = vadd.f32 %v9290, %v9450
        %v9452 = vpop.f32.mrb[0].mxu0
        %v9453 = vpop.f32.mrb[0].mxu0
        %v9454 = vadd.f32 %v9293, %v9453
        %v9455 = vpop.f32.mrb[0].mxu0
        %9456 = vmatprep.mubr.bf16.mxu0 %v8798
        %9457 = vmatmul.mubr.bf16.gmra.mrb[0].mxu0 %v8797
        %v9458 = vpop.f32.mrb[0].mxu0
        %v9459 = vadd.f32 %v9298, %v9458
        %v9460 = vpop.f32.mrb[0].mxu0
        %v9461 = vpop.f32.mrb[0].mxu0
        %v9462 = vadd.f32 %v9301, %v9461
        %v9463 = vpop.f32.mrb[0].mxu0
        %9464 = vdwg.mxu0
        %9465 = vmatprep.subr.bf16.mxu0 0
        %9466 = vmatpush1.bf16.msra.mxu0 %v9055
        %9467 = vmatprep.subr.bf16.mxu0 0
        %9468 = vmatpush1.bf16.msra.mxu0 %v9056
        %9469 = vmatprep.subr.bf16.mxu0 0
        %9470 = vmatpush1.bf16.msra.mxu0 %v9057
        %9471 = vmatprep.subr.bf16.mxu0 0
        %9472 = vmatpush1.bf16.msra.mxu0 %v9058
        %9473 = vmatprep.subr.bf16.mxu0 0
        %9474 = vmatpush1.bf16.msra.mxu0 0
        %9475 = vmatprep.subr.bf16.mxu0 0
        %9476 = vmatpush1.bf16.msra.mxu0 0
        %9477 = vmatprep.subr.bf16.mxu0 0
        %9478 = vmatpush1.bf16.msra.mxu0 0
        %9479 = vmatprep.subr.bf16.mxu0 0
        %9480 = vmatpush1.bf16.msra.mxu0 0
        %9481 = vmatprep.subr.bf16.mxu0 0
        %9482 = vmatpush1.bf16.msra.mxu0 0
        %9483 = vmatprep.subr.bf16.mxu0 0
        %9484 = vmatpush1.bf16.msra.mxu0 0
        %9485 = vmatprep.subr.bf16.mxu0 0
        %9486 = vmatpush1.bf16.msra.mxu0 0
        %9487 = vmatprep.subr.bf16.mxu0 0
        %9488 = vmatpush1.bf16.msra.mxu0 0
        %9489 = vmatprep.subr.bf16.mxu0 0
        %9490 = vmatpush1.bf16.msra.mxu0 0
        %9491 = vmatprep.subr.bf16.mxu0 0
        %9492 = vmatpush1.bf16.msra.mxu0 0
        %9493 = vmatprep.subr.bf16.mxu0 0
        %9494 = vmatpush1.bf16.msra.mxu0 0
        %9495 = vmatprep.subr.bf16.mxu0 0
        %9496 = vmatpush1.bf16.msra.mxu0 0
        %9497 = vmatprep.mubr.bf16.mxu0 0
        %9498 = vmatmul.mubr.bf16.gmra.mrb[0].mxu0 %v9096
        %v9499 = vpop.f32.mrb[0].mxu0
        %v9500 = vadd.f32 %v9339, %v9499
        %v9501 = vpop.f32.mrb[0].mxu0
        %v9502 = vpop.f32.mrb[0].mxu0
        %v9503 = vadd.f32 %v9342, %v9502
        %v9504 = vpop.f32.mrb[0].mxu0
        %9505 = vmatprep.mubr.bf16.mxu0 0
        %9506 = vmatmul.mubr.bf16.gmra.mrb[0].mxu0 %v9099
        %v9507 = vpop.f32.mrb[0].mxu0
        %v9508 = vadd.f32 %v9347, %v9507
        %v9509 = vpop.f32.mrb[0].mxu0
        %v9510 = vpop.f32.mrb[0].mxu0
        %v9511 = vadd.f32 %v9350, %v9510
        %v9512 = vpop.f32.mrb[0].mxu0
        %9513 = vmatprep.mubr.bf16.mxu0 0
        %9514 = vmatmul.mubr.bf16.gmra.mrb[0].mxu0 %v9102
        %v9515 = vpop.f32.mrb[0].mxu0
        %v9516 = vadd.f32 %v9355, %v9515
        %v9517 = vpop.f32.mrb[0].mxu0
        %v9518 = vpop.f32.mrb[0].mxu0
        %v9519 = vadd.f32 %v9358, %v9518
        %v9520 = vpop.f32.mrb[0].mxu0
        %9521 = vmatprep.mubr.bf16.mxu0 0
        %9522 = vmatmul.mubr.bf16.gmra.mrb[0].mxu0 %v9105
        %v9523 = vpop.f32.mrb[0].mxu0
        %v9524 = vadd.f32 %v9363, %v9523
        %v9525 = vpop.f32.mrb[0].mxu0
        %v9526 = vpop.f32.mrb[0].mxu0
        %v9527 = vadd.f32 %v9366, %v9526
        %v9528 = vpop.f32.mrb[0].mxu0
        %9529 = vmatprep.mubr.bf16.mxu0 0
        %9530 = vmatmul.mubr.bf16.gmra.mrb[0].mxu0 %v9108
        %v9531 = vpop.f32.mrb[0].mxu0
        %v9532 = vadd.f32 %v9371, %v9531
        %v9533 = vpop.f32.mrb[0].mxu0
        %v9534 = vpop.f32.mrb[0].mxu0
        %v9535 = vadd.f32 %v9374, %v9534
        %v9536 = vpop.f32.mrb[0].mxu0
        %9537 = vmatprep.mubr.bf16.mxu0 0
        %9538 = vmatmul.mubr.bf16.gmra.mrb[0].mxu0 %v9111
        %v9539 = vpop.f32.mrb[0].mxu0
        %v9540 = vadd.f32 %v9379, %v9539
        %v9541 = vpop.f32.mrb[0].mxu0
        %v9542 = vpop.f32.mrb[0].mxu0
        %v9543 = vadd.f32 %v9382, %v9542
        %v9544 = vpop.f32.mrb[0].mxu0
        %9545 = vmatprep.mubr.bf16.mxu0 0
        %9546 = vmatmul.mubr.bf16.gmra.mrb[0].mxu0 %v9114
        %v9547 = vpop.f32.mrb[0].mxu0
        %v9548 = vadd.f32 %v9387, %v9547
        %v9549 = vpop.f32.mrb[0].mxu0
        %v9550 = vpop.f32.mrb[0].mxu0
        %v9551 = vadd.f32 %v9390, %v9550
        %v9552 = vpop.f32.mrb[0].mxu0
        %9553 = vmatprep.mubr.bf16.mxu0 0
        %9554 = vmatmul.mubr.bf16.gmra.mrb[0].mxu0 %v9117
        %v9555 = vpop.f32.mrb[0].mxu0
        %v9556 = vadd.f32 %v9395, %v9555
        %v9557 = vpop.f32.mrb[0].mxu0
        %v9558 = vpop.f32.mrb[0].mxu0
        %v9559 = vadd.f32 %v9398, %v9558
        %v9560 = vpop.f32.mrb[0].mxu0
        %9561 = vmatprep.mubr.bf16.mxu0 0
        %9562 = vmatmul.mubr.bf16.gmra.mrb[0].mxu0 %v9120
        %v9563 = vpop.f32.mrb[0].mxu0
        %v9564 = vadd.f32 %v9403, %v9563
        %v9565 = vpop.f32.mrb[0].mxu0
        %v9566 = vpop.f32.mrb[0].mxu0
        %v9567 = vadd.f32 %v9406, %v9566
        %v9568 = vpop.f32.mrb[0].mxu0
        %9569 = vmatprep.mubr.bf16.mxu0 0
        %9570 = vmatmul.mubr.bf16.gmra.mrb[0].mxu0 %v9123
        %v9571 = vpop.f32.mrb[0].mxu0
        %v9572 = vadd.f32 %v9411, %v9571
        %v9573 = vpop.f32.mrb[0].mxu0
        %v9574 = vpop.f32.mrb[0].mxu0
        %v9575 = vadd.f32 %v9414, %v9574
        %v9576 = vpop.f32.mrb[0].mxu0
        %9577 = vmatprep.mubr.bf16.mxu0 0
        %9578 = vmatmul.mubr.bf16.gmra.mrb[0].mxu0 %v9126
        %v9579 = vpop.f32.mrb[0].mxu0
        %v9580 = vadd.f32 %v9419, %v9579
        %v9581 = vpop.f32.mrb[0].mxu0
        %v9582 = vpop.f32.mrb[0].mxu0
        %v9583 = vadd.f32 %v9422, %v9582
        %v9584 = vpop.f32.mrb[0].mxu0
        %9585 = vmatprep.mubr.bf16.mxu0 0
        %9586 = vmatmul.mubr.bf16.gmra.mrb[0].mxu0 %v9129
        %v9587 = vpop.f32.mrb[0].mxu0
        %v9588 = vadd.f32 %v9427, %v9587
        %v9589 = vpop.f32.mrb[0].mxu0
        %v9590 = vpop.f32.mrb[0].mxu0
        %v9591 = vadd.f32 %v9430, %v9590
        %v9592 = vpop.f32.mrb[0].mxu0
        %9593 = vmatprep.mubr.bf16.mxu0 0
        %9594 = vmatmul.mubr.bf16.gmra.mrb[0].mxu0 %v9132
        %v9595 = vpop.f32.mrb[0].mxu0
        %v9596 = vadd.f32 %v9435, %v9595
        %v9597 = vpop.f32.mrb[0].mxu0
        %v9598 = vpop.f32.mrb[0].mxu0
        %v9599 = vadd.f32 %v9438, %v9598
        %v9600 = vpop.f32.mrb[0].mxu0
        %9601 = vmatprep.mubr.bf16.mxu0 0
        %9602 = vmatmul.mubr.bf16.gmra.mrb[0].mxu0 %v9135
        %v9603 = vpop.f32.mrb[0].mxu0
        %v9604 = vadd.f32 %v9443, %v9603
        %v9605 = vpop.f32.mrb[0].mxu0
        %v9606 = vpop.f32.mrb[0].mxu0
        %v9607 = vadd.f32 %v9446, %v9606
        %v9608 = vpop.f32.mrb[0].mxu0
        %9609 = vmatprep.mubr.bf16.mxu0 0
        %9610 = vmatmul.mubr.bf16.gmra.mrb[0].mxu0 %v9138
        %v9611 = vpop.f32.mrb[0].mxu0
        %v9612 = vadd.f32 %v9451, %v9611
        %v9613 = vpop.f32.mrb[0].mxu0
        %v9614 = vpop.f32.mrb[0].mxu0
        %v9615 = vadd.f32 %v9454, %v9614
        %v9616 = vpop.f32.mrb[0].mxu0
        %9617 = vmatprep.mubr.bf16.mxu0 0
        %9618 = vmatmul.mubr.bf16.gmra.mrb[0].mxu0 %v9141
        %v9619 = vpop.f32.mrb[0].mxu0
        %v9620 = vadd.f32 %v9459, %v9619
        %v9621 = vpop.f32.mrb[0].mxu0
        %v9622 = vpop.f32.mrb[0].mxu0
        %v9623 = vadd.f32 %v9462, %v9622
        %v9624 = vpop.f32.mrb[0].mxu0
        %9625 = vdwg.mxu0
        %9626 = vst [vmem:[%s271] sm:$0xff] %v9500
        %9627 = vst [vmem:[%s271 + $0x8] sm:$0xff] %v9503
        %9628 = vst [vmem:[%s271 + $0x10] sm:$0xff] %v9508
        %9629 = vst [vmem:[%s271 + $0x18] sm:$0xff] %v9511
        %9630 = vst [vmem:[%s271 + $0x20] sm:$0xff] %v9516
        %9631 = vst [vmem:[%s271 + $0x28] sm:$0xff] %v9519
        %9632 = vst [vmem:[%s271 + $0x30] sm:$0xff] %v9524
        %9633 = vst [vmem:[%s271 + $0x38] sm:$0xff] %v9527
        %9634 = vst [vmem:[%s271 + $0x40] sm:$0xff] %v9532
        %9635 = vst [vmem:[%s271 + $0x48] sm:$0xff] %v9535
        %9636 = vst [vmem:[%s271 + $0x50] sm:$0xff] %v9540
        %9637 = vst [vmem:[%s271 + $0x58] sm:$0xff] %v9543
        %9638 = vst [vmem:[%s271 + $0x60] sm:$0xff] %v9548
        %9639 = vst [vmem:[%s271 + $0x68] sm:$0xff] %v9551
        %9640 = vst [vmem:[%s271 + $0x70] sm:$0xff] %v9556
        %9641 = vst [vmem:[%s271 + $0x78] sm:$0xff] %v9559
        %9642 = vst [vmem:[%s271 + $0x80] sm:$0xff] %v9564
        %9643 = vst [vmem:[%s271 + $0x88] sm:$0xff] %v9567
        %9644 = vst [vmem:[%s271 + $0x90] sm:$0xff] %v9572
        %9645 = vst [vmem:[%s271 + $0x98] sm:$0xff] %v9575
        %9646 = vst [vmem:[%s271 + $0xa0] sm:$0xff] %v9580
        %9647 = vst [vmem:[%s271 + $0xa8] sm:$0xff] %v9583
        %9648 = vst [vmem:[%s271 + $0xb0] sm:$0xff] %v9588
        %9649 = vst [vmem:[%s271 + $0xb8] sm:$0xff] %v9591
        %9650 = vst [vmem:[%s271 + $0xc0] sm:$0xff] %v9596
        %9651 = vst [vmem:[%s271 + $0xc8] sm:$0xff] %v9599
        %9652 = vst [vmem:[%s271 + $0xd0] sm:$0xff] %v9604
        %9653 = vst [vmem:[%s271 + $0xd8] sm:$0xff] %v9607
        %9654 = vst [vmem:[%s271 + $0xe0] sm:$0xff] %v9612
        %9655 = vst [vmem:[%s271 + $0xe8] sm:$0xff] %v9615
        %9656 = vst [vmem:[%s271 + $0xf0] sm:$0xff] %v9620
        %9657 = vst [vmem:[%s271 + $0xf8] sm:$0xff] %v9623
        %s9658 = sand.u32 %s181, 1
        %s9659 = scalar_lea.sflag [#allocation5], %s9658
        %s9660 = sand.u32 %s181, 1
        %s9661 = smul.addr %s9660, 256
        %s9662 = scalar_lea.vmem [#allocation4], %s9661
        // Predicated region
        $region49: #{tpu_custom_call.1} parent=47 // pred_check
          %p9663 = pneg %p191
        $region50: #{tpu_custom_call.1} parent=47 // pred_check_branch
          %9665 = sbr.rel (%p9663) target = $region52
        $region51: #{tpu_custom_call.1} parent=47 // pred_region
          %s9667 = ssub.s32 4096, 4096
          %9668 = vsyncadd %s9659, %s9667
          %s9669 = smul.addr %s21, 32
          %s9670 = smul.addr %s9669, 128
          %s9671 = scalar_lea.hbm %s7, %s9670
          %s9672 = sshll.u32 %s9662, 4
          %s9673 = int_to_ptr.vmem [resolvable:$true] %s9672
          %9678 = dma.vmem_to_hbm [thread:$0]  %s9673, 4096, %s9671, %s9659, 128, 128, 8
        $region52: #{tpu_custom_call.1} parent=47 // pred_fallthru
          _
      $region48: #{tpu_custom_call.1} parent=5 // pred_fallthru
        _
      %p9679 = scmp.le.s32.totalorder 2, %s16
      // Predicated region
      $region53: #{tpu_custom_call.1} parent=5 // pred_check
        %p9680 = pneg %p9679
      $region54: #{tpu_custom_call.1} parent=5 // pred_check_branch
        %9682 = sbr.rel (%p9680) target = $region56
      $region55: #{tpu_custom_call.1} parent=5 // pred_region
        %s9683 = ssub.s32 %s16, 2
        // Predicated region
        $region57: #{tpu_custom_call.1} parent=55 // pred_check
          %p9684 = pneg %p197
        $region58: #{tpu_custom_call.1} parent=55 // pred_check_branch
          %9686 = sbr.rel (%p9684) target = $region60
        $region59: #{tpu_custom_call.1} parent=55 // pred_region
          %s9687 = sand.u32 %s182, 1
          %s9688 = scalar_lea.sflag [#allocation5], %s9687
          %s9689 = sand.u32 %s182, 1
          %s9690 = smul.addr %s9689, 256
          %s9691 = scalar_lea.vmem [#allocation4], %s9690
          %9692 = dma.done %s9688, 4096
        $region60: #{tpu_custom_call.1} parent=55 // pred_fallthru
          _
      $region56: #{tpu_custom_call.1} parent=5 // pred_fallthru
        _
    $region6: #{tpu_custom_call.1} parent=1 // loop_footer
      %s20 = sadd.s32 1, %s16
    $region7: #{tpu_custom_call.1} parent=1 // loop_footer_branch
      %15 = sbr.rel target = $region3
    $region8: #{tpu_custom_call.1} parent=1 // loop_exit
      _
    %9693 = vsyncpa [#allocation5], 1
    %s9694 = scalar_lea.sflag [#allocation5], 1
    %9695 = vsyncpa %s9694, 1

</llo_original>
